<compile_context>
chip_gen: v7x
topology: tpu7x:2x2x1
jax: 0.10.0
libtpu: 0.0.40
codegen_flags: <defaults>
</compile_context>

<pallas_src>
import numpy as np
import jax
import jax.numpy as jnp
from jax.experimental import pallas as pl
from jax.experimental.pallas import tpu as pltpu

EPS = 1e-8          # nn.GroupNorm eps used by the torch module
ROWS = 64           # every activation / operator matrix padded to 64 rows
WT = 16             # per-sample time (W) width
SPB = 8             # samples packed side-by-side along lanes
LANES = SPB * WT    # 128 lanes
DBUF = '__dbuf__'   # sentinel: source is the dense-block running buffer


# ---------------------------------------------------------------------------
# Host-side operator builders (numpy, run once at parameter-packing time)
# ---------------------------------------------------------------------------
def _g_conv(w, j, cin_list, H_in, H_out, sh, dh, ph):
    """Freq-tap + channel-mixing operator for W-tap j of a (kh,2) conv."""
    C_out, _, kh, _ = w.shape
    G = np.zeros((C_out * H_out, len(cin_list) * H_in), np.float32)
    for co in range(C_out):
        for ho in range(H_out):
            for l, ci in enumerate(cin_list):
                for i in range(kh):
                    hin = ho * sh + i * dh - ph
                    if 0 <= hin < H_in:
                        G[co * H_out + ho, l * H_in + hin] += w[co, ci, i, j]
    return G


def _g_grouped(w, j, i_layer, dh, ph, H, half):
    """Grouped dilated (3,2) conv of the dense block; columns laid out to match
    the running dense buffer (slot 0 = x1, slot k = out_k)."""
    cin_pg = i_layer + 1
    G = np.zeros((half * H, half * cin_pg * H), np.float32)
    for g in range(half):
        for m in range(cin_pg):
            ci = g * cin_pg + m                 # channel index in torch concat
            part = ci // half                   # 0 = newest output
            q = ci % half
            cb = (i_layer - part) * half + q    # channel index in the buffer
            for ho in range(H):
                for i in range(3):
                    hin = ho + i * dh - ph
                    if 0 <= hin < H:
                        G[g * H + ho, cb * H + hin] += w[g, m, i, j]
    return G


def _g_1x1(w, cin_list, H):
    C_out = w.shape[0]
    G = np.zeros((C_out * H, len(cin_list) * H), np.float32)
    for co in range(C_out):
        for l, ci in enumerate(cin_list):
            for h in range(H):
                G[co * H + h, l * H + h] = w[co, ci, 0, 0]
    return G


def _p_shuffle(oc, H, n=2):
    """H pixel shuffle of SPCONV: pre channel c2=c*n+s, row h  ->  post channel
    c, row h*n+s (matches the torch permute/reshape chain)."""
    P = np.zeros((oc * H * n, oc * n * H), np.float32)
    for c2 in range(oc * n):
        c, s = c2 // n, c2 % n
        for h in range(H):
            P[c * H * n + h * n + s, c2 * H + h] = 1.0
    return P


def _pad_mat(m):
    assert m.shape[0] <= ROWS and m.shape[1] <= ROWS, m.shape
    buf = np.zeros((ROWS, ROWS), np.float32)
    buf[:m.shape[0], :m.shape[1]] = m
    return buf


def _pad_vec(v):
    v = np.asarray(v, np.float32).reshape(-1)
    assert v.shape[0] <= ROWS, v.shape
    buf = np.zeros((ROWS,), np.float32)
    buf[:v.shape[0]] = v
    return buf


def _segsel():
    """(128,128) block-diagonal ones: per-16-lane-segment summation matrix."""
    return np.kron(np.eye(SPB, dtype=np.float32),
                   np.ones((WT, WT), np.float32))


class _Pack:
    def __init__(self):
        self.mats = {}          # K -> list of (64, K) operator matrices
        self.vecs = []          # list of (64,) column vectors
        self.mask_idx = {}      # shift d -> index
        self.masks = []         # list of (8, LANES) lane masks

    def mat(self, m):
        assert m.shape[0] == ROWS and m.shape[1] % ROWS == 0, m.shape
        K = m.shape[1]
        lst = self.mats.setdefault(K, [])
        lst.append(m.astype(np.float32))
        return (K, len(lst) - 1)

    def vec(self, v):
        self.vecs.append(_pad_vec(v))
        return len(self.vecs) - 1

    def mask(self, d):
        if d not in self.mask_idx:
            col = np.arange(LANES)
            m = ((col % WT) >= d).astype(np.float32)
            self.masks.append(np.tile(m[None, :], (8, 1)))
            self.mask_idx[d] = len(self.masks) - 1
        return self.mask_idx[d]


# ---------------------------------------------------------------------------
# Lower the MLFEd3 graph to a linear "program" + packed operator arrays
# ---------------------------------------------------------------------------
def build_program(params, in_ch, mid_ch, out_ch, H, W):
    assert W == WT
    assert out_ch * H <= ROWS and 2 * mid_ch * (H // 2) <= 2 * ROWS
    pk = _Pack()
    prog = []
    half = mid_ch // 2
    H1, H2, H3 = H // 2, H // 4, H // 8

    def causal_step(out_name, parts, w, b, *, H_in, H_out, sh=1, dh=1, ph=1,
                    pw=1, gn=None, prelu=None, perm_oc=None):
        """One causal (3,2) conv (+optional pixel shuffle/GN/PReLU) as a single
        stacked operator matmul.  parts: list of (src, global-in-channel list)."""
        w = np.asarray(w, np.float32)
        b = np.asarray(b, np.float32)
        post = _pad_mat(_p_shuffle(perm_oc, H_out, 2)) if perm_oc is not None else None
        segs_ops, segs_desc = [], []
        for src, cin in parts:
            g1 = _pad_mat(_g_conv(w, 1, cin, H_in, H_out, sh, dh, ph))
            segs_ops.append(g1 if post is None else post @ g1)
            segs_desc.append((src, None, None))
            if pw < W:          # tap 0 (previous frames); pw >= W -> all padding
                g0 = _pad_mat(_g_conv(w, 0, cin, H_in, H_out, sh, dh, ph))
                segs_ops.append(g0 if post is None else post @ g0)
                segs_desc.append((src, pw, pk.mask(pw)))
        bias = _pad_vec(np.repeat(b, H_out))
        if post is not None:
            bias = post @ bias
        step = dict(kind='conv', out=out_name, op=pk.mat(np.hstack(segs_ops)),
                    segs=segs_desc, bias=pk.vec(bias), gn=None, prelu=None)
        ch_out, h_eff = w.shape[0], H_out
        if perm_oc is not None:
            ch_out, h_eff = perm_oc, H_out * 2
        if gn is not None:
            gamma = np.asarray(gn[0], np.float32)
            beta = np.asarray(gn[1], np.float32)
            step['gn'] = (pk.vec(np.repeat(gamma, h_eff)),
                          pk.vec(np.repeat(beta, h_eff)),
                          float(ch_out * h_eff * W))
        if prelu is not None:
            step['prelu'] = float(prelu)
        prog.append(step)

    # ---- INCONV: 1x1 conv + GN + PReLU ----
    p = params['in']
    prog.append(dict(
        kind='conv', out='xi',
        op=pk.mat(_pad_mat(_g_1x1(np.asarray(p['w'], np.float32),
                                  list(range(in_ch)), H))),
        segs=[('x', None, None)],
        bias=pk.vec(np.repeat(np.asarray(p['b'], np.float32), H)),
        gn=(pk.vec(np.repeat(np.asarray(p['g'], np.float32), H)),
            pk.vec(np.repeat(np.asarray(p['be'], np.float32), H)),
            float(out_ch * H * W)),
        prelu=float(p['a'])))
    prog.append(dict(kind='park', src='xi', slot=0))

    # ---- encoder CONV blocks (causal (3,2), stride (2,1)) ----
    p = params['en1']
    causal_step('out1',
                [(('skip', 0), list(range(out_ch))),
                 ('ed1', list(range(out_ch, 2 * out_ch)))],
                p['w'], p['b'], H_in=H, H_out=H1, sh=2,
                gn=(p['g'], p['be']), prelu=p['a'])
    prog.append(dict(kind='park', src='out1', slot=1))
    p = params['en2']
    causal_step('out2',
                [(('skip', 1), list(range(mid_ch))),
                 ('ed2', list(range(mid_ch, 2 * mid_ch)))],
                p['w'], p['b'], H_in=H1, H_out=H2, sh=2,
                gn=(p['g'], p['be']), prelu=p['a'])
    prog.append(dict(kind='park', src='out2', slot=2))
    p = params['en3']
    causal_step('out3',
                [(('skip', 2), list(range(mid_ch))),
                 ('ed3', list(range(mid_ch, 2 * mid_ch)))],
                p['w'], p['b'], H_in=H2, H_out=H3, sh=2,
                gn=(p['g'], p['be']), prelu=p['a'])
    prog.append(dict(kind='park', src='out3', slot=3))

    # ---- dilated dense block (grouped conv fused with following 1x1 conv) ----
    dd = params['dd']
    causal_step('dd_x1', [(('skip', 3), list(range(mid_ch)))],
                dd['w_in'], dd['b_in'], H_in=H3, H_out=H3, prelu=dd['a_in'])
    prog.append(dict(kind='dstore', src='dd_x1', row=0, nrows=half * H3))
    for i in range(6):
        d = 2 ** i
        ph_ = 1 if i == 0 else d
        wg = np.asarray(dd['wg'][i], np.float32)
        w1 = np.asarray(dd['w1'][i], np.float32)
        G11 = _pad_mat(_g_1x1(w1, list(range(half)), H3))
        segs_ops, segs_desc = [], []
        g1 = _pad_mat(_g_grouped(wg, 1, i, d, ph_, H3, half))
        segs_ops.append(G11 @ g1)
        segs_desc.append((DBUF, None, None))
        if d < W:
            g0 = _pad_mat(_g_grouped(wg, 0, i, d, ph_, H3, half))
            segs_ops.append(G11 @ g0)
            segs_desc.append((DBUF, d, pk.mask(d)))
        bias = (G11 @ _pad_vec(np.repeat(np.asarray(dd['bg'][i], np.float32), H3))
                + _pad_vec(np.repeat(np.asarray(dd['b1'][i], np.float32), H3)))
        prog.append(dict(
            kind='conv', out=f'dd_o{i + 1}', op=pk.mat(np.hstack(segs_ops)),
            segs=segs_desc, bias=pk.vec(bias),
            gn=(pk.vec(np.repeat(np.asarray(dd['g'][i], np.float32), H3)),
                pk.vec(np.repeat(np.asarray(dd['be'][i], np.float32), H3)),
                float(half * H3 * W)),
            prelu=float(dd['al'][i])))
        if i < 5:
            prog.append(dict(kind='dstore', src=f'dd_o{i + 1}',
                             row=(i + 1) * half * H3, nrows=half * H3))
    causal_step('dd_out', [('dd_o6', list(range(half)))],
                dd['w_out'], dd['b_out'], H_in=H3, H_out=H3, prelu=dd['a_out'])

    # ---- decoder SPCONV blocks (conv + pixel shuffle folded into operator) ----
    p = params['de1']
    causal_step('de1',
                [('dd_out', list(range(mid_ch))),
                 (('skip', 3), list(range(mid_ch, 2 * mid_ch)))],
                p['w'], p['b'], H_in=H3, H_out=H3,
                gn=(p['g'], p['be']), prelu=p['a'], perm_oc=mid_ch)
    p = params['de2']
    causal_step('de2',
                [('de1', list(range(mid_ch))),
                 (('skip', 2), list(range(mid_ch, 2 * mid_ch)))],
                p['w'], p['b'], H_in=H2, H_out=H2,
                gn=(p['g'], p['be']), prelu=p['a'], perm_oc=mid_ch)
    p = params['de3']
    causal_step('de3',
                [('de2', list(range(mid_ch))),
                 (('skip', 1), list(range(mid_ch, 2 * mid_ch)))],
                p['w'], p['b'], H_in=H1, H_out=H1,
                gn=(p['g'], p['be']), prelu=p['a'], perm_oc=out_ch)

    prog.append(dict(kind='final', a='de3', slot=0))

    mat_keys = sorted(pk.mats.keys())
    packed = dict(
        mats={k: jnp.asarray(np.stack(pk.mats[k]), dtype=jnp.bfloat16)
              for k in mat_keys},                                   # bf16 ops
        vecs=jnp.asarray(np.stack(pk.vecs)[:, :, None]),            # (NV,64,1) f32
        masks=jnp.asarray(np.stack(pk.masks)),                      # (ND,8,128) f32
        segsel=jnp.asarray(_segsel()),                              # (128,128) f32
    )
    return prog, packed, mat_keys


# ---------------------------------------------------------------------------
# The single fused Pallas kernel
# ---------------------------------------------------------------------------
def _make_kernel(program, mat_keys, roll_mode, roll_sign):
    n_mats = len(mat_keys)

    def shift_cols(a, d):
        if roll_mode == 'pltpu':
            return pltpu.roll(a, (roll_sign * d) % LANES, 1)
        return jnp.roll(a, d, axis=1)

    def kernel(*refs):
        acts_ref = refs[0]
        mats_refs = dict(zip(mat_keys, refs[1:1 + n_mats]))
        vecs_ref = refs[1 + n_mats]
        masks_ref = refs[2 + n_mats]
        segsel_ref = refs[3 + n_mats]
        out_ref = refs[4 + n_mats]
        dbuf_ref = refs[5 + n_mats]
        skip_ref = refs[6 + n_mats]

        env = {'x':   acts_ref[0, 0],
               'ed1': acts_ref[0, 1],
               'ed2': acts_ref[0, 2],
               'ed3': acts_ref[0, 3]}
        dbuf_ref[...] = jnp.zeros((ROWS, LANES), jnp.float32)

        segsel = segsel_ref[...]                          # hoisted once
        pad6 = jnp.zeros((6, LANES), jnp.float32)

        for step in program:
            kind = step['kind']
            if kind == 'conv':
                cache = {}

                def read(src, cache=cache):
                    if src not in cache:
                        if src == DBUF:
                            cache[src] = dbuf_ref[...]
                        elif isinstance(src, tuple):
                            cache[src] = skip_ref[src[1]]
                        else:
                            cache[src] = env[src]
                    return cache[src]

                pieces = []
                for src, d, midx in step['segs']:
                    a = read(src)
                    if d is not None:                     # causal time shift
                        a = shift_cols(a, d) * masks_ref[midx][0:1, :]
                    pieces.append(a.astype(jnp.bfloat16))
                stacked = pieces[0] if len(pieces) == 1 else \
                    jnp.concatenate(pieces, axis=0)
                K, mi = step['op']
                z = jnp.dot(mats_refs[K][mi], stacked,
                            preferred_element_type=jnp.float32)
                z = z + vecs_ref[step['bias']]            # (64,1) broadcast
                if step['gn'] is not None:                # GroupNorm(1 group)
                    gi, bi, cnt = step['gn']
                    s1 = jnp.sum(z, axis=0, keepdims=True)
                    s2 = jnp.sum(z * z, axis=0, keepdims=True)
                    seg = jnp.dot(jnp.concatenate([s1, s2, pad6], axis=0),
                                  segsel, preferred_element_type=jnp.float32)
                    inv = 1.0 / cnt
                    mean = seg[0:1, :] * inv
                    var = jnp.maximum(seg[1:2, :] * inv - mean * mean, 0.0)
                    z = (z - mean) * jax.lax.rsqrt(var + EPS)
                    z = z * vecs_ref[gi] + vecs_ref[bi]
                if step['prelu'] is not None:             # PReLU (static slope)
                    s = step['prelu']
                    z = jnp.where(z >= 0, z, s * z)
                env[step['out']] = z
            elif kind == 'park':                          # long-lived skip -> VMEM
                skip_ref[step['slot']] = env.pop(step['src'])
            elif kind == 'dstore':                        # dense-block buffer
                n = step['nrows']
                dbuf_ref[pl.ds(step['row'], n), :] = env[step['src']][0:n, :]
            elif kind == 'final':                         # residual add
                out_ref[0] = env[step['a']] + skip_ref[step['slot']]

    return kernel


def build_forward(program, packed, mat_keys, out_ch, H, roll_mode, roll_sign):
    kernel = _make_kernel(program, mat_keys, roll_mode, roll_sign)
    mats_arrays = [packed['mats'][k] for k in mat_keys]
    vecs, masks, segsel = packed['vecs'], packed['masks'], packed['segsel']

    def fwd(x, ed1, ed2, ed3):
        B = x.shape[0]
        G = max(1, (B + SPB - 1) // SPB)
        Bp = G * SPB

        def pack(t):
            Bt, C, Ht, Wt = t.shape
            assert Wt == WT and C * Ht <= ROWS
            t = t.reshape(Bt, C * Ht, Wt)
            t = jnp.pad(t, ((0, Bp - Bt), (0, ROWS - C * Ht), (0, 0)))
            return (t.reshape(G, SPB, ROWS, Wt)
                     .transpose(0, 2, 1, 3)
                     .reshape(G, ROWS, SPB * Wt))

        acts = jnp.stack([pack(x), pack(ed1), pack(ed2), pack(ed3)],
                         axis=1)                                  # (G,4,64,128)

        const_specs = [pl.BlockSpec(a.shape, lambda b, n=a.ndim: (0,) * n)
                       for a in mats_arrays + [vecs, masks, segsel]]

        out = pl.pallas_call(
            kernel,
            out_shape=jax.ShapeDtypeStruct((G, ROWS, LANES), jnp.float32),
            grid=(G,),
            in_specs=[pl.BlockSpec((1, 4, ROWS, LANES),
                                   lambda b: (b, 0, 0, 0))] + const_specs,
            out_specs=pl.BlockSpec((1, ROWS, LANES), lambda b: (b, 0, 0)),
            scratch_shapes=[pltpu.VMEM((ROWS, LANES), jnp.float32),      # dense buf
                            pltpu.VMEM((4, ROWS, LANES), jnp.float32)],  # skips
            compiler_params=pltpu.CompilerParams(
                dimension_semantics=("parallel",)),
        )(acts, *mats_arrays, vecs, masks, segsel)

        out = (out.reshape(G, ROWS, SPB, WT)
                  .transpose(0, 2, 1, 3)
                  .reshape(Bp, ROWS, WT))
        return out[:B, :out_ch * H, :].reshape(B, out_ch, H, WT)

    return jax.jit(fwd)


def _probe_roll():
    """Detect pltpu.roll's lane-rotation direction (once, on device)."""
    try:
        def k(x_ref, o_ref):
            o_ref[...] = pltpu.roll(x_ref[...], 1, 1)

        x = jnp.tile(jnp.arange(LANES, dtype=jnp.float32)[None, :], (8, 1))
        out = pl.pallas_call(
            k, out_shape=jax.ShapeDtypeStruct((8, LANES), jnp.float32))(x)
        out = np.asarray(jax.block_until_ready(out))
        if out[0, 1] == 0.0:        # out[:, w] = x[:, w-1]  (jnp.roll convention)
            return 'pltpu', 1
        if out[0, 0] == 1.0:        # out[:, w] = x[:, w+1]
            return 'pltpu', -1
    except Exception:
        pass
    return 'jnp', 1                 # fall back to jnp.roll semantics


# ---------------------------------------------------------------------------
# Deterministic synthetic parameters (torch-layout weights)
# ---------------------------------------------------------------------------
def init_params(key, in_ch, mid_ch, out_ch):
    keys = list(jax.random.split(key, 128))
    idx = [0]

    def nk():
        k = keys[idx[0]]
        idx[0] += 1
        return k

    def conv_wb(cout, cin_pg, kh, kw):
        w = jax.random.normal(nk(), (cout, cin_pg, kh, kw), jnp.float32) * 0.1
        b = jax.random.normal(nk(), (cout,), jnp.float32) * 0.1
        return w, b

    def gn(c):
        g = 1.0 + 0.1 * jax.random.normal(nk(), (c,), jnp.float32)
        be = 0.1 * jax.random.normal(nk(), (c,), jnp.float32)
        return g, be

    a0 = jnp.array(0.25, jnp.float32)   # nn.PReLU() default slope

    def block(cin, cout, kh, kw):
        w, b = conv_wb(cout, cin, kh, kw)
        g, be = gn(cout)
        return {'w': w, 'b': b, 'g': g, 'be': be, 'a': a0}

    p = {}
    p['in'] = block(in_ch, out_ch, 1, 1)
    p['en1'] = block(out_ch * 2, mid_ch, 3, 2)
    p['en2'] = block(mid_ch * 2, mid_ch, 3, 2)
    p['en3'] = block(mid_ch * 2, mid_ch, 3, 2)

    half = mid_ch // 2
    dd = {'wg': [], 'bg': [], 'w1': [], 'b1': [], 'g': [], 'be': [], 'al': []}
    dd['w_in'], dd['b_in'] = conv_wb(half, mid_ch, 3, 2)
    dd['a_in'] = a0
    for i in range(6):
        wg, bg = conv_wb(half, i + 1, 3, 2)     # grouped: groups=half, cin/grp=i+1
        w1, b1 = conv_wb(half, half, 1, 1)
        g, be = gn(half)
        dd['wg'].append(wg); dd['bg'].append(bg)
        dd['w1'].append(w1); dd['b1'].append(b1)
        dd['g'].append(g); dd['be'].append(be); dd['al'].append(a0)
    dd['w_out'], dd['b_out'] = conv_wb(mid_ch, half, 3, 2)
    dd['a_out'] = a0
    p['dd'] = dd

    def sp(cin, cout, scale=2):
        w, b = conv_wb(cout * scale, cin, 3, 2)
        g, be = gn(cout)
        return {'w': w, 'b': b, 'g': g, 'be': be, 'a': a0}

    p['de1'] = sp(mid_ch * 2, mid_ch)
    p['de2'] = sp(mid_ch * 2, mid_ch)
    p['de3'] = sp(mid_ch * 2, out_ch)
    return p


# ---------------------------------------------------------------------------
if __name__ == "__main__":
    in_ch, mid_ch, out_ch = 2, 8, 4
    B, H, W = 16, 16, 16          # B=16 -> 2 lane-dense blocks of 8 samples

    key = jax.random.PRNGKey(0)
    pkey, k1, k2, k3, k4 = jax.random.split(key, 5)
    params = init_params(pkey, in_ch, mid_ch, out_ch)

    # One-time host-side lowering of the network to packed operator matrices.
    program, packed, mat_keys = build_program(params, in_ch, mid_ch, out_ch, H, W)
    roll_mode, roll_sign = _probe_roll()
    fwd = build_forward(program, packed, mat_keys, out_ch, H, roll_mode, roll_sign)

    x = jax.random.normal(k1, (B, in_ch, H, W), jnp.float32)
    ed1 = jax.random.normal(k2, (B, out_ch, H, W), jnp.float32)
    ed2 = jax.random.normal(k3, (B, mid_ch, H // 2, W), jnp.float32)
    ed3 = jax.random.normal(k4, (B, mid_ch, H // 4, W), jnp.float32)

    out = fwd(x, ed1, ed2, ed3)
    out = jax.block_until_ready(out)

    assert out.shape == (B, out_ch, H, W), out.shape
    assert bool(jnp.all(jnp.isfinite(out)))
    print("KERNEL_OK")
</pallas_src>

<mosaic_0001>
module attributes {stable_mosaic.version = 11 : i64} {
  func.func @k(%arg0: memref<8x128xf32, #tpu.memory_space<vmem>>, %arg1: memref<8x128xf32, #tpu.memory_space<vmem>>) attributes {dimension_semantics = [], scalar_prefetch = 0 : i64, scratch_operands = 0 : i64, tpu.core_type = #tpu.core_type<tc>} {
    %c0 = arith.constant 0 : index
    %c0_0 = arith.constant 0 : index
    %0 = vector.load %arg0[%c0, %c0_0] : memref<8x128xf32, #tpu.memory_space<vmem>>, vector<8x128xf32>
    %c1_i32 = arith.constant 1 : i32
    %1 = tpu.dynamic_rotate %0 by %c1_i32 dim 1 : vector<8x128xf32>, i32 -> vector<8x128xf32>
    %c0_1 = arith.constant 0 : index
    %c0_2 = arith.constant 0 : index
    %2 = vector.load %arg1[%c0_1, %c0_2] : memref<8x128xf32, #tpu.memory_space<vmem>>, vector<8x128xf32>
    tpu.vector_store %arg1[%c0_1, %c0_2], %1 {strides = array<i32>} : memref<8x128xf32, #tpu.memory_space<vmem>>, vector<8x128xf32>,
    return
  }
}

module attributes {stable_mosaic.version = 11 : i64} {
  func.func @kernel(%arg0: i32, %arg1: memref<1x4x64x128xf32, #tpu.memory_space<vmem>>, %arg2: memref<3x64x64xbf16, #tpu.memory_space<vmem>>, %arg3: memref<6x64x128xbf16, #tpu.memory_space<vmem>>, %arg4: memref<6x64x256xbf16, #tpu.memory_space<vmem>>, %arg5: memref<41x64x1xf32, #tpu.memory_space<vmem>>, %arg6: memref<4x8x128xf32, #tpu.memory_space<vmem>>, %arg7: memref<128x128xf32, #tpu.memory_space<vmem>>, %arg8: memref<1x64x128xf32, #tpu.memory_space<vmem>>, %arg9: memref<64x128xf32, #tpu.memory_space<vmem>>, %arg10: memref<4x64x128xf32, #tpu.memory_space<vmem>>) attributes {dimension_semantics = [#tpu.dimension_semantics<parallel>], iteration_bounds = array<i64: 2>, scalar_prefetch = 0 : i64, scratch_operands = 2 : i64, tpu.core_type = #tpu.core_type<tc>, window_params = [{transform_indices = @transform_0, window_bounds = array<i64: 1, 4, 64, 128>}, {pipeline_mode = #tpu.pipeline_mode<synchronous>, transform_indices = @transform_1, window_bounds = array<i64: 3, 64, 64>}, {pipeline_mode = #tpu.pipeline_mode<synchronous>, transform_indices = @transform_2, window_bounds = array<i64: 6, 64, 128>}, {pipeline_mode = #tpu.pipeline_mode<synchronous>, transform_indices = @transform_3, window_bounds = array<i64: 6, 64, 256>}, {pipeline_mode = #tpu.pipeline_mode<synchronous>, transform_indices = @transform_4, window_bounds = array<i64: 41, 64, 1>}, {pipeline_mode = #tpu.pipeline_mode<synchronous>, transform_indices = @transform_5, window_bounds = array<i64: 4, 8, 128>}, {pipeline_mode = #tpu.pipeline_mode<synchronous>, transform_indices = @transform_6, window_bounds = array<i64: 128, 128>}, {transform_indices = @transform_7, window_bounds = array<i64: 1, 64, 128>}]} {
    %c0 = arith.constant 0 : index
    %c0_0 = arith.constant 0 : index
    %c0_1 = arith.constant 0 : index
    %c0_2 = arith.constant 0 : index
    %0 = vector.load %arg1[%c0, %c0_0, %c0_1, %c0_2] : memref<1x4x64x128xf32, #tpu.memory_space<vmem>>, vector<1x1x64x128xf32>
    %1 = vector.shape_cast %0 : vector<1x1x64x128xf32> to vector<64x128xf32>
    %c0_3 = arith.constant 0 : index
    %c1 = arith.constant 1 : index
    %c0_4 = arith.constant 0 : index
    %c0_5 = arith.constant 0 : index
    %2 = vector.load %arg1[%c0_3, %c1, %c0_4, %c0_5] : memref<1x4x64x128xf32, #tpu.memory_space<vmem>>, vector<1x1x64x128xf32>
    %3 = vector.shape_cast %2 : vector<1x1x64x128xf32> to vector<64x128xf32>
    %c0_6 = arith.constant 0 : index
    %c2 = arith.constant 2 : index
    %c0_7 = arith.constant 0 : index
    %c0_8 = arith.constant 0 : index
    %4 = vector.load %arg1[%c0_6, %c2, %c0_7, %c0_8] : memref<1x4x64x128xf32, #tpu.memory_space<vmem>>, vector<1x1x64x128xf32>
    %5 = vector.shape_cast %4 : vector<1x1x64x128xf32> to vector<64x128xf32>
    %c0_9 = arith.constant 0 : index
    %c3 = arith.constant 3 : index
    %c0_10 = arith.constant 0 : index
    %c0_11 = arith.constant 0 : index
    %6 = vector.load %arg1[%c0_9, %c3, %c0_10, %c0_11] : memref<1x4x64x128xf32, #tpu.memory_space<vmem>>, vector<1x1x64x128xf32>
    %7 = vector.shape_cast %6 : vector<1x1x64x128xf32> to vector<64x128xf32>
    %cst = arith.constant 0.000000e+00 : f32
    %8 = vector.broadcast %cst : f32 to vector<64x128xf32>
    %c0_12 = arith.constant 0 : index
    %c0_13 = arith.constant 0 : index
    %9 = vector.load %arg9[%c0_12, %c0_13] : memref<64x128xf32, #tpu.memory_space<vmem>>, vector<64x128xf32>
    tpu.vector_store %arg9[%c0_12, %c0_13], %8 {strides = array<i32>} : memref<64x128xf32, #tpu.memory_space<vmem>>, vector<64x128xf32>,
    %c0_14 = arith.constant 0 : index
    %c0_15 = arith.constant 0 : index
    %10 = vector.load %arg7[%c0_14, %c0_15] : memref<128x128xf32, #tpu.memory_space<vmem>>, vector<128x128xf32>
    %cst_16 = arith.constant 0.000000e+00 : f32
    %11 = vector.broadcast %cst_16 : f32 to vector<6x128xf32>
    %12 = arith.truncf %1 : vector<64x128xf32> to vector<64x128xbf16>
    %c0_17 = arith.constant 0 : index
    %c0_18 = arith.constant 0 : index
    %c0_19 = arith.constant 0 : index
    %13 = vector.load %arg2[%c0_17, %c0_18, %c0_19] : memref<3x64x64xbf16, #tpu.memory_space<vmem>>, vector<1x64x64xbf16>
    %14 = vector.shape_cast %13 : vector<1x64x64xbf16> to vector<64x64xbf16>
    %cst_20 = arith.constant dense<0.000000e+00> : vector<64x128xf32>
    %15 = tpu.matmul %14, %12, %cst_20 {dimension_numbers = #tpu.dot_dimension_numbers<[1], [0], [0], [1], [0, 0, 1, 1], [], []>} : vector<64x64xbf16>, vector<64x128xbf16>, vector<64x128xf32> -> vector<64x128xf32>
    %c0_21 = arith.constant 0 : index
    %c0_22 = arith.constant 0 : index
    %c0_23 = arith.constant 0 : index
    %16 = vector.load %arg5[%c0_21, %c0_22, %c0_23] : memref<41x64x1xf32, #tpu.memory_space<vmem>>, vector<1x64x1xf32>
    %17 = vector.shape_cast %16 : vector<1x64x1xf32> to vector<64x1xf32>
    %18 = vector.broadcast %17 : vector<64x1xf32> to vector<64x128xf32>
    %19 = arith.addf %15, %18 : vector<64x128xf32>
    %cst_24 = arith.constant dense<0.000000e+00> : vector<128xf32>
    %20 = vector.multi_reduction <add>, %19, %cst_24 [0] : vector<64x128xf32> to vector<128xf32>
    %21 = vector.shape_cast %20 : vector<128xf32> to vector<1x128xf32>
    %22 = arith.mulf %19, %19 : vector<64x128xf32>
    %cst_25 = arith.constant dense<0.000000e+00> : vector<128xf32>
    %23 = vector.multi_reduction <add>, %22, %cst_25 [0] : vector<64x128xf32> to vector<128xf32>
    %24 = vector.shape_cast %23 : vector<128xf32> to vector<1x128xf32>
    %25 = tpu.concatenate %21, %24, %11 in 0 : vector<1x128xf32>, vector<1x128xf32>, vector<6x128xf32> -> vector<8x128xf32>
    %cst_26 = arith.constant dense<0.000000e+00> : vector<8x128xf32>
    %26 = tpu.matmul %25, %10, %cst_26 {dimension_numbers = #tpu.dot_dimension_numbers<[1], [0], [0], [1], [0, 0, 1, 1], [], []>} : vector<8x128xf32>, vector<128x128xf32>, vector<8x128xf32> -> vector<8x128xf32>
    %27 = vector.extract_strided_slice %26 {offsets = [0, 0], sizes = [1, 128], strides = [1, 1]} : vector<8x128xf32> to vector<1x128xf32>
    %cst_27 = arith.constant 9.765625E-4 : f32
    %28 = vector.broadcast %cst_27 : f32 to vector<1x128xf32>
    %29 = arith.mulf %27, %28 : vector<1x128xf32>
    %30 = vector.extract_strided_slice %26 {offsets = [1, 0], sizes = [1, 128], strides = [1, 1]} : vector<8x128xf32> to vector<1x128xf32>
    %cst_28 = arith.constant 9.765625E-4 : f32
    %31 = vector.broadcast %cst_28 : f32 to vector<1x128xf32>
    %32 = arith.mulf %30, %31 : vector<1x128xf32>
    %33 = arith.mulf %29, %29 : vector<1x128xf32>
    %34 = arith.subf %32, %33 : vector<1x128xf32>
    %cst_29 = arith.constant 0.000000e+00 : f32
    %35 = vector.broadcast %cst_29 : f32 to vector<1x128xf32>
    %36 = arith.maximumf %34, %35 : vector<1x128xf32>
    %37 = vector.broadcast %29 : vector<1x128xf32> to vector<64x128xf32>
    %38 = arith.subf %19, %37 : vector<64x128xf32>
    %cst_30 = arith.constant 9.99999993E-9 : f32
    %39 = vector.broadcast %cst_30 : f32 to vector<1x128xf32>
    %40 = arith.addf %36, %39 : vector<1x128xf32>
    %41 = math.rsqrt %40 : vector<1x128xf32>
    %42 = vector.broadcast %41 : vector<1x128xf32> to vector<64x128xf32>
    %43 = arith.mulf %38, %42 : vector<64x128xf32>
    %c1_31 = arith.constant 1 : index
    %c0_32 = arith.constant 0 : index
    %c0_33 = arith.constant 0 : index
    %44 = vector.load %arg5[%c1_31, %c0_32, %c0_33] : memref<41x64x1xf32, #tpu.memory_space<vmem>>, vector<1x64x1xf32>
    %45 = vector.shape_cast %44 : vector<1x64x1xf32> to vector<64x1xf32>
    %46 = vector.broadcast %45 : vector<64x1xf32> to vector<64x128xf32>
    %47 = arith.mulf %43, %46 : vector<64x128xf32>
    %c2_34 = arith.constant 2 : index
    %c0_35 = arith.constant 0 : index
    %c0_36 = arith.constant 0 : index
    %48 = vector.load %arg5[%c2_34, %c0_35, %c0_36] : memref<41x64x1xf32, #tpu.memory_space<vmem>>, vector<1x64x1xf32>
    %49 = vector.shape_cast %48 : vector<1x64x1xf32> to vector<64x1xf32>
    %50 = vector.broadcast %49 : vector<64x1xf32> to vector<64x128xf32>
    %51 = arith.addf %47, %50 : vector<64x128xf32>
    %cst_37 = arith.constant 0.000000e+00 : f32
    %52 = vector.broadcast %cst_37 : f32 to vector<64x128xf32>
    %53 = arith.cmpf oge, %51, %52 : vector<64x128xf32>
    %cst_38 = arith.constant 2.500000e-01 : f32
    %54 = vector.broadcast %cst_38 : f32 to vector<64x128xf32>
    %55 = arith.mulf %54, %51 : vector<64x128xf32>
    %56 = arith.select %53, %51, %55 : vector<64x128xi1>, vector<64x128xf32>
    %c0_39 = arith.constant 0 : index
    %c0_40 = arith.constant 0 : index
    %c0_41 = arith.constant 0 : index
    %57 = vector.load %arg10[%c0_39, %c0_40, %c0_41] : memref<4x64x128xf32, #tpu.memory_space<vmem>>, vector<1x64x128xf32>
    %58 = vector.shape_cast %57 : vector<1x64x128xf32> to vector<64x128xf32>
    %59 = vector.shape_cast %56 : vector<64x128xf32> to vector<1x64x128xf32>
    tpu.vector_store %arg10[%c0_39, %c0_40, %c0_41], %59 {strides = array<i32>} : memref<4x64x128xf32, #tpu.memory_space<vmem>>, vector<1x64x128xf32>,
    %c0_42 = arith.constant 0 : index
    %c0_43 = arith.constant 0 : index
    %c0_44 = arith.constant 0 : index
    %60 = vector.load %arg10[%c0_42, %c0_43, %c0_44] : memref<4x64x128xf32, #tpu.memory_space<vmem>>, vector<1x64x128xf32>
    %61 = vector.shape_cast %60 : vector<1x64x128xf32> to vector<64x128xf32>
    %62 = arith.truncf %61 : vector<64x128xf32> to vector<64x128xbf16>
    %63 = vector.extract_strided_slice %61 {offsets = [0, 127], sizes = [64, 1], strides = [1, 1]} : vector<64x128xf32> to vector<64x1xf32>
    %64 = vector.extract_strided_slice %61 {offsets = [0, 0], sizes = [64, 127], strides = [1, 1]} : vector<64x128xf32> to vector<64x127xf32>
    %65 = tpu.concatenate %63, %64 in 1 : vector<64x1xf32>, vector<64x127xf32> -> vector<64x128xf32>
    %c0_45 = arith.constant 0 : index
    %c0_46 = arith.constant 0 : index
    %c0_47 = arith.constant 0 : index
    %66 = vector.load %arg6[%c0_45, %c0_46, %c0_47] : memref<4x8x128xf32, #tpu.memory_space<vmem>>, vector<1x8x128xf32>
    %67 = vector.shape_cast %66 : vector<1x8x128xf32> to vector<8x128xf32>
    %68 = vector.extract_strided_slice %67 {offsets = [0, 0], sizes = [1, 128], strides = [1, 1]} : vector<8x128xf32> to vector<1x128xf32>
    %69 = vector.broadcast %68 : vector<1x128xf32> to vector<64x128xf32>
    %70 = arith.mulf %65, %69 : vector<64x128xf32>
    %71 = arith.truncf %70 : vector<64x128xf32> to vector<64x128xbf16>
    %72 = arith.truncf %3 : vector<64x128xf32> to vector<64x128xbf16>
    %73 = vector.extract_strided_slice %3 {offsets = [0, 127], sizes = [64, 1], strides = [1, 1]} : vector<64x128xf32> to vector<64x1xf32>
    %74 = vector.extract_strided_slice %3 {offsets = [0, 0], sizes = [64, 127], strides = [1, 1]} : vector<64x128xf32> to vector<64x127xf32>
    %75 = tpu.concatenate %73, %74 in 1 : vector<64x1xf32>, vector<64x127xf32> -> vector<64x128xf32>
    %c0_48 = arith.constant 0 : index
    %c0_49 = arith.constant 0 : index
    %c0_50 = arith.constant 0 : index
    %76 = vector.load %arg6[%c0_48, %c0_49, %c0_50] : memref<4x8x128xf32, #tpu.memory_space<vmem>>, vector<1x8x128xf32>
    %77 = vector.shape_cast %76 : vector<1x8x128xf32> to vector<8x128xf32>
    %78 = vector.extract_strided_slice %77 {offsets = [0, 0], sizes = [1, 128], strides = [1, 1]} : vector<8x128xf32> to vector<1x128xf32>
    %79 = vector.broadcast %78 : vector<1x128xf32> to vector<64x128xf32>
    %80 = arith.mulf %75, %79 : vector<64x128xf32>
    %81 = arith.truncf %80 : vector<64x128xf32> to vector<64x128xbf16>
    %82 = tpu.concatenate %62, %71, %72, %81 in 0 : vector<64x128xbf16>, vector<64x128xbf16>, vector<64x128xbf16>, vector<64x128xbf16> -> vector<256x128xbf16>
    %c0_51 = arith.constant 0 : index
    %c0_52 = arith.constant 0 : index
    %c0_53 = arith.constant 0 : index
    %83 = vector.load %arg4[%c0_51, %c0_52, %c0_53] : memref<6x64x256xbf16, #tpu.memory_space<vmem>>, vector<1x64x256xbf16>
    %84 = vector.shape_cast %83 : vector<1x64x256xbf16> to vector<64x256xbf16>
    %cst_54 = arith.constant dense<0.000000e+00> : vector<64x128xf32>
    %85 = tpu.matmul %84, %82, %cst_54 {dimension_numbers = #tpu.dot_dimension_numbers<[1], [0], [0], [1], [0, 0, 1, 1], [], []>} : vector<64x256xbf16>, vector<256x128xbf16>, vector<64x128xf32> -> vector<64x128xf32>
    %c3_55 = arith.constant 3 : index
    %c0_56 = arith.constant 0 : index
    %c0_57 = arith.constant 0 : index
    %86 = vector.load %arg5[%c3_55, %c0_56, %c0_57] : memref<41x64x1xf32, #tpu.memory_space<vmem>>, vector<1x64x1xf32>
    %87 = vector.shape_cast %86 : vector<1x64x1xf32> to vector<64x1xf32>
    %88 = vector.broadcast %87 : vector<64x1xf32> to vector<64x128xf32>
    %89 = arith.addf %85, %88 : vector<64x128xf32>
    %cst_58 = arith.constant dense<0.000000e+00> : vector<128xf32>
    %90 = vector.multi_reduction <add>, %89, %cst_58 [0] : vector<64x128xf32> to vector<128xf32>
    %91 = vector.shape_cast %90 : vector<128xf32> to vector<1x128xf32>
    %92 = arith.mulf %89, %89 : vector<64x128xf32>
    %cst_59 = arith.constant dense<0.000000e+00> : vector<128xf32>
    %93 = vector.multi_reduction <add>, %92, %cst_59 [0] : vector<64x128xf32> to vector<128xf32>
    %94 = vector.shape_cast %93 : vector<128xf32> to vector<1x128xf32>
    %95 = tpu.concatenate %91, %94, %11 in 0 : vector<1x128xf32>, vector<1x128xf32>, vector<6x128xf32> -> vector<8x128xf32>
    %cst_60 = arith.constant dense<0.000000e+00> : vector<8x128xf32>
    %96 = tpu.matmul %95, %10, %cst_60 {dimension_numbers = #tpu.dot_dimension_numbers<[1], [0], [0], [1], [0, 0, 1, 1], [], []>} : vector<8x128xf32>, vector<128x128xf32>, vector<8x128xf32> -> vector<8x128xf32>
    %97 = vector.extract_strided_slice %96 {offsets = [0, 0], sizes = [1, 128], strides = [1, 1]} : vector<8x128xf32> to vector<1x128xf32>
    %cst_61 = arith.constant 9.765625E-4 : f32
    %98 = vector.broadcast %cst_61 : f32 to vector<1x128xf32>
    %99 = arith.mulf %97, %98 : vector<1x128xf32>
    %100 = vector.extract_strided_slice %96 {offsets = [1, 0], sizes = [1, 128], strides = [1, 1]} : vector<8x128xf32> to vector<1x128xf32>
    %cst_62 = arith.constant 9.765625E-4 : f32
    %101 = vector.broadcast %cst_62 : f32 to vector<1x128xf32>
    %102 = arith.mulf %100, %101 : vector<1x128xf32>
    %103 = arith.mulf %99, %99 : vector<1x128xf32>
    %104 = arith.subf %102, %103 : vector<1x128xf32>
    %cst_63 = arith.constant 0.000000e+00 : f32
    %105 = vector.broadcast %cst_63 : f32 to vector<1x128xf32>
    %106 = arith.maximumf %104, %105 : vector<1x128xf32>
    %107 = vector.broadcast %99 : vector<1x128xf32> to vector<64x128xf32>
    %108 = arith.subf %89, %107 : vector<64x128xf32>
    %cst_64 = arith.constant 9.99999993E-9 : f32
    %109 = vector.broadcast %cst_64 : f32 to vector<1x128xf32>
    %110 = arith.addf %106, %109 : vector<1x128xf32>
    %111 = math.rsqrt %110 : vector<1x128xf32>
    %112 = vector.broadcast %111 : vector<1x128xf32> to vector<64x128xf32>
    %113 = arith.mulf %108, %112 : vector<64x128xf32>
    %c4 = arith.constant 4 : index
    %c0_65 = arith.constant 0 : index
    %c0_66 = arith.constant 0 : index
    %114 = vector.load %arg5[%c4, %c0_65, %c0_66] : memref<41x64x1xf32, #tpu.memory_space<vmem>>, vector<1x64x1xf32>
    %115 = vector.shape_cast %114 : vector<1x64x1xf32> to vector<64x1xf32>
    %116 = vector.broadcast %115 : vector<64x1xf32> to vector<64x128xf32>
    %117 = arith.mulf %113, %116 : vector<64x128xf32>
    %c5 = arith.constant 5 : index
    %c0_67 = arith.constant 0 : index
    %c0_68 = arith.constant 0 : index
    %118 = vector.load %arg5[%c5, %c0_67, %c0_68] : memref<41x64x1xf32, #tpu.memory_space<vmem>>, vector<1x64x1xf32>
    %119 = vector.shape_cast %118 : vector<1x64x1xf32> to vector<64x1xf32>
    %120 = vector.broadcast %119 : vector<64x1xf32> to vector<64x128xf32>
    %121 = arith.addf %117, %120 : vector<64x128xf32>
    %cst_69 = arith.constant 0.000000e+00 : f32
    %122 = vector.broadcast %cst_69 : f32 to vector<64x128xf32>
    %123 = arith.cmpf oge, %121, %122 : vector<64x128xf32>
    %cst_70 = arith.constant 2.500000e-01 : f32
    %124 = vector.broadcast %cst_70 : f32 to vector<64x128xf32>
    %125 = arith.mulf %124, %121 : vector<64x128xf32>
    %126 = arith.select %123, %121, %125 : vector<64x128xi1>, vector<64x128xf32>
    %c1_71 = arith.constant 1 : index
    %c0_72 = arith.constant 0 : index
    %c0_73 = arith.constant 0 : index
    %127 = vector.load %arg10[%c1_71, %c0_72, %c0_73] : memref<4x64x128xf32, #tpu.memory_space<vmem>>, vector<1x64x128xf32>
    %128 = vector.shape_cast %127 : vector<1x64x128xf32> to vector<64x128xf32>
    %129 = vector.shape_cast %126 : vector<64x128xf32> to vector<1x64x128xf32>
    tpu.vector_store %arg10[%c1_71, %c0_72, %c0_73], %129 {strides = array<i32>} : memref<4x64x128xf32, #tpu.memory_space<vmem>>, vector<1x64x128xf32>,
    %c1_74 = arith.constant 1 : index
    %c0_75 = arith.constant 0 : index
    %c0_76 = arith.constant 0 : index
    %130 = vector.load %arg10[%c1_74, %c0_75, %c0_76] : memref<4x64x128xf32, #tpu.memory_space<vmem>>, vector<1x64x128xf32>
    %131 = vector.shape_cast %130 : vector<1x64x128xf32> to vector<64x128xf32>
    %132 = arith.truncf %131 : vector<64x128xf32> to vector<64x128xbf16>
    %133 = vector.extract_strided_slice %131 {offsets = [0, 127], sizes = [64, 1], strides = [1, 1]} : vector<64x128xf32> to vector<64x1xf32>
    %134 = vector.extract_strided_slice %131 {offsets = [0, 0], sizes = [64, 127], strides = [1, 1]} : vector<64x128xf32> to vector<64x127xf32>
    %135 = tpu.concatenate %133, %134 in 1 : vector<64x1xf32>, vector<64x127xf32> -> vector<64x128xf32>
    %c0_77 = arith.constant 0 : index
    %c0_78 = arith.constant 0 : index
    %c0_79 = arith.constant 0 : index
    %136 = vector.load %arg6[%c0_77, %c0_78, %c0_79] : memref<4x8x128xf32, #tpu.memory_space<vmem>>, vector<1x8x128xf32>
    %137 = vector.shape_cast %136 : vector<1x8x128xf32> to vector<8x128xf32>
    %138 = vector.extract_strided_slice %137 {offsets = [0, 0], sizes = [1, 128], strides = [1, 1]} : vector<8x128xf32> to vector<1x128xf32>
    %139 = vector.broadcast %138 : vector<1x128xf32> to vector<64x128xf32>
    %140 = arith.mulf %135, %139 : vector<64x128xf32>
    %141 = arith.truncf %140 : vector<64x128xf32> to vector<64x128xbf16>
    %142 = arith.truncf %5 : vector<64x128xf32> to vector<64x128xbf16>
    %143 = vector.extract_strided_slice %5 {offsets = [0, 127], sizes = [64, 1], strides = [1, 1]} : vector<64x128xf32> to vector<64x1xf32>
    %144 = vector.extract_strided_slice %5 {offsets = [0, 0], sizes = [64, 127], strides = [1, 1]} : vector<64x128xf32> to vector<64x127xf32>
    %145 = tpu.concatenate %143, %144 in 1 : vector<64x1xf32>, vector<64x127xf32> -> vector<64x128xf32>
    %c0_80 = arith.constant 0 : index
    %c0_81 = arith.constant 0 : index
    %c0_82 = arith.constant 0 : index
    %146 = vector.load %arg6[%c0_80, %c0_81, %c0_82] : memref<4x8x128xf32, #tpu.memory_space<vmem>>, vector<1x8x128xf32>
    %147 = vector.shape_cast %146 : vector<1x8x128xf32> to vector<8x128xf32>
    %148 = vector.extract_strided_slice %147 {offsets = [0, 0], sizes = [1, 128], strides = [1, 1]} : vector<8x128xf32> to vector<1x128xf32>
    %149 = vector.broadcast %148 : vector<1x128xf32> to vector<64x128xf32>
    %150 = arith.mulf %145, %149 : vector<64x128xf32>
    %151 = arith.truncf %150 : vector<64x128xf32> to vector<64x128xbf16>
    %152 = tpu.concatenate %132, %141, %142, %151 in 0 : vector<64x128xbf16>, vector<64x128xbf16>, vector<64x128xbf16>, vector<64x128xbf16> -> vector<256x128xbf16>
    %c1_83 = arith.constant 1 : index
    %c0_84 = arith.constant 0 : index
    %c0_85 = arith.constant 0 : index
    %153 = vector.load %arg4[%c1_83, %c0_84, %c0_85] : memref<6x64x256xbf16, #tpu.memory_space<vmem>>, vector<1x64x256xbf16>
    %154 = vector.shape_cast %153 : vector<1x64x256xbf16> to vector<64x256xbf16>
    %cst_86 = arith.constant dense<0.000000e+00> : vector<64x128xf32>
    %155 = tpu.matmul %154, %152, %cst_86 {dimension_numbers = #tpu.dot_dimension_numbers<[1], [0], [0], [1], [0, 0, 1, 1], [], []>} : vector<64x256xbf16>, vector<256x128xbf16>, vector<64x128xf32> -> vector<64x128xf32>
    %c6 = arith.constant 6 : index
    %c0_87 = arith.constant 0 : index
    %c0_88 = arith.constant 0 : index
    %156 = vector.load %arg5[%c6, %c0_87, %c0_88] : memref<41x64x1xf32, #tpu.memory_space<vmem>>, vector<1x64x1xf32>
    %157 = vector.shape_cast %156 : vector<1x64x1xf32> to vector<64x1xf32>
    %158 = vector.broadcast %157 : vector<64x1xf32> to vector<64x128xf32>
    %159 = arith.addf %155, %158 : vector<64x128xf32>
    %cst_89 = arith.constant dense<0.000000e+00> : vector<128xf32>
    %160 = vector.multi_reduction <add>, %159, %cst_89 [0] : vector<64x128xf32> to vector<128xf32>
    %161 = vector.shape_cast %160 : vector<128xf32> to vector<1x128xf32>
    %162 = arith.mulf %159, %159 : vector<64x128xf32>
    %cst_90 = arith.constant dense<0.000000e+00> : vector<128xf32>
    %163 = vector.multi_reduction <add>, %162, %cst_90 [0] : vector<64x128xf32> to vector<128xf32>
    %164 = vector.shape_cast %163 : vector<128xf32> to vector<1x128xf32>
    %165 = tpu.concatenate %161, %164, %11 in 0 : vector<1x128xf32>, vector<1x128xf32>, vector<6x128xf32> -> vector<8x128xf32>
    %cst_91 = arith.constant dense<0.000000e+00> : vector<8x128xf32>
    %166 = tpu.matmul %165, %10, %cst_91 {dimension_numbers = #tpu.dot_dimension_numbers<[1], [0], [0], [1], [0, 0, 1, 1], [], []>} : vector<8x128xf32>, vector<128x128xf32>, vector<8x128xf32> -> vector<8x128xf32>
    %167 = vector.extract_strided_slice %166 {offsets = [0, 0], sizes = [1, 128], strides = [1, 1]} : vector<8x128xf32> to vector<1x128xf32>
    %cst_92 = arith.constant 0.001953125 : f32
    %168 = vector.broadcast %cst_92 : f32 to vector<1x128xf32>
    %169 = arith.mulf %167, %168 : vector<1x128xf32>
    %170 = vector.extract_strided_slice %166 {offsets = [1, 0], sizes = [1, 128], strides = [1, 1]} : vector<8x128xf32> to vector<1x128xf32>
    %cst_93 = arith.constant 0.001953125 : f32
    %171 = vector.broadcast %cst_93 : f32 to vector<1x128xf32>
    %172 = arith.mulf %170, %171 : vector<1x128xf32>
    %173 = arith.mulf %169, %169 : vector<1x128xf32>
    %174 = arith.subf %172, %173 : vector<1x128xf32>
    %cst_94 = arith.constant 0.000000e+00 : f32
    %175 = vector.broadcast %cst_94 : f32 to vector<1x128xf32>
    %176 = arith.maximumf %174, %175 : vector<1x128xf32>
    %177 = vector.broadcast %169 : vector<1x128xf32> to vector<64x128xf32>
    %178 = arith.subf %159, %177 : vector<64x128xf32>
    %cst_95 = arith.constant 9.99999993E-9 : f32
    %179 = vector.broadcast %cst_95 : f32 to vector<1x128xf32>
    %180 = arith.addf %176, %179 : vector<1x128xf32>
    %181 = math.rsqrt %180 : vector<1x128xf32>
    %182 = vector.broadcast %181 : vector<1x128xf32> to vector<64x128xf32>
    %183 = arith.mulf %178, %182 : vector<64x128xf32>
    %c7 = arith.constant 7 : index
    %c0_96 = arith.constant 0 : index
    %c0_97 = arith.constant 0 : index
    %184 = vector.load %arg5[%c7, %c0_96, %c0_97] : memref<41x64x1xf32, #tpu.memory_space<vmem>>, vector<1x64x1xf32>
    %185 = vector.shape_cast %184 : vector<1x64x1xf32> to vector<64x1xf32>
    %186 = vector.broadcast %185 : vector<64x1xf32> to vector<64x128xf32>
    %187 = arith.mulf %183, %186 : vector<64x128xf32>
    %c8 = arith.constant 8 : index
    %c0_98 = arith.constant 0 : index
    %c0_99 = arith.constant 0 : index
    %188 = vector.load %arg5[%c8, %c0_98, %c0_99] : memref<41x64x1xf32, #tpu.memory_space<vmem>>, vector<1x64x1xf32>
    %189 = vector.shape_cast %188 : vector<1x64x1xf32> to vector<64x1xf32>
    %190 = vector.broadcast %189 : vector<64x1xf32> to vector<64x128xf32>
    %191 = arith.addf %187, %190 : vector<64x128xf32>
    %cst_100 = arith.constant 0.000000e+00 : f32
    %192 = vector.broadcast %cst_100 : f32 to vector<64x128xf32>
    %193 = arith.cmpf oge, %191, %192 : vector<64x128xf32>
    %cst_101 = arith.constant 2.500000e-01 : f32
    %194 = vector.broadcast %cst_101 : f32 to vector<64x128xf32>
    %195 = arith.mulf %194, %191 : vector<64x128xf32>
    %196 = arith.select %193, %191, %195 : vector<64x128xi1>, vector<64x128xf32>
    %c2_102 = arith.constant 2 : index
    %c0_103 = arith.constant 0 : index
    %c0_104 = arith.constant 0 : index
    %197 = vector.load %arg10[%c2_102, %c0_103, %c0_104] : memref<4x64x128xf32, #tpu.memory_space<vmem>>, vector<1x64x128xf32>
    %198 = vector.shape_cast %197 : vector<1x64x128xf32> to vector<64x128xf32>
    %199 = vector.shape_cast %196 : vector<64x128xf32> to vector<1x64x128xf32>
    tpu.vector_store %arg10[%c2_102, %c0_103, %c0_104], %199 {strides = array<i32>} : memref<4x64x128xf32, #tpu.memory_space<vmem>>, vector<1x64x128xf32>,
    %c2_105 = arith.constant 2 : index
    %c0_106 = arith.constant 0 : index
    %c0_107 = arith.constant 0 : index
    %200 = vector.load %arg10[%c2_105, %c0_106, %c0_107] : memref<4x64x128xf32, #tpu.memory_space<vmem>>, vector<1x64x128xf32>
    %201 = vector.shape_cast %200 : vector<1x64x128xf32> to vector<64x128xf32>
    %202 = arith.truncf %201 : vector<64x128xf32> to vector<64x128xbf16>
    %203 = vector.extract_strided_slice %201 {offsets = [0, 127], sizes = [64, 1], strides = [1, 1]} : vector<64x128xf32> to vector<64x1xf32>
    %204 = vector.extract_strided_slice %201 {offsets = [0, 0], sizes = [64, 127], strides = [1, 1]} : vector<64x128xf32> to vector<64x127xf32>
    %205 = tpu.concatenate %203, %204 in 1 : vector<64x1xf32>, vector<64x127xf32> -> vector<64x128xf32>
    %c0_108 = arith.constant 0 : index
    %c0_109 = arith.constant 0 : index
    %c0_110 = arith.constant 0 : index
    %206 = vector.load %arg6[%c0_108, %c0_109, %c0_110] : memref<4x8x128xf32, #tpu.memory_space<vmem>>, vector<1x8x128xf32>
    %207 = vector.shape_cast %206 : vector<1x8x128xf32> to vector<8x128xf32>
    %208 = vector.extract_strided_slice %207 {offsets = [0, 0], sizes = [1, 128], strides = [1, 1]} : vector<8x128xf32> to vector<1x128xf32>
    %209 = vector.broadcast %208 : vector<1x128xf32> to vector<64x128xf32>
    %210 = arith.mulf %205, %209 : vector<64x128xf32>
    %211 = arith.truncf %210 : vector<64x128xf32> to vector<64x128xbf16>
    %212 = arith.truncf %7 : vector<64x128xf32> to vector<64x128xbf16>
    %213 = vector.extract_strided_slice %7 {offsets = [0, 127], sizes = [64, 1], strides = [1, 1]} : vector<64x128xf32> to vector<64x1xf32>
    %214 = vector.extract_strided_slice %7 {offsets = [0, 0], sizes = [64, 127], strides = [1, 1]} : vector<64x128xf32> to vector<64x127xf32>
    %215 = tpu.concatenate %213, %214 in 1 : vector<64x1xf32>, vector<64x127xf32> -> vector<64x128xf32>
    %c0_111 = arith.constant 0 : index
    %c0_112 = arith.constant 0 : index
    %c0_113 = arith.constant 0 : index
    %216 = vector.load %arg6[%c0_111, %c0_112, %c0_113] : memref<4x8x128xf32, #tpu.memory_space<vmem>>, vector<1x8x128xf32>
    %217 = vector.shape_cast %216 : vector<1x8x128xf32> to vector<8x128xf32>
    %218 = vector.extract_strided_slice %217 {offsets = [0, 0], sizes = [1, 128], strides = [1, 1]} : vector<8x128xf32> to vector<1x128xf32>
    %219 = vector.broadcast %218 : vector<1x128xf32> to vector<64x128xf32>
    %220 = arith.mulf %215, %219 : vector<64x128xf32>
    %221 = arith.truncf %220 : vector<64x128xf32> to vector<64x128xbf16>
    %222 = tpu.concatenate %202, %211, %212, %221 in 0 : vector<64x128xbf16>, vector<64x128xbf16>, vector<64x128xbf16>, vector<64x128xbf16> -> vector<256x128xbf16>
    %c2_114 = arith.constant 2 : index
    %c0_115 = arith.constant 0 : index
    %c0_116 = arith.constant 0 : index
    %223 = vector.load %arg4[%c2_114, %c0_115, %c0_116] : memref<6x64x256xbf16, #tpu.memory_space<vmem>>, vector<1x64x256xbf16>
    %224 = vector.shape_cast %223 : vector<1x64x256xbf16> to vector<64x256xbf16>
    %cst_117 = arith.constant dense<0.000000e+00> : vector<64x128xf32>
    %225 = tpu.matmul %224, %222, %cst_117 {dimension_numbers = #tpu.dot_dimension_numbers<[1], [0], [0], [1], [0, 0, 1, 1], [], []>} : vector<64x256xbf16>, vector<256x128xbf16>, vector<64x128xf32> -> vector<64x128xf32>
    %c9 = arith.constant 9 : index
    %c0_118 = arith.constant 0 : index
    %c0_119 = arith.constant 0 : index
    %226 = vector.load %arg5[%c9, %c0_118, %c0_119] : memref<41x64x1xf32, #tpu.memory_space<vmem>>, vector<1x64x1xf32>
    %227 = vector.shape_cast %226 : vector<1x64x1xf32> to vector<64x1xf32>
    %228 = vector.broadcast %227 : vector<64x1xf32> to vector<64x128xf32>
    %229 = arith.addf %225, %228 : vector<64x128xf32>
    %cst_120 = arith.constant dense<0.000000e+00> : vector<128xf32>
    %230 = vector.multi_reduction <add>, %229, %cst_120 [0] : vector<64x128xf32> to vector<128xf32>
    %231 = vector.shape_cast %230 : vector<128xf32> to vector<1x128xf32>
    %232 = arith.mulf %229, %229 : vector<64x128xf32>
    %cst_121 = arith.constant dense<0.000000e+00> : vector<128xf32>
    %233 = vector.multi_reduction <add>, %232, %cst_121 [0] : vector<64x128xf32> to vector<128xf32>
    %234 = vector.shape_cast %233 : vector<128xf32> to vector<1x128xf32>
    %235 = tpu.concatenate %231, %234, %11 in 0 : vector<1x128xf32>, vector<1x128xf32>, vector<6x128xf32> -> vector<8x128xf32>
    %cst_122 = arith.constant dense<0.000000e+00> : vector<8x128xf32>
    %236 = tpu.matmul %235, %10, %cst_122 {dimension_numbers = #tpu.dot_dimension_numbers<[1], [0], [0], [1], [0, 0, 1, 1], [], []>} : vector<8x128xf32>, vector<128x128xf32>, vector<8x128xf32> -> vector<8x128xf32>
    %237 = vector.extract_strided_slice %236 {offsets = [0, 0], sizes = [1, 128], strides = [1, 1]} : vector<8x128xf32> to vector<1x128xf32>
    %cst_123 = arith.constant 3.906250e-03 : f32
    %238 = vector.broadcast %cst_123 : f32 to vector<1x128xf32>
    %239 = arith.mulf %237, %238 : vector<1x128xf32>
    %240 = vector.extract_strided_slice %236 {offsets = [1, 0], sizes = [1, 128], strides = [1, 1]} : vector<8x128xf32> to vector<1x128xf32>
    %cst_124 = arith.constant 3.906250e-03 : f32
    %241 = vector.broadcast %cst_124 : f32 to vector<1x128xf32>
    %242 = arith.mulf %240, %241 : vector<1x128xf32>
    %243 = arith.mulf %239, %239 : vector<1x128xf32>
    %244 = arith.subf %242, %243 : vector<1x128xf32>
    %cst_125 = arith.constant 0.000000e+00 : f32
    %245 = vector.broadcast %cst_125 : f32 to vector<1x128xf32>
    %246 = arith.maximumf %244, %245 : vector<1x128xf32>
    %247 = vector.broadcast %239 : vector<1x128xf32> to vector<64x128xf32>
    %248 = arith.subf %229, %247 : vector<64x128xf32>
    %cst_126 = arith.constant 9.99999993E-9 : f32
    %249 = vector.broadcast %cst_126 : f32 to vector<1x128xf32>
    %250 = arith.addf %246, %249 : vector<1x128xf32>
    %251 = math.rsqrt %250 : vector<1x128xf32>
    %252 = vector.broadcast %251 : vector<1x128xf32> to vector<64x128xf32>
    %253 = arith.mulf %248, %252 : vector<64x128xf32>
    %c10 = arith.constant 10 : index
    %c0_127 = arith.constant 0 : index
    %c0_128 = arith.constant 0 : index
    %254 = vector.load %arg5[%c10, %c0_127, %c0_128] : memref<41x64x1xf32, #tpu.memory_space<vmem>>, vector<1x64x1xf32>
    %255 = vector.shape_cast %254 : vector<1x64x1xf32> to vector<64x1xf32>
    %256 = vector.broadcast %255 : vector<64x1xf32> to vector<64x128xf32>
    %257 = arith.mulf %253, %256 : vector<64x128xf32>
    %c11 = arith.constant 11 : index
    %c0_129 = arith.constant 0 : index
    %c0_130 = arith.constant 0 : index
    %258 = vector.load %arg5[%c11, %c0_129, %c0_130] : memref<41x64x1xf32, #tpu.memory_space<vmem>>, vector<1x64x1xf32>
    %259 = vector.shape_cast %258 : vector<1x64x1xf32> to vector<64x1xf32>
    %260 = vector.broadcast %259 : vector<64x1xf32> to vector<64x128xf32>
    %261 = arith.addf %257, %260 : vector<64x128xf32>
    %cst_131 = arith.constant 0.000000e+00 : f32
    %262 = vector.broadcast %cst_131 : f32 to vector<64x128xf32>
    %263 = arith.cmpf oge, %261, %262 : vector<64x128xf32>
    %cst_132 = arith.constant 2.500000e-01 : f32
    %264 = vector.broadcast %cst_132 : f32 to vector<64x128xf32>
    %265 = arith.mulf %264, %261 : vector<64x128xf32>
    %266 = arith.select %263, %261, %265 : vector<64x128xi1>, vector<64x128xf32>
    %c3_133 = arith.constant 3 : index
    %c0_134 = arith.constant 0 : index
    %c0_135 = arith.constant 0 : index
    %267 = vector.load %arg10[%c3_133, %c0_134, %c0_135] : memref<4x64x128xf32, #tpu.memory_space<vmem>>, vector<1x64x128xf32>
    %268 = vector.shape_cast %267 : vector<1x64x128xf32> to vector<64x128xf32>
    %269 = vector.shape_cast %266 : vector<64x128xf32> to vector<1x64x128xf32>
    tpu.vector_store %arg10[%c3_133, %c0_134, %c0_135], %269 {strides = array<i32>} : memref<4x64x128xf32, #tpu.memory_space<vmem>>, vector<1x64x128xf32>,
    %c3_136 = arith.constant 3 : index
    %c0_137 = arith.constant 0 : index
    %c0_138 = arith.constant 0 : index
    %270 = vector.load %arg10[%c3_136, %c0_137, %c0_138] : memref<4x64x128xf32, #tpu.memory_space<vmem>>, vector<1x64x128xf32>
    %271 = vector.shape_cast %270 : vector<1x64x128xf32> to vector<64x128xf32>
    %272 = arith.truncf %271 : vector<64x128xf32> to vector<64x128xbf16>
    %273 = vector.extract_strided_slice %271 {offsets = [0, 127], sizes = [64, 1], strides = [1, 1]} : vector<64x128xf32> to vector<64x1xf32>
    %274 = vector.extract_strided_slice %271 {offsets = [0, 0], sizes = [64, 127], strides = [1, 1]} : vector<64x128xf32> to vector<64x127xf32>
    %275 = tpu.concatenate %273, %274 in 1 : vector<64x1xf32>, vector<64x127xf32> -> vector<64x128xf32>
    %c0_139 = arith.constant 0 : index
    %c0_140 = arith.constant 0 : index
    %c0_141 = arith.constant 0 : index
    %276 = vector.load %arg6[%c0_139, %c0_140, %c0_141] : memref<4x8x128xf32, #tpu.memory_space<vmem>>, vector<1x8x128xf32>
    %277 = vector.shape_cast %276 : vector<1x8x128xf32> to vector<8x128xf32>
    %278 = vector.extract_strided_slice %277 {offsets = [0, 0], sizes = [1, 128], strides = [1, 1]} : vector<8x128xf32> to vector<1x128xf32>
    %279 = vector.broadcast %278 : vector<1x128xf32> to vector<64x128xf32>
    %280 = arith.mulf %275, %279 : vector<64x128xf32>
    %281 = arith.truncf %280 : vector<64x128xf32> to vector<64x128xbf16>
    %282 = tpu.concatenate %272, %281 in 0 : vector<64x128xbf16>, vector<64x128xbf16> -> vector<128x128xbf16>
    %c0_142 = arith.constant 0 : index
    %c0_143 = arith.constant 0 : index
    %c0_144 = arith.constant 0 : index
    %283 = vector.load %arg3[%c0_142, %c0_143, %c0_144] : memref<6x64x128xbf16, #tpu.memory_space<vmem>>, vector<1x64x128xbf16>
    %284 = vector.shape_cast %283 : vector<1x64x128xbf16> to vector<64x128xbf16>
    %cst_145 = arith.constant dense<0.000000e+00> : vector<64x128xf32>
    %285 = tpu.matmul %284, %282, %cst_145 {dimension_numbers = #tpu.dot_dimension_numbers<[1], [0], [0], [1], [0, 0, 1, 1], [], []>} : vector<64x128xbf16>, vector<128x128xbf16>, vector<64x128xf32> -> vector<64x128xf32>
    %c12 = arith.constant 12 : index
    %c0_146 = arith.constant 0 : index
    %c0_147 = arith.constant 0 : index
    %286 = vector.load %arg5[%c12, %c0_146, %c0_147] : memref<41x64x1xf32, #tpu.memory_space<vmem>>, vector<1x64x1xf32>
    %287 = vector.shape_cast %286 : vector<1x64x1xf32> to vector<64x1xf32>
    %288 = vector.broadcast %287 : vector<64x1xf32> to vector<64x128xf32>
    %289 = arith.addf %285, %288 : vector<64x128xf32>
    %cst_148 = arith.constant 0.000000e+00 : f32
    %290 = vector.broadcast %cst_148 : f32 to vector<64x128xf32>
    %291 = arith.cmpf oge, %289, %290 : vector<64x128xf32>
    %cst_149 = arith.constant 2.500000e-01 : f32
    %292 = vector.broadcast %cst_149 : f32 to vector<64x128xf32>
    %293 = arith.mulf %292, %289 : vector<64x128xf32>
    %294 = arith.select %291, %289, %293 : vector<64x128xi1>, vector<64x128xf32>
    %295 = vector.extract_strided_slice %294 {offsets = [0, 0], sizes = [8, 128], strides = [1, 1]} : vector<64x128xf32> to vector<8x128xf32>
    %c0_150 = arith.constant 0 : index
    %c0_151 = arith.constant 0 : index
    %296 = vector.load %arg9[%c0_150, %c0_151] : memref<64x128xf32, #tpu.memory_space<vmem>>, vector<8x128xf32>
    tpu.vector_store %arg9[%c0_150, %c0_151], %295 {strides = array<i32>} : memref<64x128xf32, #tpu.memory_space<vmem>>, vector<8x128xf32>,
    %c0_152 = arith.constant 0 : index
    %c0_153 = arith.constant 0 : index
    %297 = vector.load %arg9[%c0_152, %c0_153] : memref<64x128xf32, #tpu.memory_space<vmem>>, vector<64x128xf32>
    %298 = arith.truncf %297 : vector<64x128xf32> to vector<64x128xbf16>
    %299 = vector.extract_strided_slice %297 {offsets = [0, 127], sizes = [64, 1], strides = [1, 1]} : vector<64x128xf32> to vector<64x1xf32>
    %300 = vector.extract_strided_slice %297 {offsets = [0, 0], sizes = [64, 127], strides = [1, 1]} : vector<64x128xf32> to vector<64x127xf32>
    %301 = tpu.concatenate %299, %300 in 1 : vector<64x1xf32>, vector<64x127xf32> -> vector<64x128xf32>
    %c0_154 = arith.constant 0 : index
    %c0_155 = arith.constant 0 : index
    %c0_156 = arith.constant 0 : index
    %302 = vector.load %arg6[%c0_154, %c0_155, %c0_156] : memref<4x8x128xf32, #tpu.memory_space<vmem>>, vector<1x8x128xf32>
    %303 = vector.shape_cast %302 : vector<1x8x128xf32> to vector<8x128xf32>
    %304 = vector.extract_strided_slice %303 {offsets = [0, 0], sizes = [1, 128], strides = [1, 1]} : vector<8x128xf32> to vector<1x128xf32>
    %305 = vector.broadcast %304 : vector<1x128xf32> to vector<64x128xf32>
    %306 = arith.mulf %301, %305 : vector<64x128xf32>
    %307 = arith.truncf %306 : vector<64x128xf32> to vector<64x128xbf16>
    %308 = tpu.concatenate %298, %307 in 0 : vector<64x128xbf16>, vector<64x128xbf16> -> vector<128x128xbf16>
    %c1_157 = arith.constant 1 : index
    %c0_158 = arith.constant 0 : index
    %c0_159 = arith.constant 0 : index
    %309 = vector.load %arg3[%c1_157, %c0_158, %c0_159] : memref<6x64x128xbf16, #tpu.memory_space<vmem>>, vector<1x64x128xbf16>
    %310 = vector.shape_cast %309 : vector<1x64x128xbf16> to vector<64x128xbf16>
    %cst_160 = arith.constant dense<0.000000e+00> : vector<64x128xf32>
    %311 = tpu.matmul %310, %308, %cst_160 {dimension_numbers = #tpu.dot_dimension_numbers<[1], [0], [0], [1], [0, 0, 1, 1], [], []>} : vector<64x128xbf16>, vector<128x128xbf16>, vector<64x128xf32> -> vector<64x128xf32>
    %c13 = arith.constant 13 : index
    %c0_161 = arith.constant 0 : index
    %c0_162 = arith.constant 0 : index
    %312 = vector.load %arg5[%c13, %c0_161, %c0_162] : memref<41x64x1xf32, #tpu.memory_space<vmem>>, vector<1x64x1xf32>
    %313 = vector.shape_cast %312 : vector<1x64x1xf32> to vector<64x1xf32>
    %314 = vector.broadcast %313 : vector<64x1xf32> to vector<64x128xf32>
    %315 = arith.addf %311, %314 : vector<64x128xf32>
    %cst_163 = arith.constant dense<0.000000e+00> : vector<128xf32>
    %316 = vector.multi_reduction <add>, %315, %cst_163 [0] : vector<64x128xf32> to vector<128xf32>
    %317 = vector.shape_cast %316 : vector<128xf32> to vector<1x128xf32>
    %318 = arith.mulf %315, %315 : vector<64x128xf32>
    %cst_164 = arith.constant dense<0.000000e+00> : vector<128xf32>
    %319 = vector.multi_reduction <add>, %318, %cst_164 [0] : vector<64x128xf32> to vector<128xf32>
    %320 = vector.shape_cast %319 : vector<128xf32> to vector<1x128xf32>
    %321 = tpu.concatenate %317, %320, %11 in 0 : vector<1x128xf32>, vector<1x128xf32>, vector<6x128xf32> -> vector<8x128xf32>
    %cst_165 = arith.constant dense<0.000000e+00> : vector<8x128xf32>
    %322 = tpu.matmul %321, %10, %cst_165 {dimension_numbers = #tpu.dot_dimension_numbers<[1], [0], [0], [1], [0, 0, 1, 1], [], []>} : vector<8x128xf32>, vector<128x128xf32>, vector<8x128xf32> -> vector<8x128xf32>
    %323 = vector.extract_strided_slice %322 {offsets = [0, 0], sizes = [1, 128], strides = [1, 1]} : vector<8x128xf32> to vector<1x128xf32>
    %cst_166 = arith.constant 7.812500e-03 : f32
    %324 = vector.broadcast %cst_166 : f32 to vector<1x128xf32>
    %325 = arith.mulf %323, %324 : vector<1x128xf32>
    %326 = vector.extract_strided_slice %322 {offsets = [1, 0], sizes = [1, 128], strides = [1, 1]} : vector<8x128xf32> to vector<1x128xf32>
    %cst_167 = arith.constant 7.812500e-03 : f32
    %327 = vector.broadcast %cst_167 : f32 to vector<1x128xf32>
    %328 = arith.mulf %326, %327 : vector<1x128xf32>
    %329 = arith.mulf %325, %325 : vector<1x128xf32>
    %330 = arith.subf %328, %329 : vector<1x128xf32>
    %cst_168 = arith.constant 0.000000e+00 : f32
    %331 = vector.broadcast %cst_168 : f32 to vector<1x128xf32>
    %332 = arith.maximumf %330, %331 : vector<1x128xf32>
    %333 = vector.broadcast %325 : vector<1x128xf32> to vector<64x128xf32>
    %334 = arith.subf %315, %333 : vector<64x128xf32>
    %cst_169 = arith.constant 9.99999993E-9 : f32
    %335 = vector.broadcast %cst_169 : f32 to vector<1x128xf32>
    %336 = arith.addf %332, %335 : vector<1x128xf32>
    %337 = math.rsqrt %336 : vector<1x128xf32>
    %338 = vector.broadcast %337 : vector<1x128xf32> to vector<64x128xf32>
    %339 = arith.mulf %334, %338 : vector<64x128xf32>
    %c14 = arith.constant 14 : index
    %c0_170 = arith.constant 0 : index
    %c0_171 = arith.constant 0 : index
    %340 = vector.load %arg5[%c14, %c0_170, %c0_171] : memref<41x64x1xf32, #tpu.memory_space<vmem>>, vector<1x64x1xf32>
    %341 = vector.shape_cast %340 : vector<1x64x1xf32> to vector<64x1xf32>
    %342 = vector.broadcast %341 : vector<64x1xf32> to vector<64x128xf32>
    %343 = arith.mulf %339, %342 : vector<64x128xf32>
    %c15 = arith.constant 15 : index
    %c0_172 = arith.constant 0 : index
    %c0_173 = arith.constant 0 : index
    %344 = vector.load %arg5[%c15, %c0_172, %c0_173] : memref<41x64x1xf32, #tpu.memory_space<vmem>>, vector<1x64x1xf32>
    %345 = vector.shape_cast %344 : vector<1x64x1xf32> to vector<64x1xf32>
    %346 = vector.broadcast %345 : vector<64x1xf32> to vector<64x128xf32>
    %347 = arith.addf %343, %346 : vector<64x128xf32>
    %cst_174 = arith.constant 0.000000e+00 : f32
    %348 = vector.broadcast %cst_174 : f32 to vector<64x128xf32>
    %349 = arith.cmpf oge, %347, %348 : vector<64x128xf32>
    %cst_175 = arith.constant 2.500000e-01 : f32
    %350 = vector.broadcast %cst_175 : f32 to vector<64x128xf32>
    %351 = arith.mulf %350, %347 : vector<64x128xf32>
    %352 = arith.select %349, %347, %351 : vector<64x128xi1>, vector<64x128xf32>
    %353 = vector.extract_strided_slice %352 {offsets = [0, 0], sizes = [8, 128], strides = [1, 1]} : vector<64x128xf32> to vector<8x128xf32>
    %c8_176 = arith.constant 8 : index
    %c0_177 = arith.constant 0 : index
    %354 = vector.load %arg9[%c8_176, %c0_177] : memref<64x128xf32, #tpu.memory_space<vmem>>, vector<8x128xf32>
    tpu.vector_store %arg9[%c8_176, %c0_177], %353 {strides = array<i32>} : memref<64x128xf32, #tpu.memory_space<vmem>>, vector<8x128xf32>,
    %c0_178 = arith.constant 0 : index
    %c0_179 = arith.constant 0 : index
    %355 = vector.load %arg9[%c0_178, %c0_179] : memref<64x128xf32, #tpu.memory_space<vmem>>, vector<64x128xf32>
    %356 = arith.truncf %355 : vector<64x128xf32> to vector<64x128xbf16>
    %357 = vector.extract_strided_slice %355 {offsets = [0, 126], sizes = [64, 2], strides = [1, 1]} : vector<64x128xf32> to vector<64x2xf32>
    %358 = vector.extract_strided_slice %355 {offsets = [0, 0], sizes = [64, 126], strides = [1, 1]} : vector<64x128xf32> to vector<64x126xf32>
    %359 = tpu.concatenate %357, %358 in 1 : vector<64x2xf32>, vector<64x126xf32> -> vector<64x128xf32>
    %c1_180 = arith.constant 1 : index
    %c0_181 = arith.constant 0 : index
    %c0_182 = arith.constant 0 : index
    %360 = vector.load %arg6[%c1_180, %c0_181, %c0_182] : memref<4x8x128xf32, #tpu.memory_space<vmem>>, vector<1x8x128xf32>
    %361 = vector.shape_cast %360 : vector<1x8x128xf32> to vector<8x128xf32>
    %362 = vector.extract_strided_slice %361 {offsets = [0, 0], sizes = [1, 128], strides = [1, 1]} : vector<8x128xf32> to vector<1x128xf32>
    %363 = vector.broadcast %362 : vector<1x128xf32> to vector<64x128xf32>
    %364 = arith.mulf %359, %363 : vector<64x128xf32>
    %365 = arith.truncf %364 : vector<64x128xf32> to vector<64x128xbf16>
    %366 = tpu.concatenate %356, %365 in 0 : vector<64x128xbf16>, vector<64x128xbf16> -> vector<128x128xbf16>
    %c2_183 = arith.constant 2 : index
    %c0_184 = arith.constant 0 : index
    %c0_185 = arith.constant 0 : index
    %367 = vector.load %arg3[%c2_183, %c0_184, %c0_185] : memref<6x64x128xbf16, #tpu.memory_space<vmem>>, vector<1x64x128xbf16>
    %368 = vector.shape_cast %367 : vector<1x64x128xbf16> to vector<64x128xbf16>
    %cst_186 = arith.constant dense<0.000000e+00> : vector<64x128xf32>
    %369 = tpu.matmul %368, %366, %cst_186 {dimension_numbers = #tpu.dot_dimension_numbers<[1], [0], [0], [1], [0, 0, 1, 1], [], []>} : vector<64x128xbf16>, vector<128x128xbf16>, vector<64x128xf32> -> vector<64x128xf32>
    %c16 = arith.constant 16 : index
    %c0_187 = arith.constant 0 : index
    %c0_188 = arith.constant 0 : index
    %370 = vector.load %arg5[%c16, %c0_187, %c0_188] : memref<41x64x1xf32, #tpu.memory_space<vmem>>, vector<1x64x1xf32>
    %371 = vector.shape_cast %370 : vector<1x64x1xf32> to vector<64x1xf32>
    %372 = vector.broadcast %371 : vector<64x1xf32> to vector<64x128xf32>
    %373 = arith.addf %369, %372 : vector<64x128xf32>
    %cst_189 = arith.constant dense<0.000000e+00> : vector<128xf32>
    %374 = vector.multi_reduction <add>, %373, %cst_189 [0] : vector<64x128xf32> to vector<128xf32>
    %375 = vector.shape_cast %374 : vector<128xf32> to vector<1x128xf32>
    %376 = arith.mulf %373, %373 : vector<64x128xf32>
    %cst_190 = arith.constant dense<0.000000e+00> : vector<128xf32>
    %377 = vector.multi_reduction <add>, %376, %cst_190 [0] : vector<64x128xf32> to vector<128xf32>
    %378 = vector.shape_cast %377 : vector<128xf32> to vector<1x128xf32>
    %379 = tpu.concatenate %375, %378, %11 in 0 : vector<1x128xf32>, vector<1x128xf32>, vector<6x128xf32> -> vector<8x128xf32>
    %cst_191 = arith.constant dense<0.000000e+00> : vector<8x128xf32>
    %380 = tpu.matmul %379, %10, %cst_191 {dimension_numbers = #tpu.dot_dimension_numbers<[1], [0], [0], [1], [0, 0, 1, 1], [], []>} : vector<8x128xf32>, vector<128x128xf32>, vector<8x128xf32> -> vector<8x128xf32>
    %381 = vector.extract_strided_slice %380 {offsets = [0, 0], sizes = [1, 128], strides = [1, 1]} : vector<8x128xf32> to vector<1x128xf32>
    %cst_192 = arith.constant 7.812500e-03 : f32
    %382 = vector.broadcast %cst_192 : f32 to vector<1x128xf32>
    %383 = arith.mulf %381, %382 : vector<1x128xf32>
    %384 = vector.extract_strided_slice %380 {offsets = [1, 0], sizes = [1, 128], strides = [1, 1]} : vector<8x128xf32> to vector<1x128xf32>
    %cst_193 = arith.constant 7.812500e-03 : f32
    %385 = vector.broadcast %cst_193 : f32 to vector<1x128xf32>
    %386 = arith.mulf %384, %385 : vector<1x128xf32>
    %387 = arith.mulf %383, %383 : vector<1x128xf32>
    %388 = arith.subf %386, %387 : vector<1x128xf32>
    %cst_194 = arith.constant 0.000000e+00 : f32
    %389 = vector.broadcast %cst_194 : f32 to vector<1x128xf32>
    %390 = arith.maximumf %388, %389 : vector<1x128xf32>
    %391 = vector.broadcast %383 : vector<1x128xf32> to vector<64x128xf32>
    %392 = arith.subf %373, %391 : vector<64x128xf32>
    %cst_195 = arith.constant 9.99999993E-9 : f32
    %393 = vector.broadcast %cst_195 : f32 to vector<1x128xf32>
    %394 = arith.addf %390, %393 : vector<1x128xf32>
    %395 = math.rsqrt %394 : vector<1x128xf32>
    %396 = vector.broadcast %395 : vector<1x128xf32> to vector<64x128xf32>
    %397 = arith.mulf %392, %396 : vector<64x128xf32>
    %c17 = arith.constant 17 : index
    %c0_196 = arith.constant 0 : index
    %c0_197 = arith.constant 0 : index
    %398 = vector.load %arg5[%c17, %c0_196, %c0_197] : memref<41x64x1xf32, #tpu.memory_space<vmem>>, vector<1x64x1xf32>
    %399 = vector.shape_cast %398 : vector<1x64x1xf32> to vector<64x1xf32>
    %400 = vector.broadcast %399 : vector<64x1xf32> to vector<64x128xf32>
    %401 = arith.mulf %397, %400 : vector<64x128xf32>
    %c18 = arith.constant 18 : index
    %c0_198 = arith.constant 0 : index
    %c0_199 = arith.constant 0 : index
    %402 = vector.load %arg5[%c18, %c0_198, %c0_199] : memref<41x64x1xf32, #tpu.memory_space<vmem>>, vector<1x64x1xf32>
    %403 = vector.shape_cast %402 : vector<1x64x1xf32> to vector<64x1xf32>
    %404 = vector.broadcast %403 : vector<64x1xf32> to vector<64x128xf32>
    %405 = arith.addf %401, %404 : vector<64x128xf32>
    %cst_200 = arith.constant 0.000000e+00 : f32
    %406 = vector.broadcast %cst_200 : f32 to vector<64x128xf32>
    %407 = arith.cmpf oge, %405, %406 : vector<64x128xf32>
    %cst_201 = arith.constant 2.500000e-01 : f32
    %408 = vector.broadcast %cst_201 : f32 to vector<64x128xf32>
    %409 = arith.mulf %408, %405 : vector<64x128xf32>
    %410 = arith.select %407, %405, %409 : vector<64x128xi1>, vector<64x128xf32>
    %411 = vector.extract_strided_slice %410 {offsets = [0, 0], sizes = [8, 128], strides = [1, 1]} : vector<64x128xf32> to vector<8x128xf32>
    %c16_202 = arith.constant 16 : index
    %c0_203 = arith.constant 0 : index
    %412 = vector.load %arg9[%c16_202, %c0_203] : memref<64x128xf32, #tpu.memory_space<vmem>>, vector<8x128xf32>
    tpu.vector_store %arg9[%c16_202, %c0_203], %411 {strides = array<i32>} : memref<64x128xf32, #tpu.memory_space<vmem>>, vector<8x128xf32>,
    %c0_204 = arith.constant 0 : index
    %c0_205 = arith.constant 0 : index
    %413 = vector.load %arg9[%c0_204, %c0_205] : memref<64x128xf32, #tpu.memory_space<vmem>>, vector<64x128xf32>
    %414 = arith.truncf %413 : vector<64x128xf32> to vector<64x128xbf16>
    %415 = vector.extract_strided_slice %413 {offsets = [0, 124], sizes = [64, 4], strides = [1, 1]} : vector<64x128xf32> to vector<64x4xf32>
    %416 = vector.extract_strided_slice %413 {offsets = [0, 0], sizes = [64, 124], strides = [1, 1]} : vector<64x128xf32> to vector<64x124xf32>
    %417 = tpu.concatenate %415, %416 in 1 : vector<64x4xf32>, vector<64x124xf32> -> vector<64x128xf32>
    %c2_206 = arith.constant 2 : index
    %c0_207 = arith.constant 0 : index
    %c0_208 = arith.constant 0 : index
    %418 = vector.load %arg6[%c2_206, %c0_207, %c0_208] : memref<4x8x128xf32, #tpu.memory_space<vmem>>, vector<1x8x128xf32>
    %419 = vector.shape_cast %418 : vector<1x8x128xf32> to vector<8x128xf32>
    %420 = vector.extract_strided_slice %419 {offsets = [0, 0], sizes = [1, 128], strides = [1, 1]} : vector<8x128xf32> to vector<1x128xf32>
    %421 = vector.broadcast %420 : vector<1x128xf32> to vector<64x128xf32>
    %422 = arith.mulf %417, %421 : vector<64x128xf32>
    %423 = arith.truncf %422 : vector<64x128xf32> to vector<64x128xbf16>
    %424 = tpu.concatenate %414, %423 in 0 : vector<64x128xbf16>, vector<64x128xbf16> -> vector<128x128xbf16>
    %c3_209 = arith.constant 3 : index
    %c0_210 = arith.constant 0 : index
    %c0_211 = arith.constant 0 : index
    %425 = vector.load %arg3[%c3_209, %c0_210, %c0_211] : memref<6x64x128xbf16, #tpu.memory_space<vmem>>, vector<1x64x128xbf16>
    %426 = vector.shape_cast %425 : vector<1x64x128xbf16> to vector<64x128xbf16>
    %cst_212 = arith.constant dense<0.000000e+00> : vector<64x128xf32>
    %427 = tpu.matmul %426, %424, %cst_212 {dimension_numbers = #tpu.dot_dimension_numbers<[1], [0], [0], [1], [0, 0, 1, 1], [], []>} : vector<64x128xbf16>, vector<128x128xbf16>, vector<64x128xf32> -> vector<64x128xf32>
    %c19 = arith.constant 19 : index
    %c0_213 = arith.constant 0 : index
    %c0_214 = arith.constant 0 : index
    %428 = vector.load %arg5[%c19, %c0_213, %c0_214] : memref<41x64x1xf32, #tpu.memory_space<vmem>>, vector<1x64x1xf32>
    %429 = vector.shape_cast %428 : vector<1x64x1xf32> to vector<64x1xf32>
    %430 = vector.broadcast %429 : vector<64x1xf32> to vector<64x128xf32>
    %431 = arith.addf %427, %430 : vector<64x128xf32>
    %cst_215 = arith.constant dense<0.000000e+00> : vector<128xf32>
    %432 = vector.multi_reduction <add>, %431, %cst_215 [0] : vector<64x128xf32> to vector<128xf32>
    %433 = vector.shape_cast %432 : vector<128xf32> to vector<1x128xf32>
    %434 = arith.mulf %431, %431 : vector<64x128xf32>
    %cst_216 = arith.constant dense<0.000000e+00> : vector<128xf32>
    %435 = vector.multi_reduction <add>, %434, %cst_216 [0] : vector<64x128xf32> to vector<128xf32>
    %436 = vector.shape_cast %435 : vector<128xf32> to vector<1x128xf32>
    %437 = tpu.concatenate %433, %436, %11 in 0 : vector<1x128xf32>, vector<1x128xf32>, vector<6x128xf32> -> vector<8x128xf32>
    %cst_217 = arith.constant dense<0.000000e+00> : vector<8x128xf32>
    %438 = tpu.matmul %437, %10, %cst_217 {dimension_numbers = #tpu.dot_dimension_numbers<[1], [0], [0], [1], [0, 0, 1, 1], [], []>} : vector<8x128xf32>, vector<128x128xf32>, vector<8x128xf32> -> vector<8x128xf32>
    %439 = vector.extract_strided_slice %438 {offsets = [0, 0], sizes = [1, 128], strides = [1, 1]} : vector<8x128xf32> to vector<1x128xf32>
    %cst_218 = arith.constant 7.812500e-03 : f32
    %440 = vector.broadcast %cst_218 : f32 to vector<1x128xf32>
    %441 = arith.mulf %439, %440 : vector<1x128xf32>
    %442 = vector.extract_strided_slice %438 {offsets = [1, 0], sizes = [1, 128], strides = [1, 1]} : vector<8x128xf32> to vector<1x128xf32>
    %cst_219 = arith.constant 7.812500e-03 : f32
    %443 = vector.broadcast %cst_219 : f32 to vector<1x128xf32>
    %444 = arith.mulf %442, %443 : vector<1x128xf32>
    %445 = arith.mulf %441, %441 : vector<1x128xf32>
    %446 = arith.subf %444, %445 : vector<1x128xf32>
    %cst_220 = arith.constant 0.000000e+00 : f32
    %447 = vector.broadcast %cst_220 : f32 to vector<1x128xf32>
    %448 = arith.maximumf %446, %447 : vector<1x128xf32>
    %449 = vector.broadcast %441 : vector<1x128xf32> to vector<64x128xf32>
    %450 = arith.subf %431, %449 : vector<64x128xf32>
    %cst_221 = arith.constant 9.99999993E-9 : f32
    %451 = vector.broadcast %cst_221 : f32 to vector<1x128xf32>
    %452 = arith.addf %448, %451 : vector<1x128xf32>
    %453 = math.rsqrt %452 : vector<1x128xf32>
    %454 = vector.broadcast %453 : vector<1x128xf32> to vector<64x128xf32>
    %455 = arith.mulf %450, %454 : vector<64x128xf32>
    %c20 = arith.constant 20 : index
    %c0_222 = arith.constant 0 : index
    %c0_223 = arith.constant 0 : index
    %456 = vector.load %arg5[%c20, %c0_222, %c0_223] : memref<41x64x1xf32, #tpu.memory_space<vmem>>, vector<1x64x1xf32>
    %457 = vector.shape_cast %456 : vector<1x64x1xf32> to vector<64x1xf32>
    %458 = vector.broadcast %457 : vector<64x1xf32> to vector<64x128xf32>
    %459 = arith.mulf %455, %458 : vector<64x128xf32>
    %c21 = arith.constant 21 : index
    %c0_224 = arith.constant 0 : index
    %c0_225 = arith.constant 0 : index
    %460 = vector.load %arg5[%c21, %c0_224, %c0_225] : memref<41x64x1xf32, #tpu.memory_space<vmem>>, vector<1x64x1xf32>
    %461 = vector.shape_cast %460 : vector<1x64x1xf32> to vector<64x1xf32>
    %462 = vector.broadcast %461 : vector<64x1xf32> to vector<64x128xf32>
    %463 = arith.addf %459, %462 : vector<64x128xf32>
    %cst_226 = arith.constant 0.000000e+00 : f32
    %464 = vector.broadcast %cst_226 : f32 to vector<64x128xf32>
    %465 = arith.cmpf oge, %463, %464 : vector<64x128xf32>
    %cst_227 = arith.constant 2.500000e-01 : f32
    %466 = vector.broadcast %cst_227 : f32 to vector<64x128xf32>
    %467 = arith.mulf %466, %463 : vector<64x128xf32>
    %468 = arith.select %465, %463, %467 : vector<64x128xi1>, vector<64x128xf32>
    %469 = vector.extract_strided_slice %468 {offsets = [0, 0], sizes = [8, 128], strides = [1, 1]} : vector<64x128xf32> to vector<8x128xf32>
    %c24 = arith.constant 24 : index
    %c0_228 = arith.constant 0 : index
    %470 = vector.load %arg9[%c24, %c0_228] : memref<64x128xf32, #tpu.memory_space<vmem>>, vector<8x128xf32>
    tpu.vector_store %arg9[%c24, %c0_228], %469 {strides = array<i32>} : memref<64x128xf32, #tpu.memory_space<vmem>>, vector<8x128xf32>,
    %c0_229 = arith.constant 0 : index
    %c0_230 = arith.constant 0 : index
    %471 = vector.load %arg9[%c0_229, %c0_230] : memref<64x128xf32, #tpu.memory_space<vmem>>, vector<64x128xf32>
    %472 = arith.truncf %471 : vector<64x128xf32> to vector<64x128xbf16>
    %473 = vector.extract_strided_slice %471 {offsets = [0, 120], sizes = [64, 8], strides = [1, 1]} : vector<64x128xf32> to vector<64x8xf32>
    %474 = vector.extract_strided_slice %471 {offsets = [0, 0], sizes = [64, 120], strides = [1, 1]} : vector<64x128xf32> to vector<64x120xf32>
    %475 = tpu.concatenate %473, %474 in 1 : vector<64x8xf32>, vector<64x120xf32> -> vector<64x128xf32>
    %c3_231 = arith.constant 3 : index
    %c0_232 = arith.constant 0 : index
    %c0_233 = arith.constant 0 : index
    %476 = vector.load %arg6[%c3_231, %c0_232, %c0_233] : memref<4x8x128xf32, #tpu.memory_space<vmem>>, vector<1x8x128xf32>
    %477 = vector.shape_cast %476 : vector<1x8x128xf32> to vector<8x128xf32>
    %478 = vector.extract_strided_slice %477 {offsets = [0, 0], sizes = [1, 128], strides = [1, 1]} : vector<8x128xf32> to vector<1x128xf32>
    %479 = vector.broadcast %478 : vector<1x128xf32> to vector<64x128xf32>
    %480 = arith.mulf %475, %479 : vector<64x128xf32>
    %481 = arith.truncf %480 : vector<64x128xf32> to vector<64x128xbf16>
    %482 = tpu.concatenate %472, %481 in 0 : vector<64x128xbf16>, vector<64x128xbf16> -> vector<128x128xbf16>
    %c4_234 = arith.constant 4 : index
    %c0_235 = arith.constant 0 : index
    %c0_236 = arith.constant 0 : index
    %483 = vector.load %arg3[%c4_234, %c0_235, %c0_236] : memref<6x64x128xbf16, #tpu.memory_space<vmem>>, vector<1x64x128xbf16>
    %484 = vector.shape_cast %483 : vector<1x64x128xbf16> to vector<64x128xbf16>
    %cst_237 = arith.constant dense<0.000000e+00> : vector<64x128xf32>
    %485 = tpu.matmul %484, %482, %cst_237 {dimension_numbers = #tpu.dot_dimension_numbers<[1], [0], [0], [1], [0, 0, 1, 1], [], []>} : vector<64x128xbf16>, vector<128x128xbf16>, vector<64x128xf32> -> vector<64x128xf32>
    %c22 = arith.constant 22 : index
    %c0_238 = arith.constant 0 : index
    %c0_239 = arith.constant 0 : index
    %486 = vector.load %arg5[%c22, %c0_238, %c0_239] : memref<41x64x1xf32, #tpu.memory_space<vmem>>, vector<1x64x1xf32>
    %487 = vector.shape_cast %486 : vector<1x64x1xf32> to vector<64x1xf32>
    %488 = vector.broadcast %487 : vector<64x1xf32> to vector<64x128xf32>
    %489 = arith.addf %485, %488 : vector<64x128xf32>
    %cst_240 = arith.constant dense<0.000000e+00> : vector<128xf32>
    %490 = vector.multi_reduction <add>, %489, %cst_240 [0] : vector<64x128xf32> to vector<128xf32>
    %491 = vector.shape_cast %490 : vector<128xf32> to vector<1x128xf32>
    %492 = arith.mulf %489, %489 : vector<64x128xf32>
    %cst_241 = arith.constant dense<0.000000e+00> : vector<128xf32>
    %493 = vector.multi_reduction <add>, %492, %cst_241 [0] : vector<64x128xf32> to vector<128xf32>
    %494 = vector.shape_cast %493 : vector<128xf32> to vector<1x128xf32>
    %495 = tpu.concatenate %491, %494, %11 in 0 : vector<1x128xf32>, vector<1x128xf32>, vector<6x128xf32> -> vector<8x128xf32>
    %cst_242 = arith.constant dense<0.000000e+00> : vector<8x128xf32>
    %496 = tpu.matmul %495, %10, %cst_242 {dimension_numbers = #tpu.dot_dimension_numbers<[1], [0], [0], [1], [0, 0, 1, 1], [], []>} : vector<8x128xf32>, vector<128x128xf32>, vector<8x128xf32> -> vector<8x128xf32>
    %497 = vector.extract_strided_slice %496 {offsets = [0, 0], sizes = [1, 128], strides = [1, 1]} : vector<8x128xf32> to vector<1x128xf32>
    %cst_243 = arith.constant 7.812500e-03 : f32
    %498 = vector.broadcast %cst_243 : f32 to vector<1x128xf32>
    %499 = arith.mulf %497, %498 : vector<1x128xf32>
    %500 = vector.extract_strided_slice %496 {offsets = [1, 0], sizes = [1, 128], strides = [1, 1]} : vector<8x128xf32> to vector<1x128xf32>
    %cst_244 = arith.constant 7.812500e-03 : f32
    %501 = vector.broadcast %cst_244 : f32 to vector<1x128xf32>
    %502 = arith.mulf %500, %501 : vector<1x128xf32>
    %503 = arith.mulf %499, %499 : vector<1x128xf32>
    %504 = arith.subf %502, %503 : vector<1x128xf32>
    %cst_245 = arith.constant 0.000000e+00 : f32
    %505 = vector.broadcast %cst_245 : f32 to vector<1x128xf32>
    %506 = arith.maximumf %504, %505 : vector<1x128xf32>
    %507 = vector.broadcast %499 : vector<1x128xf32> to vector<64x128xf32>
    %508 = arith.subf %489, %507 : vector<64x128xf32>
    %cst_246 = arith.constant 9.99999993E-9 : f32
    %509 = vector.broadcast %cst_246 : f32 to vector<1x128xf32>
    %510 = arith.addf %506, %509 : vector<1x128xf32>
    %511 = math.rsqrt %510 : vector<1x128xf32>
    %512 = vector.broadcast %511 : vector<1x128xf32> to vector<64x128xf32>
    %513 = arith.mulf %508, %512 : vector<64x128xf32>
    %c23 = arith.constant 23 : index
    %c0_247 = arith.constant 0 : index
    %c0_248 = arith.constant 0 : index
    %514 = vector.load %arg5[%c23, %c0_247, %c0_248] : memref<41x64x1xf32, #tpu.memory_space<vmem>>, vector<1x64x1xf32>
    %515 = vector.shape_cast %514 : vector<1x64x1xf32> to vector<64x1xf32>
    %516 = vector.broadcast %515 : vector<64x1xf32> to vector<64x128xf32>
    %517 = arith.mulf %513, %516 : vector<64x128xf32>
    %c24_249 = arith.constant 24 : index
    %c0_250 = arith.constant 0 : index
    %c0_251 = arith.constant 0 : index
    %518 = vector.load %arg5[%c24_249, %c0_250, %c0_251] : memref<41x64x1xf32, #tpu.memory_space<vmem>>, vector<1x64x1xf32>
    %519 = vector.shape_cast %518 : vector<1x64x1xf32> to vector<64x1xf32>
    %520 = vector.broadcast %519 : vector<64x1xf32> to vector<64x128xf32>
    %521 = arith.addf %517, %520 : vector<64x128xf32>
    %cst_252 = arith.constant 0.000000e+00 : f32
    %522 = vector.broadcast %cst_252 : f32 to vector<64x128xf32>
    %523 = arith.cmpf oge, %521, %522 : vector<64x128xf32>
    %cst_253 = arith.constant 2.500000e-01 : f32
    %524 = vector.broadcast %cst_253 : f32 to vector<64x128xf32>
    %525 = arith.mulf %524, %521 : vector<64x128xf32>
    %526 = arith.select %523, %521, %525 : vector<64x128xi1>, vector<64x128xf32>
    %527 = vector.extract_strided_slice %526 {offsets = [0, 0], sizes = [8, 128], strides = [1, 1]} : vector<64x128xf32> to vector<8x128xf32>
    %c32 = arith.constant 32 : index
    %c0_254 = arith.constant 0 : index
    %528 = vector.load %arg9[%c32, %c0_254] : memref<64x128xf32, #tpu.memory_space<vmem>>, vector<8x128xf32>
    tpu.vector_store %arg9[%c32, %c0_254], %527 {strides = array<i32>} : memref<64x128xf32, #tpu.memory_space<vmem>>, vector<8x128xf32>,
    %c0_255 = arith.constant 0 : index
    %c0_256 = arith.constant 0 : index
    %529 = vector.load %arg9[%c0_255, %c0_256] : memref<64x128xf32, #tpu.memory_space<vmem>>, vector<64x128xf32>
    %530 = arith.truncf %529 : vector<64x128xf32> to vector<64x128xbf16>
    %c1_257 = arith.constant 1 : index
    %c0_258 = arith.constant 0 : index
    %c0_259 = arith.constant 0 : index
    %531 = vector.load %arg2[%c1_257, %c0_258, %c0_259] : memref<3x64x64xbf16, #tpu.memory_space<vmem>>, vector<1x64x64xbf16>
    %532 = vector.shape_cast %531 : vector<1x64x64xbf16> to vector<64x64xbf16>
    %cst_260 = arith.constant dense<0.000000e+00> : vector<64x128xf32>
    %533 = tpu.matmul %532, %530, %cst_260 {dimension_numbers = #tpu.dot_dimension_numbers<[1], [0], [0], [1], [0, 0, 1, 1], [], []>} : vector<64x64xbf16>, vector<64x128xbf16>, vector<64x128xf32> -> vector<64x128xf32>
    %c25 = arith.constant 25 : index
    %c0_261 = arith.constant 0 : index
    %c0_262 = arith.constant 0 : index
    %534 = vector.load %arg5[%c25, %c0_261, %c0_262] : memref<41x64x1xf32, #tpu.memory_space<vmem>>, vector<1x64x1xf32>
    %535 = vector.shape_cast %534 : vector<1x64x1xf32> to vector<64x1xf32>
    %536 = vector.broadcast %535 : vector<64x1xf32> to vector<64x128xf32>
    %537 = arith.addf %533, %536 : vector<64x128xf32>
    %cst_263 = arith.constant dense<0.000000e+00> : vector<128xf32>
    %538 = vector.multi_reduction <add>, %537, %cst_263 [0] : vector<64x128xf32> to vector<128xf32>
    %539 = vector.shape_cast %538 : vector<128xf32> to vector<1x128xf32>
    %540 = arith.mulf %537, %537 : vector<64x128xf32>
    %cst_264 = arith.constant dense<0.000000e+00> : vector<128xf32>
    %541 = vector.multi_reduction <add>, %540, %cst_264 [0] : vector<64x128xf32> to vector<128xf32>
    %542 = vector.shape_cast %541 : vector<128xf32> to vector<1x128xf32>
    %543 = tpu.concatenate %539, %542, %11 in 0 : vector<1x128xf32>, vector<1x128xf32>, vector<6x128xf32> -> vector<8x128xf32>
    %cst_265 = arith.constant dense<0.000000e+00> : vector<8x128xf32>
    %544 = tpu.matmul %543, %10, %cst_265 {dimension_numbers = #tpu.dot_dimension_numbers<[1], [0], [0], [1], [0, 0, 1, 1], [], []>} : vector<8x128xf32>, vector<128x128xf32>, vector<8x128xf32> -> vector<8x128xf32>
    %545 = vector.extract_strided_slice %544 {offsets = [0, 0], sizes = [1, 128], strides = [1, 1]} : vector<8x128xf32> to vector<1x128xf32>
    %cst_266 = arith.constant 7.812500e-03 : f32
    %546 = vector.broadcast %cst_266 : f32 to vector<1x128xf32>
    %547 = arith.mulf %545, %546 : vector<1x128xf32>
    %548 = vector.extract_strided_slice %544 {offsets = [1, 0], sizes = [1, 128], strides = [1, 1]} : vector<8x128xf32> to vector<1x128xf32>
    %cst_267 = arith.constant 7.812500e-03 : f32
    %549 = vector.broadcast %cst_267 : f32 to vector<1x128xf32>
    %550 = arith.mulf %548, %549 : vector<1x128xf32>
    %551 = arith.mulf %547, %547 : vector<1x128xf32>
    %552 = arith.subf %550, %551 : vector<1x128xf32>
    %cst_268 = arith.constant 0.000000e+00 : f32
    %553 = vector.broadcast %cst_268 : f32 to vector<1x128xf32>
    %554 = arith.maximumf %552, %553 : vector<1x128xf32>
    %555 = vector.broadcast %547 : vector<1x128xf32> to vector<64x128xf32>
    %556 = arith.subf %537, %555 : vector<64x128xf32>
    %cst_269 = arith.constant 9.99999993E-9 : f32
    %557 = vector.broadcast %cst_269 : f32 to vector<1x128xf32>
    %558 = arith.addf %554, %557 : vector<1x128xf32>
    %559 = math.rsqrt %558 : vector<1x128xf32>
    %560 = vector.broadcast %559 : vector<1x128xf32> to vector<64x128xf32>
    %561 = arith.mulf %556, %560 : vector<64x128xf32>
    %c26 = arith.constant 26 : index
    %c0_270 = arith.constant 0 : index
    %c0_271 = arith.constant 0 : index
    %562 = vector.load %arg5[%c26, %c0_270, %c0_271] : memref<41x64x1xf32, #tpu.memory_space<vmem>>, vector<1x64x1xf32>
    %563 = vector.shape_cast %562 : vector<1x64x1xf32> to vector<64x1xf32>
    %564 = vector.broadcast %563 : vector<64x1xf32> to vector<64x128xf32>
    %565 = arith.mulf %561, %564 : vector<64x128xf32>
    %c27 = arith.constant 27 : index
    %c0_272 = arith.constant 0 : index
    %c0_273 = arith.constant 0 : index
    %566 = vector.load %arg5[%c27, %c0_272, %c0_273] : memref<41x64x1xf32, #tpu.memory_space<vmem>>, vector<1x64x1xf32>
    %567 = vector.shape_cast %566 : vector<1x64x1xf32> to vector<64x1xf32>
    %568 = vector.broadcast %567 : vector<64x1xf32> to vector<64x128xf32>
    %569 = arith.addf %565, %568 : vector<64x128xf32>
    %cst_274 = arith.constant 0.000000e+00 : f32
    %570 = vector.broadcast %cst_274 : f32 to vector<64x128xf32>
    %571 = arith.cmpf oge, %569, %570 : vector<64x128xf32>
    %cst_275 = arith.constant 2.500000e-01 : f32
    %572 = vector.broadcast %cst_275 : f32 to vector<64x128xf32>
    %573 = arith.mulf %572, %569 : vector<64x128xf32>
    %574 = arith.select %571, %569, %573 : vector<64x128xi1>, vector<64x128xf32>
    %575 = vector.extract_strided_slice %574 {offsets = [0, 0], sizes = [8, 128], strides = [1, 1]} : vector<64x128xf32> to vector<8x128xf32>
    %c40 = arith.constant 40 : index
    %c0_276 = arith.constant 0 : index
    %576 = vector.load %arg9[%c40, %c0_276] : memref<64x128xf32, #tpu.memory_space<vmem>>, vector<8x128xf32>
    tpu.vector_store %arg9[%c40, %c0_276], %575 {strides = array<i32>} : memref<64x128xf32, #tpu.memory_space<vmem>>, vector<8x128xf32>,
    %c0_277 = arith.constant 0 : index
    %c0_278 = arith.constant 0 : index
    %577 = vector.load %arg9[%c0_277, %c0_278] : memref<64x128xf32, #tpu.memory_space<vmem>>, vector<64x128xf32>
    %578 = arith.truncf %577 : vector<64x128xf32> to vector<64x128xbf16>
    %c2_279 = arith.constant 2 : index
    %c0_280 = arith.constant 0 : index
    %c0_281 = arith.constant 0 : index
    %579 = vector.load %arg2[%c2_279, %c0_280, %c0_281] : memref<3x64x64xbf16, #tpu.memory_space<vmem>>, vector<1x64x64xbf16>
    %580 = vector.shape_cast %579 : vector<1x64x64xbf16> to vector<64x64xbf16>
    %cst_282 = arith.constant dense<0.000000e+00> : vector<64x128xf32>
    %581 = tpu.matmul %580, %578, %cst_282 {dimension_numbers = #tpu.dot_dimension_numbers<[1], [0], [0], [1], [0, 0, 1, 1], [], []>} : vector<64x64xbf16>, vector<64x128xbf16>, vector<64x128xf32> -> vector<64x128xf32>
    %c28 = arith.constant 28 : index
    %c0_283 = arith.constant 0 : index
    %c0_284 = arith.constant 0 : index
    %582 = vector.load %arg5[%c28, %c0_283, %c0_284] : memref<41x64x1xf32, #tpu.memory_space<vmem>>, vector<1x64x1xf32>
    %583 = vector.shape_cast %582 : vector<1x64x1xf32> to vector<64x1xf32>
    %584 = vector.broadcast %583 : vector<64x1xf32> to vector<64x128xf32>
    %585 = arith.addf %581, %584 : vector<64x128xf32>
    %cst_285 = arith.constant dense<0.000000e+00> : vector<128xf32>
    %586 = vector.multi_reduction <add>, %585, %cst_285 [0] : vector<64x128xf32> to vector<128xf32>
    %587 = vector.shape_cast %586 : vector<128xf32> to vector<1x128xf32>
    %588 = arith.mulf %585, %585 : vector<64x128xf32>
    %cst_286 = arith.constant dense<0.000000e+00> : vector<128xf32>
    %589 = vector.multi_reduction <add>, %588, %cst_286 [0] : vector<64x128xf32> to vector<128xf32>
    %590 = vector.shape_cast %589 : vector<128xf32> to vector<1x128xf32>
    %591 = tpu.concatenate %587, %590, %11 in 0 : vector<1x128xf32>, vector<1x128xf32>, vector<6x128xf32> -> vector<8x128xf32>
    %cst_287 = arith.constant dense<0.000000e+00> : vector<8x128xf32>
    %592 = tpu.matmul %591, %10, %cst_287 {dimension_numbers = #tpu.dot_dimension_numbers<[1], [0], [0], [1], [0, 0, 1, 1], [], []>} : vector<8x128xf32>, vector<128x128xf32>, vector<8x128xf32> -> vector<8x128xf32>
    %593 = vector.extract_strided_slice %592 {offsets = [0, 0], sizes = [1, 128], strides = [1, 1]} : vector<8x128xf32> to vector<1x128xf32>
    %cst_288 = arith.constant 7.812500e-03 : f32
    %594 = vector.broadcast %cst_288 : f32 to vector<1x128xf32>
    %595 = arith.mulf %593, %594 : vector<1x128xf32>
    %596 = vector.extract_strided_slice %592 {offsets = [1, 0], sizes = [1, 128], strides = [1, 1]} : vector<8x128xf32> to vector<1x128xf32>
    %cst_289 = arith.constant 7.812500e-03 : f32
    %597 = vector.broadcast %cst_289 : f32 to vector<1x128xf32>
    %598 = arith.mulf %596, %597 : vector<1x128xf32>
    %599 = arith.mulf %595, %595 : vector<1x128xf32>
    %600 = arith.subf %598, %599 : vector<1x128xf32>
    %cst_290 = arith.constant 0.000000e+00 : f32
    %601 = vector.broadcast %cst_290 : f32 to vector<1x128xf32>
    %602 = arith.maximumf %600, %601 : vector<1x128xf32>
    %603 = vector.broadcast %595 : vector<1x128xf32> to vector<64x128xf32>
    %604 = arith.subf %585, %603 : vector<64x128xf32>
    %cst_291 = arith.constant 9.99999993E-9 : f32
    %605 = vector.broadcast %cst_291 : f32 to vector<1x128xf32>
    %606 = arith.addf %602, %605 : vector<1x128xf32>
    %607 = math.rsqrt %606 : vector<1x128xf32>
    %608 = vector.broadcast %607 : vector<1x128xf32> to vector<64x128xf32>
    %609 = arith.mulf %604, %608 : vector<64x128xf32>
    %c29 = arith.constant 29 : index
    %c0_292 = arith.constant 0 : index
    %c0_293 = arith.constant 0 : index
    %610 = vector.load %arg5[%c29, %c0_292, %c0_293] : memref<41x64x1xf32, #tpu.memory_space<vmem>>, vector<1x64x1xf32>
    %611 = vector.shape_cast %610 : vector<1x64x1xf32> to vector<64x1xf32>
    %612 = vector.broadcast %611 : vector<64x1xf32> to vector<64x128xf32>
    %613 = arith.mulf %609, %612 : vector<64x128xf32>
    %c30 = arith.constant 30 : index
    %c0_294 = arith.constant 0 : index
    %c0_295 = arith.constant 0 : index
    %614 = vector.load %arg5[%c30, %c0_294, %c0_295] : memref<41x64x1xf32, #tpu.memory_space<vmem>>, vector<1x64x1xf32>
    %615 = vector.shape_cast %614 : vector<1x64x1xf32> to vector<64x1xf32>
    %616 = vector.broadcast %615 : vector<64x1xf32> to vector<64x128xf32>
    %617 = arith.addf %613, %616 : vector<64x128xf32>
    %cst_296 = arith.constant 0.000000e+00 : f32
    %618 = vector.broadcast %cst_296 : f32 to vector<64x128xf32>
    %619 = arith.cmpf oge, %617, %618 : vector<64x128xf32>
    %cst_297 = arith.constant 2.500000e-01 : f32
    %620 = vector.broadcast %cst_297 : f32 to vector<64x128xf32>
    %621 = arith.mulf %620, %617 : vector<64x128xf32>
    %622 = arith.select %619, %617, %621 : vector<64x128xi1>, vector<64x128xf32>
    %623 = arith.truncf %622 : vector<64x128xf32> to vector<64x128xbf16>
    %624 = vector.extract_strided_slice %622 {offsets = [0, 127], sizes = [64, 1], strides = [1, 1]} : vector<64x128xf32> to vector<64x1xf32>
    %625 = vector.extract_strided_slice %622 {offsets = [0, 0], sizes = [64, 127], strides = [1, 1]} : vector<64x128xf32> to vector<64x127xf32>
    %626 = tpu.concatenate %624, %625 in 1 : vector<64x1xf32>, vector<64x127xf32> -> vector<64x128xf32>
    %c0_298 = arith.constant 0 : index
    %c0_299 = arith.constant 0 : index
    %c0_300 = arith.constant 0 : index
    %627 = vector.load %arg6[%c0_298, %c0_299, %c0_300] : memref<4x8x128xf32, #tpu.memory_space<vmem>>, vector<1x8x128xf32>
    %628 = vector.shape_cast %627 : vector<1x8x128xf32> to vector<8x128xf32>
    %629 = vector.extract_strided_slice %628 {offsets = [0, 0], sizes = [1, 128], strides = [1, 1]} : vector<8x128xf32> to vector<1x128xf32>
    %630 = vector.broadcast %629 : vector<1x128xf32> to vector<64x128xf32>
    %631 = arith.mulf %626, %630 : vector<64x128xf32>
    %632 = arith.truncf %631 : vector<64x128xf32> to vector<64x128xbf16>
    %633 = tpu.concatenate %623, %632 in 0 : vector<64x128xbf16>, vector<64x128xbf16> -> vector<128x128xbf16>
    %c5_301 = arith.constant 5 : index
    %c0_302 = arith.constant 0 : index
    %c0_303 = arith.constant 0 : index
    %634 = vector.load %arg3[%c5_301, %c0_302, %c0_303] : memref<6x64x128xbf16, #tpu.memory_space<vmem>>, vector<1x64x128xbf16>
    %635 = vector.shape_cast %634 : vector<1x64x128xbf16> to vector<64x128xbf16>
    %cst_304 = arith.constant dense<0.000000e+00> : vector<64x128xf32>
    %636 = tpu.matmul %635, %633, %cst_304 {dimension_numbers = #tpu.dot_dimension_numbers<[1], [0], [0], [1], [0, 0, 1, 1], [], []>} : vector<64x128xbf16>, vector<128x128xbf16>, vector<64x128xf32> -> vector<64x128xf32>
    %c31 = arith.constant 31 : index
    %c0_305 = arith.constant 0 : index
    %c0_306 = arith.constant 0 : index
    %637 = vector.load %arg5[%c31, %c0_305, %c0_306] : memref<41x64x1xf32, #tpu.memory_space<vmem>>, vector<1x64x1xf32>
    %638 = vector.shape_cast %637 : vector<1x64x1xf32> to vector<64x1xf32>
    %639 = vector.broadcast %638 : vector<64x1xf32> to vector<64x128xf32>
    %640 = arith.addf %636, %639 : vector<64x128xf32>
    %cst_307 = arith.constant 0.000000e+00 : f32
    %641 = vector.broadcast %cst_307 : f32 to vector<64x128xf32>
    %642 = arith.cmpf oge, %640, %641 : vector<64x128xf32>
    %cst_308 = arith.constant 2.500000e-01 : f32
    %643 = vector.broadcast %cst_308 : f32 to vector<64x128xf32>
    %644 = arith.mulf %643, %640 : vector<64x128xf32>
    %645 = arith.select %642, %640, %644 : vector<64x128xi1>, vector<64x128xf32>
    %646 = arith.truncf %645 : vector<64x128xf32> to vector<64x128xbf16>
    %647 = vector.extract_strided_slice %645 {offsets = [0, 127], sizes = [64, 1], strides = [1, 1]} : vector<64x128xf32> to vector<64x1xf32>
    %648 = vector.extract_strided_slice %645 {offsets = [0, 0], sizes = [64, 127], strides = [1, 1]} : vector<64x128xf32> to vector<64x127xf32>
    %649 = tpu.concatenate %647, %648 in 1 : vector<64x1xf32>, vector<64x127xf32> -> vector<64x128xf32>
    %c0_309 = arith.constant 0 : index
    %c0_310 = arith.constant 0 : index
    %c0_311 = arith.constant 0 : index
    %650 = vector.load %arg6[%c0_309, %c0_310, %c0_311] : memref<4x8x128xf32, #tpu.memory_space<vmem>>, vector<1x8x128xf32>
    %651 = vector.shape_cast %650 : vector<1x8x128xf32> to vector<8x128xf32>
    %652 = vector.extract_strided_slice %651 {offsets = [0, 0], sizes = [1, 128], strides = [1, 1]} : vector<8x128xf32> to vector<1x128xf32>
    %653 = vector.broadcast %652 : vector<1x128xf32> to vector<64x128xf32>
    %654 = arith.mulf %649, %653 : vector<64x128xf32>
    %655 = arith.truncf %654 : vector<64x128xf32> to vector<64x128xbf16>
    %c3_312 = arith.constant 3 : index
    %c0_313 = arith.constant 0 : index
    %c0_314 = arith.constant 0 : index
    %656 = vector.load %arg10[%c3_312, %c0_313, %c0_314] : memref<4x64x128xf32, #tpu.memory_space<vmem>>, vector<1x64x128xf32>
    %657 = vector.shape_cast %656 : vector<1x64x128xf32> to vector<64x128xf32>
    %658 = arith.truncf %657 : vector<64x128xf32> to vector<64x128xbf16>
    %659 = vector.extract_strided_slice %657 {offsets = [0, 127], sizes = [64, 1], strides = [1, 1]} : vector<64x128xf32> to vector<64x1xf32>
    %660 = vector.extract_strided_slice %657 {offsets = [0, 0], sizes = [64, 127], strides = [1, 1]} : vector<64x128xf32> to vector<64x127xf32>
    %661 = tpu.concatenate %659, %660 in 1 : vector<64x1xf32>, vector<64x127xf32> -> vector<64x128xf32>
    %c0_315 = arith.constant 0 : index
    %c0_316 = arith.constant 0 : index
    %c0_317 = arith.constant 0 : index
    %662 = vector.load %arg6[%c0_315, %c0_316, %c0_317] : memref<4x8x128xf32, #tpu.memory_space<vmem>>, vector<1x8x128xf32>
    %663 = vector.shape_cast %662 : vector<1x8x128xf32> to vector<8x128xf32>
    %664 = vector.extract_strided_slice %663 {offsets = [0, 0], sizes = [1, 128], strides = [1, 1]} : vector<8x128xf32> to vector<1x128xf32>
    %665 = vector.broadcast %664 : vector<1x128xf32> to vector<64x128xf32>
    %666 = arith.mulf %661, %665 : vector<64x128xf32>
    %667 = arith.truncf %666 : vector<64x128xf32> to vector<64x128xbf16>
    %668 = tpu.concatenate %646, %655, %658, %667 in 0 : vector<64x128xbf16>, vector<64x128xbf16>, vector<64x128xbf16>, vector<64x128xbf16> -> vector<256x128xbf16>
    %c3_318 = arith.constant 3 : index
    %c0_319 = arith.constant 0 : index
    %c0_320 = arith.constant 0 : index
    %669 = vector.load %arg4[%c3_318, %c0_319, %c0_320] : memref<6x64x256xbf16, #tpu.memory_space<vmem>>, vector<1x64x256xbf16>
    %670 = vector.shape_cast %669 : vector<1x64x256xbf16> to vector<64x256xbf16>
    %cst_321 = arith.constant dense<0.000000e+00> : vector<64x128xf32>
    %671 = tpu.matmul %670, %668, %cst_321 {dimension_numbers = #tpu.dot_dimension_numbers<[1], [0], [0], [1], [0, 0, 1, 1], [], []>} : vector<64x256xbf16>, vector<256x128xbf16>, vector<64x128xf32> -> vector<64x128xf32>
    %c32_322 = arith.constant 32 : index
    %c0_323 = arith.constant 0 : index
    %c0_324 = arith.constant 0 : index
    %672 = vector.load %arg5[%c32_322, %c0_323, %c0_324] : memref<41x64x1xf32, #tpu.memory_space<vmem>>, vector<1x64x1xf32>
    %673 = vector.shape_cast %672 : vector<1x64x1xf32> to vector<64x1xf32>
    %674 = vector.broadcast %673 : vector<64x1xf32> to vector<64x128xf32>
    %675 = arith.addf %671, %674 : vector<64x128xf32>
    %cst_325 = arith.constant dense<0.000000e+00> : vector<128xf32>
    %676 = vector.multi_reduction <add>, %675, %cst_325 [0] : vector<64x128xf32> to vector<128xf32>
    %677 = vector.shape_cast %676 : vector<128xf32> to vector<1x128xf32>
    %678 = arith.mulf %675, %675 : vector<64x128xf32>
    %cst_326 = arith.constant dense<0.000000e+00> : vector<128xf32>
    %679 = vector.multi_reduction <add>, %678, %cst_326 [0] : vector<64x128xf32> to vector<128xf32>
    %680 = vector.shape_cast %679 : vector<128xf32> to vector<1x128xf32>
    %681 = tpu.concatenate %677, %680, %11 in 0 : vector<1x128xf32>, vector<1x128xf32>, vector<6x128xf32> -> vector<8x128xf32>
    %cst_327 = arith.constant dense<0.000000e+00> : vector<8x128xf32>
    %682 = tpu.matmul %681, %10, %cst_327 {dimension_numbers = #tpu.dot_dimension_numbers<[1], [0], [0], [1], [0, 0, 1, 1], [], []>} : vector<8x128xf32>, vector<128x128xf32>, vector<8x128xf32> -> vector<8x128xf32>
    %683 = vector.extract_strided_slice %682 {offsets = [0, 0], sizes = [1, 128], strides = [1, 1]} : vector<8x128xf32> to vector<1x128xf32>
    %cst_328 = arith.constant 0.001953125 : f32
    %684 = vector.broadcast %cst_328 : f32 to vector<1x128xf32>
    %685 = arith.mulf %683, %684 : vector<1x128xf32>
    %686 = vector.extract_strided_slice %682 {offsets = [1, 0], sizes = [1, 128], strides = [1, 1]} : vector<8x128xf32> to vector<1x128xf32>
    %cst_329 = arith.constant 0.001953125 : f32
    %687 = vector.broadcast %cst_329 : f32 to vector<1x128xf32>
    %688 = arith.mulf %686, %687 : vector<1x128xf32>
    %689 = arith.mulf %685, %685 : vector<1x128xf32>
    %690 = arith.subf %688, %689 : vector<1x128xf32>
    %cst_330 = arith.constant 0.000000e+00 : f32
    %691 = vector.broadcast %cst_330 : f32 to vector<1x128xf32>
    %692 = arith.maximumf %690, %691 : vector<1x128xf32>
    %693 = vector.broadcast %685 : vector<1x128xf32> to vector<64x128xf32>
    %694 = arith.subf %675, %693 : vector<64x128xf32>
    %cst_331 = arith.constant 9.99999993E-9 : f32
    %695 = vector.broadcast %cst_331 : f32 to vector<1x128xf32>
    %696 = arith.addf %692, %695 : vector<1x128xf32>
    %697 = math.rsqrt %696 : vector<1x128xf32>
    %698 = vector.broadcast %697 : vector<1x128xf32> to vector<64x128xf32>
    %699 = arith.mulf %694, %698 : vector<64x128xf32>
    %c33 = arith.constant 33 : index
    %c0_332 = arith.constant 0 : index
    %c0_333 = arith.constant 0 : index
    %700 = vector.load %arg5[%c33, %c0_332, %c0_333] : memref<41x64x1xf32, #tpu.memory_space<vmem>>, vector<1x64x1xf32>
    %701 = vector.shape_cast %700 : vector<1x64x1xf32> to vector<64x1xf32>
    %702 = vector.broadcast %701 : vector<64x1xf32> to vector<64x128xf32>
    %703 = arith.mulf %699, %702 : vector<64x128xf32>
    %c34 = arith.constant 34 : index
    %c0_334 = arith.constant 0 : index
    %c0_335 = arith.constant 0 : index
    %704 = vector.load %arg5[%c34, %c0_334, %c0_335] : memref<41x64x1xf32, #tpu.memory_space<vmem>>, vector<1x64x1xf32>
    %705 = vector.shape_cast %704 : vector<1x64x1xf32> to vector<64x1xf32>
    %706 = vector.broadcast %705 : vector<64x1xf32> to vector<64x128xf32>
    %707 = arith.addf %703, %706 : vector<64x128xf32>
    %cst_336 = arith.constant 0.000000e+00 : f32
    %708 = vector.broadcast %cst_336 : f32 to vector<64x128xf32>
    %709 = arith.cmpf oge, %707, %708 : vector<64x128xf32>
    %cst_337 = arith.constant 2.500000e-01 : f32
    %710 = vector.broadcast %cst_337 : f32 to vector<64x128xf32>
    %711 = arith.mulf %710, %707 : vector<64x128xf32>
    %712 = arith.select %709, %707, %711 : vector<64x128xi1>, vector<64x128xf32>
    %713 = arith.truncf %712 : vector<64x128xf32> to vector<64x128xbf16>
    %714 = vector.extract_strided_slice %712 {offsets = [0, 127], sizes = [64, 1], strides = [1, 1]} : vector<64x128xf32> to vector<64x1xf32>
    %715 = vector.extract_strided_slice %712 {offsets = [0, 0], sizes = [64, 127], strides = [1, 1]} : vector<64x128xf32> to vector<64x127xf32>
    %716 = tpu.concatenate %714, %715 in 1 : vector<64x1xf32>, vector<64x127xf32> -> vector<64x128xf32>
    %c0_338 = arith.constant 0 : index
    %c0_339 = arith.constant 0 : index
    %c0_340 = arith.constant 0 : index
    %717 = vector.load %arg6[%c0_338, %c0_339, %c0_340] : memref<4x8x128xf32, #tpu.memory_space<vmem>>, vector<1x8x128xf32>
    %718 = vector.shape_cast %717 : vector<1x8x128xf32> to vector<8x128xf32>
    %719 = vector.extract_strided_slice %718 {offsets = [0, 0], sizes = [1, 128], strides = [1, 1]} : vector<8x128xf32> to vector<1x128xf32>
    %720 = vector.broadcast %719 : vector<1x128xf32> to vector<64x128xf32>
    %721 = arith.mulf %716, %720 : vector<64x128xf32>
    %722 = arith.truncf %721 : vector<64x128xf32> to vector<64x128xbf16>
    %c2_341 = arith.constant 2 : index
    %c0_342 = arith.constant 0 : index
    %c0_343 = arith.constant 0 : index
    %723 = vector.load %arg10[%c2_341, %c0_342, %c0_343] : memref<4x64x128xf32, #tpu.memory_space<vmem>>, vector<1x64x128xf32>
    %724 = vector.shape_cast %723 : vector<1x64x128xf32> to vector<64x128xf32>
    %725 = arith.truncf %724 : vector<64x128xf32> to vector<64x128xbf16>
    %726 = vector.extract_strided_slice %724 {offsets = [0, 127], sizes = [64, 1], strides = [1, 1]} : vector<64x128xf32> to vector<64x1xf32>
    %727 = vector.extract_strided_slice %724 {offsets = [0, 0], sizes = [64, 127], strides = [1, 1]} : vector<64x128xf32> to vector<64x127xf32>
    %728 = tpu.concatenate %726, %727 in 1 : vector<64x1xf32>, vector<64x127xf32> -> vector<64x128xf32>
    %c0_344 = arith.constant 0 : index
    %c0_345 = arith.constant 0 : index
    %c0_346 = arith.constant 0 : index
    %729 = vector.load %arg6[%c0_344, %c0_345, %c0_346] : memref<4x8x128xf32, #tpu.memory_space<vmem>>, vector<1x8x128xf32>
    %730 = vector.shape_cast %729 : vector<1x8x128xf32> to vector<8x128xf32>
    %731 = vector.extract_strided_slice %730 {offsets = [0, 0], sizes = [1, 128], strides = [1, 1]} : vector<8x128xf32> to vector<1x128xf32>
    %732 = vector.broadcast %731 : vector<1x128xf32> to vector<64x128xf32>
    %733 = arith.mulf %728, %732 : vector<64x128xf32>
    %734 = arith.truncf %733 : vector<64x128xf32> to vector<64x128xbf16>
    %735 = tpu.concatenate %713, %722, %725, %734 in 0 : vector<64x128xbf16>, vector<64x128xbf16>, vector<64x128xbf16>, vector<64x128xbf16> -> vector<256x128xbf16>
    %c4_347 = arith.constant 4 : index
    %c0_348 = arith.constant 0 : index
    %c0_349 = arith.constant 0 : index
    %736 = vector.load %arg4[%c4_347, %c0_348, %c0_349] : memref<6x64x256xbf16, #tpu.memory_space<vmem>>, vector<1x64x256xbf16>
    %737 = vector.shape_cast %736 : vector<1x64x256xbf16> to vector<64x256xbf16>
    %cst_350 = arith.constant dense<0.000000e+00> : vector<64x128xf32>
    %738 = tpu.matmul %737, %735, %cst_350 {dimension_numbers = #tpu.dot_dimension_numbers<[1], [0], [0], [1], [0, 0, 1, 1], [], []>} : vector<64x256xbf16>, vector<256x128xbf16>, vector<64x128xf32> -> vector<64x128xf32>
    %c35 = arith.constant 35 : index
    %c0_351 = arith.constant 0 : index
    %c0_352 = arith.constant 0 : index
    %739 = vector.load %arg5[%c35, %c0_351, %c0_352] : memref<41x64x1xf32, #tpu.memory_space<vmem>>, vector<1x64x1xf32>
    %740 = vector.shape_cast %739 : vector<1x64x1xf32> to vector<64x1xf32>
    %741 = vector.broadcast %740 : vector<64x1xf32> to vector<64x128xf32>
    %742 = arith.addf %738, %741 : vector<64x128xf32>
    %cst_353 = arith.constant dense<0.000000e+00> : vector<128xf32>
    %743 = vector.multi_reduction <add>, %742, %cst_353 [0] : vector<64x128xf32> to vector<128xf32>
    %744 = vector.shape_cast %743 : vector<128xf32> to vector<1x128xf32>
    %745 = arith.mulf %742, %742 : vector<64x128xf32>
    %cst_354 = arith.constant dense<0.000000e+00> : vector<128xf32>
    %746 = vector.multi_reduction <add>, %745, %cst_354 [0] : vector<64x128xf32> to vector<128xf32>
    %747 = vector.shape_cast %746 : vector<128xf32> to vector<1x128xf32>
    %748 = tpu.concatenate %744, %747, %11 in 0 : vector<1x128xf32>, vector<1x128xf32>, vector<6x128xf32> -> vector<8x128xf32>
    %cst_355 = arith.constant dense<0.000000e+00> : vector<8x128xf32>
    %749 = tpu.matmul %748, %10, %cst_355 {dimension_numbers = #tpu.dot_dimension_numbers<[1], [0], [0], [1], [0, 0, 1, 1], [], []>} : vector<8x128xf32>, vector<128x128xf32>, vector<8x128xf32> -> vector<8x128xf32>
    %750 = vector.extract_strided_slice %749 {offsets = [0, 0], sizes = [1, 128], strides = [1, 1]} : vector<8x128xf32> to vector<1x128xf32>
    %cst_356 = arith.constant 9.765625E-4 : f32
    %751 = vector.broadcast %cst_356 : f32 to vector<1x128xf32>
    %752 = arith.mulf %750, %751 : vector<1x128xf32>
    %753 = vector.extract_strided_slice %749 {offsets = [1, 0], sizes = [1, 128], strides = [1, 1]} : vector<8x128xf32> to vector<1x128xf32>
    %cst_357 = arith.constant 9.765625E-4 : f32
    %754 = vector.broadcast %cst_357 : f32 to vector<1x128xf32>
    %755 = arith.mulf %753, %754 : vector<1x128xf32>
    %756 = arith.mulf %752, %752 : vector<1x128xf32>
    %757 = arith.subf %755, %756 : vector<1x128xf32>
    %cst_358 = arith.constant 0.000000e+00 : f32
    %758 = vector.broadcast %cst_358 : f32 to vector<1x128xf32>
    %759 = arith.maximumf %757, %758 : vector<1x128xf32>
    %760 = vector.broadcast %752 : vector<1x128xf32> to vector<64x128xf32>
    %761 = arith.subf %742, %760 : vector<64x128xf32>
    %cst_359 = arith.constant 9.99999993E-9 : f32
    %762 = vector.broadcast %cst_359 : f32 to vector<1x128xf32>
    %763 = arith.addf %759, %762 : vector<1x128xf32>
    %764 = math.rsqrt %763 : vector<1x128xf32>
    %765 = vector.broadcast %764 : vector<1x128xf32> to vector<64x128xf32>
    %766 = arith.mulf %761, %765 : vector<64x128xf32>
    %c36 = arith.constant 36 : index
    %c0_360 = arith.constant 0 : index
    %c0_361 = arith.constant 0 : index
    %767 = vector.load %arg5[%c36, %c0_360, %c0_361] : memref<41x64x1xf32, #tpu.memory_space<vmem>>, vector<1x64x1xf32>
    %768 = vector.shape_cast %767 : vector<1x64x1xf32> to vector<64x1xf32>
    %769 = vector.broadcast %768 : vector<64x1xf32> to vector<64x128xf32>
    %770 = arith.mulf %766, %769 : vector<64x128xf32>
    %c37 = arith.constant 37 : index
    %c0_362 = arith.constant 0 : index
    %c0_363 = arith.constant 0 : index
    %771 = vector.load %arg5[%c37, %c0_362, %c0_363] : memref<41x64x1xf32, #tpu.memory_space<vmem>>, vector<1x64x1xf32>
    %772 = vector.shape_cast %771 : vector<1x64x1xf32> to vector<64x1xf32>
    %773 = vector.broadcast %772 : vector<64x1xf32> to vector<64x128xf32>
    %774 = arith.addf %770, %773 : vector<64x128xf32>
    %cst_364 = arith.constant 0.000000e+00 : f32
    %775 = vector.broadcast %cst_364 : f32 to vector<64x128xf32>
    %776 = arith.cmpf oge, %774, %775 : vector<64x128xf32>
    %cst_365 = arith.constant 2.500000e-01 : f32
    %777 = vector.broadcast %cst_365 : f32 to vector<64x128xf32>
    %778 = arith.mulf %777, %774 : vector<64x128xf32>
    %779 = arith.select %776, %774, %778 : vector<64x128xi1>, vector<64x128xf32>
    %780 = arith.truncf %779 : vector<64x128xf32> to vector<64x128xbf16>
    %781 = vector.extract_strided_slice %779 {offsets = [0, 127], sizes = [64, 1], strides = [1, 1]} : vector<64x128xf32> to vector<64x1xf32>
    %782 = vector.extract_strided_slice %779 {offsets = [0, 0], sizes = [64, 127], strides = [1, 1]} : vector<64x128xf32> to vector<64x127xf32>
    %783 = tpu.concatenate %781, %782 in 1 : vector<64x1xf32>, vector<64x127xf32> -> vector<64x128xf32>
    %c0_366 = arith.constant 0 : index
    %c0_367 = arith.constant 0 : index
    %c0_368 = arith.constant 0 : index
    %784 = vector.load %arg6[%c0_366, %c0_367, %c0_368] : memref<4x8x128xf32, #tpu.memory_space<vmem>>, vector<1x8x128xf32>
    %785 = vector.shape_cast %784 : vector<1x8x128xf32> to vector<8x128xf32>
    %786 = vector.extract_strided_slice %785 {offsets = [0, 0], sizes = [1, 128], strides = [1, 1]} : vector<8x128xf32> to vector<1x128xf32>
    %787 = vector.broadcast %786 : vector<1x128xf32> to vector<64x128xf32>
    %788 = arith.mulf %783, %787 : vector<64x128xf32>
    %789 = arith.truncf %788 : vector<64x128xf32> to vector<64x128xbf16>
    %c1_369 = arith.constant 1 : index
    %c0_370 = arith.constant 0 : index
    %c0_371 = arith.constant 0 : index
    %790 = vector.load %arg10[%c1_369, %c0_370, %c0_371] : memref<4x64x128xf32, #tpu.memory_space<vmem>>, vector<1x64x128xf32>
    %791 = vector.shape_cast %790 : vector<1x64x128xf32> to vector<64x128xf32>
    %792 = arith.truncf %791 : vector<64x128xf32> to vector<64x128xbf16>
    %793 = vector.extract_strided_slice %791 {offsets = [0, 127], sizes = [64, 1], strides = [1, 1]} : vector<64x128xf32> to vector<64x1xf32>
    %794 = vector.extract_strided_slice %791 {offsets = [0, 0], sizes = [64, 127], strides = [1, 1]} : vector<64x128xf32> to vector<64x127xf32>
    %795 = tpu.concatenate %793, %794 in 1 : vector<64x1xf32>, vector<64x127xf32> -> vector<64x128xf32>
    %c0_372 = arith.constant 0 : index
    %c0_373 = arith.constant 0 : index
    %c0_374 = arith.constant 0 : index
    %796 = vector.load %arg6[%c0_372, %c0_373, %c0_374] : memref<4x8x128xf32, #tpu.memory_space<vmem>>, vector<1x8x128xf32>
    %797 = vector.shape_cast %796 : vector<1x8x128xf32> to vector<8x128xf32>
    %798 = vector.extract_strided_slice %797 {offsets = [0, 0], sizes = [1, 128], strides = [1, 1]} : vector<8x128xf32> to vector<1x128xf32>
    %799 = vector.broadcast %798 : vector<1x128xf32> to vector<64x128xf32>
    %800 = arith.mulf %795, %799 : vector<64x128xf32>
    %801 = arith.truncf %800 : vector<64x128xf32> to vector<64x128xbf16>
    %802 = tpu.concatenate %780, %789, %792, %801 in 0 : vector<64x128xbf16>, vector<64x128xbf16>, vector<64x128xbf16>, vector<64x128xbf16> -> vector<256x128xbf16>
    %c5_375 = arith.constant 5 : index
    %c0_376 = arith.constant 0 : index
    %c0_377 = arith.constant 0 : index
    %803 = vector.load %arg4[%c5_375, %c0_376, %c0_377] : memref<6x64x256xbf16, #tpu.memory_space<vmem>>, vector<1x64x256xbf16>
    %804 = vector.shape_cast %803 : vector<1x64x256xbf16> to vector<64x256xbf16>
    %cst_378 = arith.constant dense<0.000000e+00> : vector<64x128xf32>
    %805 = tpu.matmul %804, %802, %cst_378 {dimension_numbers = #tpu.dot_dimension_numbers<[1], [0], [0], [1], [0, 0, 1, 1], [], []>} : vector<64x256xbf16>, vector<256x128xbf16>, vector<64x128xf32> -> vector<64x128xf32>
    %c38 = arith.constant 38 : index
    %c0_379 = arith.constant 0 : index
    %c0_380 = arith.constant 0 : index
    %806 = vector.load %arg5[%c38, %c0_379, %c0_380] : memref<41x64x1xf32, #tpu.memory_space<vmem>>, vector<1x64x1xf32>
    %807 = vector.shape_cast %806 : vector<1x64x1xf32> to vector<64x1xf32>
    %808 = vector.broadcast %807 : vector<64x1xf32> to vector<64x128xf32>
    %809 = arith.addf %805, %808 : vector<64x128xf32>
    %cst_381 = arith.constant dense<0.000000e+00> : vector<128xf32>
    %810 = vector.multi_reduction <add>, %809, %cst_381 [0] : vector<64x128xf32> to vector<128xf32>
    %811 = vector.shape_cast %810 : vector<128xf32> to vector<1x128xf32>
    %812 = arith.mulf %809, %809 : vector<64x128xf32>
    %cst_382 = arith.constant dense<0.000000e+00> : vector<128xf32>
    %813 = vector.multi_reduction <add>, %812, %cst_382 [0] : vector<64x128xf32> to vector<128xf32>
    %814 = vector.shape_cast %813 : vector<128xf32> to vector<1x128xf32>
    %815 = tpu.concatenate %811, %814, %11 in 0 : vector<1x128xf32>, vector<1x128xf32>, vector<6x128xf32> -> vector<8x128xf32>
    %cst_383 = arith.constant dense<0.000000e+00> : vector<8x128xf32>
    %816 = tpu.matmul %815, %10, %cst_383 {dimension_numbers = #tpu.dot_dimension_numbers<[1], [0], [0], [1], [0, 0, 1, 1], [], []>} : vector<8x128xf32>, vector<128x128xf32>, vector<8x128xf32> -> vector<8x128xf32>
    %817 = vector.extract_strided_slice %816 {offsets = [0, 0], sizes = [1, 128], strides = [1, 1]} : vector<8x128xf32> to vector<1x128xf32>
    %cst_384 = arith.constant 9.765625E-4 : f32
    %818 = vector.broadcast %cst_384 : f32 to vector<1x128xf32>
    %819 = arith.mulf %817, %818 : vector<1x128xf32>
    %820 = vector.extract_strided_slice %816 {offsets = [1, 0], sizes = [1, 128], strides = [1, 1]} : vector<8x128xf32> to vector<1x128xf32>
    %cst_385 = arith.constant 9.765625E-4 : f32
    %821 = vector.broadcast %cst_385 : f32 to vector<1x128xf32>
    %822 = arith.mulf %820, %821 : vector<1x128xf32>
    %823 = arith.mulf %819, %819 : vector<1x128xf32>
    %824 = arith.subf %822, %823 : vector<1x128xf32>
    %cst_386 = arith.constant 0.000000e+00 : f32
    %825 = vector.broadcast %cst_386 : f32 to vector<1x128xf32>
    %826 = arith.maximumf %824, %825 : vector<1x128xf32>
    %827 = vector.broadcast %819 : vector<1x128xf32> to vector<64x128xf32>
    %828 = arith.subf %809, %827 : vector<64x128xf32>
    %cst_387 = arith.constant 9.99999993E-9 : f32
    %829 = vector.broadcast %cst_387 : f32 to vector<1x128xf32>
    %830 = arith.addf %826, %829 : vector<1x128xf32>
    %831 = math.rsqrt %830 : vector<1x128xf32>
    %832 = vector.broadcast %831 : vector<1x128xf32> to vector<64x128xf32>
    %833 = arith.mulf %828, %832 : vector<64x128xf32>
    %c39 = arith.constant 39 : index
    %c0_388 = arith.constant 0 : index
    %c0_389 = arith.constant 0 : index
    %834 = vector.load %arg5[%c39, %c0_388, %c0_389] : memref<41x64x1xf32, #tpu.memory_space<vmem>>, vector<1x64x1xf32>
    %835 = vector.shape_cast %834 : vector<1x64x1xf32> to vector<64x1xf32>
    %836 = vector.broadcast %835 : vector<64x1xf32> to vector<64x128xf32>
    %837 = arith.mulf %833, %836 : vector<64x128xf32>
    %c40_390 = arith.constant 40 : index
    %c0_391 = arith.constant 0 : index
    %c0_392 = arith.constant 0 : index
    %838 = vector.load %arg5[%c40_390, %c0_391, %c0_392] : memref<41x64x1xf32, #tpu.memory_space<vmem>>, vector<1x64x1xf32>
    %839 = vector.shape_cast %838 : vector<1x64x1xf32> to vector<64x1xf32>
    %840 = vector.broadcast %839 : vector<64x1xf32> to vector<64x128xf32>
    %841 = arith.addf %837, %840 : vector<64x128xf32>
    %cst_393 = arith.constant 0.000000e+00 : f32
    %842 = vector.broadcast %cst_393 : f32 to vector<64x128xf32>
    %843 = arith.cmpf oge, %841, %842 : vector<64x128xf32>
    %cst_394 = arith.constant 2.500000e-01 : f32
    %844 = vector.broadcast %cst_394 : f32 to vector<64x128xf32>
    %845 = arith.mulf %844, %841 : vector<64x128xf32>
    %846 = arith.select %843, %841, %845 : vector<64x128xi1>, vector<64x128xf32>
    %c0_395 = arith.constant 0 : index
    %c0_396 = arith.constant 0 : index
    %c0_397 = arith.constant 0 : index
    %847 = vector.load %arg10[%c0_395, %c0_396, %c0_397] : memref<4x64x128xf32, #tpu.memory_space<vmem>>, vector<1x64x128xf32>
    %848 = vector.shape_cast %847 : vector<1x64x128xf32> to vector<64x128xf32>
    %849 = arith.addf %846, %848 : vector<64x128xf32>
    %c0_398 = arith.constant 0 : index
    %c0_399 = arith.constant 0 : index
    %c0_400 = arith.constant 0 : index
    %850 = vector.load %arg8[%c0_398, %c0_399, %c0_400] : memref<1x64x128xf32, #tpu.memory_space<vmem>>, vector<1x64x128xf32>
    %851 = vector.shape_cast %850 : vector<1x64x128xf32> to vector<64x128xf32>
    %852 = vector.shape_cast %849 : vector<64x128xf32> to vector<1x64x128xf32>
    tpu.vector_store %arg8[%c0_398, %c0_399, %c0_400], %852 {strides = array<i32>} : memref<1x64x128xf32, #tpu.memory_space<vmem>>, vector<1x64x128xf32>,
    return
  }
  func.func @transform_0(%arg0: i32) -> (i32, i32, i32, i32) {
    %c0_i32 = arith.constant 0 : i32
    %c0_i32_0 = arith.constant 0 : i32
    %c0_i32_1 = arith.constant 0 : i32
    %c0_i32_2 = arith.constant 0 : i32
    return %arg0, %c0_i32, %c0_i32_0, %c0_i32_1 : i32, i32, i32, i32
  }
  func.func @transform_1(%arg0: i32) -> (i32, i32, i32) {
    %c0_i32 = arith.constant 0 : i32
    %c0_i32_0 = arith.constant 0 : i32
    %c0_i32_1 = arith.constant 0 : i32
    %c0_i32_2 = arith.constant 0 : i32
    return %c0_i32, %c0_i32_0, %c0_i32_1 : i32, i32, i32
  }
  func.func @transform_2(%arg0: i32) -> (i32, i32, i32) {
    %c0_i32 = arith.constant 0 : i32
    %c0_i32_0 = arith.constant 0 : i32
    %c0_i32_1 = arith.constant 0 : i32
    %c0_i32_2 = arith.constant 0 : i32
    return %c0_i32, %c0_i32_0, %c0_i32_1 : i32, i32, i32
  }
  func.func @transform_3(%arg0: i32) -> (i32, i32, i32) {
    %c0_i32 = arith.constant 0 : i32
    %c0_i32_0 = arith.constant 0 : i32
    %c0_i32_1 = arith.constant 0 : i32
    %c0_i32_2 = arith.constant 0 : i32
    return %c0_i32, %c0_i32_0, %c0_i32_1 : i32, i32, i32
  }
  func.func @transform_4(%arg0: i32) -> (i32, i32, i32) {
    %c0_i32 = arith.constant 0 : i32
    %c0_i32_0 = arith.constant 0 : i32
    %c0_i32_1 = arith.constant 0 : i32
    %c0_i32_2 = arith.constant 0 : i32
    return %c0_i32, %c0_i32_0, %c0_i32_1 : i32, i32, i32
  }
  func.func @transform_5(%arg0: i32) -> (i32, i32, i32) {
    %c0_i32 = arith.constant 0 : i32
    %c0_i32_0 = arith.constant 0 : i32
    %c0_i32_1 = arith.constant 0 : i32
    %c0_i32_2 = arith.constant 0 : i32
    return %c0_i32, %c0_i32_0, %c0_i32_1 : i32, i32, i32
  }
  func.func @transform_6(%arg0: i32) -> (i32, i32) {
    %c0_i32 = arith.constant 0 : i32
    %c0_i32_0 = arith.constant 0 : i32
    %c0_i32_1 = arith.constant 0 : i32
    return %c0_i32, %c0_i32_0 : i32, i32
  }
  func.func @transform_7(%arg0: i32) -> (i32, i32, i32) {
    %c0_i32 = arith.constant 0 : i32
    %c0_i32_0 = arith.constant 0 : i32
    %c0_i32_1 = arith.constant 0 : i32
    return %arg0, %c0_i32, %c0_i32_0 : i32, i32, i32
  }
}

</mosaic_0001>

<llo_original>
// kernel: tpu_custom_call.1
$region0: #{tpu_custom_call.1}
  #allocation0 [shape = 'u32[]', space=smem, size = 0x4, offset = 0x4, fixed_abs, tag = 'smem constant byte address 0x4 - core index']
  #allocation1 [shape = 'u32[144,128]{1,0:T(1,128)}', space=vmem, size = 0x12000, scoped, tag = 'internal scratch']
  %s0 = inlined_call_operand.hbm [shape: f32[8,128], index: 0, kind: input, shape index: {}]
  %s1 = inlined_call_operand.hbm [shape: f32[8,128], index: 1, kind: output, shape index: {}]
  %s2 = sld [smem:[#allocation0]]
  $region18: #{tpu_custom_call.1} parent=0
    _
  %s4 = ssub.s32 1, %s2
  %s5 = scalar_select 0, %s4, %s2
  $region1: #{tpu_custom_call.1} parent=0
    #allocation2 [shape = 'u8[4096]{0}', space=vmem, size = 0x1000, scoped, tag = 'input window, operand 0, single buffered']
    #allocation3 [shape = 's32[1]{0}', space=sflag, size = 0x4, scoped, tag = 'scoped memory for tpu_custom_call.1']
    #allocation4 [shape = 's32[1]{0}', space=sflag, size = 0x4, scoped, tag = 'scoped memory for tpu_custom_call.1']
    #allocation5 [shape = 'u8[4096]{0}', space=vmem, size = 0x1000, scoped, tag = 'output window, operand 0, single buffered']
    %6 = vsyncpa [#allocation3], 0
    %7 = vsyncpa [#allocation4], 0
    // Predicated region
    $region2: #{tpu_custom_call.1} parent=1 // pred_check
      _
    $region3: #{tpu_custom_call.1} parent=1 // pred_check_branch
      %9 = sbr.rel (0) target = $region5
    $region4: #{tpu_custom_call.1} parent=1 // pred_region
      %s11 = ssub.s32 128, 128
      %12 = vsyncadd [#allocation3], %s11
      %s14 = sshll.u32 [#allocation2], 4
      %s15 = int_to_ptr.vmem [resolvable:$true] %s14
      %17 = dma.hbm_to_vmem [thread:$0]  %s0, 128, %s15, [#allocation3]
    $region5: #{tpu_custom_call.1} parent=1 // pred_fallthru
      _
    // Predicated region
    $region6: #{tpu_custom_call.1} parent=1 // pred_check
      _
    $region7: #{tpu_custom_call.1} parent=1 // pred_check_branch
      %19 = sbr.rel (0) target = $region9
    $region8: #{tpu_custom_call.1} parent=1 // pred_region
      %20 = dma.done [#allocation3], 128
    $region9: #{tpu_custom_call.1} parent=1 // pred_fallthru
      _
    %v21 = vld [vmem:[#allocation2] sm:$0xff]
    %22 = vrot.lane.b32.xlu0 %v21, 1
    %v23 = vpop.permute.xlu0 %22
    %24 = vst [vmem:[#allocation5] sm:$0xff] %v23
    // Predicated region
    $region10: #{tpu_custom_call.1} parent=1 // pred_check
      _
    $region11: #{tpu_custom_call.1} parent=1 // pred_check_branch
      %26 = sbr.rel (0) target = $region13
    $region12: #{tpu_custom_call.1} parent=1 // pred_region
      %s28 = ssub.s32 128, 128
      %29 = vsyncadd [#allocation4], %s28
      %s31 = sshll.u32 [#allocation5], 4
      %s32 = int_to_ptr.vmem [resolvable:$true] %s31
      %34 = dma.vmem_to_hbm [thread:$0]  %s32, 128, %s1, [#allocation4]
    $region13: #{tpu_custom_call.1} parent=1 // pred_fallthru
      _
    // Predicated region
    $region14: #{tpu_custom_call.1} parent=1 // pred_check
      _
    $region15: #{tpu_custom_call.1} parent=1 // pred_check_branch
      %36 = sbr.rel (0) target = $region17
    $region16: #{tpu_custom_call.1} parent=1 // pred_region
      %37 = dma.done [#allocation4], 128
    $region17: #{tpu_custom_call.1} parent=1 // pred_fallthru
      _
    %38 = vsyncpa [#allocation3], 1
    %39 = vsyncpa [#allocation4], 1

// kernel: fwd.1
$region0: #{fwd.1}
  #allocation0 [shape = 'u32[]', space=smem, size = 0x4, offset = 0x4, fixed_abs, tag = 'smem constant byte address 0x4 - core index']
  #allocation1 [shape = 'u32[144,128]{1,0:T(1,128)}', space=vmem, size = 0x12000, scoped, tag = 'internal scratch']
  #allocation2 [shape = 'f32[64,128]{1,0:T(8,128)}', space=vmem, size = 0x8000, scoped, tag = 'scratch operand']
  #allocation3 [shape = 'f32[4,64,128]{2,1,0:T(8,128)}', space=vmem, size = 0x20000, scoped, tag = 'scratch operand']
  %s0 = inlined_call_operand.vmem [shape: f32[2,4,64,128], index: 0, kind: input, shape index: {}]
  %s1 = inlined_call_operand.vmem [shape: bf16[3,64,64], index: 1, kind: input, shape index: {}]
  %s2 = inlined_call_operand.vmem [shape: bf16[6,64,128], index: 2, kind: input, shape index: {}]
  %s3 = inlined_call_operand.vmem [shape: bf16[6,64,256], index: 3, kind: input, shape index: {}]
  %s4 = inlined_call_operand.vmem [shape: f32[41,64,1], index: 4, kind: input, shape index: {}]
  %s5 = inlined_call_operand.vmem [shape: f32[4,8,128], index: 5, kind: input, shape index: {}]
  %s6 = inlined_call_operand.vmem [shape: f32[128,128], index: 6, kind: input, shape index: {}]
  %s7 = inlined_call_operand.vmem [shape: f32[2,64,128], index: 7, kind: output, shape index: {}]
  %s8 = sld [smem:[#allocation0]]
  $region61: #{fwd.1} parent=0
    _
  %s10 = ssub.s32 1, %s8
  %s11 = scalar_select 0, %s10, %s8
  loop: start=0, step=1, limit=4
  $region2: #{fwd.1} parent=0 // loop_pre_header
    _
  $region3: #{fwd.1} parent=0 // loop_header
    %s13 = sphi 0, %s17
    %p14 = scmp.ge.s32.totalorder %s13, 4
    %s23 = sphi 0, %s25
    %s26 = sphi 0, %s23
    %s27 = sphi 0, %s26
    %s43 = sphi 0, %s27
    %s47 = sphi 0, %s47
    %s49 = sphi 0, %s47
    %s50 = sphi 0, %s49
    %s64 = sphi 0, %s50
    %s68 = sphi 0, %s68
    %s70 = sphi 0, %s68
    %s71 = sphi 0, %s70
    %s85 = sphi 0, %s71
    %s89 = sphi 0, %s89
    %s91 = sphi 0, %s89
    %s92 = sphi 0, %s91
    %s106 = sphi 0, %s92
    %s110 = sphi 0, %s110
    %s112 = sphi 0, %s110
    %s113 = sphi 0, %s112
    %s127 = sphi 0, %s113
    %s131 = sphi 0, %s131
    %s133 = sphi 0, %s131
    %s134 = sphi 0, %s133
    %s148 = sphi 0, %s134
    %s152 = sphi 0, %s152
    %s154 = sphi 0, %s152
    %s155 = sphi 0, %s154
    %s169 = sphi 0, %s155
    %s175 = sphi 0, %s177
    %s178 = sphi 0, %s175
    %s179 = sphi 0, %s178
    %s195 = sphi 0, %s179
  $region4: #{fwd.1} parent=0 // loop_header_branch
    %16 = sbr.rel (%p14) target = $region8
  $region5: #{fwd.1} parent=0 // loop_body
    %s18 = ssub.s32 %s13, 1
    %s19 = ssub.s32 %s13, 2
    %s20 = sadd.s32 %s13, 1
    %s21 = ssub.s32 %s13, %s20
    %p22 = scmp.eq.s32.totalorder %s21, 0
    %s24 = sadd.s32 %s23, 1
    %s25 = scalar_select %p22, %s23, %s24
    %p28 = pneg %p22
    %p29 = scmp.eq.s32.totalorder %s13, 1
    %p30 = por %p28, %p29
    %p31 = scmp.ne.s32.totalorder %s23, %s26
    %p32 = scmp.eq.s32.totalorder %s13, 0
    %p33 = por %p31, %p32
    %p34 = scmp.ne.s32.totalorder %s23, %s26
    %p35 = scmp.eq.s32.totalorder %s18, 1
    %p36 = por %p34, %p35
    %p37 = scmp.ne.s32.totalorder %s26, %s27
    %p38 = scmp.eq.s32.totalorder %s18, 0
    %p39 = por %p37, %p38
    %p40 = scmp.ne.s32.totalorder %s26, %s27
    %p41 = scmp.eq.s32.totalorder %s19, 1
    %p42 = por %p40, %p41
    %p44 = scmp.ne.s32.totalorder %s27, %s43
    %p45 = scmp.eq.s32.totalorder %s19, 0
    %p46 = por %p44, %p45
    %s48 = sadd.s32 %s47, 1
    %p51 = scmp.eq.s32.totalorder %s13, 1
    %p52 = scmp.ne.s32.totalorder %s47, %s49
    %p53 = scmp.eq.s32.totalorder %s13, 0
    %p54 = por %p52, %p53
    %p55 = scmp.ne.s32.totalorder %s47, %s49
    %p56 = scmp.eq.s32.totalorder %s18, 1
    %p57 = por %p55, %p56
    %p58 = scmp.ne.s32.totalorder %s49, %s50
    %p59 = scmp.eq.s32.totalorder %s18, 0
    %p60 = por %p58, %p59
    %p61 = scmp.ne.s32.totalorder %s49, %s50
    %p62 = scmp.eq.s32.totalorder %s19, 1
    %p63 = por %p61, %p62
    %p65 = scmp.ne.s32.totalorder %s50, %s64
    %p66 = scmp.eq.s32.totalorder %s19, 0
    %p67 = por %p65, %p66
    %s69 = sadd.s32 %s68, 1
    %p72 = scmp.eq.s32.totalorder %s13, 1
    %p73 = scmp.ne.s32.totalorder %s68, %s70
    %p74 = scmp.eq.s32.totalorder %s13, 0
    %p75 = por %p73, %p74
    %p76 = scmp.ne.s32.totalorder %s68, %s70
    %p77 = scmp.eq.s32.totalorder %s18, 1
    %p78 = por %p76, %p77
    %p79 = scmp.ne.s32.totalorder %s70, %s71
    %p80 = scmp.eq.s32.totalorder %s18, 0
    %p81 = por %p79, %p80
    %p82 = scmp.ne.s32.totalorder %s70, %s71
    %p83 = scmp.eq.s32.totalorder %s19, 1
    %p84 = por %p82, %p83
    %p86 = scmp.ne.s32.totalorder %s71, %s85
    %p87 = scmp.eq.s32.totalorder %s19, 0
    %p88 = por %p86, %p87
    %s90 = sadd.s32 %s89, 1
    %p93 = scmp.eq.s32.totalorder %s13, 1
    %p94 = scmp.ne.s32.totalorder %s89, %s91
    %p95 = scmp.eq.s32.totalorder %s13, 0
    %p96 = por %p94, %p95
    %p97 = scmp.ne.s32.totalorder %s89, %s91
    %p98 = scmp.eq.s32.totalorder %s18, 1
    %p99 = por %p97, %p98
    %p100 = scmp.ne.s32.totalorder %s91, %s92
    %p101 = scmp.eq.s32.totalorder %s18, 0
    %p102 = por %p100, %p101
    %p103 = scmp.ne.s32.totalorder %s91, %s92
    %p104 = scmp.eq.s32.totalorder %s19, 1
    %p105 = por %p103, %p104
    %p107 = scmp.ne.s32.totalorder %s92, %s106
    %p108 = scmp.eq.s32.totalorder %s19, 0
    %p109 = por %p107, %p108
    %s111 = sadd.s32 %s110, 1
    %p114 = scmp.eq.s32.totalorder %s13, 1
    %p115 = scmp.ne.s32.totalorder %s110, %s112
    %p116 = scmp.eq.s32.totalorder %s13, 0
    %p117 = por %p115, %p116
    %p118 = scmp.ne.s32.totalorder %s110, %s112
    %p119 = scmp.eq.s32.totalorder %s18, 1
    %p120 = por %p118, %p119
    %p121 = scmp.ne.s32.totalorder %s112, %s113
    %p122 = scmp.eq.s32.totalorder %s18, 0
    %p123 = por %p121, %p122
    %p124 = scmp.ne.s32.totalorder %s112, %s113
    %p125 = scmp.eq.s32.totalorder %s19, 1
    %p126 = por %p124, %p125
    %p128 = scmp.ne.s32.totalorder %s113, %s127
    %p129 = scmp.eq.s32.totalorder %s19, 0
    %p130 = por %p128, %p129
    %s132 = sadd.s32 %s131, 1
    %p135 = scmp.eq.s32.totalorder %s13, 1
    %p136 = scmp.ne.s32.totalorder %s131, %s133
    %p137 = scmp.eq.s32.totalorder %s13, 0
    %p138 = por %p136, %p137
    %p139 = scmp.ne.s32.totalorder %s131, %s133
    %p140 = scmp.eq.s32.totalorder %s18, 1
    %p141 = por %p139, %p140
    %p142 = scmp.ne.s32.totalorder %s133, %s134
    %p143 = scmp.eq.s32.totalorder %s18, 0
    %p144 = por %p142, %p143
    %p145 = scmp.ne.s32.totalorder %s133, %s134
    %p146 = scmp.eq.s32.totalorder %s19, 1
    %p147 = por %p145, %p146
    %p149 = scmp.ne.s32.totalorder %s134, %s148
    %p150 = scmp.eq.s32.totalorder %s19, 0
    %p151 = por %p149, %p150
    %s153 = sadd.s32 %s152, 1
    %p156 = scmp.eq.s32.totalorder %s13, 1
    %p157 = scmp.ne.s32.totalorder %s152, %s154
    %p158 = scmp.eq.s32.totalorder %s13, 0
    %p159 = por %p157, %p158
    %p160 = scmp.ne.s32.totalorder %s152, %s154
    %p161 = scmp.eq.s32.totalorder %s18, 1
    %p162 = por %p160, %p161
    %p163 = scmp.ne.s32.totalorder %s154, %s155
    %p164 = scmp.eq.s32.totalorder %s18, 0
    %p165 = por %p163, %p164
    %p166 = scmp.ne.s32.totalorder %s154, %s155
    %p167 = scmp.eq.s32.totalorder %s19, 1
    %p168 = por %p166, %p167
    %p170 = scmp.ne.s32.totalorder %s155, %s169
    %p171 = scmp.eq.s32.totalorder %s19, 0
    %p172 = por %p170, %p171
    %s173 = ssub.s32 %s13, %s20
    %p174 = scmp.eq.s32.totalorder %s173, 0
    %s176 = sadd.s32 %s175, 1
    %s177 = scalar_select %p174, %s175, %s176
    %p180 = pneg %p174
    %p181 = scmp.eq.s32.totalorder %s13, 1
    %p182 = por %p180, %p181
    %p183 = scmp.ne.s32.totalorder %s175, %s178
    %p184 = scmp.eq.s32.totalorder %s13, 0
    %p185 = por %p183, %p184
    %p186 = scmp.ne.s32.totalorder %s175, %s178
    %p187 = scmp.eq.s32.totalorder %s18, 1
    %p188 = por %p186, %p187
    %p189 = scmp.ne.s32.totalorder %s178, %s179
    %p190 = scmp.eq.s32.totalorder %s18, 0
    %p191 = por %p189, %p190
    %p192 = scmp.ne.s32.totalorder %s178, %s179
    %p193 = scmp.eq.s32.totalorder %s19, 1
    %p194 = por %p192, %p193
    %p196 = scmp.ne.s32.totalorder %s179, %s195
    %p197 = scmp.eq.s32.totalorder %s19, 0
    %p198 = por %p196, %p197
    %p199 = scmp.le.s32.totalorder 1, %s13
    %p200 = scmp.lt.s32.totalorder %s13, 3
    %p201 = pnand %p199, %p200
    %p202 = pneg %p201
    // Predicated region
    $region9: #{fwd.1} parent=5 // pred_check
      _
    $region10: #{fwd.1} parent=5 // pred_check_branch
      %204 = sbr.rel (%p201) target = $region12
    $region11: #{fwd.1} parent=5 // pred_region
      %s205 = ssub.s32 %s13, 1
      // Predicated region
      $region13: #{fwd.1} parent=11 // pred_check
        %p206 = pneg %p60
      $region14: #{fwd.1} parent=11 // pred_check_branch
        %208 = sbr.rel (%p206) target = $region16
      $region15: #{fwd.1} parent=11 // pred_region
        _
      $region16: #{fwd.1} parent=11 // pred_fallthru
        _
      // Predicated region
      $region17: #{fwd.1} parent=11 // pred_check
        %p209 = pneg %p81
      $region18: #{fwd.1} parent=11 // pred_check_branch
        %211 = sbr.rel (%p209) target = $region20
      $region19: #{fwd.1} parent=11 // pred_region
        _
      $region20: #{fwd.1} parent=11 // pred_fallthru
        _
      // Predicated region
      $region21: #{fwd.1} parent=11 // pred_check
        %p212 = pneg %p102
      $region22: #{fwd.1} parent=11 // pred_check_branch
        %214 = sbr.rel (%p212) target = $region24
      $region23: #{fwd.1} parent=11 // pred_region
        _
      $region24: #{fwd.1} parent=11 // pred_fallthru
        _
      // Predicated region
      $region25: #{fwd.1} parent=11 // pred_check
        %p215 = pneg %p123
      $region26: #{fwd.1} parent=11 // pred_check_branch
        %217 = sbr.rel (%p215) target = $region28
      $region27: #{fwd.1} parent=11 // pred_region
        _
      $region28: #{fwd.1} parent=11 // pred_fallthru
        _
      // Predicated region
      $region29: #{fwd.1} parent=11 // pred_check
        %p218 = pneg %p144
      $region30: #{fwd.1} parent=11 // pred_check_branch
        %220 = sbr.rel (%p218) target = $region32
      $region31: #{fwd.1} parent=11 // pred_region
        _
      $region32: #{fwd.1} parent=11 // pred_fallthru
        _
      // Predicated region
      $region33: #{fwd.1} parent=11 // pred_check
        %p221 = pneg %p165
      $region34: #{fwd.1} parent=11 // pred_check_branch
        %223 = sbr.rel (%p221) target = $region36
      $region35: #{fwd.1} parent=11 // pred_region
        _
      $region36: #{fwd.1} parent=11 // pred_fallthru
        _
    $region12: #{fwd.1} parent=5 // pred_fallthru
      _
    %p224 = scmp.lt.s32.totalorder %s13, 2
    // Predicated region
    $region37: #{fwd.1} parent=5 // pred_check
      %p225 = pneg %p224
    $region38: #{fwd.1} parent=5 // pred_check_branch
      %227 = sbr.rel (%p225) target = $region40
    $region39: #{fwd.1} parent=5 // pred_region
      // Predicated region
      $region41: #{fwd.1} parent=39 // pred_check
        %p228 = pneg %p33
      $region42: #{fwd.1} parent=39 // pred_check_branch
        %230 = sbr.rel (%p228) target = $region44
      $region43: #{fwd.1} parent=39 // pred_region
        %p231 = scmp.lt.s32.totalorder %s13, 1
        %s232 = scalar_select %p231, %s13, 1
        %s233 = smul.addr %s232, 32
        %s234 = smul.addr %s233, 8
        %s235 = scalar_lea.vmem %s0, %s234
      $region44: #{fwd.1} parent=39 // pred_fallthru
        _
    $region40: #{fwd.1} parent=5 // pred_fallthru
      _
    %p236 = scmp.le.s32.totalorder 1, %s13
    %p237 = scmp.lt.s32.totalorder %s13, 3
    %p238 = pnand %p236, %p237
    %p239 = pneg %p238
    // Predicated region
    $region45: #{fwd.1} parent=5 // pred_check
      _
    $region46: #{fwd.1} parent=5 // pred_check_branch
      %241 = sbr.rel (%p238) target = $region48
    $region47: #{fwd.1} parent=5 // pred_region
      %s242 = ssub.s32 %s13, 1
      %p243 = scmp.lt.s32.totalorder %s18, 1
      %s244 = scalar_select %p243, %s18, 1
      %s245 = smul.addr %s244, 32
      %s246 = smul.addr %s245, 8
      %s247 = scalar_lea.vmem %s0, %s246
      %p248 = pneg %p39
      %p249 = pneg %p36
      %p250 = pneg %p60
      %p251 = pneg %p57
      %p252 = pneg %p81
      %p253 = pneg %p78
      %p254 = pneg %p102
      %p255 = pneg %p99
      %p256 = pneg %p123
      %p257 = pneg %p120
      %p258 = pneg %p144
      %p259 = pneg %p141
      %p260 = pneg %p165
      %p261 = pneg %p162
      %p262 = pneg %p191
      %p263 = pneg %p188
      %p264 = scmp.lt.s32.totalorder %s18, 1
      %s265 = scalar_select %p264, %s18, 1
      %s266 = smul.addr %s265, 8
      %s267 = smul.addr %s266, 8
      %s268 = scalar_lea.vmem %s7, %s267
      %p269 = scmp.lt.s32.totalorder %s18, 1
      %s270 = scalar_select %p269, %s18, 1
      %s271 = smul.addr %s270, 32
      %s272 = smul.addr %s271, 8
      %s273 = scalar_lea.vmem %s0, %s272
      %p274 = scmp.lt.s32.totalorder %s18, 1
      %s275 = scalar_select %p274, %s18, 1
      %s276 = smul.addr %s275, 8
      %s277 = smul.addr %s276, 8
      %s278 = scalar_lea.vmem %s7, %s277
      %v280 = vld [vmem:[%s273] sm:$0xff]
      %v281 = vld [vmem:[%s273 + $0x8] sm:$0xff]
      %v282 = vld [vmem:[%s273 + $0x10] sm:$0xff]
      %v283 = vld [vmem:[%s273 + $0x18] sm:$0xff]
      %v284 = vld [vmem:[%s273 + $0x20] sm:$0xff]
      %v285 = vld [vmem:[%s273 + $0x28] sm:$0xff]
      %v286 = vld [vmem:[%s273 + $0x30] sm:$0xff]
      %v287 = vld [vmem:[%s273 + $0x38] sm:$0xff]
      %s288 = scalar_lea.vmem %s273, 64
      %v289 = vld [vmem:[%s288] sm:$0xff]
      %v290 = vld [vmem:[%s288 + $0x8] sm:$0xff]
      %v291 = vld [vmem:[%s288 + $0x10] sm:$0xff]
      %v292 = vld [vmem:[%s288 + $0x18] sm:$0xff]
      %v293 = vld [vmem:[%s288 + $0x20] sm:$0xff]
      %v294 = vld [vmem:[%s288 + $0x28] sm:$0xff]
      %v295 = vld [vmem:[%s288 + $0x30] sm:$0xff]
      %v296 = vld [vmem:[%s288 + $0x38] sm:$0xff]
      %s297 = scalar_lea.vmem %s273, 128
      %v298 = vld [vmem:[%s297] sm:$0xff]
      %v299 = vld [vmem:[%s297 + $0x8] sm:$0xff]
      %v300 = vld [vmem:[%s297 + $0x10] sm:$0xff]
      %v301 = vld [vmem:[%s297 + $0x18] sm:$0xff]
      %v302 = vld [vmem:[%s297 + $0x20] sm:$0xff]
      %v303 = vld [vmem:[%s297 + $0x28] sm:$0xff]
      %v304 = vld [vmem:[%s297 + $0x30] sm:$0xff]
      %v305 = vld [vmem:[%s297 + $0x38] sm:$0xff]
      %s306 = scalar_lea.vmem %s273, 192
      %v307 = vld [vmem:[%s306] sm:$0xff]
      %v308 = vld [vmem:[%s306 + $0x8] sm:$0xff]
      %v309 = vld [vmem:[%s306 + $0x10] sm:$0xff]
      %v310 = vld [vmem:[%s306 + $0x18] sm:$0xff]
      %v311 = vld [vmem:[%s306 + $0x20] sm:$0xff]
      %v312 = vld [vmem:[%s306 + $0x28] sm:$0xff]
      %v313 = vld [vmem:[%s306 + $0x30] sm:$0xff]
      %v314 = vld [vmem:[%s306 + $0x38] sm:$0xff]
      %315 = vst [vmem:[#allocation2] sm:$0xff] 0.0
      %316 = vst [vmem:[#allocation2 + $0x8] sm:$0xff] 0.0
      %317 = vst [vmem:[#allocation2 + $0x10] sm:$0xff] 0.0
      %318 = vst [vmem:[#allocation2 + $0x18] sm:$0xff] 0.0
      %319 = vst [vmem:[#allocation2 + $0x20] sm:$0xff] 0.0
      %320 = vst [vmem:[#allocation2 + $0x28] sm:$0xff] 0.0
      %321 = vst [vmem:[#allocation2 + $0x30] sm:$0xff] 0.0
      %322 = vst [vmem:[#allocation2 + $0x38] sm:$0xff] 0.0
      %v323 = vld [vmem:[%s6] sm:$0xff]
      %v324 = vld [vmem:[%s6 + $0x8] sm:$0xff]
      %v325 = vld [vmem:[%s6 + $0x10] sm:$0xff]
      %v326 = vld [vmem:[%s6 + $0x18] sm:$0xff]
      %v327 = vld [vmem:[%s6 + $0x20] sm:$0xff]
      %v328 = vld [vmem:[%s6 + $0x28] sm:$0xff]
      %v329 = vld [vmem:[%s6 + $0x30] sm:$0xff]
      %v330 = vld [vmem:[%s6 + $0x38] sm:$0xff]
      %v331 = vld [vmem:[%s6 + $0x40] sm:$0xff]
      %v332 = vld [vmem:[%s6 + $0x48] sm:$0xff]
      %v333 = vld [vmem:[%s6 + $0x50] sm:$0xff]
      %v334 = vld [vmem:[%s6 + $0x58] sm:$0xff]
      %v335 = vld [vmem:[%s6 + $0x60] sm:$0xff]
      %v336 = vld [vmem:[%s6 + $0x68] sm:$0xff]
      %v337 = vld [vmem:[%s6 + $0x70] sm:$0xff]
      %v338 = vld [vmem:[%s6 + $0x78] sm:$0xff]
      %v339 = vpack.c.bf16 %v281, %v280
      %v340 = vpack.c.bf16 %v283, %v282
      %v341 = vpack.c.bf16 %v285, %v284
      %v342 = vpack.c.bf16 %v287, %v286
      %v343 = vld [vmem:[%s1] sm:$0xf]
      %v344 = vld [vmem:[%s1 + $0x4] sm:$0xf]
      %v345 = vld [vmem:[%s1 + $0x8] sm:$0xf]
      %v346 = vld [vmem:[%s1 + $0xc] sm:$0xf]
      %v347 = vld [vmem:[%s1 + $0x10] sm:$0xf]
      %v348 = vld [vmem:[%s1 + $0x14] sm:$0xf]
      %v349 = vld [vmem:[%s1 + $0x18] sm:$0xf]
      %v350 = vld [vmem:[%s1 + $0x1c] sm:$0xf]
      %v351 = vld [vmem:[%s4] sm:$0xff]
      %v352 = vld [vmem:[%s4 + $0x8] sm:$0xff]
      %v353 = vld [vmem:[%s4 + $0x10] sm:$0xff]
      %v354 = vld [vmem:[%s4 + $0x18] sm:$0xff]
      %v355 = vld [vmem:[%s4 + $0x20] sm:$0xff]
      %v356 = vld [vmem:[%s4 + $0x28] sm:$0xff]
      %v357 = vld [vmem:[%s4 + $0x30] sm:$0xff]
      %v358 = vld [vmem:[%s4 + $0x38] sm:$0xff]
      %360 = vset.pattern.permute.xlu0 0
      %361 = vperm.xlu0 %360, %v351
      %v362 = vpop.permute.xlu0 %361
      %365 = vset.pattern.permute.xlu0 0
      %366 = vperm.xlu0 %365, %v352
      %v367 = vpop.permute.xlu0 %366
      %370 = vset.pattern.permute.xlu0 0
      %371 = vperm.xlu0 %370, %v353
      %v372 = vpop.permute.xlu0 %371
      %375 = vset.pattern.permute.xlu0 0
      %376 = vperm.xlu0 %375, %v354
      %v377 = vpop.permute.xlu0 %376
      %380 = vset.pattern.permute.xlu0 0
      %381 = vperm.xlu0 %380, %v355
      %v382 = vpop.permute.xlu0 %381
      %385 = vset.pattern.permute.xlu0 0
      %386 = vperm.xlu0 %385, %v356
      %v387 = vpop.permute.xlu0 %386
      %390 = vset.pattern.permute.xlu0 0
      %391 = vperm.xlu0 %390, %v357
      %v392 = vpop.permute.xlu0 %391
      %395 = vset.pattern.permute.xlu0 0
      %396 = vperm.xlu0 %395, %v358
      %v397 = vpop.permute.xlu0 %396
      %v407 = vunpack.c.l.b16 %v343
      %v408 = vunpack.c.l.b16 %v344
      %v409 = vunpack.c.l.b16 %v345
      %v410 = vunpack.c.l.b16 %v346
      %v411 = vunpack.c.l.b16 %v347
      %v412 = vunpack.c.l.b16 %v348
      %v413 = vunpack.c.l.b16 %v349
      %v414 = vunpack.c.l.b16 %v350
      %v415 = vpack.c.b16 %v408, %v407
      %v416 = vpack.c.b16 %v410, %v409
      %v417 = vpack.c.b16 %v412, %v411
      %v418 = vpack.c.b16 %v414, %v413
      %vm419 = vcmask 523264
      %v421 = vsel %vm419, %v415, 0
      %v424 = vsel %vm419, %v416, 0
      %v427 = vsel %vm419, %v417, 0
      %v430 = vsel %vm419, %v418, 0
      %432 = vmatprep.subr.bf16.mxu0 0
      %433 = vmatpush1.bf16.msra.mxu0 %v339
      %434 = vmatprep.subr.bf16.mxu0 0
      %435 = vmatpush1.bf16.msra.mxu0 %v340
      %436 = vmatprep.subr.bf16.mxu0 0
      %437 = vmatpush1.bf16.msra.mxu0 %v341
      %438 = vmatprep.subr.bf16.mxu0 0
      %439 = vmatpush1.bf16.msra.mxu0 %v342
      %440 = vmatprep.subr.bf16.mxu0 0
      %441 = vmatpush1.bf16.msra.mxu0 0
      %442 = vmatprep.subr.bf16.mxu0 0
      %443 = vmatpush1.bf16.msra.mxu0 0
      %444 = vmatprep.subr.bf16.mxu0 0
      %445 = vmatpush1.bf16.msra.mxu0 0
      %446 = vmatprep.subr.bf16.mxu0 0
      %447 = vmatpush1.bf16.msra.mxu0 0
      %448 = vmatprep.subr.bf16.mxu0 0
      %449 = vmatpush1.bf16.msra.mxu0 0
      %450 = vmatprep.subr.bf16.mxu0 0
      %451 = vmatpush1.bf16.msra.mxu0 0
      %452 = vmatprep.subr.bf16.mxu0 0
      %453 = vmatpush1.bf16.msra.mxu0 0
      %454 = vmatprep.subr.bf16.mxu0 0
      %455 = vmatpush1.bf16.msra.mxu0 0
      %456 = vmatprep.subr.bf16.mxu0 0
      %457 = vmatpush1.bf16.msra.mxu0 0
      %458 = vmatprep.subr.bf16.mxu0 0
      %459 = vmatpush1.bf16.msra.mxu0 0
      %460 = vmatprep.subr.bf16.mxu0 0
      %461 = vmatpush1.bf16.msra.mxu0 0
      %462 = vmatprep.subr.bf16.mxu0 0
      %463 = vmatpush1.bf16.msra.mxu0 0
      %464 = vmatprep.mubr.bf16.mxu0 0
      %465 = vmatmul.mubr.bf16.gmra.mrb[0].mxu0 %v421
      %v466 = vpop.f32.mrb[0].mxu0
      %v467 = vadd.f32 %v362, %v466
      %v468 = vpop.f32.mrb[0].mxu0
      %v469 = vpop.f32.mrb[0].mxu0
      %v470 = vadd.f32 %v367, %v469
      %v471 = vpop.f32.mrb[0].mxu0
      %472 = vmatprep.mubr.bf16.mxu0 0
      %473 = vmatmul.mubr.bf16.gmra.mrb[0].mxu0 %v424
      %v474 = vpop.f32.mrb[0].mxu0
      %v475 = vadd.f32 %v372, %v474
      %v476 = vpop.f32.mrb[0].mxu0
      %v477 = vpop.f32.mrb[0].mxu0
      %v478 = vadd.f32 %v377, %v477
      %v479 = vpop.f32.mrb[0].mxu0
      %480 = vmatprep.mubr.bf16.mxu0 0
      %481 = vmatmul.mubr.bf16.gmra.mrb[0].mxu0 %v427
      %v482 = vpop.f32.mrb[0].mxu0
      %v483 = vadd.f32 %v382, %v482
      %v484 = vpop.f32.mrb[0].mxu0
      %v485 = vpop.f32.mrb[0].mxu0
      %v486 = vadd.f32 %v387, %v485
      %v487 = vpop.f32.mrb[0].mxu0
      %488 = vmatprep.mubr.bf16.mxu0 0
      %489 = vmatmul.mubr.bf16.gmra.mrb[0].mxu0 %v430
      %v490 = vpop.f32.mrb[0].mxu0
      %v491 = vadd.f32 %v392, %v490
      %v492 = vpop.f32.mrb[0].mxu0
      %v493 = vpop.f32.mrb[0].mxu0
      %v494 = vadd.f32 %v397, %v493
      %v495 = vpop.f32.mrb[0].mxu0
      %496 = vdwg.mxu0
      %v497 = vadd.f32 %v467, %v470
      %v498 = vadd.f32 %v497, %v475
      %v499 = vadd.f32 %v498, %v478
      %v500 = vadd.f32 %v499, %v483
      %v501 = vadd.f32 %v500, %v486
      %v502 = vadd.f32 %v501, %v491
      %v503 = vadd.f32 %v502, %v494
      %v504 = vrot.slane %v503, 4
      %v505 = vadd.f32 %v503, %v504
      %v506 = vrot.slane %v505, 2
      %v507 = vadd.f32 %v505, %v506
      %v508 = vrot.slane %v507, 1
      %v509 = vadd.f32 %v507, %v508
      %v510 = vmul.f32 %v467, %v467
      %v511 = vmul.f32 %v470, %v470
      %v512 = vmul.f32 %v475, %v475
      %v513 = vmul.f32 %v478, %v478
      %v514 = vmul.f32 %v483, %v483
      %v515 = vmul.f32 %v486, %v486
      %v516 = vmul.f32 %v491, %v491
      %v517 = vmul.f32 %v494, %v494
      %v518 = vadd.f32 %v510, %v511
      %v519 = vadd.f32 %v518, %v512
      %v520 = vadd.f32 %v519, %v513
      %v521 = vadd.f32 %v520, %v514
      %v522 = vadd.f32 %v521, %v515
      %v523 = vadd.f32 %v522, %v516
      %v524 = vadd.f32 %v523, %v517
      %v525 = vrot.slane %v524, 4
      %v526 = vadd.f32 %v524, %v525
      %v527 = vrot.slane %v526, 2
      %v528 = vadd.f32 %v526, %v527
      %v529 = vrot.slane %v528, 1
      %v530 = vadd.f32 %v528, %v529
      %vm531 = vcmask 1040384
      %v532 = vsel %vm531, %v509, %v530
      %vm533 = vcmask 1041408
      %v534 = vsel %vm533, %v532, 0.0
      %535 = vmatprep.subr.mxu0 0.0
      %536 = vmatpush1.msra.mxu0 %v323
      %537 = vmatprep.subr.mxu0 0.0
      %538 = vmatpush1.msra.mxu0 %v324
      %539 = vmatprep.subr.mxu0 0.0
      %540 = vmatpush1.msra.mxu0 %v325
      %541 = vmatprep.subr.mxu0 0.0
      %542 = vmatpush1.msra.mxu0 %v326
      %543 = vmatprep.subr.mxu0 0.0
      %544 = vmatpush1.msra.mxu0 %v327
      %545 = vmatprep.subr.mxu0 0.0
      %546 = vmatpush1.msra.mxu0 %v328
      %547 = vmatprep.subr.mxu0 0.0
      %548 = vmatpush1.msra.mxu0 %v329
      %549 = vmatprep.subr.mxu0 0.0
      %550 = vmatpush1.msra.mxu0 %v330
      %551 = vmatprep.subr.mxu0 0.0
      %552 = vmatpush1.msra.mxu0 %v331
      %553 = vmatprep.subr.mxu0 0.0
      %554 = vmatpush1.msra.mxu0 %v332
      %555 = vmatprep.subr.mxu0 0.0
      %556 = vmatpush1.msra.mxu0 %v333
      %557 = vmatprep.subr.mxu0 0.0
      %558 = vmatpush1.msra.mxu0 %v334
      %559 = vmatprep.subr.mxu0 0.0
      %560 = vmatpush1.msra.mxu0 %v335
      %561 = vmatprep.subr.mxu0 0.0
      %562 = vmatpush1.msra.mxu0 %v336
      %563 = vmatprep.subr.mxu0 0.0
      %564 = vmatpush1.msra.mxu0 %v337
      %565 = vmatprep.subr.mxu0 0.0
      %566 = vmatpush1.msra.mxu0 %v338
      %567 = vmatprep.subr.mxu0 0.0
      %568 = vmatpush1.msra.mxu0 0.0
      %569 = vmatprep.subr.mxu0 0.0
      %570 = vmatpush1.msra.mxu0 0.0
      %571 = vmatprep.subr.mxu0 0.0
      %572 = vmatpush1.msra.mxu0 0.0
      %573 = vmatprep.subr.mxu0 0.0
      %574 = vmatpush1.msra.mxu0 0.0
      %575 = vmatprep.subr.mxu0 0.0
      %576 = vmatpush1.msra.mxu0 0.0
      %577 = vmatprep.subr.mxu0 0.0
      %578 = vmatpush1.msra.mxu0 0.0
      %579 = vmatprep.subr.mxu0 0.0
      %580 = vmatpush1.msra.mxu0 0.0
      %581 = vmatprep.subr.mxu0 0.0
      %582 = vmatpush1.msra.mxu0 0.0
      %583 = vmatprep.subr.mxu0 0.0
      %584 = vmatpush1.msra.mxu0 0.0
      %585 = vmatprep.subr.mxu0 0.0
      %586 = vmatpush1.msra.mxu0 0.0
      %587 = vmatprep.subr.mxu0 0.0
      %588 = vmatpush1.msra.mxu0 0.0
      %589 = vmatprep.subr.mxu0 0.0
      %590 = vmatpush1.msra.mxu0 0.0
      %591 = vmatprep.subr.mxu0 0.0
      %592 = vmatpush1.msra.mxu0 0.0
      %593 = vmatprep.subr.mxu0 0.0
      %594 = vmatpush1.msra.mxu0 0.0
      %595 = vmatprep.subr.mxu0 0.0
      %596 = vmatpush1.msra.mxu0 0.0
      %597 = vmatprep.subr.mxu0 0.0
      %598 = vmatpush1.msra.mxu0 0.0
      %599 = vmatprep.mubr.f32.mxu0 0.0
      %600 = vmatmul.mubr.f32.gmra.mrb[0].mxu0 %v534
      %v601 = vpop.f32.mrb[0].mxu0
      %v602 = vadd.f32 0.0, %v601
      %v603 = vpop.f32.mrb[0].mxu0
      %604 = vdwg.mxu0
      %v605 = vmul.f32 %v602, 0.0009765625
      %v606 = vmul.f32 %v605, %v605
      %v608 = vrot.slane %v606, 7
      %v610 = vsub.f32 %v605, %v608
      %v611 = vmax.f32 %v610, 0.0
      %v612 = vlaneseq
      %v613 = vshrl.u32 %v612, 7
      %v614 = vsub.s32 0, %v613
      %v615 = vrot.slane %v605, %v614
      %v616 = vsub.f32 %v467, %v615
      %v617 = vsub.f32 %v470, %v615
      %v618 = vsub.f32 %v475, %v615
      %v619 = vsub.f32 %v478, %v615
      %v620 = vsub.f32 %v483, %v615
      %v621 = vsub.f32 %v486, %v615
      %v622 = vsub.f32 %v491, %v615
      %v623 = vsub.f32 %v494, %v615
      %v624 = vadd.f32 %v611, 1e-08
      %v625 = vrsqrt.pop %v624
      %v626 = vlaneseq
      %v627 = vshrl.u32 %v626, 7
      %v628 = vsub.s32 1, %v627
      %v629 = vrot.slane %v625, %v628
      %v630 = vmul.f32 %v616, %v629
      %v631 = vmul.f32 %v617, %v629
      %v632 = vmul.f32 %v618, %v629
      %v633 = vmul.f32 %v619, %v629
      %v634 = vmul.f32 %v620, %v629
      %v635 = vmul.f32 %v621, %v629
      %v636 = vmul.f32 %v622, %v629
      %v637 = vmul.f32 %v623, %v629
      %s638 = scalar_lea.vmem %s4, 64
      %v639 = vld [vmem:[%s638] sm:$0xff]
      %v640 = vld [vmem:[%s638 + $0x8] sm:$0xff]
      %v641 = vld [vmem:[%s638 + $0x10] sm:$0xff]
      %v642 = vld [vmem:[%s638 + $0x18] sm:$0xff]
      %v643 = vld [vmem:[%s638 + $0x20] sm:$0xff]
      %v644 = vld [vmem:[%s638 + $0x28] sm:$0xff]
      %v645 = vld [vmem:[%s638 + $0x30] sm:$0xff]
      %v646 = vld [vmem:[%s638 + $0x38] sm:$0xff]
      %648 = vset.pattern.permute.xlu0 0
      %649 = vperm.xlu0 %648, %v639
      %v650 = vpop.permute.xlu0 %649
      %653 = vset.pattern.permute.xlu0 0
      %654 = vperm.xlu0 %653, %v640
      %v655 = vpop.permute.xlu0 %654
      %658 = vset.pattern.permute.xlu0 0
      %659 = vperm.xlu0 %658, %v641
      %v660 = vpop.permute.xlu0 %659
      %663 = vset.pattern.permute.xlu0 0
      %664 = vperm.xlu0 %663, %v642
      %v665 = vpop.permute.xlu0 %664
      %668 = vset.pattern.permute.xlu0 0
      %669 = vperm.xlu0 %668, %v643
      %v670 = vpop.permute.xlu0 %669
      %673 = vset.pattern.permute.xlu0 0
      %674 = vperm.xlu0 %673, %v644
      %v675 = vpop.permute.xlu0 %674
      %678 = vset.pattern.permute.xlu0 0
      %679 = vperm.xlu0 %678, %v645
      %v680 = vpop.permute.xlu0 %679
      %683 = vset.pattern.permute.xlu0 0
      %684 = vperm.xlu0 %683, %v646
      %v685 = vpop.permute.xlu0 %684
      %v687 = vmul.f32 %v630, %v650
      %v688 = vmul.f32 %v631, %v655
      %v689 = vmul.f32 %v632, %v660
      %v690 = vmul.f32 %v633, %v665
      %v691 = vmul.f32 %v634, %v670
      %v692 = vmul.f32 %v635, %v675
      %v693 = vmul.f32 %v636, %v680
      %v694 = vmul.f32 %v637, %v685
      %s695 = scalar_lea.vmem %s4, 128
      %v696 = vld [vmem:[%s695] sm:$0xff]
      %v697 = vld [vmem:[%s695 + $0x8] sm:$0xff]
      %v698 = vld [vmem:[%s695 + $0x10] sm:$0xff]
      %v699 = vld [vmem:[%s695 + $0x18] sm:$0xff]
      %v700 = vld [vmem:[%s695 + $0x20] sm:$0xff]
      %v701 = vld [vmem:[%s695 + $0x28] sm:$0xff]
      %v702 = vld [vmem:[%s695 + $0x30] sm:$0xff]
      %v703 = vld [vmem:[%s695 + $0x38] sm:$0xff]
      %705 = vset.pattern.permute.xlu0 0
      %706 = vperm.xlu0 %705, %v696
      %v707 = vpop.permute.xlu0 %706
      %710 = vset.pattern.permute.xlu0 0
      %711 = vperm.xlu0 %710, %v697
      %v712 = vpop.permute.xlu0 %711
      %715 = vset.pattern.permute.xlu0 0
      %716 = vperm.xlu0 %715, %v698
      %v717 = vpop.permute.xlu0 %716
      %720 = vset.pattern.permute.xlu0 0
      %721 = vperm.xlu0 %720, %v699
      %v722 = vpop.permute.xlu0 %721
      %725 = vset.pattern.permute.xlu0 0
      %726 = vperm.xlu0 %725, %v700
      %v727 = vpop.permute.xlu0 %726
      %730 = vset.pattern.permute.xlu0 0
      %731 = vperm.xlu0 %730, %v701
      %v732 = vpop.permute.xlu0 %731
      %735 = vset.pattern.permute.xlu0 0
      %736 = vperm.xlu0 %735, %v702
      %v737 = vpop.permute.xlu0 %736
      %740 = vset.pattern.permute.xlu0 0
      %741 = vperm.xlu0 %740, %v703
      %v742 = vpop.permute.xlu0 %741
      %v744 = vadd.f32 %v687, %v707
      %v745 = vadd.f32 %v688, %v712
      %v746 = vadd.f32 %v689, %v717
      %v747 = vadd.f32 %v690, %v722
      %v748 = vadd.f32 %v691, %v727
      %v749 = vadd.f32 %v692, %v732
      %v750 = vadd.f32 %v693, %v737
      %v751 = vadd.f32 %v694, %v742
      %vm752 = vcmp.ge.f32.partialorder %v744, 0.0
      %vm753 = vcmp.ge.f32.partialorder %v745, 0.0
      %vm754 = vcmp.ge.f32.partialorder %v746, 0.0
      %vm755 = vcmp.ge.f32.partialorder %v747, 0.0
      %vm756 = vcmp.ge.f32.partialorder %v748, 0.0
      %vm757 = vcmp.ge.f32.partialorder %v749, 0.0
      %vm758 = vcmp.ge.f32.partialorder %v750, 0.0
      %vm759 = vcmp.ge.f32.partialorder %v751, 0.0
      %v760 = vmul.f32 %v744, 0.25
      %v761 = vmul.f32 %v745, 0.25
      %v762 = vmul.f32 %v746, 0.25
      %v763 = vmul.f32 %v747, 0.25
      %v764 = vmul.f32 %v748, 0.25
      %v765 = vmul.f32 %v749, 0.25
      %v766 = vmul.f32 %v750, 0.25
      %v767 = vmul.f32 %v751, 0.25
      %v768 = vsel %vm752, %v744, %v760
      %v769 = vsel %vm753, %v745, %v761
      %v770 = vsel %vm754, %v746, %v762
      %v771 = vsel %vm755, %v747, %v763
      %v772 = vsel %vm756, %v748, %v764
      %v773 = vsel %vm757, %v749, %v765
      %v774 = vsel %vm758, %v750, %v766
      %v775 = vsel %vm759, %v751, %v767
      %776 = vst [vmem:[#allocation3] sm:$0xff] %v768
      %777 = vst [vmem:[#allocation3 + $0x8] sm:$0xff] %v769
      %778 = vst [vmem:[#allocation3 + $0x10] sm:$0xff] %v770
      %779 = vst [vmem:[#allocation3 + $0x18] sm:$0xff] %v771
      %780 = vst [vmem:[#allocation3 + $0x20] sm:$0xff] %v772
      %781 = vst [vmem:[#allocation3 + $0x28] sm:$0xff] %v773
      %782 = vst [vmem:[#allocation3 + $0x30] sm:$0xff] %v774
      %783 = vst [vmem:[#allocation3 + $0x38] sm:$0xff] %v775
      %v784 = vld [vmem:[#allocation3] sm:$0xff]
      %v785 = vld [vmem:[#allocation3 + $0x8] sm:$0xff]
      %v786 = vld [vmem:[#allocation3 + $0x10] sm:$0xff]
      %v787 = vld [vmem:[#allocation3 + $0x18] sm:$0xff]
      %v788 = vld [vmem:[#allocation3 + $0x20] sm:$0xff]
      %v789 = vld [vmem:[#allocation3 + $0x28] sm:$0xff]
      %v790 = vld [vmem:[#allocation3 + $0x30] sm:$0xff]
      %v791 = vld [vmem:[#allocation3 + $0x38] sm:$0xff]
      %v792 = vpack.c.bf16 %v785, %v784
      %v793 = vpack.c.bf16 %v787, %v786
      %v794 = vpack.c.bf16 %v789, %v788
      %v795 = vpack.c.bf16 %v791, %v790
      %804 = vrot.lane.b32.xlu0 %v784, 1
      %v805 = vpop.permute.xlu0 %804
      %806 = vrot.lane.b32.xlu0 %v785, 1
      %v807 = vpop.permute.xlu0 %806
      %808 = vrot.lane.b32.xlu0 %v786, 1
      %v809 = vpop.permute.xlu0 %808
      %810 = vrot.lane.b32.xlu0 %v787, 1
      %v811 = vpop.permute.xlu0 %810
      %812 = vrot.lane.b32.xlu0 %v788, 1
      %v813 = vpop.permute.xlu0 %812
      %814 = vrot.lane.b32.xlu0 %v789, 1
      %v815 = vpop.permute.xlu0 %814
      %816 = vrot.lane.b32.xlu0 %v790, 1
      %v817 = vpop.permute.xlu0 %816
      %818 = vrot.lane.b32.xlu0 %v791, 1
      %v819 = vpop.permute.xlu0 %818
      %v828 = vld [vmem:[%s5] sm:$0xff]
      %v829 = vlaneseq
      %v830 = vshrl.u32 %v829, 7
      %v831 = vsub.s32 0, %v830
      %v832 = vrot.slane %v828, %v831
      %v833 = vmul.f32 %v805, %v832
      %v834 = vmul.f32 %v807, %v832
      %v835 = vmul.f32 %v809, %v832
      %v836 = vmul.f32 %v811, %v832
      %v837 = vmul.f32 %v813, %v832
      %v838 = vmul.f32 %v815, %v832
      %v839 = vmul.f32 %v817, %v832
      %v840 = vmul.f32 %v819, %v832
      %v841 = vpack.c.bf16 %v834, %v833
      %v842 = vpack.c.bf16 %v836, %v835
      %v843 = vpack.c.bf16 %v838, %v837
      %v844 = vpack.c.bf16 %v840, %v839
      %v845 = vpack.c.bf16 %v290, %v289
      %v846 = vpack.c.bf16 %v292, %v291
      %v847 = vpack.c.bf16 %v294, %v293
      %v848 = vpack.c.bf16 %v296, %v295
      %857 = vrot.lane.b32.xlu0 %v289, 1
      %v858 = vpop.permute.xlu0 %857
      %859 = vrot.lane.b32.xlu0 %v290, 1
      %v860 = vpop.permute.xlu0 %859
      %861 = vrot.lane.b32.xlu0 %v291, 1
      %v862 = vpop.permute.xlu0 %861
      %863 = vrot.lane.b32.xlu0 %v292, 1
      %v864 = vpop.permute.xlu0 %863
      %865 = vrot.lane.b32.xlu0 %v293, 1
      %v866 = vpop.permute.xlu0 %865
      %867 = vrot.lane.b32.xlu0 %v294, 1
      %v868 = vpop.permute.xlu0 %867
      %869 = vrot.lane.b32.xlu0 %v295, 1
      %v870 = vpop.permute.xlu0 %869
      %871 = vrot.lane.b32.xlu0 %v296, 1
      %v872 = vpop.permute.xlu0 %871
      %v881 = vmul.f32 %v858, %v832
      %v882 = vmul.f32 %v860, %v832
      %v883 = vmul.f32 %v862, %v832
      %v884 = vmul.f32 %v864, %v832
      %v885 = vmul.f32 %v866, %v832
      %v886 = vmul.f32 %v868, %v832
      %v887 = vmul.f32 %v870, %v832
      %v888 = vmul.f32 %v872, %v832
      %v889 = vpack.c.bf16 %v882, %v881
      %v890 = vpack.c.bf16 %v884, %v883
      %v891 = vpack.c.bf16 %v886, %v885
      %v892 = vpack.c.bf16 %v888, %v887
      %v893 = vld [vmem:[%s3] sm:$0xff]
      %v894 = vld [vmem:[%s3 + $0x8] sm:$0xff]
      %v895 = vld [vmem:[%s3 + $0x10] sm:$0xff]
      %v896 = vld [vmem:[%s3 + $0x18] sm:$0xff]
      %v897 = vld [vmem:[%s3 + $0x20] sm:$0xff]
      %v898 = vld [vmem:[%s3 + $0x28] sm:$0xff]
      %v899 = vld [vmem:[%s3 + $0x30] sm:$0xff]
      %v900 = vld [vmem:[%s3 + $0x38] sm:$0xff]
      %s901 = scalar_lea.vmem %s4, 192
      %v902 = vld [vmem:[%s901] sm:$0xff]
      %v903 = vld [vmem:[%s901 + $0x8] sm:$0xff]
      %v904 = vld [vmem:[%s901 + $0x10] sm:$0xff]
      %v905 = vld [vmem:[%s901 + $0x18] sm:$0xff]
      %v906 = vld [vmem:[%s901 + $0x20] sm:$0xff]
      %v907 = vld [vmem:[%s901 + $0x28] sm:$0xff]
      %v908 = vld [vmem:[%s901 + $0x30] sm:$0xff]
      %v909 = vld [vmem:[%s901 + $0x38] sm:$0xff]
      %911 = vset.pattern.permute.xlu0 0
      %912 = vperm.xlu0 %911, %v902
      %v913 = vpop.permute.xlu0 %912
      %916 = vset.pattern.permute.xlu0 0
      %917 = vperm.xlu0 %916, %v903
      %v918 = vpop.permute.xlu0 %917
      %921 = vset.pattern.permute.xlu0 0
      %922 = vperm.xlu0 %921, %v904
      %v923 = vpop.permute.xlu0 %922
      %926 = vset.pattern.permute.xlu0 0
      %927 = vperm.xlu0 %926, %v905
      %v928 = vpop.permute.xlu0 %927
      %931 = vset.pattern.permute.xlu0 0
      %932 = vperm.xlu0 %931, %v906
      %v933 = vpop.permute.xlu0 %932
      %936 = vset.pattern.permute.xlu0 0
      %937 = vperm.xlu0 %936, %v907
      %v938 = vpop.permute.xlu0 %937
      %941 = vset.pattern.permute.xlu0 0
      %942 = vperm.xlu0 %941, %v908
      %v943 = vpop.permute.xlu0 %942
      %946 = vset.pattern.permute.xlu0 0
      %947 = vperm.xlu0 %946, %v909
      %v948 = vpop.permute.xlu0 %947
      %v958 = vunpack.c.l.b16 %v893
      %v959 = vunpack.c.h.b16 %v893
      %v960 = vunpack.c.l.b16 %v894
      %v961 = vunpack.c.h.b16 %v894
      %v962 = vunpack.c.l.b16 %v895
      %v963 = vunpack.c.h.b16 %v895
      %v964 = vunpack.c.l.b16 %v896
      %v965 = vunpack.c.h.b16 %v896
      %v966 = vunpack.c.l.b16 %v897
      %v967 = vunpack.c.h.b16 %v897
      %v968 = vunpack.c.l.b16 %v898
      %v969 = vunpack.c.h.b16 %v898
      %v970 = vunpack.c.l.b16 %v899
      %v971 = vunpack.c.h.b16 %v899
      %v972 = vunpack.c.l.b16 %v900
      %v973 = vunpack.c.h.b16 %v900
      %v974 = vpack.c.b16 %v960, %v958
      %v975 = vpack.c.b16 %v961, %v959
      %v976 = vpack.c.b16 %v964, %v962
      %v977 = vpack.c.b16 %v965, %v963
      %v978 = vpack.c.b16 %v968, %v966
      %v979 = vpack.c.b16 %v969, %v967
      %v980 = vpack.c.b16 %v972, %v970
      %v981 = vpack.c.b16 %v973, %v971
      %990 = vmatprep.subr.bf16.mxu0 0
      %991 = vmatpush1.bf16.msra.mxu0 %v792
      %992 = vmatprep.subr.bf16.mxu0 0
      %993 = vmatpush1.bf16.msra.mxu0 %v793
      %994 = vmatprep.subr.bf16.mxu0 0
      %995 = vmatpush1.bf16.msra.mxu0 %v794
      %996 = vmatprep.subr.bf16.mxu0 0
      %997 = vmatpush1.bf16.msra.mxu0 %v795
      %998 = vmatprep.subr.bf16.mxu0 0
      %999 = vmatpush1.bf16.msra.mxu0 %v841
      %1000 = vmatprep.subr.bf16.mxu0 0
      %1001 = vmatpush1.bf16.msra.mxu0 %v842
      %1002 = vmatprep.subr.bf16.mxu0 0
      %1003 = vmatpush1.bf16.msra.mxu0 %v843
      %1004 = vmatprep.subr.bf16.mxu0 0
      %1005 = vmatpush1.bf16.msra.mxu0 %v844
      %1006 = vmatprep.subr.bf16.mxu0 0
      %1007 = vmatpush1.bf16.msra.mxu0 %v845
      %1008 = vmatprep.subr.bf16.mxu0 0
      %1009 = vmatpush1.bf16.msra.mxu0 %v846
      %1010 = vmatprep.subr.bf16.mxu0 0
      %1011 = vmatpush1.bf16.msra.mxu0 %v847
      %1012 = vmatprep.subr.bf16.mxu0 0
      %1013 = vmatpush1.bf16.msra.mxu0 %v848
      %1014 = vmatprep.subr.bf16.mxu0 0
      %1015 = vmatpush1.bf16.msra.mxu0 %v889
      %1016 = vmatprep.subr.bf16.mxu0 0
      %1017 = vmatpush1.bf16.msra.mxu0 %v890
      %1018 = vmatprep.subr.bf16.mxu0 0
      %1019 = vmatpush1.bf16.msra.mxu0 %v891
      %1020 = vmatprep.subr.bf16.mxu0 0
      %1021 = vmatpush1.bf16.msra.mxu0 %v892
      %1022 = vmatprep.mubr.bf16.mxu0 %v975
      %1023 = vmatmul.mubr.bf16.gmra.mrb[0].mxu0 %v974
      %v1024 = vpop.f32.mrb[0].mxu0
      %v1025 = vadd.f32 %v913, %v1024
      %v1026 = vpop.f32.mrb[0].mxu0
      %v1027 = vpop.f32.mrb[0].mxu0
      %v1028 = vadd.f32 %v918, %v1027
      %v1029 = vpop.f32.mrb[0].mxu0
      %1030 = vmatprep.mubr.bf16.mxu0 %v977
      %1031 = vmatmul.mubr.bf16.gmra.mrb[0].mxu0 %v976
      %v1032 = vpop.f32.mrb[0].mxu0
      %v1033 = vadd.f32 %v923, %v1032
      %v1034 = vpop.f32.mrb[0].mxu0
      %v1035 = vpop.f32.mrb[0].mxu0
      %v1036 = vadd.f32 %v928, %v1035
      %v1037 = vpop.f32.mrb[0].mxu0
      %1038 = vmatprep.mubr.bf16.mxu0 %v979
      %1039 = vmatmul.mubr.bf16.gmra.mrb[0].mxu0 %v978
      %v1040 = vpop.f32.mrb[0].mxu0
      %v1041 = vadd.f32 %v933, %v1040
      %v1042 = vpop.f32.mrb[0].mxu0
      %v1043 = vpop.f32.mrb[0].mxu0
      %v1044 = vadd.f32 %v938, %v1043
      %v1045 = vpop.f32.mrb[0].mxu0
      %1046 = vmatprep.mubr.bf16.mxu0 %v981
      %1047 = vmatmul.mubr.bf16.gmra.mrb[0].mxu0 %v980
      %v1048 = vpop.f32.mrb[0].mxu0
      %v1049 = vadd.f32 %v943, %v1048
      %v1050 = vpop.f32.mrb[0].mxu0
      %v1051 = vpop.f32.mrb[0].mxu0
      %v1052 = vadd.f32 %v948, %v1051
      %v1053 = vpop.f32.mrb[0].mxu0
      %1054 = vdwg.mxu0
      %v1055 = vadd.f32 %v1025, %v1028
      %v1056 = vadd.f32 %v1055, %v1033
      %v1057 = vadd.f32 %v1056, %v1036
      %v1058 = vadd.f32 %v1057, %v1041
      %v1059 = vadd.f32 %v1058, %v1044
      %v1060 = vadd.f32 %v1059, %v1049
      %v1061 = vadd.f32 %v1060, %v1052
      %v1062 = vrot.slane %v1061, 4
      %v1063 = vadd.f32 %v1061, %v1062
      %v1064 = vrot.slane %v1063, 2
      %v1065 = vadd.f32 %v1063, %v1064
      %v1066 = vrot.slane %v1065, 1
      %v1067 = vadd.f32 %v1065, %v1066
      %v1068 = vmul.f32 %v1025, %v1025
      %v1069 = vmul.f32 %v1028, %v1028
      %v1070 = vmul.f32 %v1033, %v1033
      %v1071 = vmul.f32 %v1036, %v1036
      %v1072 = vmul.f32 %v1041, %v1041
      %v1073 = vmul.f32 %v1044, %v1044
      %v1074 = vmul.f32 %v1049, %v1049
      %v1075 = vmul.f32 %v1052, %v1052
      %v1076 = vadd.f32 %v1068, %v1069
      %v1077 = vadd.f32 %v1076, %v1070
      %v1078 = vadd.f32 %v1077, %v1071
      %v1079 = vadd.f32 %v1078, %v1072
      %v1080 = vadd.f32 %v1079, %v1073
      %v1081 = vadd.f32 %v1080, %v1074
      %v1082 = vadd.f32 %v1081, %v1075
      %v1083 = vrot.slane %v1082, 4
      %v1084 = vadd.f32 %v1082, %v1083
      %v1085 = vrot.slane %v1084, 2
      %v1086 = vadd.f32 %v1084, %v1085
      %v1087 = vrot.slane %v1086, 1
      %v1088 = vadd.f32 %v1086, %v1087
      %v1089 = vsel %vm531, %v1067, %v1088
      %v1090 = vsel %vm533, %v1089, 0.0
      %1091 = vmatprep.subr.mxu0 0.0
      %1092 = vmatpush1.msra.mxu0 %v323
      %1093 = vmatprep.subr.mxu0 0.0
      %1094 = vmatpush1.msra.mxu0 %v324
      %1095 = vmatprep.subr.mxu0 0.0
      %1096 = vmatpush1.msra.mxu0 %v325
      %1097 = vmatprep.subr.mxu0 0.0
      %1098 = vmatpush1.msra.mxu0 %v326
      %1099 = vmatprep.subr.mxu0 0.0
      %1100 = vmatpush1.msra.mxu0 %v327
      %1101 = vmatprep.subr.mxu0 0.0
      %1102 = vmatpush1.msra.mxu0 %v328
      %1103 = vmatprep.subr.mxu0 0.0
      %1104 = vmatpush1.msra.mxu0 %v329
      %1105 = vmatprep.subr.mxu0 0.0
      %1106 = vmatpush1.msra.mxu0 %v330
      %1107 = vmatprep.subr.mxu0 0.0
      %1108 = vmatpush1.msra.mxu0 %v331
      %1109 = vmatprep.subr.mxu0 0.0
      %1110 = vmatpush1.msra.mxu0 %v332
      %1111 = vmatprep.subr.mxu0 0.0
      %1112 = vmatpush1.msra.mxu0 %v333
      %1113 = vmatprep.subr.mxu0 0.0
      %1114 = vmatpush1.msra.mxu0 %v334
      %1115 = vmatprep.subr.mxu0 0.0
      %1116 = vmatpush1.msra.mxu0 %v335
      %1117 = vmatprep.subr.mxu0 0.0
      %1118 = vmatpush1.msra.mxu0 %v336
      %1119 = vmatprep.subr.mxu0 0.0
      %1120 = vmatpush1.msra.mxu0 %v337
      %1121 = vmatprep.subr.mxu0 0.0
      %1122 = vmatpush1.msra.mxu0 %v338
      %1123 = vmatprep.subr.mxu0 0.0
      %1124 = vmatpush1.msra.mxu0 0.0
      %1125 = vmatprep.subr.mxu0 0.0
      %1126 = vmatpush1.msra.mxu0 0.0
      %1127 = vmatprep.subr.mxu0 0.0
      %1128 = vmatpush1.msra.mxu0 0.0
      %1129 = vmatprep.subr.mxu0 0.0
      %1130 = vmatpush1.msra.mxu0 0.0
      %1131 = vmatprep.subr.mxu0 0.0
      %1132 = vmatpush1.msra.mxu0 0.0
      %1133 = vmatprep.subr.mxu0 0.0
      %1134 = vmatpush1.msra.mxu0 0.0
      %1135 = vmatprep.subr.mxu0 0.0
      %1136 = vmatpush1.msra.mxu0 0.0
      %1137 = vmatprep.subr.mxu0 0.0
      %1138 = vmatpush1.msra.mxu0 0.0
      %1139 = vmatprep.subr.mxu0 0.0
      %1140 = vmatpush1.msra.mxu0 0.0
      %1141 = vmatprep.subr.mxu0 0.0
      %1142 = vmatpush1.msra.mxu0 0.0
      %1143 = vmatprep.subr.mxu0 0.0
      %1144 = vmatpush1.msra.mxu0 0.0
      %1145 = vmatprep.subr.mxu0 0.0
      %1146 = vmatpush1.msra.mxu0 0.0
      %1147 = vmatprep.subr.mxu0 0.0
      %1148 = vmatpush1.msra.mxu0 0.0
      %1149 = vmatprep.subr.mxu0 0.0
      %1150 = vmatpush1.msra.mxu0 0.0
      %1151 = vmatprep.subr.mxu0 0.0
      %1152 = vmatpush1.msra.mxu0 0.0
      %1153 = vmatprep.subr.mxu0 0.0
      %1154 = vmatpush1.msra.mxu0 0.0
      %1155 = vmatprep.mubr.f32.mxu0 0.0
      %1156 = vmatmul.mubr.f32.gmra.mrb[0].mxu0 %v1090
      %v1157 = vpop.f32.mrb[0].mxu0
      %v1158 = vadd.f32 0.0, %v1157
      %v1159 = vpop.f32.mrb[0].mxu0
      %1160 = vdwg.mxu0
      %v1161 = vmul.f32 %v1158, 0.0009765625
      %v1162 = vmul.f32 %v1161, %v1161
      %v1164 = vrot.slane %v1162, 7
      %v1166 = vsub.f32 %v1161, %v1164
      %v1167 = vmax.f32 %v1166, 0.0
      %v1168 = vlaneseq
      %v1169 = vshrl.u32 %v1168, 7
      %v1170 = vsub.s32 0, %v1169
      %v1171 = vrot.slane %v1161, %v1170
      %v1172 = vsub.f32 %v1025, %v1171
      %v1173 = vsub.f32 %v1028, %v1171
      %v1174 = vsub.f32 %v1033, %v1171
      %v1175 = vsub.f32 %v1036, %v1171
      %v1176 = vsub.f32 %v1041, %v1171
      %v1177 = vsub.f32 %v1044, %v1171
      %v1178 = vsub.f32 %v1049, %v1171
      %v1179 = vsub.f32 %v1052, %v1171
      %v1180 = vadd.f32 %v1167, 1e-08
      %v1181 = vrsqrt.pop %v1180
      %v1182 = vlaneseq
      %v1183 = vshrl.u32 %v1182, 7
      %v1184 = vsub.s32 1, %v1183
      %v1185 = vrot.slane %v1181, %v1184
      %v1186 = vmul.f32 %v1172, %v1185
      %v1187 = vmul.f32 %v1173, %v1185
      %v1188 = vmul.f32 %v1174, %v1185
      %v1189 = vmul.f32 %v1175, %v1185
      %v1190 = vmul.f32 %v1176, %v1185
      %v1191 = vmul.f32 %v1177, %v1185
      %v1192 = vmul.f32 %v1178, %v1185
      %v1193 = vmul.f32 %v1179, %v1185
      %s1194 = scalar_lea.vmem %s4, 256
      %v1195 = vld [vmem:[%s1194] sm:$0xff]
      %v1196 = vld [vmem:[%s1194 + $0x8] sm:$0xff]
      %v1197 = vld [vmem:[%s1194 + $0x10] sm:$0xff]
      %v1198 = vld [vmem:[%s1194 + $0x18] sm:$0xff]
      %v1199 = vld [vmem:[%s1194 + $0x20] sm:$0xff]
      %v1200 = vld [vmem:[%s1194 + $0x28] sm:$0xff]
      %v1201 = vld [vmem:[%s1194 + $0x30] sm:$0xff]
      %v1202 = vld [vmem:[%s1194 + $0x38] sm:$0xff]
      %1204 = vset.pattern.permute.xlu0 0
      %1205 = vperm.xlu0 %1204, %v1195
      %v1206 = vpop.permute.xlu0 %1205
      %1209 = vset.pattern.permute.xlu0 0
      %1210 = vperm.xlu0 %1209, %v1196
      %v1211 = vpop.permute.xlu0 %1210
      %1214 = vset.pattern.permute.xlu0 0
      %1215 = vperm.xlu0 %1214, %v1197
      %v1216 = vpop.permute.xlu0 %1215
      %1219 = vset.pattern.permute.xlu0 0
      %1220 = vperm.xlu0 %1219, %v1198
      %v1221 = vpop.permute.xlu0 %1220
      %1224 = vset.pattern.permute.xlu0 0
      %1225 = vperm.xlu0 %1224, %v1199
      %v1226 = vpop.permute.xlu0 %1225
      %1229 = vset.pattern.permute.xlu0 0
      %1230 = vperm.xlu0 %1229, %v1200
      %v1231 = vpop.permute.xlu0 %1230
      %1234 = vset.pattern.permute.xlu0 0
      %1235 = vperm.xlu0 %1234, %v1201
      %v1236 = vpop.permute.xlu0 %1235
      %1239 = vset.pattern.permute.xlu0 0
      %1240 = vperm.xlu0 %1239, %v1202
      %v1241 = vpop.permute.xlu0 %1240
      %v1243 = vmul.f32 %v1186, %v1206
      %v1244 = vmul.f32 %v1187, %v1211
      %v1245 = vmul.f32 %v1188, %v1216
      %v1246 = vmul.f32 %v1189, %v1221
      %v1247 = vmul.f32 %v1190, %v1226
      %v1248 = vmul.f32 %v1191, %v1231
      %v1249 = vmul.f32 %v1192, %v1236
      %v1250 = vmul.f32 %v1193, %v1241
      %s1251 = scalar_lea.vmem %s4, 320
      %v1252 = vld [vmem:[%s1251] sm:$0xff]
      %v1253 = vld [vmem:[%s1251 + $0x8] sm:$0xff]
      %v1254 = vld [vmem:[%s1251 + $0x10] sm:$0xff]
      %v1255 = vld [vmem:[%s1251 + $0x18] sm:$0xff]
      %v1256 = vld [vmem:[%s1251 + $0x20] sm:$0xff]
      %v1257 = vld [vmem:[%s1251 + $0x28] sm:$0xff]
      %v1258 = vld [vmem:[%s1251 + $0x30] sm:$0xff]
      %v1259 = vld [vmem:[%s1251 + $0x38] sm:$0xff]
      %1261 = vset.pattern.permute.xlu0 0
      %1262 = vperm.xlu0 %1261, %v1252
      %v1263 = vpop.permute.xlu0 %1262
      %1266 = vset.pattern.permute.xlu0 0
      %1267 = vperm.xlu0 %1266, %v1253
      %v1268 = vpop.permute.xlu0 %1267
      %1271 = vset.pattern.permute.xlu0 0
      %1272 = vperm.xlu0 %1271, %v1254
      %v1273 = vpop.permute.xlu0 %1272
      %1276 = vset.pattern.permute.xlu0 0
      %1277 = vperm.xlu0 %1276, %v1255
      %v1278 = vpop.permute.xlu0 %1277
      %1281 = vset.pattern.permute.xlu0 0
      %1282 = vperm.xlu0 %1281, %v1256
      %v1283 = vpop.permute.xlu0 %1282
      %1286 = vset.pattern.permute.xlu0 0
      %1287 = vperm.xlu0 %1286, %v1257
      %v1288 = vpop.permute.xlu0 %1287
      %1291 = vset.pattern.permute.xlu0 0
      %1292 = vperm.xlu0 %1291, %v1258
      %v1293 = vpop.permute.xlu0 %1292
      %1296 = vset.pattern.permute.xlu0 0
      %1297 = vperm.xlu0 %1296, %v1259
      %v1298 = vpop.permute.xlu0 %1297
      %v1300 = vadd.f32 %v1243, %v1263
      %v1301 = vadd.f32 %v1244, %v1268
      %v1302 = vadd.f32 %v1245, %v1273
      %v1303 = vadd.f32 %v1246, %v1278
      %v1304 = vadd.f32 %v1247, %v1283
      %v1305 = vadd.f32 %v1248, %v1288
      %v1306 = vadd.f32 %v1249, %v1293
      %v1307 = vadd.f32 %v1250, %v1298
      %vm1308 = vcmp.ge.f32.partialorder %v1300, 0.0
      %vm1309 = vcmp.ge.f32.partialorder %v1301, 0.0
      %vm1310 = vcmp.ge.f32.partialorder %v1302, 0.0
      %vm1311 = vcmp.ge.f32.partialorder %v1303, 0.0
      %vm1312 = vcmp.ge.f32.partialorder %v1304, 0.0
      %vm1313 = vcmp.ge.f32.partialorder %v1305, 0.0
      %vm1314 = vcmp.ge.f32.partialorder %v1306, 0.0
      %vm1315 = vcmp.ge.f32.partialorder %v1307, 0.0
      %v1316 = vmul.f32 %v1300, 0.25
      %v1317 = vmul.f32 %v1301, 0.25
      %v1318 = vmul.f32 %v1302, 0.25
      %v1319 = vmul.f32 %v1303, 0.25
      %v1320 = vmul.f32 %v1304, 0.25
      %v1321 = vmul.f32 %v1305, 0.25
      %v1322 = vmul.f32 %v1306, 0.25
      %v1323 = vmul.f32 %v1307, 0.25
      %v1324 = vsel %vm1308, %v1300, %v1316
      %v1325 = vsel %vm1309, %v1301, %v1317
      %v1326 = vsel %vm1310, %v1302, %v1318
      %v1327 = vsel %vm1311, %v1303, %v1319
      %v1328 = vsel %vm1312, %v1304, %v1320
      %v1329 = vsel %vm1313, %v1305, %v1321
      %v1330 = vsel %vm1314, %v1306, %v1322
      %v1331 = vsel %vm1315, %v1307, %v1323
      %s1332 = scalar_lea.vmem [#allocation3], 64
      %1333 = vst [vmem:[%s1332] sm:$0xff] %v1324
      %1334 = vst [vmem:[%s1332 + $0x8] sm:$0xff] %v1325
      %1335 = vst [vmem:[%s1332 + $0x10] sm:$0xff] %v1326
      %1336 = vst [vmem:[%s1332 + $0x18] sm:$0xff] %v1327
      %1337 = vst [vmem:[%s1332 + $0x20] sm:$0xff] %v1328
      %1338 = vst [vmem:[%s1332 + $0x28] sm:$0xff] %v1329
      %1339 = vst [vmem:[%s1332 + $0x30] sm:$0xff] %v1330
      %1340 = vst [vmem:[%s1332 + $0x38] sm:$0xff] %v1331
      %v1341 = vld [vmem:[%s1332] sm:$0xff]
      %v1342 = vld [vmem:[%s1332 + $0x8] sm:$0xff]
      %v1343 = vld [vmem:[%s1332 + $0x10] sm:$0xff]
      %v1344 = vld [vmem:[%s1332 + $0x18] sm:$0xff]
      %v1345 = vld [vmem:[%s1332 + $0x20] sm:$0xff]
      %v1346 = vld [vmem:[%s1332 + $0x28] sm:$0xff]
      %v1347 = vld [vmem:[%s1332 + $0x30] sm:$0xff]
      %v1348 = vld [vmem:[%s1332 + $0x38] sm:$0xff]
      %v1349 = vpack.c.bf16 %v1342, %v1341
      %v1350 = vpack.c.bf16 %v1344, %v1343
      %v1351 = vpack.c.bf16 %v1346, %v1345
      %v1352 = vpack.c.bf16 %v1348, %v1347
      %1361 = vrot.lane.b32.xlu0 %v1341, 1
      %v1362 = vpop.permute.xlu0 %1361
      %1363 = vrot.lane.b32.xlu0 %v1342, 1
      %v1364 = vpop.permute.xlu0 %1363
      %1365 = vrot.lane.b32.xlu0 %v1343, 1
      %v1366 = vpop.permute.xlu0 %1365
      %1367 = vrot.lane.b32.xlu0 %v1344, 1
      %v1368 = vpop.permute.xlu0 %1367
      %1369 = vrot.lane.b32.xlu0 %v1345, 1
      %v1370 = vpop.permute.xlu0 %1369
      %1371 = vrot.lane.b32.xlu0 %v1346, 1
      %v1372 = vpop.permute.xlu0 %1371
      %1373 = vrot.lane.b32.xlu0 %v1347, 1
      %v1374 = vpop.permute.xlu0 %1373
      %1375 = vrot.lane.b32.xlu0 %v1348, 1
      %v1376 = vpop.permute.xlu0 %1375
      %v1385 = vld [vmem:[%s5] sm:$0xff]
      %v1386 = vlaneseq
      %v1387 = vshrl.u32 %v1386, 7
      %v1388 = vsub.s32 0, %v1387
      %v1389 = vrot.slane %v1385, %v1388
      %v1390 = vmul.f32 %v1362, %v1389
      %v1391 = vmul.f32 %v1364, %v1389
      %v1392 = vmul.f32 %v1366, %v1389
      %v1393 = vmul.f32 %v1368, %v1389
      %v1394 = vmul.f32 %v1370, %v1389
      %v1395 = vmul.f32 %v1372, %v1389
      %v1396 = vmul.f32 %v1374, %v1389
      %v1397 = vmul.f32 %v1376, %v1389
      %v1398 = vpack.c.bf16 %v1391, %v1390
      %v1399 = vpack.c.bf16 %v1393, %v1392
      %v1400 = vpack.c.bf16 %v1395, %v1394
      %v1401 = vpack.c.bf16 %v1397, %v1396
      %v1402 = vpack.c.bf16 %v299, %v298
      %v1403 = vpack.c.bf16 %v301, %v300
      %v1404 = vpack.c.bf16 %v303, %v302
      %v1405 = vpack.c.bf16 %v305, %v304
      %1414 = vrot.lane.b32.xlu0 %v298, 1
      %v1415 = vpop.permute.xlu0 %1414
      %1416 = vrot.lane.b32.xlu0 %v299, 1
      %v1417 = vpop.permute.xlu0 %1416
      %1418 = vrot.lane.b32.xlu0 %v300, 1
      %v1419 = vpop.permute.xlu0 %1418
      %1420 = vrot.lane.b32.xlu0 %v301, 1
      %v1421 = vpop.permute.xlu0 %1420
      %1422 = vrot.lane.b32.xlu0 %v302, 1
      %v1423 = vpop.permute.xlu0 %1422
      %1424 = vrot.lane.b32.xlu0 %v303, 1
      %v1425 = vpop.permute.xlu0 %1424
      %1426 = vrot.lane.b32.xlu0 %v304, 1
      %v1427 = vpop.permute.xlu0 %1426
      %1428 = vrot.lane.b32.xlu0 %v305, 1
      %v1429 = vpop.permute.xlu0 %1428
      %v1438 = vmul.f32 %v1415, %v1389
      %v1439 = vmul.f32 %v1417, %v1389
      %v1440 = vmul.f32 %v1419, %v1389
      %v1441 = vmul.f32 %v1421, %v1389
      %v1442 = vmul.f32 %v1423, %v1389
      %v1443 = vmul.f32 %v1425, %v1389
      %v1444 = vmul.f32 %v1427, %v1389
      %v1445 = vmul.f32 %v1429, %v1389
      %v1446 = vpack.c.bf16 %v1439, %v1438
      %v1447 = vpack.c.bf16 %v1441, %v1440
      %v1448 = vpack.c.bf16 %v1443, %v1442
      %v1449 = vpack.c.bf16 %v1445, %v1444
      %s1450 = scalar_lea.vmem %s3, 64
      %v1451 = vld [vmem:[%s1450] sm:$0xff]
      %v1452 = vld [vmem:[%s1450 + $0x8] sm:$0xff]
      %v1453 = vld [vmem:[%s1450 + $0x10] sm:$0xff]
      %v1454 = vld [vmem:[%s1450 + $0x18] sm:$0xff]
      %v1455 = vld [vmem:[%s1450 + $0x20] sm:$0xff]
      %v1456 = vld [vmem:[%s1450 + $0x28] sm:$0xff]
      %v1457 = vld [vmem:[%s1450 + $0x30] sm:$0xff]
      %v1458 = vld [vmem:[%s1450 + $0x38] sm:$0xff]
      %s1459 = scalar_lea.vmem %s4, 384
      %v1460 = vld [vmem:[%s1459] sm:$0xff]
      %v1461 = vld [vmem:[%s1459 + $0x8] sm:$0xff]
      %v1462 = vld [vmem:[%s1459 + $0x10] sm:$0xff]
      %v1463 = vld [vmem:[%s1459 + $0x18] sm:$0xff]
      %v1464 = vld [vmem:[%s1459 + $0x20] sm:$0xff]
      %v1465 = vld [vmem:[%s1459 + $0x28] sm:$0xff]
      %v1466 = vld [vmem:[%s1459 + $0x30] sm:$0xff]
      %v1467 = vld [vmem:[%s1459 + $0x38] sm:$0xff]
      %1469 = vset.pattern.permute.xlu0 0
      %1470 = vperm.xlu0 %1469, %v1460
      %v1471 = vpop.permute.xlu0 %1470
      %1474 = vset.pattern.permute.xlu0 0
      %1475 = vperm.xlu0 %1474, %v1461
      %v1476 = vpop.permute.xlu0 %1475
      %1479 = vset.pattern.permute.xlu0 0
      %1480 = vperm.xlu0 %1479, %v1462
      %v1481 = vpop.permute.xlu0 %1480
      %1484 = vset.pattern.permute.xlu0 0
      %1485 = vperm.xlu0 %1484, %v1463
      %v1486 = vpop.permute.xlu0 %1485
      %1489 = vset.pattern.permute.xlu0 0
      %1490 = vperm.xlu0 %1489, %v1464
      %v1491 = vpop.permute.xlu0 %1490
      %1494 = vset.pattern.permute.xlu0 0
      %1495 = vperm.xlu0 %1494, %v1465
      %v1496 = vpop.permute.xlu0 %1495
      %1499 = vset.pattern.permute.xlu0 0
      %1500 = vperm.xlu0 %1499, %v1466
      %v1501 = vpop.permute.xlu0 %1500
      %1504 = vset.pattern.permute.xlu0 0
      %1505 = vperm.xlu0 %1504, %v1467
      %v1506 = vpop.permute.xlu0 %1505
      %v1516 = vunpack.c.l.b16 %v1451
      %v1517 = vunpack.c.h.b16 %v1451
      %v1518 = vunpack.c.l.b16 %v1452
      %v1519 = vunpack.c.h.b16 %v1452
      %v1520 = vunpack.c.l.b16 %v1453
      %v1521 = vunpack.c.h.b16 %v1453
      %v1522 = vunpack.c.l.b16 %v1454
      %v1523 = vunpack.c.h.b16 %v1454
      %v1524 = vunpack.c.l.b16 %v1455
      %v1525 = vunpack.c.h.b16 %v1455
      %v1526 = vunpack.c.l.b16 %v1456
      %v1527 = vunpack.c.h.b16 %v1456
      %v1528 = vunpack.c.l.b16 %v1457
      %v1529 = vunpack.c.h.b16 %v1457
      %v1530 = vunpack.c.l.b16 %v1458
      %v1531 = vunpack.c.h.b16 %v1458
      %v1532 = vpack.c.b16 %v1518, %v1516
      %v1533 = vpack.c.b16 %v1519, %v1517
      %v1534 = vpack.c.b16 %v1522, %v1520
      %v1535 = vpack.c.b16 %v1523, %v1521
      %v1536 = vpack.c.b16 %v1526, %v1524
      %v1537 = vpack.c.b16 %v1527, %v1525
      %v1538 = vpack.c.b16 %v1530, %v1528
      %v1539 = vpack.c.b16 %v1531, %v1529
      %1548 = vmatprep.subr.bf16.mxu0 0
      %1549 = vmatpush1.bf16.msra.mxu0 %v1349
      %1550 = vmatprep.subr.bf16.mxu0 0
      %1551 = vmatpush1.bf16.msra.mxu0 %v1350
      %1552 = vmatprep.subr.bf16.mxu0 0
      %1553 = vmatpush1.bf16.msra.mxu0 %v1351
      %1554 = vmatprep.subr.bf16.mxu0 0
      %1555 = vmatpush1.bf16.msra.mxu0 %v1352
      %1556 = vmatprep.subr.bf16.mxu0 0
      %1557 = vmatpush1.bf16.msra.mxu0 %v1398
      %1558 = vmatprep.subr.bf16.mxu0 0
      %1559 = vmatpush1.bf16.msra.mxu0 %v1399
      %1560 = vmatprep.subr.bf16.mxu0 0
      %1561 = vmatpush1.bf16.msra.mxu0 %v1400
      %1562 = vmatprep.subr.bf16.mxu0 0
      %1563 = vmatpush1.bf16.msra.mxu0 %v1401
      %1564 = vmatprep.subr.bf16.mxu0 0
      %1565 = vmatpush1.bf16.msra.mxu0 %v1402
      %1566 = vmatprep.subr.bf16.mxu0 0
      %1567 = vmatpush1.bf16.msra.mxu0 %v1403
      %1568 = vmatprep.subr.bf16.mxu0 0
      %1569 = vmatpush1.bf16.msra.mxu0 %v1404
      %1570 = vmatprep.subr.bf16.mxu0 0
      %1571 = vmatpush1.bf16.msra.mxu0 %v1405
      %1572 = vmatprep.subr.bf16.mxu0 0
      %1573 = vmatpush1.bf16.msra.mxu0 %v1446
      %1574 = vmatprep.subr.bf16.mxu0 0
      %1575 = vmatpush1.bf16.msra.mxu0 %v1447
      %1576 = vmatprep.subr.bf16.mxu0 0
      %1577 = vmatpush1.bf16.msra.mxu0 %v1448
      %1578 = vmatprep.subr.bf16.mxu0 0
      %1579 = vmatpush1.bf16.msra.mxu0 %v1449
      %1580 = vmatprep.mubr.bf16.mxu0 %v1533
      %1581 = vmatmul.mubr.bf16.gmra.mrb[0].mxu0 %v1532
      %v1582 = vpop.f32.mrb[0].mxu0
      %v1583 = vadd.f32 %v1471, %v1582
      %v1584 = vpop.f32.mrb[0].mxu0
      %v1585 = vpop.f32.mrb[0].mxu0
      %v1586 = vadd.f32 %v1476, %v1585
      %v1587 = vpop.f32.mrb[0].mxu0
      %1588 = vmatprep.mubr.bf16.mxu0 %v1535
      %1589 = vmatmul.mubr.bf16.gmra.mrb[0].mxu0 %v1534
      %v1590 = vpop.f32.mrb[0].mxu0
      %v1591 = vadd.f32 %v1481, %v1590
      %v1592 = vpop.f32.mrb[0].mxu0
      %v1593 = vpop.f32.mrb[0].mxu0
      %v1594 = vadd.f32 %v1486, %v1593
      %v1595 = vpop.f32.mrb[0].mxu0
      %1596 = vmatprep.mubr.bf16.mxu0 %v1537
      %1597 = vmatmul.mubr.bf16.gmra.mrb[0].mxu0 %v1536
      %v1598 = vpop.f32.mrb[0].mxu0
      %v1599 = vadd.f32 %v1491, %v1598
      %v1600 = vpop.f32.mrb[0].mxu0
      %v1601 = vpop.f32.mrb[0].mxu0
      %v1602 = vadd.f32 %v1496, %v1601
      %v1603 = vpop.f32.mrb[0].mxu0
      %1604 = vmatprep.mubr.bf16.mxu0 %v1539
      %1605 = vmatmul.mubr.bf16.gmra.mrb[0].mxu0 %v1538
      %v1606 = vpop.f32.mrb[0].mxu0
      %v1607 = vadd.f32 %v1501, %v1606
      %v1608 = vpop.f32.mrb[0].mxu0
      %v1609 = vpop.f32.mrb[0].mxu0
      %v1610 = vadd.f32 %v1506, %v1609
      %v1611 = vpop.f32.mrb[0].mxu0
      %1612 = vdwg.mxu0
      %v1613 = vadd.f32 %v1583, %v1586
      %v1614 = vadd.f32 %v1613, %v1591
      %v1615 = vadd.f32 %v1614, %v1594
      %v1616 = vadd.f32 %v1615, %v1599
      %v1617 = vadd.f32 %v1616, %v1602
      %v1618 = vadd.f32 %v1617, %v1607
      %v1619 = vadd.f32 %v1618, %v1610
      %v1620 = vrot.slane %v1619, 4
      %v1621 = vadd.f32 %v1619, %v1620
      %v1622 = vrot.slane %v1621, 2
      %v1623 = vadd.f32 %v1621, %v1622
      %v1624 = vrot.slane %v1623, 1
      %v1625 = vadd.f32 %v1623, %v1624
      %v1626 = vmul.f32 %v1583, %v1583
      %v1627 = vmul.f32 %v1586, %v1586
      %v1628 = vmul.f32 %v1591, %v1591
      %v1629 = vmul.f32 %v1594, %v1594
      %v1630 = vmul.f32 %v1599, %v1599
      %v1631 = vmul.f32 %v1602, %v1602
      %v1632 = vmul.f32 %v1607, %v1607
      %v1633 = vmul.f32 %v1610, %v1610
      %v1634 = vadd.f32 %v1626, %v1627
      %v1635 = vadd.f32 %v1634, %v1628
      %v1636 = vadd.f32 %v1635, %v1629
      %v1637 = vadd.f32 %v1636, %v1630
      %v1638 = vadd.f32 %v1637, %v1631
      %v1639 = vadd.f32 %v1638, %v1632
      %v1640 = vadd.f32 %v1639, %v1633
      %v1641 = vrot.slane %v1640, 4
      %v1642 = vadd.f32 %v1640, %v1641
      %v1643 = vrot.slane %v1642, 2
      %v1644 = vadd.f32 %v1642, %v1643
      %v1645 = vrot.slane %v1644, 1
      %v1646 = vadd.f32 %v1644, %v1645
      %v1647 = vsel %vm531, %v1625, %v1646
      %v1648 = vsel %vm533, %v1647, 0.0
      %1649 = vmatprep.subr.mxu0 0.0
      %1650 = vmatpush1.msra.mxu0 %v323
      %1651 = vmatprep.subr.mxu0 0.0
      %1652 = vmatpush1.msra.mxu0 %v324
      %1653 = vmatprep.subr.mxu0 0.0
      %1654 = vmatpush1.msra.mxu0 %v325
      %1655 = vmatprep.subr.mxu0 0.0
      %1656 = vmatpush1.msra.mxu0 %v326
      %1657 = vmatprep.subr.mxu0 0.0
      %1658 = vmatpush1.msra.mxu0 %v327
      %1659 = vmatprep.subr.mxu0 0.0
      %1660 = vmatpush1.msra.mxu0 %v328
      %1661 = vmatprep.subr.mxu0 0.0
      %1662 = vmatpush1.msra.mxu0 %v329
      %1663 = vmatprep.subr.mxu0 0.0
      %1664 = vmatpush1.msra.mxu0 %v330
      %1665 = vmatprep.subr.mxu0 0.0
      %1666 = vmatpush1.msra.mxu0 %v331
      %1667 = vmatprep.subr.mxu0 0.0
      %1668 = vmatpush1.msra.mxu0 %v332
      %1669 = vmatprep.subr.mxu0 0.0
      %1670 = vmatpush1.msra.mxu0 %v333
      %1671 = vmatprep.subr.mxu0 0.0
      %1672 = vmatpush1.msra.mxu0 %v334
      %1673 = vmatprep.subr.mxu0 0.0
      %1674 = vmatpush1.msra.mxu0 %v335
      %1675 = vmatprep.subr.mxu0 0.0
      %1676 = vmatpush1.msra.mxu0 %v336
      %1677 = vmatprep.subr.mxu0 0.0
      %1678 = vmatpush1.msra.mxu0 %v337
      %1679 = vmatprep.subr.mxu0 0.0
      %1680 = vmatpush1.msra.mxu0 %v338
      %1681 = vmatprep.subr.mxu0 0.0
      %1682 = vmatpush1.msra.mxu0 0.0
      %1683 = vmatprep.subr.mxu0 0.0
      %1684 = vmatpush1.msra.mxu0 0.0
      %1685 = vmatprep.subr.mxu0 0.0
      %1686 = vmatpush1.msra.mxu0 0.0
      %1687 = vmatprep.subr.mxu0 0.0
      %1688 = vmatpush1.msra.mxu0 0.0
      %1689 = vmatprep.subr.mxu0 0.0
      %1690 = vmatpush1.msra.mxu0 0.0
      %1691 = vmatprep.subr.mxu0 0.0
      %1692 = vmatpush1.msra.mxu0 0.0
      %1693 = vmatprep.subr.mxu0 0.0
      %1694 = vmatpush1.msra.mxu0 0.0
      %1695 = vmatprep.subr.mxu0 0.0
      %1696 = vmatpush1.msra.mxu0 0.0
      %1697 = vmatprep.subr.mxu0 0.0
      %1698 = vmatpush1.msra.mxu0 0.0
      %1699 = vmatprep.subr.mxu0 0.0
      %1700 = vmatpush1.msra.mxu0 0.0
      %1701 = vmatprep.subr.mxu0 0.0
      %1702 = vmatpush1.msra.mxu0 0.0
      %1703 = vmatprep.subr.mxu0 0.0
      %1704 = vmatpush1.msra.mxu0 0.0
      %1705 = vmatprep.subr.mxu0 0.0
      %1706 = vmatpush1.msra.mxu0 0.0
      %1707 = vmatprep.subr.mxu0 0.0
      %1708 = vmatpush1.msra.mxu0 0.0
      %1709 = vmatprep.subr.mxu0 0.0
      %1710 = vmatpush1.msra.mxu0 0.0
      %1711 = vmatprep.subr.mxu0 0.0
      %1712 = vmatpush1.msra.mxu0 0.0
      %1713 = vmatprep.mubr.f32.mxu0 0.0
      %1714 = vmatmul.mubr.f32.gmra.mrb[0].mxu0 %v1648
      %v1715 = vpop.f32.mrb[0].mxu0
      %v1716 = vadd.f32 0.0, %v1715
      %v1717 = vpop.f32.mrb[0].mxu0
      %1718 = vdwg.mxu0
      %v1719 = vmul.f32 %v1716, 0.001953125
      %v1720 = vmul.f32 %v1719, %v1719
      %v1722 = vrot.slane %v1720, 7
      %v1724 = vsub.f32 %v1719, %v1722
      %v1725 = vmax.f32 %v1724, 0.0
      %v1726 = vlaneseq
      %v1727 = vshrl.u32 %v1726, 7
      %v1728 = vsub.s32 0, %v1727
      %v1729 = vrot.slane %v1719, %v1728
      %v1730 = vsub.f32 %v1583, %v1729
      %v1731 = vsub.f32 %v1586, %v1729
      %v1732 = vsub.f32 %v1591, %v1729
      %v1733 = vsub.f32 %v1594, %v1729
      %v1734 = vsub.f32 %v1599, %v1729
      %v1735 = vsub.f32 %v1602, %v1729
      %v1736 = vsub.f32 %v1607, %v1729
      %v1737 = vsub.f32 %v1610, %v1729
      %v1738 = vadd.f32 %v1725, 1e-08
      %v1739 = vrsqrt.pop %v1738
      %v1740 = vlaneseq
      %v1741 = vshrl.u32 %v1740, 7
      %v1742 = vsub.s32 1, %v1741
      %v1743 = vrot.slane %v1739, %v1742
      %v1744 = vmul.f32 %v1730, %v1743
      %v1745 = vmul.f32 %v1731, %v1743
      %v1746 = vmul.f32 %v1732, %v1743
      %v1747 = vmul.f32 %v1733, %v1743
      %v1748 = vmul.f32 %v1734, %v1743
      %v1749 = vmul.f32 %v1735, %v1743
      %v1750 = vmul.f32 %v1736, %v1743
      %v1751 = vmul.f32 %v1737, %v1743
      %s1752 = scalar_lea.vmem %s4, 448
      %v1753 = vld [vmem:[%s1752] sm:$0xff]
      %v1754 = vld [vmem:[%s1752 + $0x8] sm:$0xff]
      %v1755 = vld [vmem:[%s1752 + $0x10] sm:$0xff]
      %v1756 = vld [vmem:[%s1752 + $0x18] sm:$0xff]
      %v1757 = vld [vmem:[%s1752 + $0x20] sm:$0xff]
      %v1758 = vld [vmem:[%s1752 + $0x28] sm:$0xff]
      %v1759 = vld [vmem:[%s1752 + $0x30] sm:$0xff]
      %v1760 = vld [vmem:[%s1752 + $0x38] sm:$0xff]
      %1762 = vset.pattern.permute.xlu0 0
      %1763 = vperm.xlu0 %1762, %v1753
      %v1764 = vpop.permute.xlu0 %1763
      %1767 = vset.pattern.permute.xlu0 0
      %1768 = vperm.xlu0 %1767, %v1754
      %v1769 = vpop.permute.xlu0 %1768
      %1772 = vset.pattern.permute.xlu0 0
      %1773 = vperm.xlu0 %1772, %v1755
      %v1774 = vpop.permute.xlu0 %1773
      %1777 = vset.pattern.permute.xlu0 0
      %1778 = vperm.xlu0 %1777, %v1756
      %v1779 = vpop.permute.xlu0 %1778
      %1782 = vset.pattern.permute.xlu0 0
      %1783 = vperm.xlu0 %1782, %v1757
      %v1784 = vpop.permute.xlu0 %1783
      %1787 = vset.pattern.permute.xlu0 0
      %1788 = vperm.xlu0 %1787, %v1758
      %v1789 = vpop.permute.xlu0 %1788
      %1792 = vset.pattern.permute.xlu0 0
      %1793 = vperm.xlu0 %1792, %v1759
      %v1794 = vpop.permute.xlu0 %1793
      %1797 = vset.pattern.permute.xlu0 0
      %1798 = vperm.xlu0 %1797, %v1760
      %v1799 = vpop.permute.xlu0 %1798
      %v1801 = vmul.f32 %v1744, %v1764
      %v1802 = vmul.f32 %v1745, %v1769
      %v1803 = vmul.f32 %v1746, %v1774
      %v1804 = vmul.f32 %v1747, %v1779
      %v1805 = vmul.f32 %v1748, %v1784
      %v1806 = vmul.f32 %v1749, %v1789
      %v1807 = vmul.f32 %v1750, %v1794
      %v1808 = vmul.f32 %v1751, %v1799
      %s1809 = scalar_lea.vmem %s4, 512
      %v1810 = vld [vmem:[%s1809] sm:$0xff]
      %v1811 = vld [vmem:[%s1809 + $0x8] sm:$0xff]
      %v1812 = vld [vmem:[%s1809 + $0x10] sm:$0xff]
      %v1813 = vld [vmem:[%s1809 + $0x18] sm:$0xff]
      %v1814 = vld [vmem:[%s1809 + $0x20] sm:$0xff]
      %v1815 = vld [vmem:[%s1809 + $0x28] sm:$0xff]
      %v1816 = vld [vmem:[%s1809 + $0x30] sm:$0xff]
      %v1817 = vld [vmem:[%s1809 + $0x38] sm:$0xff]
      %1819 = vset.pattern.permute.xlu0 0
      %1820 = vperm.xlu0 %1819, %v1810
      %v1821 = vpop.permute.xlu0 %1820
      %1824 = vset.pattern.permute.xlu0 0
      %1825 = vperm.xlu0 %1824, %v1811
      %v1826 = vpop.permute.xlu0 %1825
      %1829 = vset.pattern.permute.xlu0 0
      %1830 = vperm.xlu0 %1829, %v1812
      %v1831 = vpop.permute.xlu0 %1830
      %1834 = vset.pattern.permute.xlu0 0
      %1835 = vperm.xlu0 %1834, %v1813
      %v1836 = vpop.permute.xlu0 %1835
      %1839 = vset.pattern.permute.xlu0 0
      %1840 = vperm.xlu0 %1839, %v1814
      %v1841 = vpop.permute.xlu0 %1840
      %1844 = vset.pattern.permute.xlu0 0
      %1845 = vperm.xlu0 %1844, %v1815
      %v1846 = vpop.permute.xlu0 %1845
      %1849 = vset.pattern.permute.xlu0 0
      %1850 = vperm.xlu0 %1849, %v1816
      %v1851 = vpop.permute.xlu0 %1850
      %1854 = vset.pattern.permute.xlu0 0
      %1855 = vperm.xlu0 %1854, %v1817
      %v1856 = vpop.permute.xlu0 %1855
      %v1858 = vadd.f32 %v1801, %v1821
      %v1859 = vadd.f32 %v1802, %v1826
      %v1860 = vadd.f32 %v1803, %v1831
      %v1861 = vadd.f32 %v1804, %v1836
      %v1862 = vadd.f32 %v1805, %v1841
      %v1863 = vadd.f32 %v1806, %v1846
      %v1864 = vadd.f32 %v1807, %v1851
      %v1865 = vadd.f32 %v1808, %v1856
      %vm1866 = vcmp.ge.f32.partialorder %v1858, 0.0
      %vm1867 = vcmp.ge.f32.partialorder %v1859, 0.0
      %vm1868 = vcmp.ge.f32.partialorder %v1860, 0.0
      %vm1869 = vcmp.ge.f32.partialorder %v1861, 0.0
      %vm1870 = vcmp.ge.f32.partialorder %v1862, 0.0
      %vm1871 = vcmp.ge.f32.partialorder %v1863, 0.0
      %vm1872 = vcmp.ge.f32.partialorder %v1864, 0.0
      %vm1873 = vcmp.ge.f32.partialorder %v1865, 0.0
      %v1874 = vmul.f32 %v1858, 0.25
      %v1875 = vmul.f32 %v1859, 0.25
      %v1876 = vmul.f32 %v1860, 0.25
      %v1877 = vmul.f32 %v1861, 0.25
      %v1878 = vmul.f32 %v1862, 0.25
      %v1879 = vmul.f32 %v1863, 0.25
      %v1880 = vmul.f32 %v1864, 0.25
      %v1881 = vmul.f32 %v1865, 0.25
      %v1882 = vsel %vm1866, %v1858, %v1874
      %v1883 = vsel %vm1867, %v1859, %v1875
      %v1884 = vsel %vm1868, %v1860, %v1876
      %v1885 = vsel %vm1869, %v1861, %v1877
      %v1886 = vsel %vm1870, %v1862, %v1878
      %v1887 = vsel %vm1871, %v1863, %v1879
      %v1888 = vsel %vm1872, %v1864, %v1880
      %v1889 = vsel %vm1873, %v1865, %v1881
      %s1890 = scalar_lea.vmem [#allocation3], 128
      %1891 = vst [vmem:[%s1890] sm:$0xff] %v1882
      %1892 = vst [vmem:[%s1890 + $0x8] sm:$0xff] %v1883
      %1893 = vst [vmem:[%s1890 + $0x10] sm:$0xff] %v1884
      %1894 = vst [vmem:[%s1890 + $0x18] sm:$0xff] %v1885
      %1895 = vst [vmem:[%s1890 + $0x20] sm:$0xff] %v1886
      %1896 = vst [vmem:[%s1890 + $0x28] sm:$0xff] %v1887
      %1897 = vst [vmem:[%s1890 + $0x30] sm:$0xff] %v1888
      %1898 = vst [vmem:[%s1890 + $0x38] sm:$0xff] %v1889
      %v1899 = vld [vmem:[%s1890] sm:$0xff]
      %v1900 = vld [vmem:[%s1890 + $0x8] sm:$0xff]
      %v1901 = vld [vmem:[%s1890 + $0x10] sm:$0xff]
      %v1902 = vld [vmem:[%s1890 + $0x18] sm:$0xff]
      %v1903 = vld [vmem:[%s1890 + $0x20] sm:$0xff]
      %v1904 = vld [vmem:[%s1890 + $0x28] sm:$0xff]
      %v1905 = vld [vmem:[%s1890 + $0x30] sm:$0xff]
      %v1906 = vld [vmem:[%s1890 + $0x38] sm:$0xff]
      %v1907 = vpack.c.bf16 %v1900, %v1899
      %v1908 = vpack.c.bf16 %v1902, %v1901
      %v1909 = vpack.c.bf16 %v1904, %v1903
      %v1910 = vpack.c.bf16 %v1906, %v1905
      %1919 = vrot.lane.b32.xlu0 %v1899, 1
      %v1920 = vpop.permute.xlu0 %1919
      %1921 = vrot.lane.b32.xlu0 %v1900, 1
      %v1922 = vpop.permute.xlu0 %1921
      %1923 = vrot.lane.b32.xlu0 %v1901, 1
      %v1924 = vpop.permute.xlu0 %1923
      %1925 = vrot.lane.b32.xlu0 %v1902, 1
      %v1926 = vpop.permute.xlu0 %1925
      %1927 = vrot.lane.b32.xlu0 %v1903, 1
      %v1928 = vpop.permute.xlu0 %1927
      %1929 = vrot.lane.b32.xlu0 %v1904, 1
      %v1930 = vpop.permute.xlu0 %1929
      %1931 = vrot.lane.b32.xlu0 %v1905, 1
      %v1932 = vpop.permute.xlu0 %1931
      %1933 = vrot.lane.b32.xlu0 %v1906, 1
      %v1934 = vpop.permute.xlu0 %1933
      %v1943 = vld [vmem:[%s5] sm:$0xff]
      %v1944 = vlaneseq
      %v1945 = vshrl.u32 %v1944, 7
      %v1946 = vsub.s32 0, %v1945
      %v1947 = vrot.slane %v1943, %v1946
      %v1948 = vmul.f32 %v1920, %v1947
      %v1949 = vmul.f32 %v1922, %v1947
      %v1950 = vmul.f32 %v1924, %v1947
      %v1951 = vmul.f32 %v1926, %v1947
      %v1952 = vmul.f32 %v1928, %v1947
      %v1953 = vmul.f32 %v1930, %v1947
      %v1954 = vmul.f32 %v1932, %v1947
      %v1955 = vmul.f32 %v1934, %v1947
      %v1956 = vpack.c.bf16 %v1949, %v1948
      %v1957 = vpack.c.bf16 %v1951, %v1950
      %v1958 = vpack.c.bf16 %v1953, %v1952
      %v1959 = vpack.c.bf16 %v1955, %v1954
      %v1960 = vpack.c.bf16 %v308, %v307
      %v1961 = vpack.c.bf16 %v310, %v309
      %v1962 = vpack.c.bf16 %v312, %v311
      %v1963 = vpack.c.bf16 %v314, %v313
      %1972 = vrot.lane.b32.xlu0 %v307, 1
      %v1973 = vpop.permute.xlu0 %1972
      %1974 = vrot.lane.b32.xlu0 %v308, 1
      %v1975 = vpop.permute.xlu0 %1974
      %1976 = vrot.lane.b32.xlu0 %v309, 1
      %v1977 = vpop.permute.xlu0 %1976
      %1978 = vrot.lane.b32.xlu0 %v310, 1
      %v1979 = vpop.permute.xlu0 %1978
      %1980 = vrot.lane.b32.xlu0 %v311, 1
      %v1981 = vpop.permute.xlu0 %1980
      %1982 = vrot.lane.b32.xlu0 %v312, 1
      %v1983 = vpop.permute.xlu0 %1982
      %1984 = vrot.lane.b32.xlu0 %v313, 1
      %v1985 = vpop.permute.xlu0 %1984
      %1986 = vrot.lane.b32.xlu0 %v314, 1
      %v1987 = vpop.permute.xlu0 %1986
      %v1996 = vmul.f32 %v1973, %v1947
      %v1997 = vmul.f32 %v1975, %v1947
      %v1998 = vmul.f32 %v1977, %v1947
      %v1999 = vmul.f32 %v1979, %v1947
      %v2000 = vmul.f32 %v1981, %v1947
      %v2001 = vmul.f32 %v1983, %v1947
      %v2002 = vmul.f32 %v1985, %v1947
      %v2003 = vmul.f32 %v1987, %v1947
      %v2004 = vpack.c.bf16 %v1997, %v1996
      %v2005 = vpack.c.bf16 %v1999, %v1998
      %v2006 = vpack.c.bf16 %v2001, %v2000
      %v2007 = vpack.c.bf16 %v2003, %v2002
      %s2008 = scalar_lea.vmem %s3, 128
      %v2009 = vld [vmem:[%s2008] sm:$0xff]
      %v2010 = vld [vmem:[%s2008 + $0x8] sm:$0xff]
      %v2011 = vld [vmem:[%s2008 + $0x10] sm:$0xff]
      %v2012 = vld [vmem:[%s2008 + $0x18] sm:$0xff]
      %v2013 = vld [vmem:[%s2008 + $0x20] sm:$0xff]
      %v2014 = vld [vmem:[%s2008 + $0x28] sm:$0xff]
      %v2015 = vld [vmem:[%s2008 + $0x30] sm:$0xff]
      %v2016 = vld [vmem:[%s2008 + $0x38] sm:$0xff]
      %s2017 = scalar_lea.vmem %s4, 576
      %v2018 = vld [vmem:[%s2017] sm:$0xff]
      %v2019 = vld [vmem:[%s2017 + $0x8] sm:$0xff]
      %v2020 = vld [vmem:[%s2017 + $0x10] sm:$0xff]
      %v2021 = vld [vmem:[%s2017 + $0x18] sm:$0xff]
      %v2022 = vld [vmem:[%s2017 + $0x20] sm:$0xff]
      %v2023 = vld [vmem:[%s2017 + $0x28] sm:$0xff]
      %v2024 = vld [vmem:[%s2017 + $0x30] sm:$0xff]
      %v2025 = vld [vmem:[%s2017 + $0x38] sm:$0xff]
      %2027 = vset.pattern.permute.xlu0 0
      %2028 = vperm.xlu0 %2027, %v2018
      %v2029 = vpop.permute.xlu0 %2028
      %2032 = vset.pattern.permute.xlu0 0
      %2033 = vperm.xlu0 %2032, %v2019
      %v2034 = vpop.permute.xlu0 %2033
      %2037 = vset.pattern.permute.xlu0 0
      %2038 = vperm.xlu0 %2037, %v2020
      %v2039 = vpop.permute.xlu0 %2038
      %2042 = vset.pattern.permute.xlu0 0
      %2043 = vperm.xlu0 %2042, %v2021
      %v2044 = vpop.permute.xlu0 %2043
      %2047 = vset.pattern.permute.xlu0 0
      %2048 = vperm.xlu0 %2047, %v2022
      %v2049 = vpop.permute.xlu0 %2048
      %2052 = vset.pattern.permute.xlu0 0
      %2053 = vperm.xlu0 %2052, %v2023
      %v2054 = vpop.permute.xlu0 %2053
      %2057 = vset.pattern.permute.xlu0 0
      %2058 = vperm.xlu0 %2057, %v2024
      %v2059 = vpop.permute.xlu0 %2058
      %2062 = vset.pattern.permute.xlu0 0
      %2063 = vperm.xlu0 %2062, %v2025
      %v2064 = vpop.permute.xlu0 %2063
      %v2074 = vunpack.c.l.b16 %v2009
      %v2075 = vunpack.c.h.b16 %v2009
      %v2076 = vunpack.c.l.b16 %v2010
      %v2077 = vunpack.c.h.b16 %v2010
      %v2078 = vunpack.c.l.b16 %v2011
      %v2079 = vunpack.c.h.b16 %v2011
      %v2080 = vunpack.c.l.b16 %v2012
      %v2081 = vunpack.c.h.b16 %v2012
      %v2082 = vunpack.c.l.b16 %v2013
      %v2083 = vunpack.c.h.b16 %v2013
      %v2084 = vunpack.c.l.b16 %v2014
      %v2085 = vunpack.c.h.b16 %v2014
      %v2086 = vunpack.c.l.b16 %v2015
      %v2087 = vunpack.c.h.b16 %v2015
      %v2088 = vunpack.c.l.b16 %v2016
      %v2089 = vunpack.c.h.b16 %v2016
      %v2090 = vpack.c.b16 %v2076, %v2074
      %v2091 = vpack.c.b16 %v2077, %v2075
      %v2092 = vpack.c.b16 %v2080, %v2078
      %v2093 = vpack.c.b16 %v2081, %v2079
      %v2094 = vpack.c.b16 %v2084, %v2082
      %v2095 = vpack.c.b16 %v2085, %v2083
      %v2096 = vpack.c.b16 %v2088, %v2086
      %v2097 = vpack.c.b16 %v2089, %v2087
      %2106 = vmatprep.subr.bf16.mxu0 0
      %2107 = vmatpush1.bf16.msra.mxu0 %v1907
      %2108 = vmatprep.subr.bf16.mxu0 0
      %2109 = vmatpush1.bf16.msra.mxu0 %v1908
      %2110 = vmatprep.subr.bf16.mxu0 0
      %2111 = vmatpush1.bf16.msra.mxu0 %v1909
      %2112 = vmatprep.subr.bf16.mxu0 0
      %2113 = vmatpush1.bf16.msra.mxu0 %v1910
      %2114 = vmatprep.subr.bf16.mxu0 0
      %2115 = vmatpush1.bf16.msra.mxu0 %v1956
      %2116 = vmatprep.subr.bf16.mxu0 0
      %2117 = vmatpush1.bf16.msra.mxu0 %v1957
      %2118 = vmatprep.subr.bf16.mxu0 0
      %2119 = vmatpush1.bf16.msra.mxu0 %v1958
      %2120 = vmatprep.subr.bf16.mxu0 0
      %2121 = vmatpush1.bf16.msra.mxu0 %v1959
      %2122 = vmatprep.subr.bf16.mxu0 0
      %2123 = vmatpush1.bf16.msra.mxu0 %v1960
      %2124 = vmatprep.subr.bf16.mxu0 0
      %2125 = vmatpush1.bf16.msra.mxu0 %v1961
      %2126 = vmatprep.subr.bf16.mxu0 0
      %2127 = vmatpush1.bf16.msra.mxu0 %v1962
      %2128 = vmatprep.subr.bf16.mxu0 0
      %2129 = vmatpush1.bf16.msra.mxu0 %v1963
      %2130 = vmatprep.subr.bf16.mxu0 0
      %2131 = vmatpush1.bf16.msra.mxu0 %v2004
      %2132 = vmatprep.subr.bf16.mxu0 0
      %2133 = vmatpush1.bf16.msra.mxu0 %v2005
      %2134 = vmatprep.subr.bf16.mxu0 0
      %2135 = vmatpush1.bf16.msra.mxu0 %v2006
      %2136 = vmatprep.subr.bf16.mxu0 0
      %2137 = vmatpush1.bf16.msra.mxu0 %v2007
      %2138 = vmatprep.mubr.bf16.mxu0 %v2091
      %2139 = vmatmul.mubr.bf16.gmra.mrb[0].mxu0 %v2090
      %v2140 = vpop.f32.mrb[0].mxu0
      %v2141 = vadd.f32 %v2029, %v2140
      %v2142 = vpop.f32.mrb[0].mxu0
      %v2143 = vpop.f32.mrb[0].mxu0
      %v2144 = vadd.f32 %v2034, %v2143
      %v2145 = vpop.f32.mrb[0].mxu0
      %2146 = vmatprep.mubr.bf16.mxu0 %v2093
      %2147 = vmatmul.mubr.bf16.gmra.mrb[0].mxu0 %v2092
      %v2148 = vpop.f32.mrb[0].mxu0
      %v2149 = vadd.f32 %v2039, %v2148
      %v2150 = vpop.f32.mrb[0].mxu0
      %v2151 = vpop.f32.mrb[0].mxu0
      %v2152 = vadd.f32 %v2044, %v2151
      %v2153 = vpop.f32.mrb[0].mxu0
      %2154 = vmatprep.mubr.bf16.mxu0 %v2095
      %2155 = vmatmul.mubr.bf16.gmra.mrb[0].mxu0 %v2094
      %v2156 = vpop.f32.mrb[0].mxu0
      %v2157 = vadd.f32 %v2049, %v2156
      %v2158 = vpop.f32.mrb[0].mxu0
      %v2159 = vpop.f32.mrb[0].mxu0
      %v2160 = vadd.f32 %v2054, %v2159
      %v2161 = vpop.f32.mrb[0].mxu0
      %2162 = vmatprep.mubr.bf16.mxu0 %v2097
      %2163 = vmatmul.mubr.bf16.gmra.mrb[0].mxu0 %v2096
      %v2164 = vpop.f32.mrb[0].mxu0
      %v2165 = vadd.f32 %v2059, %v2164
      %v2166 = vpop.f32.mrb[0].mxu0
      %v2167 = vpop.f32.mrb[0].mxu0
      %v2168 = vadd.f32 %v2064, %v2167
      %v2169 = vpop.f32.mrb[0].mxu0
      %2170 = vdwg.mxu0
      %v2171 = vadd.f32 %v2141, %v2144
      %v2172 = vadd.f32 %v2171, %v2149
      %v2173 = vadd.f32 %v2172, %v2152
      %v2174 = vadd.f32 %v2173, %v2157
      %v2175 = vadd.f32 %v2174, %v2160
      %v2176 = vadd.f32 %v2175, %v2165
      %v2177 = vadd.f32 %v2176, %v2168
      %v2178 = vrot.slane %v2177, 4
      %v2179 = vadd.f32 %v2177, %v2178
      %v2180 = vrot.slane %v2179, 2
      %v2181 = vadd.f32 %v2179, %v2180
      %v2182 = vrot.slane %v2181, 1
      %v2183 = vadd.f32 %v2181, %v2182
      %v2184 = vmul.f32 %v2141, %v2141
      %v2185 = vmul.f32 %v2144, %v2144
      %v2186 = vmul.f32 %v2149, %v2149
      %v2187 = vmul.f32 %v2152, %v2152
      %v2188 = vmul.f32 %v2157, %v2157
      %v2189 = vmul.f32 %v2160, %v2160
      %v2190 = vmul.f32 %v2165, %v2165
      %v2191 = vmul.f32 %v2168, %v2168
      %v2192 = vadd.f32 %v2184, %v2185
      %v2193 = vadd.f32 %v2192, %v2186
      %v2194 = vadd.f32 %v2193, %v2187
      %v2195 = vadd.f32 %v2194, %v2188
      %v2196 = vadd.f32 %v2195, %v2189
      %v2197 = vadd.f32 %v2196, %v2190
      %v2198 = vadd.f32 %v2197, %v2191
      %v2199 = vrot.slane %v2198, 4
      %v2200 = vadd.f32 %v2198, %v2199
      %v2201 = vrot.slane %v2200, 2
      %v2202 = vadd.f32 %v2200, %v2201
      %v2203 = vrot.slane %v2202, 1
      %v2204 = vadd.f32 %v2202, %v2203
      %v2205 = vsel %vm531, %v2183, %v2204
      %v2206 = vsel %vm533, %v2205, 0.0
      %2207 = vmatprep.subr.mxu0 0.0
      %2208 = vmatpush1.msra.mxu0 %v323
      %2209 = vmatprep.subr.mxu0 0.0
      %2210 = vmatpush1.msra.mxu0 %v324
      %2211 = vmatprep.subr.mxu0 0.0
      %2212 = vmatpush1.msra.mxu0 %v325
      %2213 = vmatprep.subr.mxu0 0.0
      %2214 = vmatpush1.msra.mxu0 %v326
      %2215 = vmatprep.subr.mxu0 0.0
      %2216 = vmatpush1.msra.mxu0 %v327
      %2217 = vmatprep.subr.mxu0 0.0
      %2218 = vmatpush1.msra.mxu0 %v328
      %2219 = vmatprep.subr.mxu0 0.0
      %2220 = vmatpush1.msra.mxu0 %v329
      %2221 = vmatprep.subr.mxu0 0.0
      %2222 = vmatpush1.msra.mxu0 %v330
      %2223 = vmatprep.subr.mxu0 0.0
      %2224 = vmatpush1.msra.mxu0 %v331
      %2225 = vmatprep.subr.mxu0 0.0
      %2226 = vmatpush1.msra.mxu0 %v332
      %2227 = vmatprep.subr.mxu0 0.0
      %2228 = vmatpush1.msra.mxu0 %v333
      %2229 = vmatprep.subr.mxu0 0.0
      %2230 = vmatpush1.msra.mxu0 %v334
      %2231 = vmatprep.subr.mxu0 0.0
      %2232 = vmatpush1.msra.mxu0 %v335
      %2233 = vmatprep.subr.mxu0 0.0
      %2234 = vmatpush1.msra.mxu0 %v336
      %2235 = vmatprep.subr.mxu0 0.0
      %2236 = vmatpush1.msra.mxu0 %v337
      %2237 = vmatprep.subr.mxu0 0.0
      %2238 = vmatpush1.msra.mxu0 %v338
      %2239 = vmatprep.subr.mxu0 0.0
      %2240 = vmatpush1.msra.mxu0 0.0
      %2241 = vmatprep.subr.mxu0 0.0
      %2242 = vmatpush1.msra.mxu0 0.0
      %2243 = vmatprep.subr.mxu0 0.0
      %2244 = vmatpush1.msra.mxu0 0.0
      %2245 = vmatprep.subr.mxu0 0.0
      %2246 = vmatpush1.msra.mxu0 0.0
      %2247 = vmatprep.subr.mxu0 0.0
      %2248 = vmatpush1.msra.mxu0 0.0
      %2249 = vmatprep.subr.mxu0 0.0
      %2250 = vmatpush1.msra.mxu0 0.0
      %2251 = vmatprep.subr.mxu0 0.0
      %2252 = vmatpush1.msra.mxu0 0.0
      %2253 = vmatprep.subr.mxu0 0.0
      %2254 = vmatpush1.msra.mxu0 0.0
      %2255 = vmatprep.subr.mxu0 0.0
      %2256 = vmatpush1.msra.mxu0 0.0
      %2257 = vmatprep.subr.mxu0 0.0
      %2258 = vmatpush1.msra.mxu0 0.0
      %2259 = vmatprep.subr.mxu0 0.0
      %2260 = vmatpush1.msra.mxu0 0.0
      %2261 = vmatprep.subr.mxu0 0.0
      %2262 = vmatpush1.msra.mxu0 0.0
      %2263 = vmatprep.subr.mxu0 0.0
      %2264 = vmatpush1.msra.mxu0 0.0
      %2265 = vmatprep.subr.mxu0 0.0
      %2266 = vmatpush1.msra.mxu0 0.0
      %2267 = vmatprep.subr.mxu0 0.0
      %2268 = vmatpush1.msra.mxu0 0.0
      %2269 = vmatprep.subr.mxu0 0.0
      %2270 = vmatpush1.msra.mxu0 0.0
      %2271 = vmatprep.mubr.f32.mxu0 0.0
      %2272 = vmatmul.mubr.f32.gmra.mrb[0].mxu0 %v2206
      %v2273 = vpop.f32.mrb[0].mxu0
      %v2274 = vadd.f32 0.0, %v2273
      %v2275 = vpop.f32.mrb[0].mxu0
      %2276 = vdwg.mxu0
      %v2277 = vmul.f32 %v2274, 0.00390625
      %v2278 = vmul.f32 %v2277, %v2277
      %v2280 = vrot.slane %v2278, 7
      %v2282 = vsub.f32 %v2277, %v2280
      %v2283 = vmax.f32 %v2282, 0.0
      %v2284 = vlaneseq
      %v2285 = vshrl.u32 %v2284, 7
      %v2286 = vsub.s32 0, %v2285
      %v2287 = vrot.slane %v2277, %v2286
      %v2288 = vsub.f32 %v2141, %v2287
      %v2289 = vsub.f32 %v2144, %v2287
      %v2290 = vsub.f32 %v2149, %v2287
      %v2291 = vsub.f32 %v2152, %v2287
      %v2292 = vsub.f32 %v2157, %v2287
      %v2293 = vsub.f32 %v2160, %v2287
      %v2294 = vsub.f32 %v2165, %v2287
      %v2295 = vsub.f32 %v2168, %v2287
      %v2296 = vadd.f32 %v2283, 1e-08
      %v2297 = vrsqrt.pop %v2296
      %v2298 = vlaneseq
      %v2299 = vshrl.u32 %v2298, 7
      %v2300 = vsub.s32 1, %v2299
      %v2301 = vrot.slane %v2297, %v2300
      %v2302 = vmul.f32 %v2288, %v2301
      %v2303 = vmul.f32 %v2289, %v2301
      %v2304 = vmul.f32 %v2290, %v2301
      %v2305 = vmul.f32 %v2291, %v2301
      %v2306 = vmul.f32 %v2292, %v2301
      %v2307 = vmul.f32 %v2293, %v2301
      %v2308 = vmul.f32 %v2294, %v2301
      %v2309 = vmul.f32 %v2295, %v2301
      %s2310 = scalar_lea.vmem %s4, 640
      %v2311 = vld [vmem:[%s2310] sm:$0xff]
      %v2312 = vld [vmem:[%s2310 + $0x8] sm:$0xff]
      %v2313 = vld [vmem:[%s2310 + $0x10] sm:$0xff]
      %v2314 = vld [vmem:[%s2310 + $0x18] sm:$0xff]
      %v2315 = vld [vmem:[%s2310 + $0x20] sm:$0xff]
      %v2316 = vld [vmem:[%s2310 + $0x28] sm:$0xff]
      %v2317 = vld [vmem:[%s2310 + $0x30] sm:$0xff]
      %v2318 = vld [vmem:[%s2310 + $0x38] sm:$0xff]
      %2320 = vset.pattern.permute.xlu0 0
      %2321 = vperm.xlu0 %2320, %v2311
      %v2322 = vpop.permute.xlu0 %2321
      %2325 = vset.pattern.permute.xlu0 0
      %2326 = vperm.xlu0 %2325, %v2312
      %v2327 = vpop.permute.xlu0 %2326
      %2330 = vset.pattern.permute.xlu0 0
      %2331 = vperm.xlu0 %2330, %v2313
      %v2332 = vpop.permute.xlu0 %2331
      %2335 = vset.pattern.permute.xlu0 0
      %2336 = vperm.xlu0 %2335, %v2314
      %v2337 = vpop.permute.xlu0 %2336
      %2340 = vset.pattern.permute.xlu0 0
      %2341 = vperm.xlu0 %2340, %v2315
      %v2342 = vpop.permute.xlu0 %2341
      %2345 = vset.pattern.permute.xlu0 0
      %2346 = vperm.xlu0 %2345, %v2316
      %v2347 = vpop.permute.xlu0 %2346
      %2350 = vset.pattern.permute.xlu0 0
      %2351 = vperm.xlu0 %2350, %v2317
      %v2352 = vpop.permute.xlu0 %2351
      %2355 = vset.pattern.permute.xlu0 0
      %2356 = vperm.xlu0 %2355, %v2318
      %v2357 = vpop.permute.xlu0 %2356
      %v2359 = vmul.f32 %v2302, %v2322
      %v2360 = vmul.f32 %v2303, %v2327
      %v2361 = vmul.f32 %v2304, %v2332
      %v2362 = vmul.f32 %v2305, %v2337
      %v2363 = vmul.f32 %v2306, %v2342
      %v2364 = vmul.f32 %v2307, %v2347
      %v2365 = vmul.f32 %v2308, %v2352
      %v2366 = vmul.f32 %v2309, %v2357
      %s2367 = scalar_lea.vmem %s4, 704
      %v2368 = vld [vmem:[%s2367] sm:$0xff]
      %v2369 = vld [vmem:[%s2367 + $0x8] sm:$0xff]
      %v2370 = vld [vmem:[%s2367 + $0x10] sm:$0xff]
      %v2371 = vld [vmem:[%s2367 + $0x18] sm:$0xff]
      %v2372 = vld [vmem:[%s2367 + $0x20] sm:$0xff]
      %v2373 = vld [vmem:[%s2367 + $0x28] sm:$0xff]
      %v2374 = vld [vmem:[%s2367 + $0x30] sm:$0xff]
      %v2375 = vld [vmem:[%s2367 + $0x38] sm:$0xff]
      %2377 = vset.pattern.permute.xlu0 0
      %2378 = vperm.xlu0 %2377, %v2368
      %v2379 = vpop.permute.xlu0 %2378
      %2382 = vset.pattern.permute.xlu0 0
      %2383 = vperm.xlu0 %2382, %v2369
      %v2384 = vpop.permute.xlu0 %2383
      %2387 = vset.pattern.permute.xlu0 0
      %2388 = vperm.xlu0 %2387, %v2370
      %v2389 = vpop.permute.xlu0 %2388
      %2392 = vset.pattern.permute.xlu0 0
      %2393 = vperm.xlu0 %2392, %v2371
      %v2394 = vpop.permute.xlu0 %2393
      %2397 = vset.pattern.permute.xlu0 0
      %2398 = vperm.xlu0 %2397, %v2372
      %v2399 = vpop.permute.xlu0 %2398
      %2402 = vset.pattern.permute.xlu0 0
      %2403 = vperm.xlu0 %2402, %v2373
      %v2404 = vpop.permute.xlu0 %2403
      %2407 = vset.pattern.permute.xlu0 0
      %2408 = vperm.xlu0 %2407, %v2374
      %v2409 = vpop.permute.xlu0 %2408
      %2412 = vset.pattern.permute.xlu0 0
      %2413 = vperm.xlu0 %2412, %v2375
      %v2414 = vpop.permute.xlu0 %2413
      %v2416 = vadd.f32 %v2359, %v2379
      %v2417 = vadd.f32 %v2360, %v2384
      %v2418 = vadd.f32 %v2361, %v2389
      %v2419 = vadd.f32 %v2362, %v2394
      %v2420 = vadd.f32 %v2363, %v2399
      %v2421 = vadd.f32 %v2364, %v2404
      %v2422 = vadd.f32 %v2365, %v2409
      %v2423 = vadd.f32 %v2366, %v2414
      %vm2424 = vcmp.ge.f32.partialorder %v2416, 0.0
      %vm2425 = vcmp.ge.f32.partialorder %v2417, 0.0
      %vm2426 = vcmp.ge.f32.partialorder %v2418, 0.0
      %vm2427 = vcmp.ge.f32.partialorder %v2419, 0.0
      %vm2428 = vcmp.ge.f32.partialorder %v2420, 0.0
      %vm2429 = vcmp.ge.f32.partialorder %v2421, 0.0
      %vm2430 = vcmp.ge.f32.partialorder %v2422, 0.0
      %vm2431 = vcmp.ge.f32.partialorder %v2423, 0.0
      %v2432 = vmul.f32 %v2416, 0.25
      %v2433 = vmul.f32 %v2417, 0.25
      %v2434 = vmul.f32 %v2418, 0.25
      %v2435 = vmul.f32 %v2419, 0.25
      %v2436 = vmul.f32 %v2420, 0.25
      %v2437 = vmul.f32 %v2421, 0.25
      %v2438 = vmul.f32 %v2422, 0.25
      %v2439 = vmul.f32 %v2423, 0.25
      %v2440 = vsel %vm2424, %v2416, %v2432
      %v2441 = vsel %vm2425, %v2417, %v2433
      %v2442 = vsel %vm2426, %v2418, %v2434
      %v2443 = vsel %vm2427, %v2419, %v2435
      %v2444 = vsel %vm2428, %v2420, %v2436
      %v2445 = vsel %vm2429, %v2421, %v2437
      %v2446 = vsel %vm2430, %v2422, %v2438
      %v2447 = vsel %vm2431, %v2423, %v2439
      %s2448 = scalar_lea.vmem [#allocation3], 192
      %2449 = vst [vmem:[%s2448] sm:$0xff] %v2440
      %2450 = vst [vmem:[%s2448 + $0x8] sm:$0xff] %v2441
      %2451 = vst [vmem:[%s2448 + $0x10] sm:$0xff] %v2442
      %2452 = vst [vmem:[%s2448 + $0x18] sm:$0xff] %v2443
      %2453 = vst [vmem:[%s2448 + $0x20] sm:$0xff] %v2444
      %2454 = vst [vmem:[%s2448 + $0x28] sm:$0xff] %v2445
      %2455 = vst [vmem:[%s2448 + $0x30] sm:$0xff] %v2446
      %2456 = vst [vmem:[%s2448 + $0x38] sm:$0xff] %v2447
      %v2457 = vld [vmem:[%s2448] sm:$0xff]
      %v2458 = vld [vmem:[%s2448 + $0x8] sm:$0xff]
      %v2459 = vld [vmem:[%s2448 + $0x10] sm:$0xff]
      %v2460 = vld [vmem:[%s2448 + $0x18] sm:$0xff]
      %v2461 = vld [vmem:[%s2448 + $0x20] sm:$0xff]
      %v2462 = vld [vmem:[%s2448 + $0x28] sm:$0xff]
      %v2463 = vld [vmem:[%s2448 + $0x30] sm:$0xff]
      %v2464 = vld [vmem:[%s2448 + $0x38] sm:$0xff]
      %v2465 = vpack.c.bf16 %v2458, %v2457
      %v2466 = vpack.c.bf16 %v2460, %v2459
      %v2467 = vpack.c.bf16 %v2462, %v2461
      %v2468 = vpack.c.bf16 %v2464, %v2463
      %2477 = vrot.lane.b32.xlu0 %v2457, 1
      %v2478 = vpop.permute.xlu0 %2477
      %2479 = vrot.lane.b32.xlu0 %v2458, 1
      %v2480 = vpop.permute.xlu0 %2479
      %2481 = vrot.lane.b32.xlu0 %v2459, 1
      %v2482 = vpop.permute.xlu0 %2481
      %2483 = vrot.lane.b32.xlu0 %v2460, 1
      %v2484 = vpop.permute.xlu0 %2483
      %2485 = vrot.lane.b32.xlu0 %v2461, 1
      %v2486 = vpop.permute.xlu0 %2485
      %2487 = vrot.lane.b32.xlu0 %v2462, 1
      %v2488 = vpop.permute.xlu0 %2487
      %2489 = vrot.lane.b32.xlu0 %v2463, 1
      %v2490 = vpop.permute.xlu0 %2489
      %2491 = vrot.lane.b32.xlu0 %v2464, 1
      %v2492 = vpop.permute.xlu0 %2491
      %v2501 = vld [vmem:[%s5] sm:$0xff]
      %v2502 = vlaneseq
      %v2503 = vshrl.u32 %v2502, 7
      %v2504 = vsub.s32 0, %v2503
      %v2505 = vrot.slane %v2501, %v2504
      %v2506 = vmul.f32 %v2478, %v2505
      %v2507 = vmul.f32 %v2480, %v2505
      %v2508 = vmul.f32 %v2482, %v2505
      %v2509 = vmul.f32 %v2484, %v2505
      %v2510 = vmul.f32 %v2486, %v2505
      %v2511 = vmul.f32 %v2488, %v2505
      %v2512 = vmul.f32 %v2490, %v2505
      %v2513 = vmul.f32 %v2492, %v2505
      %v2514 = vpack.c.bf16 %v2507, %v2506
      %v2515 = vpack.c.bf16 %v2509, %v2508
      %v2516 = vpack.c.bf16 %v2511, %v2510
      %v2517 = vpack.c.bf16 %v2513, %v2512
      %v2518 = vld [vmem:[%s2] sm:$0xf]
      %v2519 = vld [vmem:[%s2 + $0x4] sm:$0xf]
      %v2520 = vld [vmem:[%s2 + $0x8] sm:$0xf]
      %v2521 = vld [vmem:[%s2 + $0xc] sm:$0xf]
      %v2522 = vld [vmem:[%s2 + $0x10] sm:$0xf]
      %v2523 = vld [vmem:[%s2 + $0x14] sm:$0xf]
      %v2524 = vld [vmem:[%s2 + $0x18] sm:$0xf]
      %v2525 = vld [vmem:[%s2 + $0x1c] sm:$0xf]
      %s2526 = scalar_lea.vmem %s4, 768
      %v2527 = vld [vmem:[%s2526] sm:$0xff]
      %v2528 = vld [vmem:[%s2526 + $0x8] sm:$0xff]
      %v2529 = vld [vmem:[%s2526 + $0x10] sm:$0xff]
      %v2530 = vld [vmem:[%s2526 + $0x18] sm:$0xff]
      %v2531 = vld [vmem:[%s2526 + $0x20] sm:$0xff]
      %v2532 = vld [vmem:[%s2526 + $0x28] sm:$0xff]
      %v2533 = vld [vmem:[%s2526 + $0x30] sm:$0xff]
      %v2534 = vld [vmem:[%s2526 + $0x38] sm:$0xff]
      %2536 = vset.pattern.permute.xlu0 0
      %2537 = vperm.xlu0 %2536, %v2527
      %v2538 = vpop.permute.xlu0 %2537
      %2541 = vset.pattern.permute.xlu0 0
      %2542 = vperm.xlu0 %2541, %v2528
      %v2543 = vpop.permute.xlu0 %2542
      %2545 = vset.pattern.permute.xlu0 0
      %2546 = vperm.xlu0 %2545, %v2529
      %v2547 = vpop.permute.xlu0 %2546
      %2549 = vset.pattern.permute.xlu0 0
      %2550 = vperm.xlu0 %2549, %v2530
      %v2551 = vpop.permute.xlu0 %2550
      %2553 = vset.pattern.permute.xlu0 0
      %2554 = vperm.xlu0 %2553, %v2531
      %v2555 = vpop.permute.xlu0 %2554
      %2557 = vset.pattern.permute.xlu0 0
      %2558 = vperm.xlu0 %2557, %v2532
      %v2559 = vpop.permute.xlu0 %2558
      %2561 = vset.pattern.permute.xlu0 0
      %2562 = vperm.xlu0 %2561, %v2533
      %v2563 = vpop.permute.xlu0 %2562
      %2565 = vset.pattern.permute.xlu0 0
      %2566 = vperm.xlu0 %2565, %v2534
      %v2567 = vpop.permute.xlu0 %2566
      %v2576 = vunpack.c.l.b16 %v2518
      %v2577 = vunpack.c.l.b16 %v2519
      %v2578 = vunpack.c.l.b16 %v2520
      %v2579 = vunpack.c.l.b16 %v2521
      %v2580 = vunpack.c.l.b16 %v2522
      %v2581 = vunpack.c.l.b16 %v2523
      %v2582 = vunpack.c.l.b16 %v2524
      %v2583 = vunpack.c.l.b16 %v2525
      %v2584 = vpack.c.b16 %v2577, %v2576
      %v2585 = vpack.c.b16 %v2579, %v2578
      %v2586 = vpack.c.b16 %v2581, %v2580
      %v2587 = vpack.c.b16 %v2583, %v2582
      %2592 = vmatprep.subr.bf16.mxu0 0
      %2593 = vmatpush1.bf16.msra.mxu0 %v2465
      %2594 = vmatprep.subr.bf16.mxu0 0
      %2595 = vmatpush1.bf16.msra.mxu0 %v2466
      %2596 = vmatprep.subr.bf16.mxu0 0
      %2597 = vmatpush1.bf16.msra.mxu0 %v2467
      %2598 = vmatprep.subr.bf16.mxu0 0
      %2599 = vmatpush1.bf16.msra.mxu0 %v2468
      %2600 = vmatprep.subr.bf16.mxu0 0
      %2601 = vmatpush1.bf16.msra.mxu0 %v2514
      %2602 = vmatprep.subr.bf16.mxu0 0
      %2603 = vmatpush1.bf16.msra.mxu0 %v2515
      %2604 = vmatprep.subr.bf16.mxu0 0
      %2605 = vmatpush1.bf16.msra.mxu0 %v2516
      %2606 = vmatprep.subr.bf16.mxu0 0
      %2607 = vmatpush1.bf16.msra.mxu0 %v2517
      %2608 = vmatprep.subr.bf16.mxu0 0
      %2609 = vmatpush1.bf16.msra.mxu0 0
      %2610 = vmatprep.subr.bf16.mxu0 0
      %2611 = vmatpush1.bf16.msra.mxu0 0
      %2612 = vmatprep.subr.bf16.mxu0 0
      %2613 = vmatpush1.bf16.msra.mxu0 0
      %2614 = vmatprep.subr.bf16.mxu0 0
      %2615 = vmatpush1.bf16.msra.mxu0 0
      %2616 = vmatprep.subr.bf16.mxu0 0
      %2617 = vmatpush1.bf16.msra.mxu0 0
      %2618 = vmatprep.subr.bf16.mxu0 0
      %2619 = vmatpush1.bf16.msra.mxu0 0
      %2620 = vmatprep.subr.bf16.mxu0 0
      %2621 = vmatpush1.bf16.msra.mxu0 0
      %2622 = vmatprep.subr.bf16.mxu0 0
      %2623 = vmatpush1.bf16.msra.mxu0 0
      %2624 = vmatprep.mubr.bf16.mxu0 0
      %2625 = vmatmul.mubr.bf16.gmra.mrb[0].mxu0 %v2584
      %v2626 = vpop.f32.mrb[0].mxu0
      %v2627 = vadd.f32 %v2538, %v2626
      %v2628 = vpop.f32.mrb[0].mxu0
      %v2629 = vpop.f32.mrb[0].mxu0
      %v2630 = vpop.f32.mrb[0].mxu0
      %2631 = vmatprep.mubr.bf16.mxu0 0
      %2632 = vmatmul.mubr.bf16.gmra.mrb[0].mxu0 %v2585
      %v2633 = vpop.f32.mrb[0].mxu0
      %v2634 = vpop.f32.mrb[0].mxu0
      %v2635 = vpop.f32.mrb[0].mxu0
      %v2636 = vpop.f32.mrb[0].mxu0
      %2637 = vmatprep.mubr.bf16.mxu0 0
      %2638 = vmatmul.mubr.bf16.gmra.mrb[0].mxu0 %v2586
      %v2639 = vpop.f32.mrb[0].mxu0
      %v2640 = vpop.f32.mrb[0].mxu0
      %v2641 = vpop.f32.mrb[0].mxu0
      %v2642 = vpop.f32.mrb[0].mxu0
      %2643 = vmatprep.mubr.bf16.mxu0 0
      %2644 = vmatmul.mubr.bf16.gmra.mrb[0].mxu0 %v2587
      %v2645 = vpop.f32.mrb[0].mxu0
      %v2646 = vpop.f32.mrb[0].mxu0
      %v2647 = vpop.f32.mrb[0].mxu0
      %v2648 = vpop.f32.mrb[0].mxu0
      %2649 = vdwg.mxu0
      %vm2650 = vcmp.ge.f32.partialorder %v2627, 0.0
      %v2651 = vmul.f32 %v2627, 0.25
      %v2652 = vsel %vm2650, %v2627, %v2651
      %2653 = vst [vmem:[#allocation2] sm:$0xff] %v2652
      %v2654 = vld [vmem:[#allocation2] sm:$0xff]
      %v2655 = vld [vmem:[#allocation2 + $0x8] sm:$0xff]
      %v2656 = vld [vmem:[#allocation2 + $0x10] sm:$0xff]
      %v2657 = vld [vmem:[#allocation2 + $0x18] sm:$0xff]
      %v2658 = vld [vmem:[#allocation2 + $0x20] sm:$0xff]
      %v2659 = vld [vmem:[#allocation2 + $0x28] sm:$0xff]
      %v2660 = vld [vmem:[#allocation2 + $0x30] sm:$0xff]
      %v2661 = vld [vmem:[#allocation2 + $0x38] sm:$0xff]
      %v2662 = vpack.c.bf16 %v2655, %v2654
      %v2663 = vpack.c.bf16 %v2657, %v2656
      %v2664 = vpack.c.bf16 %v2659, %v2658
      %v2665 = vpack.c.bf16 %v2661, %v2660
      %2674 = vrot.lane.b32.xlu0 %v2654, 1
      %v2675 = vpop.permute.xlu0 %2674
      %2676 = vrot.lane.b32.xlu0 %v2655, 1
      %v2677 = vpop.permute.xlu0 %2676
      %2678 = vrot.lane.b32.xlu0 %v2656, 1
      %v2679 = vpop.permute.xlu0 %2678
      %2680 = vrot.lane.b32.xlu0 %v2657, 1
      %v2681 = vpop.permute.xlu0 %2680
      %2682 = vrot.lane.b32.xlu0 %v2658, 1
      %v2683 = vpop.permute.xlu0 %2682
      %2684 = vrot.lane.b32.xlu0 %v2659, 1
      %v2685 = vpop.permute.xlu0 %2684
      %2686 = vrot.lane.b32.xlu0 %v2660, 1
      %v2687 = vpop.permute.xlu0 %2686
      %2688 = vrot.lane.b32.xlu0 %v2661, 1
      %v2689 = vpop.permute.xlu0 %2688
      %v2698 = vld [vmem:[%s5] sm:$0xff]
      %v2699 = vlaneseq
      %v2700 = vshrl.u32 %v2699, 7
      %v2701 = vsub.s32 0, %v2700
      %v2702 = vrot.slane %v2698, %v2701
      %v2703 = vmul.f32 %v2675, %v2702
      %v2704 = vmul.f32 %v2677, %v2702
      %v2705 = vmul.f32 %v2679, %v2702
      %v2706 = vmul.f32 %v2681, %v2702
      %v2707 = vmul.f32 %v2683, %v2702
      %v2708 = vmul.f32 %v2685, %v2702
      %v2709 = vmul.f32 %v2687, %v2702
      %v2710 = vmul.f32 %v2689, %v2702
      %v2711 = vpack.c.bf16 %v2704, %v2703
      %v2712 = vpack.c.bf16 %v2706, %v2705
      %v2713 = vpack.c.bf16 %v2708, %v2707
      %v2714 = vpack.c.bf16 %v2710, %v2709
      %s2715 = scalar_lea.vmem %s2, 32
      %v2716 = vld [vmem:[%s2715] sm:$0xf]
      %v2717 = vld [vmem:[%s2715 + $0x4] sm:$0xf]
      %v2718 = vld [vmem:[%s2715 + $0x8] sm:$0xf]
      %v2719 = vld [vmem:[%s2715 + $0xc] sm:$0xf]
      %v2720 = vld [vmem:[%s2715 + $0x10] sm:$0xf]
      %v2721 = vld [vmem:[%s2715 + $0x14] sm:$0xf]
      %v2722 = vld [vmem:[%s2715 + $0x18] sm:$0xf]
      %v2723 = vld [vmem:[%s2715 + $0x1c] sm:$0xf]
      %s2724 = scalar_lea.vmem %s4, 832
      %v2725 = vld [vmem:[%s2724] sm:$0xff]
      %v2726 = vld [vmem:[%s2724 + $0x8] sm:$0xff]
      %v2727 = vld [vmem:[%s2724 + $0x10] sm:$0xff]
      %v2728 = vld [vmem:[%s2724 + $0x18] sm:$0xff]
      %v2729 = vld [vmem:[%s2724 + $0x20] sm:$0xff]
      %v2730 = vld [vmem:[%s2724 + $0x28] sm:$0xff]
      %v2731 = vld [vmem:[%s2724 + $0x30] sm:$0xff]
      %v2732 = vld [vmem:[%s2724 + $0x38] sm:$0xff]
      %2734 = vset.pattern.permute.xlu0 0
      %2735 = vperm.xlu0 %2734, %v2725
      %v2736 = vpop.permute.xlu0 %2735
      %2739 = vset.pattern.permute.xlu0 0
      %2740 = vperm.xlu0 %2739, %v2726
      %v2741 = vpop.permute.xlu0 %2740
      %2744 = vset.pattern.permute.xlu0 0
      %2745 = vperm.xlu0 %2744, %v2727
      %v2746 = vpop.permute.xlu0 %2745
      %2749 = vset.pattern.permute.xlu0 0
      %2750 = vperm.xlu0 %2749, %v2728
      %v2751 = vpop.permute.xlu0 %2750
      %2754 = vset.pattern.permute.xlu0 0
      %2755 = vperm.xlu0 %2754, %v2729
      %v2756 = vpop.permute.xlu0 %2755
      %2759 = vset.pattern.permute.xlu0 0
      %2760 = vperm.xlu0 %2759, %v2730
      %v2761 = vpop.permute.xlu0 %2760
      %2764 = vset.pattern.permute.xlu0 0
      %2765 = vperm.xlu0 %2764, %v2731
      %v2766 = vpop.permute.xlu0 %2765
      %2769 = vset.pattern.permute.xlu0 0
      %2770 = vperm.xlu0 %2769, %v2732
      %v2771 = vpop.permute.xlu0 %2770
      %v2781 = vunpack.c.l.b16 %v2716
      %v2782 = vunpack.c.l.b16 %v2717
      %v2783 = vunpack.c.l.b16 %v2718
      %v2784 = vunpack.c.l.b16 %v2719
      %v2785 = vunpack.c.l.b16 %v2720
      %v2786 = vunpack.c.l.b16 %v2721
      %v2787 = vunpack.c.l.b16 %v2722
      %v2788 = vunpack.c.l.b16 %v2723
      %v2789 = vpack.c.b16 %v2782, %v2781
      %v2790 = vpack.c.b16 %v2784, %v2783
      %v2791 = vpack.c.b16 %v2786, %v2785
      %v2792 = vpack.c.b16 %v2788, %v2787
      %2797 = vmatprep.subr.bf16.mxu0 0
      %2798 = vmatpush1.bf16.msra.mxu0 %v2662
      %2799 = vmatprep.subr.bf16.mxu0 0
      %2800 = vmatpush1.bf16.msra.mxu0 %v2663
      %2801 = vmatprep.subr.bf16.mxu0 0
      %2802 = vmatpush1.bf16.msra.mxu0 %v2664
      %2803 = vmatprep.subr.bf16.mxu0 0
      %2804 = vmatpush1.bf16.msra.mxu0 %v2665
      %2805 = vmatprep.subr.bf16.mxu0 0
      %2806 = vmatpush1.bf16.msra.mxu0 %v2711
      %2807 = vmatprep.subr.bf16.mxu0 0
      %2808 = vmatpush1.bf16.msra.mxu0 %v2712
      %2809 = vmatprep.subr.bf16.mxu0 0
      %2810 = vmatpush1.bf16.msra.mxu0 %v2713
      %2811 = vmatprep.subr.bf16.mxu0 0
      %2812 = vmatpush1.bf16.msra.mxu0 %v2714
      %2813 = vmatprep.subr.bf16.mxu0 0
      %2814 = vmatpush1.bf16.msra.mxu0 0
      %2815 = vmatprep.subr.bf16.mxu0 0
      %2816 = vmatpush1.bf16.msra.mxu0 0
      %2817 = vmatprep.subr.bf16.mxu0 0
      %2818 = vmatpush1.bf16.msra.mxu0 0
      %2819 = vmatprep.subr.bf16.mxu0 0
      %2820 = vmatpush1.bf16.msra.mxu0 0
      %2821 = vmatprep.subr.bf16.mxu0 0
      %2822 = vmatpush1.bf16.msra.mxu0 0
      %2823 = vmatprep.subr.bf16.mxu0 0
      %2824 = vmatpush1.bf16.msra.mxu0 0
      %2825 = vmatprep.subr.bf16.mxu0 0
      %2826 = vmatpush1.bf16.msra.mxu0 0
      %2827 = vmatprep.subr.bf16.mxu0 0
      %2828 = vmatpush1.bf16.msra.mxu0 0
      %2829 = vmatprep.mubr.bf16.mxu0 0
      %2830 = vmatmul.mubr.bf16.gmra.mrb[0].mxu0 %v2789
      %v2831 = vpop.f32.mrb[0].mxu0
      %v2832 = vadd.f32 %v2736, %v2831
      %v2833 = vpop.f32.mrb[0].mxu0
      %v2834 = vpop.f32.mrb[0].mxu0
      %v2835 = vadd.f32 %v2741, %v2834
      %v2836 = vpop.f32.mrb[0].mxu0
      %2837 = vmatprep.mubr.bf16.mxu0 0
      %2838 = vmatmul.mubr.bf16.gmra.mrb[0].mxu0 %v2790
      %v2839 = vpop.f32.mrb[0].mxu0
      %v2840 = vadd.f32 %v2746, %v2839
      %v2841 = vpop.f32.mrb[0].mxu0
      %v2842 = vpop.f32.mrb[0].mxu0
      %v2843 = vadd.f32 %v2751, %v2842
      %v2844 = vpop.f32.mrb[0].mxu0
      %2845 = vmatprep.mubr.bf16.mxu0 0
      %2846 = vmatmul.mubr.bf16.gmra.mrb[0].mxu0 %v2791
      %v2847 = vpop.f32.mrb[0].mxu0
      %v2848 = vadd.f32 %v2756, %v2847
      %v2849 = vpop.f32.mrb[0].mxu0
      %v2850 = vpop.f32.mrb[0].mxu0
      %v2851 = vadd.f32 %v2761, %v2850
      %v2852 = vpop.f32.mrb[0].mxu0
      %2853 = vmatprep.mubr.bf16.mxu0 0
      %2854 = vmatmul.mubr.bf16.gmra.mrb[0].mxu0 %v2792
      %v2855 = vpop.f32.mrb[0].mxu0
      %v2856 = vadd.f32 %v2766, %v2855
      %v2857 = vpop.f32.mrb[0].mxu0
      %v2858 = vpop.f32.mrb[0].mxu0
      %v2859 = vadd.f32 %v2771, %v2858
      %v2860 = vpop.f32.mrb[0].mxu0
      %2861 = vdwg.mxu0
      %v2862 = vadd.f32 %v2832, %v2835
      %v2863 = vadd.f32 %v2862, %v2840
      %v2864 = vadd.f32 %v2863, %v2843
      %v2865 = vadd.f32 %v2864, %v2848
      %v2866 = vadd.f32 %v2865, %v2851
      %v2867 = vadd.f32 %v2866, %v2856
      %v2868 = vadd.f32 %v2867, %v2859
      %v2869 = vrot.slane %v2868, 4
      %v2870 = vadd.f32 %v2868, %v2869
      %v2871 = vrot.slane %v2870, 2
      %v2872 = vadd.f32 %v2870, %v2871
      %v2873 = vrot.slane %v2872, 1
      %v2874 = vadd.f32 %v2872, %v2873
      %v2875 = vmul.f32 %v2832, %v2832
      %v2876 = vmul.f32 %v2835, %v2835
      %v2877 = vmul.f32 %v2840, %v2840
      %v2878 = vmul.f32 %v2843, %v2843
      %v2879 = vmul.f32 %v2848, %v2848
      %v2880 = vmul.f32 %v2851, %v2851
      %v2881 = vmul.f32 %v2856, %v2856
      %v2882 = vmul.f32 %v2859, %v2859
      %v2883 = vadd.f32 %v2875, %v2876
      %v2884 = vadd.f32 %v2883, %v2877
      %v2885 = vadd.f32 %v2884, %v2878
      %v2886 = vadd.f32 %v2885, %v2879
      %v2887 = vadd.f32 %v2886, %v2880
      %v2888 = vadd.f32 %v2887, %v2881
      %v2889 = vadd.f32 %v2888, %v2882
      %v2890 = vrot.slane %v2889, 4
      %v2891 = vadd.f32 %v2889, %v2890
      %v2892 = vrot.slane %v2891, 2
      %v2893 = vadd.f32 %v2891, %v2892
      %v2894 = vrot.slane %v2893, 1
      %v2895 = vadd.f32 %v2893, %v2894
      %v2896 = vsel %vm531, %v2874, %v2895
      %v2897 = vsel %vm533, %v2896, 0.0
      %2898 = vmatprep.subr.mxu0 0.0
      %2899 = vmatpush1.msra.mxu0 %v323
      %2900 = vmatprep.subr.mxu0 0.0
      %2901 = vmatpush1.msra.mxu0 %v324
      %2902 = vmatprep.subr.mxu0 0.0
      %2903 = vmatpush1.msra.mxu0 %v325
      %2904 = vmatprep.subr.mxu0 0.0
      %2905 = vmatpush1.msra.mxu0 %v326
      %2906 = vmatprep.subr.mxu0 0.0
      %2907 = vmatpush1.msra.mxu0 %v327
      %2908 = vmatprep.subr.mxu0 0.0
      %2909 = vmatpush1.msra.mxu0 %v328
      %2910 = vmatprep.subr.mxu0 0.0
      %2911 = vmatpush1.msra.mxu0 %v329
      %2912 = vmatprep.subr.mxu0 0.0
      %2913 = vmatpush1.msra.mxu0 %v330
      %2914 = vmatprep.subr.mxu0 0.0
      %2915 = vmatpush1.msra.mxu0 %v331
      %2916 = vmatprep.subr.mxu0 0.0
      %2917 = vmatpush1.msra.mxu0 %v332
      %2918 = vmatprep.subr.mxu0 0.0
      %2919 = vmatpush1.msra.mxu0 %v333
      %2920 = vmatprep.subr.mxu0 0.0
      %2921 = vmatpush1.msra.mxu0 %v334
      %2922 = vmatprep.subr.mxu0 0.0
      %2923 = vmatpush1.msra.mxu0 %v335
      %2924 = vmatprep.subr.mxu0 0.0
      %2925 = vmatpush1.msra.mxu0 %v336
      %2926 = vmatprep.subr.mxu0 0.0
      %2927 = vmatpush1.msra.mxu0 %v337
      %2928 = vmatprep.subr.mxu0 0.0
      %2929 = vmatpush1.msra.mxu0 %v338
      %2930 = vmatprep.subr.mxu0 0.0
      %2931 = vmatpush1.msra.mxu0 0.0
      %2932 = vmatprep.subr.mxu0 0.0
      %2933 = vmatpush1.msra.mxu0 0.0
      %2934 = vmatprep.subr.mxu0 0.0
      %2935 = vmatpush1.msra.mxu0 0.0
      %2936 = vmatprep.subr.mxu0 0.0
      %2937 = vmatpush1.msra.mxu0 0.0
      %2938 = vmatprep.subr.mxu0 0.0
      %2939 = vmatpush1.msra.mxu0 0.0
      %2940 = vmatprep.subr.mxu0 0.0
      %2941 = vmatpush1.msra.mxu0 0.0
      %2942 = vmatprep.subr.mxu0 0.0
      %2943 = vmatpush1.msra.mxu0 0.0
      %2944 = vmatprep.subr.mxu0 0.0
      %2945 = vmatpush1.msra.mxu0 0.0
      %2946 = vmatprep.subr.mxu0 0.0
      %2947 = vmatpush1.msra.mxu0 0.0
      %2948 = vmatprep.subr.mxu0 0.0
      %2949 = vmatpush1.msra.mxu0 0.0
      %2950 = vmatprep.subr.mxu0 0.0
      %2951 = vmatpush1.msra.mxu0 0.0
      %2952 = vmatprep.subr.mxu0 0.0
      %2953 = vmatpush1.msra.mxu0 0.0
      %2954 = vmatprep.subr.mxu0 0.0
      %2955 = vmatpush1.msra.mxu0 0.0
      %2956 = vmatprep.subr.mxu0 0.0
      %2957 = vmatpush1.msra.mxu0 0.0
      %2958 = vmatprep.subr.mxu0 0.0
      %2959 = vmatpush1.msra.mxu0 0.0
      %2960 = vmatprep.subr.mxu0 0.0
      %2961 = vmatpush1.msra.mxu0 0.0
      %2962 = vmatprep.mubr.f32.mxu0 0.0
      %2963 = vmatmul.mubr.f32.gmra.mrb[0].mxu0 %v2897
      %v2964 = vpop.f32.mrb[0].mxu0
      %v2965 = vadd.f32 0.0, %v2964
      %v2966 = vpop.f32.mrb[0].mxu0
      %2967 = vdwg.mxu0
      %v2968 = vmul.f32 %v2965, 0.0078125
      %v2969 = vmul.f32 %v2968, %v2968
      %v2971 = vrot.slane %v2969, 7
      %v2973 = vsub.f32 %v2968, %v2971
      %v2974 = vmax.f32 %v2973, 0.0
      %v2975 = vlaneseq
      %v2976 = vshrl.u32 %v2975, 7
      %v2977 = vsub.s32 0, %v2976
      %v2978 = vrot.slane %v2968, %v2977
      %v2979 = vsub.f32 %v2832, %v2978
      %v2980 = vadd.f32 %v2974, 1e-08
      %v2981 = vrsqrt.pop %v2980
      %v2982 = vlaneseq
      %v2983 = vshrl.u32 %v2982, 7
      %v2984 = vsub.s32 1, %v2983
      %v2985 = vrot.slane %v2981, %v2984
      %v2986 = vmul.f32 %v2979, %v2985
      %s2987 = scalar_lea.vmem %s4, 896
      %v2988 = vld [vmem:[%s2987] sm:$0xff]
      %2990 = vset.pattern.permute.xlu0 0
      %2991 = vperm.xlu0 %2990, %v2988
      %v2992 = vpop.permute.xlu0 %2991
      %v2994 = vmul.f32 %v2986, %v2992
      %s2995 = scalar_lea.vmem %s4, 960
      %v2996 = vld [vmem:[%s2995] sm:$0xff]
      %2998 = vset.pattern.permute.xlu0 0
      %2999 = vperm.xlu0 %2998, %v2996
      %v3000 = vpop.permute.xlu0 %2999
      %v3002 = vadd.f32 %v2994, %v3000
      %vm3003 = vcmp.ge.f32.partialorder %v3002, 0.0
      %v3004 = vmul.f32 %v3002, 0.25
      %v3005 = vsel %vm3003, %v3002, %v3004
      %3006 = vst [vmem:[#allocation2 + $0x8] sm:$0xff] %v3005
      %v3007 = vld [vmem:[#allocation2] sm:$0xff]
      %v3008 = vld [vmem:[#allocation2 + $0x8] sm:$0xff]
      %v3009 = vld [vmem:[#allocation2 + $0x10] sm:$0xff]
      %v3010 = vld [vmem:[#allocation2 + $0x18] sm:$0xff]
      %v3011 = vld [vmem:[#allocation2 + $0x20] sm:$0xff]
      %v3012 = vld [vmem:[#allocation2 + $0x28] sm:$0xff]
      %v3013 = vld [vmem:[#allocation2 + $0x30] sm:$0xff]
      %v3014 = vld [vmem:[#allocation2 + $0x38] sm:$0xff]
      %v3015 = vpack.c.bf16 %v3008, %v3007
      %v3016 = vpack.c.bf16 %v3010, %v3009
      %v3017 = vpack.c.bf16 %v3012, %v3011
      %v3018 = vpack.c.bf16 %v3014, %v3013
      %3027 = vrot.lane.b32.xlu0 %v3007, 2
      %v3028 = vpop.permute.xlu0 %3027
      %3029 = vrot.lane.b32.xlu0 %v3008, 2
      %v3030 = vpop.permute.xlu0 %3029
      %3031 = vrot.lane.b32.xlu0 %v3009, 2
      %v3032 = vpop.permute.xlu0 %3031
      %3033 = vrot.lane.b32.xlu0 %v3010, 2
      %v3034 = vpop.permute.xlu0 %3033
      %3035 = vrot.lane.b32.xlu0 %v3011, 2
      %v3036 = vpop.permute.xlu0 %3035
      %3037 = vrot.lane.b32.xlu0 %v3012, 2
      %v3038 = vpop.permute.xlu0 %3037
      %3039 = vrot.lane.b32.xlu0 %v3013, 2
      %v3040 = vpop.permute.xlu0 %3039
      %3041 = vrot.lane.b32.xlu0 %v3014, 2
      %v3042 = vpop.permute.xlu0 %3041
      %s3051 = scalar_lea.vmem %s5, 8
      %v3052 = vld [vmem:[%s3051] sm:$0xff]
      %v3053 = vlaneseq
      %v3054 = vshrl.u32 %v3053, 7
      %v3055 = vsub.s32 0, %v3054
      %v3056 = vrot.slane %v3052, %v3055
      %v3057 = vmul.f32 %v3028, %v3056
      %v3058 = vmul.f32 %v3030, %v3056
      %v3059 = vmul.f32 %v3032, %v3056
      %v3060 = vmul.f32 %v3034, %v3056
      %v3061 = vmul.f32 %v3036, %v3056
      %v3062 = vmul.f32 %v3038, %v3056
      %v3063 = vmul.f32 %v3040, %v3056
      %v3064 = vmul.f32 %v3042, %v3056
      %v3065 = vpack.c.bf16 %v3058, %v3057
      %v3066 = vpack.c.bf16 %v3060, %v3059
      %v3067 = vpack.c.bf16 %v3062, %v3061
      %v3068 = vpack.c.bf16 %v3064, %v3063
      %s3069 = scalar_lea.vmem %s2, 64
      %v3070 = vld [vmem:[%s3069] sm:$0xf]
      %v3071 = vld [vmem:[%s3069 + $0x4] sm:$0xf]
      %v3072 = vld [vmem:[%s3069 + $0x8] sm:$0xf]
      %v3073 = vld [vmem:[%s3069 + $0xc] sm:$0xf]
      %v3074 = vld [vmem:[%s3069 + $0x10] sm:$0xf]
      %v3075 = vld [vmem:[%s3069 + $0x14] sm:$0xf]
      %v3076 = vld [vmem:[%s3069 + $0x18] sm:$0xf]
      %v3077 = vld [vmem:[%s3069 + $0x1c] sm:$0xf]
      %s3078 = scalar_lea.vmem %s4, 1024
      %v3079 = vld [vmem:[%s3078] sm:$0xff]
      %v3080 = vld [vmem:[%s3078 + $0x8] sm:$0xff]
      %v3081 = vld [vmem:[%s3078 + $0x10] sm:$0xff]
      %v3082 = vld [vmem:[%s3078 + $0x18] sm:$0xff]
      %v3083 = vld [vmem:[%s3078 + $0x20] sm:$0xff]
      %v3084 = vld [vmem:[%s3078 + $0x28] sm:$0xff]
      %v3085 = vld [vmem:[%s3078 + $0x30] sm:$0xff]
      %v3086 = vld [vmem:[%s3078 + $0x38] sm:$0xff]
      %3088 = vset.pattern.permute.xlu0 0
      %3089 = vperm.xlu0 %3088, %v3079
      %v3090 = vpop.permute.xlu0 %3089
      %3093 = vset.pattern.permute.xlu0 0
      %3094 = vperm.xlu0 %3093, %v3080
      %v3095 = vpop.permute.xlu0 %3094
      %3098 = vset.pattern.permute.xlu0 0
      %3099 = vperm.xlu0 %3098, %v3081
      %v3100 = vpop.permute.xlu0 %3099
      %3103 = vset.pattern.permute.xlu0 0
      %3104 = vperm.xlu0 %3103, %v3082
      %v3105 = vpop.permute.xlu0 %3104
      %3108 = vset.pattern.permute.xlu0 0
      %3109 = vperm.xlu0 %3108, %v3083
      %v3110 = vpop.permute.xlu0 %3109
      %3113 = vset.pattern.permute.xlu0 0
      %3114 = vperm.xlu0 %3113, %v3084
      %v3115 = vpop.permute.xlu0 %3114
      %3118 = vset.pattern.permute.xlu0 0
      %3119 = vperm.xlu0 %3118, %v3085
      %v3120 = vpop.permute.xlu0 %3119
      %3123 = vset.pattern.permute.xlu0 0
      %3124 = vperm.xlu0 %3123, %v3086
      %v3125 = vpop.permute.xlu0 %3124
      %v3135 = vunpack.c.l.b16 %v3070
      %v3136 = vunpack.c.l.b16 %v3071
      %v3137 = vunpack.c.l.b16 %v3072
      %v3138 = vunpack.c.l.b16 %v3073
      %v3139 = vunpack.c.l.b16 %v3074
      %v3140 = vunpack.c.l.b16 %v3075
      %v3141 = vunpack.c.l.b16 %v3076
      %v3142 = vunpack.c.l.b16 %v3077
      %v3143 = vpack.c.b16 %v3136, %v3135
      %v3144 = vpack.c.b16 %v3138, %v3137
      %v3145 = vpack.c.b16 %v3140, %v3139
      %v3146 = vpack.c.b16 %v3142, %v3141
      %3151 = vmatprep.subr.bf16.mxu0 0
      %3152 = vmatpush1.bf16.msra.mxu0 %v3015
      %3153 = vmatprep.subr.bf16.mxu0 0
      %3154 = vmatpush1.bf16.msra.mxu0 %v3016
      %3155 = vmatprep.subr.bf16.mxu0 0
      %3156 = vmatpush1.bf16.msra.mxu0 %v3017
      %3157 = vmatprep.subr.bf16.mxu0 0
      %3158 = vmatpush1.bf16.msra.mxu0 %v3018
      %3159 = vmatprep.subr.bf16.mxu0 0
      %3160 = vmatpush1.bf16.msra.mxu0 %v3065
      %3161 = vmatprep.subr.bf16.mxu0 0
      %3162 = vmatpush1.bf16.msra.mxu0 %v3066
      %3163 = vmatprep.subr.bf16.mxu0 0
      %3164 = vmatpush1.bf16.msra.mxu0 %v3067
      %3165 = vmatprep.subr.bf16.mxu0 0
      %3166 = vmatpush1.bf16.msra.mxu0 %v3068
      %3167 = vmatprep.subr.bf16.mxu0 0
      %3168 = vmatpush1.bf16.msra.mxu0 0
      %3169 = vmatprep.subr.bf16.mxu0 0
      %3170 = vmatpush1.bf16.msra.mxu0 0
      %3171 = vmatprep.subr.bf16.mxu0 0
      %3172 = vmatpush1.bf16.msra.mxu0 0
      %3173 = vmatprep.subr.bf16.mxu0 0
      %3174 = vmatpush1.bf16.msra.mxu0 0
      %3175 = vmatprep.subr.bf16.mxu0 0
      %3176 = vmatpush1.bf16.msra.mxu0 0
      %3177 = vmatprep.subr.bf16.mxu0 0
      %3178 = vmatpush1.bf16.msra.mxu0 0
      %3179 = vmatprep.subr.bf16.mxu0 0
      %3180 = vmatpush1.bf16.msra.mxu0 0
      %3181 = vmatprep.subr.bf16.mxu0 0
      %3182 = vmatpush1.bf16.msra.mxu0 0
      %3183 = vmatprep.mubr.bf16.mxu0 0
      %3184 = vmatmul.mubr.bf16.gmra.mrb[0].mxu0 %v3143
      %v3185 = vpop.f32.mrb[0].mxu0
      %v3186 = vadd.f32 %v3090, %v3185
      %v3187 = vpop.f32.mrb[0].mxu0
      %v3188 = vpop.f32.mrb[0].mxu0
      %v3189 = vadd.f32 %v3095, %v3188
      %v3190 = vpop.f32.mrb[0].mxu0
      %3191 = vmatprep.mubr.bf16.mxu0 0
      %3192 = vmatmul.mubr.bf16.gmra.mrb[0].mxu0 %v3144
      %v3193 = vpop.f32.mrb[0].mxu0
      %v3194 = vadd.f32 %v3100, %v3193
      %v3195 = vpop.f32.mrb[0].mxu0
      %v3196 = vpop.f32.mrb[0].mxu0
      %v3197 = vadd.f32 %v3105, %v3196
      %v3198 = vpop.f32.mrb[0].mxu0
      %3199 = vmatprep.mubr.bf16.mxu0 0
      %3200 = vmatmul.mubr.bf16.gmra.mrb[0].mxu0 %v3145
      %v3201 = vpop.f32.mrb[0].mxu0
      %v3202 = vadd.f32 %v3110, %v3201
      %v3203 = vpop.f32.mrb[0].mxu0
      %v3204 = vpop.f32.mrb[0].mxu0
      %v3205 = vadd.f32 %v3115, %v3204
      %v3206 = vpop.f32.mrb[0].mxu0
      %3207 = vmatprep.mubr.bf16.mxu0 0
      %3208 = vmatmul.mubr.bf16.gmra.mrb[0].mxu0 %v3146
      %v3209 = vpop.f32.mrb[0].mxu0
      %v3210 = vadd.f32 %v3120, %v3209
      %v3211 = vpop.f32.mrb[0].mxu0
      %v3212 = vpop.f32.mrb[0].mxu0
      %v3213 = vadd.f32 %v3125, %v3212
      %v3214 = vpop.f32.mrb[0].mxu0
      %3215 = vdwg.mxu0
      %v3216 = vadd.f32 %v3186, %v3189
      %v3217 = vadd.f32 %v3216, %v3194
      %v3218 = vadd.f32 %v3217, %v3197
      %v3219 = vadd.f32 %v3218, %v3202
      %v3220 = vadd.f32 %v3219, %v3205
      %v3221 = vadd.f32 %v3220, %v3210
      %v3222 = vadd.f32 %v3221, %v3213
      %v3223 = vrot.slane %v3222, 4
      %v3224 = vadd.f32 %v3222, %v3223
      %v3225 = vrot.slane %v3224, 2
      %v3226 = vadd.f32 %v3224, %v3225
      %v3227 = vrot.slane %v3226, 1
      %v3228 = vadd.f32 %v3226, %v3227
      %v3229 = vmul.f32 %v3186, %v3186
      %v3230 = vmul.f32 %v3189, %v3189
      %v3231 = vmul.f32 %v3194, %v3194
      %v3232 = vmul.f32 %v3197, %v3197
      %v3233 = vmul.f32 %v3202, %v3202
      %v3234 = vmul.f32 %v3205, %v3205
      %v3235 = vmul.f32 %v3210, %v3210
      %v3236 = vmul.f32 %v3213, %v3213
      %v3237 = vadd.f32 %v3229, %v3230
      %v3238 = vadd.f32 %v3237, %v3231
      %v3239 = vadd.f32 %v3238, %v3232
      %v3240 = vadd.f32 %v3239, %v3233
      %v3241 = vadd.f32 %v3240, %v3234
      %v3242 = vadd.f32 %v3241, %v3235
      %v3243 = vadd.f32 %v3242, %v3236
      %v3244 = vrot.slane %v3243, 4
      %v3245 = vadd.f32 %v3243, %v3244
      %v3246 = vrot.slane %v3245, 2
      %v3247 = vadd.f32 %v3245, %v3246
      %v3248 = vrot.slane %v3247, 1
      %v3249 = vadd.f32 %v3247, %v3248
      %v3250 = vsel %vm531, %v3228, %v3249
      %v3251 = vsel %vm533, %v3250, 0.0
      %3252 = vmatprep.subr.mxu0 0.0
      %3253 = vmatpush1.msra.mxu0 %v323
      %3254 = vmatprep.subr.mxu0 0.0
      %3255 = vmatpush1.msra.mxu0 %v324
      %3256 = vmatprep.subr.mxu0 0.0
      %3257 = vmatpush1.msra.mxu0 %v325
      %3258 = vmatprep.subr.mxu0 0.0
      %3259 = vmatpush1.msra.mxu0 %v326
      %3260 = vmatprep.subr.mxu0 0.0
      %3261 = vmatpush1.msra.mxu0 %v327
      %3262 = vmatprep.subr.mxu0 0.0
      %3263 = vmatpush1.msra.mxu0 %v328
      %3264 = vmatprep.subr.mxu0 0.0
      %3265 = vmatpush1.msra.mxu0 %v329
      %3266 = vmatprep.subr.mxu0 0.0
      %3267 = vmatpush1.msra.mxu0 %v330
      %3268 = vmatprep.subr.mxu0 0.0
      %3269 = vmatpush1.msra.mxu0 %v331
      %3270 = vmatprep.subr.mxu0 0.0
      %3271 = vmatpush1.msra.mxu0 %v332
      %3272 = vmatprep.subr.mxu0 0.0
      %3273 = vmatpush1.msra.mxu0 %v333
      %3274 = vmatprep.subr.mxu0 0.0
      %3275 = vmatpush1.msra.mxu0 %v334
      %3276 = vmatprep.subr.mxu0 0.0
      %3277 = vmatpush1.msra.mxu0 %v335
      %3278 = vmatprep.subr.mxu0 0.0
      %3279 = vmatpush1.msra.mxu0 %v336
      %3280 = vmatprep.subr.mxu0 0.0
      %3281 = vmatpush1.msra.mxu0 %v337
      %3282 = vmatprep.subr.mxu0 0.0
      %3283 = vmatpush1.msra.mxu0 %v338
      %3284 = vmatprep.subr.mxu0 0.0
      %3285 = vmatpush1.msra.mxu0 0.0
      %3286 = vmatprep.subr.mxu0 0.0
      %3287 = vmatpush1.msra.mxu0 0.0
      %3288 = vmatprep.subr.mxu0 0.0
      %3289 = vmatpush1.msra.mxu0 0.0
      %3290 = vmatprep.subr.mxu0 0.0
      %3291 = vmatpush1.msra.mxu0 0.0
      %3292 = vmatprep.subr.mxu0 0.0
      %3293 = vmatpush1.msra.mxu0 0.0
      %3294 = vmatprep.subr.mxu0 0.0
      %3295 = vmatpush1.msra.mxu0 0.0
      %3296 = vmatprep.subr.mxu0 0.0
      %3297 = vmatpush1.msra.mxu0 0.0
      %3298 = vmatprep.subr.mxu0 0.0
      %3299 = vmatpush1.msra.mxu0 0.0
      %3300 = vmatprep.subr.mxu0 0.0
      %3301 = vmatpush1.msra.mxu0 0.0
      %3302 = vmatprep.subr.mxu0 0.0
      %3303 = vmatpush1.msra.mxu0 0.0
      %3304 = vmatprep.subr.mxu0 0.0
      %3305 = vmatpush1.msra.mxu0 0.0
      %3306 = vmatprep.subr.mxu0 0.0
      %3307 = vmatpush1.msra.mxu0 0.0
      %3308 = vmatprep.subr.mxu0 0.0
      %3309 = vmatpush1.msra.mxu0 0.0
      %3310 = vmatprep.subr.mxu0 0.0
      %3311 = vmatpush1.msra.mxu0 0.0
      %3312 = vmatprep.subr.mxu0 0.0
      %3313 = vmatpush1.msra.mxu0 0.0
      %3314 = vmatprep.subr.mxu0 0.0
      %3315 = vmatpush1.msra.mxu0 0.0
      %3316 = vmatprep.mubr.f32.mxu0 0.0
      %3317 = vmatmul.mubr.f32.gmra.mrb[0].mxu0 %v3251
      %v3318 = vpop.f32.mrb[0].mxu0
      %v3319 = vadd.f32 0.0, %v3318
      %v3320 = vpop.f32.mrb[0].mxu0
      %3321 = vdwg.mxu0
      %v3322 = vmul.f32 %v3319, 0.0078125
      %v3323 = vmul.f32 %v3322, %v3322
      %v3325 = vrot.slane %v3323, 7
      %v3327 = vsub.f32 %v3322, %v3325
      %v3328 = vmax.f32 %v3327, 0.0
      %v3329 = vlaneseq
      %v3330 = vshrl.u32 %v3329, 7
      %v3331 = vsub.s32 0, %v3330
      %v3332 = vrot.slane %v3322, %v3331
      %v3333 = vsub.f32 %v3186, %v3332
      %v3334 = vadd.f32 %v3328, 1e-08
      %v3335 = vrsqrt.pop %v3334
      %v3336 = vlaneseq
      %v3337 = vshrl.u32 %v3336, 7
      %v3338 = vsub.s32 1, %v3337
      %v3339 = vrot.slane %v3335, %v3338
      %v3340 = vmul.f32 %v3333, %v3339
      %s3341 = scalar_lea.vmem %s4, 1088
      %v3342 = vld [vmem:[%s3341] sm:$0xff]
      %3344 = vset.pattern.permute.xlu0 0
      %3345 = vperm.xlu0 %3344, %v3342
      %v3346 = vpop.permute.xlu0 %3345
      %v3348 = vmul.f32 %v3340, %v3346
      %s3349 = scalar_lea.vmem %s4, 1152
      %v3350 = vld [vmem:[%s3349] sm:$0xff]
      %3352 = vset.pattern.permute.xlu0 0
      %3353 = vperm.xlu0 %3352, %v3350
      %v3354 = vpop.permute.xlu0 %3353
      %v3356 = vadd.f32 %v3348, %v3354
      %vm3357 = vcmp.ge.f32.partialorder %v3356, 0.0
      %v3358 = vmul.f32 %v3356, 0.25
      %v3359 = vsel %vm3357, %v3356, %v3358
      %3360 = vst [vmem:[#allocation2 + $0x10] sm:$0xff] %v3359
      %v3361 = vld [vmem:[#allocation2] sm:$0xff]
      %v3362 = vld [vmem:[#allocation2 + $0x8] sm:$0xff]
      %v3363 = vld [vmem:[#allocation2 + $0x10] sm:$0xff]
      %v3364 = vld [vmem:[#allocation2 + $0x18] sm:$0xff]
      %v3365 = vld [vmem:[#allocation2 + $0x20] sm:$0xff]
      %v3366 = vld [vmem:[#allocation2 + $0x28] sm:$0xff]
      %v3367 = vld [vmem:[#allocation2 + $0x30] sm:$0xff]
      %v3368 = vld [vmem:[#allocation2 + $0x38] sm:$0xff]
      %v3369 = vpack.c.bf16 %v3362, %v3361
      %v3370 = vpack.c.bf16 %v3364, %v3363
      %v3371 = vpack.c.bf16 %v3366, %v3365
      %v3372 = vpack.c.bf16 %v3368, %v3367
      %3381 = vrot.lane.b32.xlu0 %v3361, 4
      %v3382 = vpop.permute.xlu0 %3381
      %3383 = vrot.lane.b32.xlu0 %v3362, 4
      %v3384 = vpop.permute.xlu0 %3383
      %3385 = vrot.lane.b32.xlu0 %v3363, 4
      %v3386 = vpop.permute.xlu0 %3385
      %3387 = vrot.lane.b32.xlu0 %v3364, 4
      %v3388 = vpop.permute.xlu0 %3387
      %3389 = vrot.lane.b32.xlu0 %v3365, 4
      %v3390 = vpop.permute.xlu0 %3389
      %3391 = vrot.lane.b32.xlu0 %v3366, 4
      %v3392 = vpop.permute.xlu0 %3391
      %3393 = vrot.lane.b32.xlu0 %v3367, 4
      %v3394 = vpop.permute.xlu0 %3393
      %3395 = vrot.lane.b32.xlu0 %v3368, 4
      %v3396 = vpop.permute.xlu0 %3395
      %s3405 = scalar_lea.vmem %s5, 16
      %v3406 = vld [vmem:[%s3405] sm:$0xff]
      %v3407 = vlaneseq
      %v3408 = vshrl.u32 %v3407, 7
      %v3409 = vsub.s32 0, %v3408
      %v3410 = vrot.slane %v3406, %v3409
      %v3411 = vmul.f32 %v3382, %v3410
      %v3412 = vmul.f32 %v3384, %v3410
      %v3413 = vmul.f32 %v3386, %v3410
      %v3414 = vmul.f32 %v3388, %v3410
      %v3415 = vmul.f32 %v3390, %v3410
      %v3416 = vmul.f32 %v3392, %v3410
      %v3417 = vmul.f32 %v3394, %v3410
      %v3418 = vmul.f32 %v3396, %v3410
      %v3419 = vpack.c.bf16 %v3412, %v3411
      %v3420 = vpack.c.bf16 %v3414, %v3413
      %v3421 = vpack.c.bf16 %v3416, %v3415
      %v3422 = vpack.c.bf16 %v3418, %v3417
      %s3423 = scalar_lea.vmem %s2, 96
      %v3424 = vld [vmem:[%s3423] sm:$0xf]
      %v3425 = vld [vmem:[%s3423 + $0x4] sm:$0xf]
      %v3426 = vld [vmem:[%s3423 + $0x8] sm:$0xf]
      %v3427 = vld [vmem:[%s3423 + $0xc] sm:$0xf]
      %v3428 = vld [vmem:[%s3423 + $0x10] sm:$0xf]
      %v3429 = vld [vmem:[%s3423 + $0x14] sm:$0xf]
      %v3430 = vld [vmem:[%s3423 + $0x18] sm:$0xf]
      %v3431 = vld [vmem:[%s3423 + $0x1c] sm:$0xf]
      %s3432 = scalar_lea.vmem %s4, 1216
      %v3433 = vld [vmem:[%s3432] sm:$0xff]
      %v3434 = vld [vmem:[%s3432 + $0x8] sm:$0xff]
      %v3435 = vld [vmem:[%s3432 + $0x10] sm:$0xff]
      %v3436 = vld [vmem:[%s3432 + $0x18] sm:$0xff]
      %v3437 = vld [vmem:[%s3432 + $0x20] sm:$0xff]
      %v3438 = vld [vmem:[%s3432 + $0x28] sm:$0xff]
      %v3439 = vld [vmem:[%s3432 + $0x30] sm:$0xff]
      %v3440 = vld [vmem:[%s3432 + $0x38] sm:$0xff]
      %3442 = vset.pattern.permute.xlu0 0
      %3443 = vperm.xlu0 %3442, %v3433
      %v3444 = vpop.permute.xlu0 %3443
      %3447 = vset.pattern.permute.xlu0 0
      %3448 = vperm.xlu0 %3447, %v3434
      %v3449 = vpop.permute.xlu0 %3448
      %3452 = vset.pattern.permute.xlu0 0
      %3453 = vperm.xlu0 %3452, %v3435
      %v3454 = vpop.permute.xlu0 %3453
      %3457 = vset.pattern.permute.xlu0 0
      %3458 = vperm.xlu0 %3457, %v3436
      %v3459 = vpop.permute.xlu0 %3458
      %3462 = vset.pattern.permute.xlu0 0
      %3463 = vperm.xlu0 %3462, %v3437
      %v3464 = vpop.permute.xlu0 %3463
      %3467 = vset.pattern.permute.xlu0 0
      %3468 = vperm.xlu0 %3467, %v3438
      %v3469 = vpop.permute.xlu0 %3468
      %3472 = vset.pattern.permute.xlu0 0
      %3473 = vperm.xlu0 %3472, %v3439
      %v3474 = vpop.permute.xlu0 %3473
      %3477 = vset.pattern.permute.xlu0 0
      %3478 = vperm.xlu0 %3477, %v3440
      %v3479 = vpop.permute.xlu0 %3478
      %v3489 = vunpack.c.l.b16 %v3424
      %v3490 = vunpack.c.l.b16 %v3425
      %v3491 = vunpack.c.l.b16 %v3426
      %v3492 = vunpack.c.l.b16 %v3427
      %v3493 = vunpack.c.l.b16 %v3428
      %v3494 = vunpack.c.l.b16 %v3429
      %v3495 = vunpack.c.l.b16 %v3430
      %v3496 = vunpack.c.l.b16 %v3431
      %v3497 = vpack.c.b16 %v3490, %v3489
      %v3498 = vpack.c.b16 %v3492, %v3491
      %v3499 = vpack.c.b16 %v3494, %v3493
      %v3500 = vpack.c.b16 %v3496, %v3495
      %3505 = vmatprep.subr.bf16.mxu0 0
      %3506 = vmatpush1.bf16.msra.mxu0 %v3369
      %3507 = vmatprep.subr.bf16.mxu0 0
      %3508 = vmatpush1.bf16.msra.mxu0 %v3370
      %3509 = vmatprep.subr.bf16.mxu0 0
      %3510 = vmatpush1.bf16.msra.mxu0 %v3371
      %3511 = vmatprep.subr.bf16.mxu0 0
      %3512 = vmatpush1.bf16.msra.mxu0 %v3372
      %3513 = vmatprep.subr.bf16.mxu0 0
      %3514 = vmatpush1.bf16.msra.mxu0 %v3419
      %3515 = vmatprep.subr.bf16.mxu0 0
      %3516 = vmatpush1.bf16.msra.mxu0 %v3420
      %3517 = vmatprep.subr.bf16.mxu0 0
      %3518 = vmatpush1.bf16.msra.mxu0 %v3421
      %3519 = vmatprep.subr.bf16.mxu0 0
      %3520 = vmatpush1.bf16.msra.mxu0 %v3422
      %3521 = vmatprep.subr.bf16.mxu0 0
      %3522 = vmatpush1.bf16.msra.mxu0 0
      %3523 = vmatprep.subr.bf16.mxu0 0
      %3524 = vmatpush1.bf16.msra.mxu0 0
      %3525 = vmatprep.subr.bf16.mxu0 0
      %3526 = vmatpush1.bf16.msra.mxu0 0
      %3527 = vmatprep.subr.bf16.mxu0 0
      %3528 = vmatpush1.bf16.msra.mxu0 0
      %3529 = vmatprep.subr.bf16.mxu0 0
      %3530 = vmatpush1.bf16.msra.mxu0 0
      %3531 = vmatprep.subr.bf16.mxu0 0
      %3532 = vmatpush1.bf16.msra.mxu0 0
      %3533 = vmatprep.subr.bf16.mxu0 0
      %3534 = vmatpush1.bf16.msra.mxu0 0
      %3535 = vmatprep.subr.bf16.mxu0 0
      %3536 = vmatpush1.bf16.msra.mxu0 0
      %3537 = vmatprep.mubr.bf16.mxu0 0
      %3538 = vmatmul.mubr.bf16.gmra.mrb[0].mxu0 %v3497
      %v3539 = vpop.f32.mrb[0].mxu0
      %v3540 = vadd.f32 %v3444, %v3539
      %v3541 = vpop.f32.mrb[0].mxu0
      %v3542 = vpop.f32.mrb[0].mxu0
      %v3543 = vadd.f32 %v3449, %v3542
      %v3544 = vpop.f32.mrb[0].mxu0
      %3545 = vmatprep.mubr.bf16.mxu0 0
      %3546 = vmatmul.mubr.bf16.gmra.mrb[0].mxu0 %v3498
      %v3547 = vpop.f32.mrb[0].mxu0
      %v3548 = vadd.f32 %v3454, %v3547
      %v3549 = vpop.f32.mrb[0].mxu0
      %v3550 = vpop.f32.mrb[0].mxu0
      %v3551 = vadd.f32 %v3459, %v3550
      %v3552 = vpop.f32.mrb[0].mxu0
      %3553 = vmatprep.mubr.bf16.mxu0 0
      %3554 = vmatmul.mubr.bf16.gmra.mrb[0].mxu0 %v3499
      %v3555 = vpop.f32.mrb[0].mxu0
      %v3556 = vadd.f32 %v3464, %v3555
      %v3557 = vpop.f32.mrb[0].mxu0
      %v3558 = vpop.f32.mrb[0].mxu0
      %v3559 = vadd.f32 %v3469, %v3558
      %v3560 = vpop.f32.mrb[0].mxu0
      %3561 = vmatprep.mubr.bf16.mxu0 0
      %3562 = vmatmul.mubr.bf16.gmra.mrb[0].mxu0 %v3500
      %v3563 = vpop.f32.mrb[0].mxu0
      %v3564 = vadd.f32 %v3474, %v3563
      %v3565 = vpop.f32.mrb[0].mxu0
      %v3566 = vpop.f32.mrb[0].mxu0
      %v3567 = vadd.f32 %v3479, %v3566
      %v3568 = vpop.f32.mrb[0].mxu0
      %3569 = vdwg.mxu0
      %v3570 = vadd.f32 %v3540, %v3543
      %v3571 = vadd.f32 %v3570, %v3548
      %v3572 = vadd.f32 %v3571, %v3551
      %v3573 = vadd.f32 %v3572, %v3556
      %v3574 = vadd.f32 %v3573, %v3559
      %v3575 = vadd.f32 %v3574, %v3564
      %v3576 = vadd.f32 %v3575, %v3567
      %v3577 = vrot.slane %v3576, 4
      %v3578 = vadd.f32 %v3576, %v3577
      %v3579 = vrot.slane %v3578, 2
      %v3580 = vadd.f32 %v3578, %v3579
      %v3581 = vrot.slane %v3580, 1
      %v3582 = vadd.f32 %v3580, %v3581
      %v3583 = vmul.f32 %v3540, %v3540
      %v3584 = vmul.f32 %v3543, %v3543
      %v3585 = vmul.f32 %v3548, %v3548
      %v3586 = vmul.f32 %v3551, %v3551
      %v3587 = vmul.f32 %v3556, %v3556
      %v3588 = vmul.f32 %v3559, %v3559
      %v3589 = vmul.f32 %v3564, %v3564
      %v3590 = vmul.f32 %v3567, %v3567
      %v3591 = vadd.f32 %v3583, %v3584
      %v3592 = vadd.f32 %v3591, %v3585
      %v3593 = vadd.f32 %v3592, %v3586
      %v3594 = vadd.f32 %v3593, %v3587
      %v3595 = vadd.f32 %v3594, %v3588
      %v3596 = vadd.f32 %v3595, %v3589
      %v3597 = vadd.f32 %v3596, %v3590
      %v3598 = vrot.slane %v3597, 4
      %v3599 = vadd.f32 %v3597, %v3598
      %v3600 = vrot.slane %v3599, 2
      %v3601 = vadd.f32 %v3599, %v3600
      %v3602 = vrot.slane %v3601, 1
      %v3603 = vadd.f32 %v3601, %v3602
      %v3604 = vsel %vm531, %v3582, %v3603
      %v3605 = vsel %vm533, %v3604, 0.0
      %3606 = vmatprep.subr.mxu0 0.0
      %3607 = vmatpush1.msra.mxu0 %v323
      %3608 = vmatprep.subr.mxu0 0.0
      %3609 = vmatpush1.msra.mxu0 %v324
      %3610 = vmatprep.subr.mxu0 0.0
      %3611 = vmatpush1.msra.mxu0 %v325
      %3612 = vmatprep.subr.mxu0 0.0
      %3613 = vmatpush1.msra.mxu0 %v326
      %3614 = vmatprep.subr.mxu0 0.0
      %3615 = vmatpush1.msra.mxu0 %v327
      %3616 = vmatprep.subr.mxu0 0.0
      %3617 = vmatpush1.msra.mxu0 %v328
      %3618 = vmatprep.subr.mxu0 0.0
      %3619 = vmatpush1.msra.mxu0 %v329
      %3620 = vmatprep.subr.mxu0 0.0
      %3621 = vmatpush1.msra.mxu0 %v330
      %3622 = vmatprep.subr.mxu0 0.0
      %3623 = vmatpush1.msra.mxu0 %v331
      %3624 = vmatprep.subr.mxu0 0.0
      %3625 = vmatpush1.msra.mxu0 %v332
      %3626 = vmatprep.subr.mxu0 0.0
      %3627 = vmatpush1.msra.mxu0 %v333
      %3628 = vmatprep.subr.mxu0 0.0
      %3629 = vmatpush1.msra.mxu0 %v334
      %3630 = vmatprep.subr.mxu0 0.0
      %3631 = vmatpush1.msra.mxu0 %v335
      %3632 = vmatprep.subr.mxu0 0.0
      %3633 = vmatpush1.msra.mxu0 %v336
      %3634 = vmatprep.subr.mxu0 0.0
      %3635 = vmatpush1.msra.mxu0 %v337
      %3636 = vmatprep.subr.mxu0 0.0
      %3637 = vmatpush1.msra.mxu0 %v338
      %3638 = vmatprep.subr.mxu0 0.0
      %3639 = vmatpush1.msra.mxu0 0.0
      %3640 = vmatprep.subr.mxu0 0.0
      %3641 = vmatpush1.msra.mxu0 0.0
      %3642 = vmatprep.subr.mxu0 0.0
      %3643 = vmatpush1.msra.mxu0 0.0
      %3644 = vmatprep.subr.mxu0 0.0
      %3645 = vmatpush1.msra.mxu0 0.0
      %3646 = vmatprep.subr.mxu0 0.0
      %3647 = vmatpush1.msra.mxu0 0.0
      %3648 = vmatprep.subr.mxu0 0.0
      %3649 = vmatpush1.msra.mxu0 0.0
      %3650 = vmatprep.subr.mxu0 0.0
      %3651 = vmatpush1.msra.mxu0 0.0
      %3652 = vmatprep.subr.mxu0 0.0
      %3653 = vmatpush1.msra.mxu0 0.0
      %3654 = vmatprep.subr.mxu0 0.0
      %3655 = vmatpush1.msra.mxu0 0.0
      %3656 = vmatprep.subr.mxu0 0.0
      %3657 = vmatpush1.msra.mxu0 0.0
      %3658 = vmatprep.subr.mxu0 0.0
      %3659 = vmatpush1.msra.mxu0 0.0
      %3660 = vmatprep.subr.mxu0 0.0
      %3661 = vmatpush1.msra.mxu0 0.0
      %3662 = vmatprep.subr.mxu0 0.0
      %3663 = vmatpush1.msra.mxu0 0.0
      %3664 = vmatprep.subr.mxu0 0.0
      %3665 = vmatpush1.msra.mxu0 0.0
      %3666 = vmatprep.subr.mxu0 0.0
      %3667 = vmatpush1.msra.mxu0 0.0
      %3668 = vmatprep.subr.mxu0 0.0
      %3669 = vmatpush1.msra.mxu0 0.0
      %3670 = vmatprep.mubr.f32.mxu0 0.0
      %3671 = vmatmul.mubr.f32.gmra.mrb[0].mxu0 %v3605
      %v3672 = vpop.f32.mrb[0].mxu0
      %v3673 = vadd.f32 0.0, %v3672
      %v3674 = vpop.f32.mrb[0].mxu0
      %3675 = vdwg.mxu0
      %v3676 = vmul.f32 %v3673, 0.0078125
      %v3677 = vmul.f32 %v3676, %v3676
      %v3679 = vrot.slane %v3677, 7
      %v3681 = vsub.f32 %v3676, %v3679
      %v3682 = vmax.f32 %v3681, 0.0
      %v3683 = vlaneseq
      %v3684 = vshrl.u32 %v3683, 7
      %v3685 = vsub.s32 0, %v3684
      %v3686 = vrot.slane %v3676, %v3685
      %v3687 = vsub.f32 %v3540, %v3686
      %v3688 = vadd.f32 %v3682, 1e-08
      %v3689 = vrsqrt.pop %v3688
      %v3690 = vlaneseq
      %v3691 = vshrl.u32 %v3690, 7
      %v3692 = vsub.s32 1, %v3691
      %v3693 = vrot.slane %v3689, %v3692
      %v3694 = vmul.f32 %v3687, %v3693
      %s3695 = scalar_lea.vmem %s4, 1280
      %v3696 = vld [vmem:[%s3695] sm:$0xff]
      %3698 = vset.pattern.permute.xlu0 0
      %3699 = vperm.xlu0 %3698, %v3696
      %v3700 = vpop.permute.xlu0 %3699
      %v3702 = vmul.f32 %v3694, %v3700
      %s3703 = scalar_lea.vmem %s4, 1344
      %v3704 = vld [vmem:[%s3703] sm:$0xff]
      %3706 = vset.pattern.permute.xlu0 0
      %3707 = vperm.xlu0 %3706, %v3704
      %v3708 = vpop.permute.xlu0 %3707
      %v3710 = vadd.f32 %v3702, %v3708
      %vm3711 = vcmp.ge.f32.partialorder %v3710, 0.0
      %v3712 = vmul.f32 %v3710, 0.25
      %v3713 = vsel %vm3711, %v3710, %v3712
      %3714 = vst [vmem:[#allocation2 + $0x18] sm:$0xff] %v3713
      %v3715 = vld [vmem:[#allocation2] sm:$0xff]
      %v3716 = vld [vmem:[#allocation2 + $0x8] sm:$0xff]
      %v3717 = vld [vmem:[#allocation2 + $0x10] sm:$0xff]
      %v3718 = vld [vmem:[#allocation2 + $0x18] sm:$0xff]
      %v3719 = vld [vmem:[#allocation2 + $0x20] sm:$0xff]
      %v3720 = vld [vmem:[#allocation2 + $0x28] sm:$0xff]
      %v3721 = vld [vmem:[#allocation2 + $0x30] sm:$0xff]
      %v3722 = vld [vmem:[#allocation2 + $0x38] sm:$0xff]
      %v3723 = vpack.c.bf16 %v3716, %v3715
      %v3724 = vpack.c.bf16 %v3718, %v3717
      %v3725 = vpack.c.bf16 %v3720, %v3719
      %v3726 = vpack.c.bf16 %v3722, %v3721
      %3735 = vrot.lane.b32.xlu0 %v3715, 8
      %v3736 = vpop.permute.xlu0 %3735
      %3737 = vrot.lane.b32.xlu0 %v3716, 8
      %v3738 = vpop.permute.xlu0 %3737
      %3739 = vrot.lane.b32.xlu0 %v3717, 8
      %v3740 = vpop.permute.xlu0 %3739
      %3741 = vrot.lane.b32.xlu0 %v3718, 8
      %v3742 = vpop.permute.xlu0 %3741
      %3743 = vrot.lane.b32.xlu0 %v3719, 8
      %v3744 = vpop.permute.xlu0 %3743
      %3745 = vrot.lane.b32.xlu0 %v3720, 8
      %v3746 = vpop.permute.xlu0 %3745
      %3747 = vrot.lane.b32.xlu0 %v3721, 8
      %v3748 = vpop.permute.xlu0 %3747
      %3749 = vrot.lane.b32.xlu0 %v3722, 8
      %v3750 = vpop.permute.xlu0 %3749
      %s3759 = scalar_lea.vmem %s5, 24
      %v3760 = vld [vmem:[%s3759] sm:$0xff]
      %v3761 = vlaneseq
      %v3762 = vshrl.u32 %v3761, 7
      %v3763 = vsub.s32 0, %v3762
      %v3764 = vrot.slane %v3760, %v3763
      %v3765 = vmul.f32 %v3736, %v3764
      %v3766 = vmul.f32 %v3738, %v3764
      %v3767 = vmul.f32 %v3740, %v3764
      %v3768 = vmul.f32 %v3742, %v3764
      %v3769 = vmul.f32 %v3744, %v3764
      %v3770 = vmul.f32 %v3746, %v3764
      %v3771 = vmul.f32 %v3748, %v3764
      %v3772 = vmul.f32 %v3750, %v3764
      %v3773 = vpack.c.bf16 %v3766, %v3765
      %v3774 = vpack.c.bf16 %v3768, %v3767
      %v3775 = vpack.c.bf16 %v3770, %v3769
      %v3776 = vpack.c.bf16 %v3772, %v3771
      %s3777 = scalar_lea.vmem %s2, 128
      %v3778 = vld [vmem:[%s3777] sm:$0xf]
      %v3779 = vld [vmem:[%s3777 + $0x4] sm:$0xf]
      %v3780 = vld [vmem:[%s3777 + $0x8] sm:$0xf]
      %v3781 = vld [vmem:[%s3777 + $0xc] sm:$0xf]
      %v3782 = vld [vmem:[%s3777 + $0x10] sm:$0xf]
      %v3783 = vld [vmem:[%s3777 + $0x14] sm:$0xf]
      %v3784 = vld [vmem:[%s3777 + $0x18] sm:$0xf]
      %v3785 = vld [vmem:[%s3777 + $0x1c] sm:$0xf]
      %s3786 = scalar_lea.vmem %s4, 1408
      %v3787 = vld [vmem:[%s3786] sm:$0xff]
      %v3788 = vld [vmem:[%s3786 + $0x8] sm:$0xff]
      %v3789 = vld [vmem:[%s3786 + $0x10] sm:$0xff]
      %v3790 = vld [vmem:[%s3786 + $0x18] sm:$0xff]
      %v3791 = vld [vmem:[%s3786 + $0x20] sm:$0xff]
      %v3792 = vld [vmem:[%s3786 + $0x28] sm:$0xff]
      %v3793 = vld [vmem:[%s3786 + $0x30] sm:$0xff]
      %v3794 = vld [vmem:[%s3786 + $0x38] sm:$0xff]
      %3796 = vset.pattern.permute.xlu0 0
      %3797 = vperm.xlu0 %3796, %v3787
      %v3798 = vpop.permute.xlu0 %3797
      %3801 = vset.pattern.permute.xlu0 0
      %3802 = vperm.xlu0 %3801, %v3788
      %v3803 = vpop.permute.xlu0 %3802
      %3806 = vset.pattern.permute.xlu0 0
      %3807 = vperm.xlu0 %3806, %v3789
      %v3808 = vpop.permute.xlu0 %3807
      %3811 = vset.pattern.permute.xlu0 0
      %3812 = vperm.xlu0 %3811, %v3790
      %v3813 = vpop.permute.xlu0 %3812
      %3816 = vset.pattern.permute.xlu0 0
      %3817 = vperm.xlu0 %3816, %v3791
      %v3818 = vpop.permute.xlu0 %3817
      %3821 = vset.pattern.permute.xlu0 0
      %3822 = vperm.xlu0 %3821, %v3792
      %v3823 = vpop.permute.xlu0 %3822
      %3826 = vset.pattern.permute.xlu0 0
      %3827 = vperm.xlu0 %3826, %v3793
      %v3828 = vpop.permute.xlu0 %3827
      %3831 = vset.pattern.permute.xlu0 0
      %3832 = vperm.xlu0 %3831, %v3794
      %v3833 = vpop.permute.xlu0 %3832
      %v3843 = vunpack.c.l.b16 %v3778
      %v3844 = vunpack.c.l.b16 %v3779
      %v3845 = vunpack.c.l.b16 %v3780
      %v3846 = vunpack.c.l.b16 %v3781
      %v3847 = vunpack.c.l.b16 %v3782
      %v3848 = vunpack.c.l.b16 %v3783
      %v3849 = vunpack.c.l.b16 %v3784
      %v3850 = vunpack.c.l.b16 %v3785
      %v3851 = vpack.c.b16 %v3844, %v3843
      %v3852 = vpack.c.b16 %v3846, %v3845
      %v3853 = vpack.c.b16 %v3848, %v3847
      %v3854 = vpack.c.b16 %v3850, %v3849
      %3859 = vmatprep.subr.bf16.mxu0 0
      %3860 = vmatpush1.bf16.msra.mxu0 %v3723
      %3861 = vmatprep.subr.bf16.mxu0 0
      %3862 = vmatpush1.bf16.msra.mxu0 %v3724
      %3863 = vmatprep.subr.bf16.mxu0 0
      %3864 = vmatpush1.bf16.msra.mxu0 %v3725
      %3865 = vmatprep.subr.bf16.mxu0 0
      %3866 = vmatpush1.bf16.msra.mxu0 %v3726
      %3867 = vmatprep.subr.bf16.mxu0 0
      %3868 = vmatpush1.bf16.msra.mxu0 %v3773
      %3869 = vmatprep.subr.bf16.mxu0 0
      %3870 = vmatpush1.bf16.msra.mxu0 %v3774
      %3871 = vmatprep.subr.bf16.mxu0 0
      %3872 = vmatpush1.bf16.msra.mxu0 %v3775
      %3873 = vmatprep.subr.bf16.mxu0 0
      %3874 = vmatpush1.bf16.msra.mxu0 %v3776
      %3875 = vmatprep.subr.bf16.mxu0 0
      %3876 = vmatpush1.bf16.msra.mxu0 0
      %3877 = vmatprep.subr.bf16.mxu0 0
      %3878 = vmatpush1.bf16.msra.mxu0 0
      %3879 = vmatprep.subr.bf16.mxu0 0
      %3880 = vmatpush1.bf16.msra.mxu0 0
      %3881 = vmatprep.subr.bf16.mxu0 0
      %3882 = vmatpush1.bf16.msra.mxu0 0
      %3883 = vmatprep.subr.bf16.mxu0 0
      %3884 = vmatpush1.bf16.msra.mxu0 0
      %3885 = vmatprep.subr.bf16.mxu0 0
      %3886 = vmatpush1.bf16.msra.mxu0 0
      %3887 = vmatprep.subr.bf16.mxu0 0
      %3888 = vmatpush1.bf16.msra.mxu0 0
      %3889 = vmatprep.subr.bf16.mxu0 0
      %3890 = vmatpush1.bf16.msra.mxu0 0
      %3891 = vmatprep.mubr.bf16.mxu0 0
      %3892 = vmatmul.mubr.bf16.gmra.mrb[0].mxu0 %v3851
      %v3893 = vpop.f32.mrb[0].mxu0
      %v3894 = vadd.f32 %v3798, %v3893
      %v3895 = vpop.f32.mrb[0].mxu0
      %v3896 = vpop.f32.mrb[0].mxu0
      %v3897 = vadd.f32 %v3803, %v3896
      %v3898 = vpop.f32.mrb[0].mxu0
      %3899 = vmatprep.mubr.bf16.mxu0 0
      %3900 = vmatmul.mubr.bf16.gmra.mrb[0].mxu0 %v3852
      %v3901 = vpop.f32.mrb[0].mxu0
      %v3902 = vadd.f32 %v3808, %v3901
      %v3903 = vpop.f32.mrb[0].mxu0
      %v3904 = vpop.f32.mrb[0].mxu0
      %v3905 = vadd.f32 %v3813, %v3904
      %v3906 = vpop.f32.mrb[0].mxu0
      %3907 = vmatprep.mubr.bf16.mxu0 0
      %3908 = vmatmul.mubr.bf16.gmra.mrb[0].mxu0 %v3853
      %v3909 = vpop.f32.mrb[0].mxu0
      %v3910 = vadd.f32 %v3818, %v3909
      %v3911 = vpop.f32.mrb[0].mxu0
      %v3912 = vpop.f32.mrb[0].mxu0
      %v3913 = vadd.f32 %v3823, %v3912
      %v3914 = vpop.f32.mrb[0].mxu0
      %3915 = vmatprep.mubr.bf16.mxu0 0
      %3916 = vmatmul.mubr.bf16.gmra.mrb[0].mxu0 %v3854
      %v3917 = vpop.f32.mrb[0].mxu0
      %v3918 = vadd.f32 %v3828, %v3917
      %v3919 = vpop.f32.mrb[0].mxu0
      %v3920 = vpop.f32.mrb[0].mxu0
      %v3921 = vadd.f32 %v3833, %v3920
      %v3922 = vpop.f32.mrb[0].mxu0
      %3923 = vdwg.mxu0
      %v3924 = vadd.f32 %v3894, %v3897
      %v3925 = vadd.f32 %v3924, %v3902
      %v3926 = vadd.f32 %v3925, %v3905
      %v3927 = vadd.f32 %v3926, %v3910
      %v3928 = vadd.f32 %v3927, %v3913
      %v3929 = vadd.f32 %v3928, %v3918
      %v3930 = vadd.f32 %v3929, %v3921
      %v3931 = vrot.slane %v3930, 4
      %v3932 = vadd.f32 %v3930, %v3931
      %v3933 = vrot.slane %v3932, 2
      %v3934 = vadd.f32 %v3932, %v3933
      %v3935 = vrot.slane %v3934, 1
      %v3936 = vadd.f32 %v3934, %v3935
      %v3937 = vmul.f32 %v3894, %v3894
      %v3938 = vmul.f32 %v3897, %v3897
      %v3939 = vmul.f32 %v3902, %v3902
      %v3940 = vmul.f32 %v3905, %v3905
      %v3941 = vmul.f32 %v3910, %v3910
      %v3942 = vmul.f32 %v3913, %v3913
      %v3943 = vmul.f32 %v3918, %v3918
      %v3944 = vmul.f32 %v3921, %v3921
      %v3945 = vadd.f32 %v3937, %v3938
      %v3946 = vadd.f32 %v3945, %v3939
      %v3947 = vadd.f32 %v3946, %v3940
      %v3948 = vadd.f32 %v3947, %v3941
      %v3949 = vadd.f32 %v3948, %v3942
      %v3950 = vadd.f32 %v3949, %v3943
      %v3951 = vadd.f32 %v3950, %v3944
      %v3952 = vrot.slane %v3951, 4
      %v3953 = vadd.f32 %v3951, %v3952
      %v3954 = vrot.slane %v3953, 2
      %v3955 = vadd.f32 %v3953, %v3954
      %v3956 = vrot.slane %v3955, 1
      %v3957 = vadd.f32 %v3955, %v3956
      %v3958 = vsel %vm531, %v3936, %v3957
      %v3959 = vsel %vm533, %v3958, 0.0
      %3960 = vmatprep.subr.mxu0 0.0
      %3961 = vmatpush1.msra.mxu0 %v323
      %3962 = vmatprep.subr.mxu0 0.0
      %3963 = vmatpush1.msra.mxu0 %v324
      %3964 = vmatprep.subr.mxu0 0.0
      %3965 = vmatpush1.msra.mxu0 %v325
      %3966 = vmatprep.subr.mxu0 0.0
      %3967 = vmatpush1.msra.mxu0 %v326
      %3968 = vmatprep.subr.mxu0 0.0
      %3969 = vmatpush1.msra.mxu0 %v327
      %3970 = vmatprep.subr.mxu0 0.0
      %3971 = vmatpush1.msra.mxu0 %v328
      %3972 = vmatprep.subr.mxu0 0.0
      %3973 = vmatpush1.msra.mxu0 %v329
      %3974 = vmatprep.subr.mxu0 0.0
      %3975 = vmatpush1.msra.mxu0 %v330
      %3976 = vmatprep.subr.mxu0 0.0
      %3977 = vmatpush1.msra.mxu0 %v331
      %3978 = vmatprep.subr.mxu0 0.0
      %3979 = vmatpush1.msra.mxu0 %v332
      %3980 = vmatprep.subr.mxu0 0.0
      %3981 = vmatpush1.msra.mxu0 %v333
      %3982 = vmatprep.subr.mxu0 0.0
      %3983 = vmatpush1.msra.mxu0 %v334
      %3984 = vmatprep.subr.mxu0 0.0
      %3985 = vmatpush1.msra.mxu0 %v335
      %3986 = vmatprep.subr.mxu0 0.0
      %3987 = vmatpush1.msra.mxu0 %v336
      %3988 = vmatprep.subr.mxu0 0.0
      %3989 = vmatpush1.msra.mxu0 %v337
      %3990 = vmatprep.subr.mxu0 0.0
      %3991 = vmatpush1.msra.mxu0 %v338
      %3992 = vmatprep.subr.mxu0 0.0
      %3993 = vmatpush1.msra.mxu0 0.0
      %3994 = vmatprep.subr.mxu0 0.0
      %3995 = vmatpush1.msra.mxu0 0.0
      %3996 = vmatprep.subr.mxu0 0.0
      %3997 = vmatpush1.msra.mxu0 0.0
      %3998 = vmatprep.subr.mxu0 0.0
      %3999 = vmatpush1.msra.mxu0 0.0
      %4000 = vmatprep.subr.mxu0 0.0
      %4001 = vmatpush1.msra.mxu0 0.0
      %4002 = vmatprep.subr.mxu0 0.0
      %4003 = vmatpush1.msra.mxu0 0.0
      %4004 = vmatprep.subr.mxu0 0.0
      %4005 = vmatpush1.msra.mxu0 0.0
      %4006 = vmatprep.subr.mxu0 0.0
      %4007 = vmatpush1.msra.mxu0 0.0
      %4008 = vmatprep.subr.mxu0 0.0
      %4009 = vmatpush1.msra.mxu0 0.0
      %4010 = vmatprep.subr.mxu0 0.0
      %4011 = vmatpush1.msra.mxu0 0.0
      %4012 = vmatprep.subr.mxu0 0.0
      %4013 = vmatpush1.msra.mxu0 0.0
      %4014 = vmatprep.subr.mxu0 0.0
      %4015 = vmatpush1.msra.mxu0 0.0
      %4016 = vmatprep.subr.mxu0 0.0
      %4017 = vmatpush1.msra.mxu0 0.0
      %4018 = vmatprep.subr.mxu0 0.0
      %4019 = vmatpush1.msra.mxu0 0.0
      %4020 = vmatprep.subr.mxu0 0.0
      %4021 = vmatpush1.msra.mxu0 0.0
      %4022 = vmatprep.subr.mxu0 0.0
      %4023 = vmatpush1.msra.mxu0 0.0
      %4024 = vmatprep.mubr.f32.mxu0 0.0
      %4025 = vmatmul.mubr.f32.gmra.mrb[0].mxu0 %v3959
      %v4026 = vpop.f32.mrb[0].mxu0
      %v4027 = vadd.f32 0.0, %v4026
      %v4028 = vpop.f32.mrb[0].mxu0
      %4029 = vdwg.mxu0
      %v4030 = vmul.f32 %v4027, 0.0078125
      %v4031 = vmul.f32 %v4030, %v4030
      %v4033 = vrot.slane %v4031, 7
      %v4035 = vsub.f32 %v4030, %v4033
      %v4036 = vmax.f32 %v4035, 0.0
      %v4037 = vlaneseq
      %v4038 = vshrl.u32 %v4037, 7
      %v4039 = vsub.s32 0, %v4038
      %v4040 = vrot.slane %v4030, %v4039
      %v4041 = vsub.f32 %v3894, %v4040
      %v4042 = vadd.f32 %v4036, 1e-08
      %v4043 = vrsqrt.pop %v4042
      %v4044 = vlaneseq
      %v4045 = vshrl.u32 %v4044, 7
      %v4046 = vsub.s32 1, %v4045
      %v4047 = vrot.slane %v4043, %v4046
      %v4048 = vmul.f32 %v4041, %v4047
      %s4049 = scalar_lea.vmem %s4, 1472
      %v4050 = vld [vmem:[%s4049] sm:$0xff]
      %4052 = vset.pattern.permute.xlu0 0
      %4053 = vperm.xlu0 %4052, %v4050
      %v4054 = vpop.permute.xlu0 %4053
      %v4056 = vmul.f32 %v4048, %v4054
      %s4057 = scalar_lea.vmem %s4, 1536
      %v4058 = vld [vmem:[%s4057] sm:$0xff]
      %4060 = vset.pattern.permute.xlu0 0
      %4061 = vperm.xlu0 %4060, %v4058
      %v4062 = vpop.permute.xlu0 %4061
      %v4064 = vadd.f32 %v4056, %v4062
      %vm4065 = vcmp.ge.f32.partialorder %v4064, 0.0
      %v4066 = vmul.f32 %v4064, 0.25
      %v4067 = vsel %vm4065, %v4064, %v4066
      %4068 = vst [vmem:[#allocation2 + $0x20] sm:$0xff] %v4067
      %v4069 = vld [vmem:[#allocation2] sm:$0xff]
      %v4070 = vld [vmem:[#allocation2 + $0x8] sm:$0xff]
      %v4071 = vld [vmem:[#allocation2 + $0x10] sm:$0xff]
      %v4072 = vld [vmem:[#allocation2 + $0x18] sm:$0xff]
      %v4073 = vld [vmem:[#allocation2 + $0x20] sm:$0xff]
      %v4074 = vld [vmem:[#allocation2 + $0x28] sm:$0xff]
      %v4075 = vld [vmem:[#allocation2 + $0x30] sm:$0xff]
      %v4076 = vld [vmem:[#allocation2 + $0x38] sm:$0xff]
      %v4077 = vpack.c.bf16 %v4070, %v4069
      %v4078 = vpack.c.bf16 %v4072, %v4071
      %v4079 = vpack.c.bf16 %v4074, %v4073
      %v4080 = vpack.c.bf16 %v4076, %v4075
      %s4081 = scalar_lea.vmem %s1, 32
      %v4082 = vld [vmem:[%s4081] sm:$0xf]
      %v4083 = vld [vmem:[%s4081 + $0x4] sm:$0xf]
      %v4084 = vld [vmem:[%s4081 + $0x8] sm:$0xf]
      %v4085 = vld [vmem:[%s4081 + $0xc] sm:$0xf]
      %v4086 = vld [vmem:[%s4081 + $0x10] sm:$0xf]
      %v4087 = vld [vmem:[%s4081 + $0x14] sm:$0xf]
      %v4088 = vld [vmem:[%s4081 + $0x18] sm:$0xf]
      %v4089 = vld [vmem:[%s4081 + $0x1c] sm:$0xf]
      %s4090 = scalar_lea.vmem %s4, 1600
      %v4091 = vld [vmem:[%s4090] sm:$0xff]
      %v4092 = vld [vmem:[%s4090 + $0x8] sm:$0xff]
      %v4093 = vld [vmem:[%s4090 + $0x10] sm:$0xff]
      %v4094 = vld [vmem:[%s4090 + $0x18] sm:$0xff]
      %v4095 = vld [vmem:[%s4090 + $0x20] sm:$0xff]
      %v4096 = vld [vmem:[%s4090 + $0x28] sm:$0xff]
      %v4097 = vld [vmem:[%s4090 + $0x30] sm:$0xff]
      %v4098 = vld [vmem:[%s4090 + $0x38] sm:$0xff]
      %4100 = vset.pattern.permute.xlu0 0
      %4101 = vperm.xlu0 %4100, %v4091
      %v4102 = vpop.permute.xlu0 %4101
      %4105 = vset.pattern.permute.xlu0 0
      %4106 = vperm.xlu0 %4105, %v4092
      %v4107 = vpop.permute.xlu0 %4106
      %4110 = vset.pattern.permute.xlu0 0
      %4111 = vperm.xlu0 %4110, %v4093
      %v4112 = vpop.permute.xlu0 %4111
      %4115 = vset.pattern.permute.xlu0 0
      %4116 = vperm.xlu0 %4115, %v4094
      %v4117 = vpop.permute.xlu0 %4116
      %4120 = vset.pattern.permute.xlu0 0
      %4121 = vperm.xlu0 %4120, %v4095
      %v4122 = vpop.permute.xlu0 %4121
      %4125 = vset.pattern.permute.xlu0 0
      %4126 = vperm.xlu0 %4125, %v4096
      %v4127 = vpop.permute.xlu0 %4126
      %4130 = vset.pattern.permute.xlu0 0
      %4131 = vperm.xlu0 %4130, %v4097
      %v4132 = vpop.permute.xlu0 %4131
      %4135 = vset.pattern.permute.xlu0 0
      %4136 = vperm.xlu0 %4135, %v4098
      %v4137 = vpop.permute.xlu0 %4136
      %v4147 = vunpack.c.l.b16 %v4082
      %v4148 = vunpack.c.l.b16 %v4083
      %v4149 = vunpack.c.l.b16 %v4084
      %v4150 = vunpack.c.l.b16 %v4085
      %v4151 = vunpack.c.l.b16 %v4086
      %v4152 = vunpack.c.l.b16 %v4087
      %v4153 = vunpack.c.l.b16 %v4088
      %v4154 = vunpack.c.l.b16 %v4089
      %v4155 = vpack.c.b16 %v4148, %v4147
      %v4156 = vpack.c.b16 %v4150, %v4149
      %v4157 = vpack.c.b16 %v4152, %v4151
      %v4158 = vpack.c.b16 %v4154, %v4153
      %v4160 = vsel %vm419, %v4155, 0
      %v4163 = vsel %vm419, %v4156, 0
      %v4166 = vsel %vm419, %v4157, 0
      %v4169 = vsel %vm419, %v4158, 0
      %4171 = vmatprep.subr.bf16.mxu0 0
      %4172 = vmatpush1.bf16.msra.mxu0 %v4077
      %4173 = vmatprep.subr.bf16.mxu0 0
      %4174 = vmatpush1.bf16.msra.mxu0 %v4078
      %4175 = vmatprep.subr.bf16.mxu0 0
      %4176 = vmatpush1.bf16.msra.mxu0 %v4079
      %4177 = vmatprep.subr.bf16.mxu0 0
      %4178 = vmatpush1.bf16.msra.mxu0 %v4080
      %4179 = vmatprep.subr.bf16.mxu0 0
      %4180 = vmatpush1.bf16.msra.mxu0 0
      %4181 = vmatprep.subr.bf16.mxu0 0
      %4182 = vmatpush1.bf16.msra.mxu0 0
      %4183 = vmatprep.subr.bf16.mxu0 0
      %4184 = vmatpush1.bf16.msra.mxu0 0
      %4185 = vmatprep.subr.bf16.mxu0 0
      %4186 = vmatpush1.bf16.msra.mxu0 0
      %4187 = vmatprep.subr.bf16.mxu0 0
      %4188 = vmatpush1.bf16.msra.mxu0 0
      %4189 = vmatprep.subr.bf16.mxu0 0
      %4190 = vmatpush1.bf16.msra.mxu0 0
      %4191 = vmatprep.subr.bf16.mxu0 0
      %4192 = vmatpush1.bf16.msra.mxu0 0
      %4193 = vmatprep.subr.bf16.mxu0 0
      %4194 = vmatpush1.bf16.msra.mxu0 0
      %4195 = vmatprep.subr.bf16.mxu0 0
      %4196 = vmatpush1.bf16.msra.mxu0 0
      %4197 = vmatprep.subr.bf16.mxu0 0
      %4198 = vmatpush1.bf16.msra.mxu0 0
      %4199 = vmatprep.subr.bf16.mxu0 0
      %4200 = vmatpush1.bf16.msra.mxu0 0
      %4201 = vmatprep.subr.bf16.mxu0 0
      %4202 = vmatpush1.bf16.msra.mxu0 0
      %4203 = vmatprep.mubr.bf16.mxu0 0
      %4204 = vmatmul.mubr.bf16.gmra.mrb[0].mxu0 %v4160
      %v4205 = vpop.f32.mrb[0].mxu0
      %v4206 = vadd.f32 %v4102, %v4205
      %v4207 = vpop.f32.mrb[0].mxu0
      %v4208 = vpop.f32.mrb[0].mxu0
      %v4209 = vadd.f32 %v4107, %v4208
      %v4210 = vpop.f32.mrb[0].mxu0
      %4211 = vmatprep.mubr.bf16.mxu0 0
      %4212 = vmatmul.mubr.bf16.gmra.mrb[0].mxu0 %v4163
      %v4213 = vpop.f32.mrb[0].mxu0
      %v4214 = vadd.f32 %v4112, %v4213
      %v4215 = vpop.f32.mrb[0].mxu0
      %v4216 = vpop.f32.mrb[0].mxu0
      %v4217 = vadd.f32 %v4117, %v4216
      %v4218 = vpop.f32.mrb[0].mxu0
      %4219 = vmatprep.mubr.bf16.mxu0 0
      %4220 = vmatmul.mubr.bf16.gmra.mrb[0].mxu0 %v4166
      %v4221 = vpop.f32.mrb[0].mxu0
      %v4222 = vadd.f32 %v4122, %v4221
      %v4223 = vpop.f32.mrb[0].mxu0
      %v4224 = vpop.f32.mrb[0].mxu0
      %v4225 = vadd.f32 %v4127, %v4224
      %v4226 = vpop.f32.mrb[0].mxu0
      %4227 = vmatprep.mubr.bf16.mxu0 0
      %4228 = vmatmul.mubr.bf16.gmra.mrb[0].mxu0 %v4169
      %v4229 = vpop.f32.mrb[0].mxu0
      %v4230 = vadd.f32 %v4132, %v4229
      %v4231 = vpop.f32.mrb[0].mxu0
      %v4232 = vpop.f32.mrb[0].mxu0
      %v4233 = vadd.f32 %v4137, %v4232
      %v4234 = vpop.f32.mrb[0].mxu0
      %4235 = vdwg.mxu0
      %v4236 = vadd.f32 %v4206, %v4209
      %v4237 = vadd.f32 %v4236, %v4214
      %v4238 = vadd.f32 %v4237, %v4217
      %v4239 = vadd.f32 %v4238, %v4222
      %v4240 = vadd.f32 %v4239, %v4225
      %v4241 = vadd.f32 %v4240, %v4230
      %v4242 = vadd.f32 %v4241, %v4233
      %v4243 = vrot.slane %v4242, 4
      %v4244 = vadd.f32 %v4242, %v4243
      %v4245 = vrot.slane %v4244, 2
      %v4246 = vadd.f32 %v4244, %v4245
      %v4247 = vrot.slane %v4246, 1
      %v4248 = vadd.f32 %v4246, %v4247
      %v4249 = vmul.f32 %v4206, %v4206
      %v4250 = vmul.f32 %v4209, %v4209
      %v4251 = vmul.f32 %v4214, %v4214
      %v4252 = vmul.f32 %v4217, %v4217
      %v4253 = vmul.f32 %v4222, %v4222
      %v4254 = vmul.f32 %v4225, %v4225
      %v4255 = vmul.f32 %v4230, %v4230
      %v4256 = vmul.f32 %v4233, %v4233
      %v4257 = vadd.f32 %v4249, %v4250
      %v4258 = vadd.f32 %v4257, %v4251
      %v4259 = vadd.f32 %v4258, %v4252
      %v4260 = vadd.f32 %v4259, %v4253
      %v4261 = vadd.f32 %v4260, %v4254
      %v4262 = vadd.f32 %v4261, %v4255
      %v4263 = vadd.f32 %v4262, %v4256
      %v4264 = vrot.slane %v4263, 4
      %v4265 = vadd.f32 %v4263, %v4264
      %v4266 = vrot.slane %v4265, 2
      %v4267 = vadd.f32 %v4265, %v4266
      %v4268 = vrot.slane %v4267, 1
      %v4269 = vadd.f32 %v4267, %v4268
      %v4270 = vsel %vm531, %v4248, %v4269
      %v4271 = vsel %vm533, %v4270, 0.0
      %4272 = vmatprep.subr.mxu0 0.0
      %4273 = vmatpush1.msra.mxu0 %v323
      %4274 = vmatprep.subr.mxu0 0.0
      %4275 = vmatpush1.msra.mxu0 %v324
      %4276 = vmatprep.subr.mxu0 0.0
      %4277 = vmatpush1.msra.mxu0 %v325
      %4278 = vmatprep.subr.mxu0 0.0
      %4279 = vmatpush1.msra.mxu0 %v326
      %4280 = vmatprep.subr.mxu0 0.0
      %4281 = vmatpush1.msra.mxu0 %v327
      %4282 = vmatprep.subr.mxu0 0.0
      %4283 = vmatpush1.msra.mxu0 %v328
      %4284 = vmatprep.subr.mxu0 0.0
      %4285 = vmatpush1.msra.mxu0 %v329
      %4286 = vmatprep.subr.mxu0 0.0
      %4287 = vmatpush1.msra.mxu0 %v330
      %4288 = vmatprep.subr.mxu0 0.0
      %4289 = vmatpush1.msra.mxu0 %v331
      %4290 = vmatprep.subr.mxu0 0.0
      %4291 = vmatpush1.msra.mxu0 %v332
      %4292 = vmatprep.subr.mxu0 0.0
      %4293 = vmatpush1.msra.mxu0 %v333
      %4294 = vmatprep.subr.mxu0 0.0
      %4295 = vmatpush1.msra.mxu0 %v334
      %4296 = vmatprep.subr.mxu0 0.0
      %4297 = vmatpush1.msra.mxu0 %v335
      %4298 = vmatprep.subr.mxu0 0.0
      %4299 = vmatpush1.msra.mxu0 %v336
      %4300 = vmatprep.subr.mxu0 0.0
      %4301 = vmatpush1.msra.mxu0 %v337
      %4302 = vmatprep.subr.mxu0 0.0
      %4303 = vmatpush1.msra.mxu0 %v338
      %4304 = vmatprep.subr.mxu0 0.0
      %4305 = vmatpush1.msra.mxu0 0.0
      %4306 = vmatprep.subr.mxu0 0.0
      %4307 = vmatpush1.msra.mxu0 0.0
      %4308 = vmatprep.subr.mxu0 0.0
      %4309 = vmatpush1.msra.mxu0 0.0
      %4310 = vmatprep.subr.mxu0 0.0
      %4311 = vmatpush1.msra.mxu0 0.0
      %4312 = vmatprep.subr.mxu0 0.0
      %4313 = vmatpush1.msra.mxu0 0.0
      %4314 = vmatprep.subr.mxu0 0.0
      %4315 = vmatpush1.msra.mxu0 0.0
      %4316 = vmatprep.subr.mxu0 0.0
      %4317 = vmatpush1.msra.mxu0 0.0
      %4318 = vmatprep.subr.mxu0 0.0
      %4319 = vmatpush1.msra.mxu0 0.0
      %4320 = vmatprep.subr.mxu0 0.0
      %4321 = vmatpush1.msra.mxu0 0.0
      %4322 = vmatprep.subr.mxu0 0.0
      %4323 = vmatpush1.msra.mxu0 0.0
      %4324 = vmatprep.subr.mxu0 0.0
      %4325 = vmatpush1.msra.mxu0 0.0
      %4326 = vmatprep.subr.mxu0 0.0
      %4327 = vmatpush1.msra.mxu0 0.0
      %4328 = vmatprep.subr.mxu0 0.0
      %4329 = vmatpush1.msra.mxu0 0.0
      %4330 = vmatprep.subr.mxu0 0.0
      %4331 = vmatpush1.msra.mxu0 0.0
      %4332 = vmatprep.subr.mxu0 0.0
      %4333 = vmatpush1.msra.mxu0 0.0
      %4334 = vmatprep.subr.mxu0 0.0
      %4335 = vmatpush1.msra.mxu0 0.0
      %4336 = vmatprep.mubr.f32.mxu0 0.0
      %4337 = vmatmul.mubr.f32.gmra.mrb[0].mxu0 %v4271
      %v4338 = vpop.f32.mrb[0].mxu0
      %v4339 = vadd.f32 0.0, %v4338
      %v4340 = vpop.f32.mrb[0].mxu0
      %4341 = vdwg.mxu0
      %v4342 = vmul.f32 %v4339, 0.0078125
      %v4343 = vmul.f32 %v4342, %v4342
      %v4345 = vrot.slane %v4343, 7
      %v4347 = vsub.f32 %v4342, %v4345
      %v4348 = vmax.f32 %v4347, 0.0
      %v4349 = vlaneseq
      %v4350 = vshrl.u32 %v4349, 7
      %v4351 = vsub.s32 0, %v4350
      %v4352 = vrot.slane %v4342, %v4351
      %v4353 = vsub.f32 %v4206, %v4352
      %v4354 = vadd.f32 %v4348, 1e-08
      %v4355 = vrsqrt.pop %v4354
      %v4356 = vlaneseq
      %v4357 = vshrl.u32 %v4356, 7
      %v4358 = vsub.s32 1, %v4357
      %v4359 = vrot.slane %v4355, %v4358
      %v4360 = vmul.f32 %v4353, %v4359
      %s4361 = scalar_lea.vmem %s4, 1664
      %v4362 = vld [vmem:[%s4361] sm:$0xff]
      %4364 = vset.pattern.permute.xlu0 0
      %4365 = vperm.xlu0 %4364, %v4362
      %v4366 = vpop.permute.xlu0 %4365
      %v4368 = vmul.f32 %v4360, %v4366
      %s4369 = scalar_lea.vmem %s4, 1728
      %v4370 = vld [vmem:[%s4369] sm:$0xff]
      %4372 = vset.pattern.permute.xlu0 0
      %4373 = vperm.xlu0 %4372, %v4370
      %v4374 = vpop.permute.xlu0 %4373
      %v4376 = vadd.f32 %v4368, %v4374
      %vm4377 = vcmp.ge.f32.partialorder %v4376, 0.0
      %v4378 = vmul.f32 %v4376, 0.25
      %v4379 = vsel %vm4377, %v4376, %v4378
      %4380 = vst [vmem:[#allocation2 + $0x28] sm:$0xff] %v4379
      %v4381 = vld [vmem:[#allocation2] sm:$0xff]
      %v4382 = vld [vmem:[#allocation2 + $0x8] sm:$0xff]
      %v4383 = vld [vmem:[#allocation2 + $0x10] sm:$0xff]
      %v4384 = vld [vmem:[#allocation2 + $0x18] sm:$0xff]
      %v4385 = vld [vmem:[#allocation2 + $0x20] sm:$0xff]
      %v4386 = vld [vmem:[#allocation2 + $0x28] sm:$0xff]
      %v4387 = vld [vmem:[#allocation2 + $0x30] sm:$0xff]
      %v4388 = vld [vmem:[#allocation2 + $0x38] sm:$0xff]
      %v4389 = vpack.c.bf16 %v4382, %v4381
      %v4390 = vpack.c.bf16 %v4384, %v4383
      %v4391 = vpack.c.bf16 %v4386, %v4385
      %v4392 = vpack.c.bf16 %v4388, %v4387
      %s4393 = scalar_lea.vmem %s1, 64
      %v4394 = vld [vmem:[%s4393] sm:$0xf]
      %v4395 = vld [vmem:[%s4393 + $0x4] sm:$0xf]
      %v4396 = vld [vmem:[%s4393 + $0x8] sm:$0xf]
      %v4397 = vld [vmem:[%s4393 + $0xc] sm:$0xf]
      %v4398 = vld [vmem:[%s4393 + $0x10] sm:$0xf]
      %v4399 = vld [vmem:[%s4393 + $0x14] sm:$0xf]
      %v4400 = vld [vmem:[%s4393 + $0x18] sm:$0xf]
      %v4401 = vld [vmem:[%s4393 + $0x1c] sm:$0xf]
      %s4402 = scalar_lea.vmem %s4, 1792
      %v4403 = vld [vmem:[%s4402] sm:$0xff]
      %v4404 = vld [vmem:[%s4402 + $0x8] sm:$0xff]
      %v4405 = vld [vmem:[%s4402 + $0x10] sm:$0xff]
      %v4406 = vld [vmem:[%s4402 + $0x18] sm:$0xff]
      %v4407 = vld [vmem:[%s4402 + $0x20] sm:$0xff]
      %v4408 = vld [vmem:[%s4402 + $0x28] sm:$0xff]
      %v4409 = vld [vmem:[%s4402 + $0x30] sm:$0xff]
      %v4410 = vld [vmem:[%s4402 + $0x38] sm:$0xff]
      %4412 = vset.pattern.permute.xlu0 0
      %4413 = vperm.xlu0 %4412, %v4403
      %v4414 = vpop.permute.xlu0 %4413
      %4417 = vset.pattern.permute.xlu0 0
      %4418 = vperm.xlu0 %4417, %v4404
      %v4419 = vpop.permute.xlu0 %4418
      %4422 = vset.pattern.permute.xlu0 0
      %4423 = vperm.xlu0 %4422, %v4405
      %v4424 = vpop.permute.xlu0 %4423
      %4427 = vset.pattern.permute.xlu0 0
      %4428 = vperm.xlu0 %4427, %v4406
      %v4429 = vpop.permute.xlu0 %4428
      %4432 = vset.pattern.permute.xlu0 0
      %4433 = vperm.xlu0 %4432, %v4407
      %v4434 = vpop.permute.xlu0 %4433
      %4437 = vset.pattern.permute.xlu0 0
      %4438 = vperm.xlu0 %4437, %v4408
      %v4439 = vpop.permute.xlu0 %4438
      %4442 = vset.pattern.permute.xlu0 0
      %4443 = vperm.xlu0 %4442, %v4409
      %v4444 = vpop.permute.xlu0 %4443
      %4447 = vset.pattern.permute.xlu0 0
      %4448 = vperm.xlu0 %4447, %v4410
      %v4449 = vpop.permute.xlu0 %4448
      %v4459 = vunpack.c.l.b16 %v4394
      %v4460 = vunpack.c.l.b16 %v4395
      %v4461 = vunpack.c.l.b16 %v4396
      %v4462 = vunpack.c.l.b16 %v4397
      %v4463 = vunpack.c.l.b16 %v4398
      %v4464 = vunpack.c.l.b16 %v4399
      %v4465 = vunpack.c.l.b16 %v4400
      %v4466 = vunpack.c.l.b16 %v4401
      %v4467 = vpack.c.b16 %v4460, %v4459
      %v4468 = vpack.c.b16 %v4462, %v4461
      %v4469 = vpack.c.b16 %v4464, %v4463
      %v4470 = vpack.c.b16 %v4466, %v4465
      %v4472 = vsel %vm419, %v4467, 0
      %v4475 = vsel %vm419, %v4468, 0
      %v4478 = vsel %vm419, %v4469, 0
      %v4481 = vsel %vm419, %v4470, 0
      %4483 = vmatprep.subr.bf16.mxu0 0
      %4484 = vmatpush1.bf16.msra.mxu0 %v4389
      %4485 = vmatprep.subr.bf16.mxu0 0
      %4486 = vmatpush1.bf16.msra.mxu0 %v4390
      %4487 = vmatprep.subr.bf16.mxu0 0
      %4488 = vmatpush1.bf16.msra.mxu0 %v4391
      %4489 = vmatprep.subr.bf16.mxu0 0
      %4490 = vmatpush1.bf16.msra.mxu0 %v4392
      %4491 = vmatprep.subr.bf16.mxu0 0
      %4492 = vmatpush1.bf16.msra.mxu0 0
      %4493 = vmatprep.subr.bf16.mxu0 0
      %4494 = vmatpush1.bf16.msra.mxu0 0
      %4495 = vmatprep.subr.bf16.mxu0 0
      %4496 = vmatpush1.bf16.msra.mxu0 0
      %4497 = vmatprep.subr.bf16.mxu0 0
      %4498 = vmatpush1.bf16.msra.mxu0 0
      %4499 = vmatprep.subr.bf16.mxu0 0
      %4500 = vmatpush1.bf16.msra.mxu0 0
      %4501 = vmatprep.subr.bf16.mxu0 0
      %4502 = vmatpush1.bf16.msra.mxu0 0
      %4503 = vmatprep.subr.bf16.mxu0 0
      %4504 = vmatpush1.bf16.msra.mxu0 0
      %4505 = vmatprep.subr.bf16.mxu0 0
      %4506 = vmatpush1.bf16.msra.mxu0 0
      %4507 = vmatprep.subr.bf16.mxu0 0
      %4508 = vmatpush1.bf16.msra.mxu0 0
      %4509 = vmatprep.subr.bf16.mxu0 0
      %4510 = vmatpush1.bf16.msra.mxu0 0
      %4511 = vmatprep.subr.bf16.mxu0 0
      %4512 = vmatpush1.bf16.msra.mxu0 0
      %4513 = vmatprep.subr.bf16.mxu0 0
      %4514 = vmatpush1.bf16.msra.mxu0 0
      %4515 = vmatprep.mubr.bf16.mxu0 0
      %4516 = vmatmul.mubr.bf16.gmra.mrb[0].mxu0 %v4472
      %v4517 = vpop.f32.mrb[0].mxu0
      %v4518 = vadd.f32 %v4414, %v4517
      %v4519 = vpop.f32.mrb[0].mxu0
      %v4520 = vpop.f32.mrb[0].mxu0
      %v4521 = vadd.f32 %v4419, %v4520
      %v4522 = vpop.f32.mrb[0].mxu0
      %4523 = vmatprep.mubr.bf16.mxu0 0
      %4524 = vmatmul.mubr.bf16.gmra.mrb[0].mxu0 %v4475
      %v4525 = vpop.f32.mrb[0].mxu0
      %v4526 = vadd.f32 %v4424, %v4525
      %v4527 = vpop.f32.mrb[0].mxu0
      %v4528 = vpop.f32.mrb[0].mxu0
      %v4529 = vadd.f32 %v4429, %v4528
      %v4530 = vpop.f32.mrb[0].mxu0
      %4531 = vmatprep.mubr.bf16.mxu0 0
      %4532 = vmatmul.mubr.bf16.gmra.mrb[0].mxu0 %v4478
      %v4533 = vpop.f32.mrb[0].mxu0
      %v4534 = vadd.f32 %v4434, %v4533
      %v4535 = vpop.f32.mrb[0].mxu0
      %v4536 = vpop.f32.mrb[0].mxu0
      %v4537 = vadd.f32 %v4439, %v4536
      %v4538 = vpop.f32.mrb[0].mxu0
      %4539 = vmatprep.mubr.bf16.mxu0 0
      %4540 = vmatmul.mubr.bf16.gmra.mrb[0].mxu0 %v4481
      %v4541 = vpop.f32.mrb[0].mxu0
      %v4542 = vadd.f32 %v4444, %v4541
      %v4543 = vpop.f32.mrb[0].mxu0
      %v4544 = vpop.f32.mrb[0].mxu0
      %v4545 = vadd.f32 %v4449, %v4544
      %v4546 = vpop.f32.mrb[0].mxu0
      %4547 = vdwg.mxu0
      %v4548 = vadd.f32 %v4518, %v4521
      %v4549 = vadd.f32 %v4548, %v4526
      %v4550 = vadd.f32 %v4549, %v4529
      %v4551 = vadd.f32 %v4550, %v4534
      %v4552 = vadd.f32 %v4551, %v4537
      %v4553 = vadd.f32 %v4552, %v4542
      %v4554 = vadd.f32 %v4553, %v4545
      %v4555 = vrot.slane %v4554, 4
      %v4556 = vadd.f32 %v4554, %v4555
      %v4557 = vrot.slane %v4556, 2
      %v4558 = vadd.f32 %v4556, %v4557
      %v4559 = vrot.slane %v4558, 1
      %v4560 = vadd.f32 %v4558, %v4559
      %v4561 = vmul.f32 %v4518, %v4518
      %v4562 = vmul.f32 %v4521, %v4521
      %v4563 = vmul.f32 %v4526, %v4526
      %v4564 = vmul.f32 %v4529, %v4529
      %v4565 = vmul.f32 %v4534, %v4534
      %v4566 = vmul.f32 %v4537, %v4537
      %v4567 = vmul.f32 %v4542, %v4542
      %v4568 = vmul.f32 %v4545, %v4545
      %v4569 = vadd.f32 %v4561, %v4562
      %v4570 = vadd.f32 %v4569, %v4563
      %v4571 = vadd.f32 %v4570, %v4564
      %v4572 = vadd.f32 %v4571, %v4565
      %v4573 = vadd.f32 %v4572, %v4566
      %v4574 = vadd.f32 %v4573, %v4567
      %v4575 = vadd.f32 %v4574, %v4568
      %v4576 = vrot.slane %v4575, 4
      %v4577 = vadd.f32 %v4575, %v4576
      %v4578 = vrot.slane %v4577, 2
      %v4579 = vadd.f32 %v4577, %v4578
      %v4580 = vrot.slane %v4579, 1
      %v4581 = vadd.f32 %v4579, %v4580
      %v4582 = vsel %vm531, %v4560, %v4581
      %v4583 = vsel %vm533, %v4582, 0.0
      %4584 = vmatprep.subr.mxu0 0.0
      %4585 = vmatpush1.msra.mxu0 %v323
      %4586 = vmatprep.subr.mxu0 0.0
      %4587 = vmatpush1.msra.mxu0 %v324
      %4588 = vmatprep.subr.mxu0 0.0
      %4589 = vmatpush1.msra.mxu0 %v325
      %4590 = vmatprep.subr.mxu0 0.0
      %4591 = vmatpush1.msra.mxu0 %v326
      %4592 = vmatprep.subr.mxu0 0.0
      %4593 = vmatpush1.msra.mxu0 %v327
      %4594 = vmatprep.subr.mxu0 0.0
      %4595 = vmatpush1.msra.mxu0 %v328
      %4596 = vmatprep.subr.mxu0 0.0
      %4597 = vmatpush1.msra.mxu0 %v329
      %4598 = vmatprep.subr.mxu0 0.0
      %4599 = vmatpush1.msra.mxu0 %v330
      %4600 = vmatprep.subr.mxu0 0.0
      %4601 = vmatpush1.msra.mxu0 %v331
      %4602 = vmatprep.subr.mxu0 0.0
      %4603 = vmatpush1.msra.mxu0 %v332
      %4604 = vmatprep.subr.mxu0 0.0
      %4605 = vmatpush1.msra.mxu0 %v333
      %4606 = vmatprep.subr.mxu0 0.0
      %4607 = vmatpush1.msra.mxu0 %v334
      %4608 = vmatprep.subr.mxu0 0.0
      %4609 = vmatpush1.msra.mxu0 %v335
      %4610 = vmatprep.subr.mxu0 0.0
      %4611 = vmatpush1.msra.mxu0 %v336
      %4612 = vmatprep.subr.mxu0 0.0
      %4613 = vmatpush1.msra.mxu0 %v337
      %4614 = vmatprep.subr.mxu0 0.0
      %4615 = vmatpush1.msra.mxu0 %v338
      %4616 = vmatprep.subr.mxu0 0.0
      %4617 = vmatpush1.msra.mxu0 0.0
      %4618 = vmatprep.subr.mxu0 0.0
      %4619 = vmatpush1.msra.mxu0 0.0
      %4620 = vmatprep.subr.mxu0 0.0
      %4621 = vmatpush1.msra.mxu0 0.0
      %4622 = vmatprep.subr.mxu0 0.0
      %4623 = vmatpush1.msra.mxu0 0.0
      %4624 = vmatprep.subr.mxu0 0.0
      %4625 = vmatpush1.msra.mxu0 0.0
      %4626 = vmatprep.subr.mxu0 0.0
      %4627 = vmatpush1.msra.mxu0 0.0
      %4628 = vmatprep.subr.mxu0 0.0
      %4629 = vmatpush1.msra.mxu0 0.0
      %4630 = vmatprep.subr.mxu0 0.0
      %4631 = vmatpush1.msra.mxu0 0.0
      %4632 = vmatprep.subr.mxu0 0.0
      %4633 = vmatpush1.msra.mxu0 0.0
      %4634 = vmatprep.subr.mxu0 0.0
      %4635 = vmatpush1.msra.mxu0 0.0
      %4636 = vmatprep.subr.mxu0 0.0
      %4637 = vmatpush1.msra.mxu0 0.0
      %4638 = vmatprep.subr.mxu0 0.0
      %4639 = vmatpush1.msra.mxu0 0.0
      %4640 = vmatprep.subr.mxu0 0.0
      %4641 = vmatpush1.msra.mxu0 0.0
      %4642 = vmatprep.subr.mxu0 0.0
      %4643 = vmatpush1.msra.mxu0 0.0
      %4644 = vmatprep.subr.mxu0 0.0
      %4645 = vmatpush1.msra.mxu0 0.0
      %4646 = vmatprep.subr.mxu0 0.0
      %4647 = vmatpush1.msra.mxu0 0.0
      %4648 = vmatprep.mubr.f32.mxu0 0.0
      %4649 = vmatmul.mubr.f32.gmra.mrb[0].mxu0 %v4583
      %v4650 = vpop.f32.mrb[0].mxu0
      %v4651 = vadd.f32 0.0, %v4650
      %v4652 = vpop.f32.mrb[0].mxu0
      %4653 = vdwg.mxu0
      %v4654 = vmul.f32 %v4651, 0.0078125
      %v4655 = vmul.f32 %v4654, %v4654
      %v4657 = vrot.slane %v4655, 7
      %v4659 = vsub.f32 %v4654, %v4657
      %v4660 = vmax.f32 %v4659, 0.0
      %v4661 = vlaneseq
      %v4662 = vshrl.u32 %v4661, 7
      %v4663 = vsub.s32 0, %v4662
      %v4664 = vrot.slane %v4654, %v4663
      %v4665 = vsub.f32 %v4518, %v4664
      %v4666 = vsub.f32 %v4521, %v4664
      %v4667 = vsub.f32 %v4526, %v4664
      %v4668 = vsub.f32 %v4529, %v4664
      %v4669 = vsub.f32 %v4534, %v4664
      %v4670 = vsub.f32 %v4537, %v4664
      %v4671 = vsub.f32 %v4542, %v4664
      %v4672 = vsub.f32 %v4545, %v4664
      %v4673 = vadd.f32 %v4660, 1e-08
      %v4674 = vrsqrt.pop %v4673
      %v4675 = vlaneseq
      %v4676 = vshrl.u32 %v4675, 7
      %v4677 = vsub.s32 1, %v4676
      %v4678 = vrot.slane %v4674, %v4677
      %v4679 = vmul.f32 %v4665, %v4678
      %v4680 = vmul.f32 %v4666, %v4678
      %v4681 = vmul.f32 %v4667, %v4678
      %v4682 = vmul.f32 %v4668, %v4678
      %v4683 = vmul.f32 %v4669, %v4678
      %v4684 = vmul.f32 %v4670, %v4678
      %v4685 = vmul.f32 %v4671, %v4678
      %v4686 = vmul.f32 %v4672, %v4678
      %s4687 = scalar_lea.vmem %s4, 1856
      %v4688 = vld [vmem:[%s4687] sm:$0xff]
      %v4689 = vld [vmem:[%s4687 + $0x8] sm:$0xff]
      %v4690 = vld [vmem:[%s4687 + $0x10] sm:$0xff]
      %v4691 = vld [vmem:[%s4687 + $0x18] sm:$0xff]
      %v4692 = vld [vmem:[%s4687 + $0x20] sm:$0xff]
      %v4693 = vld [vmem:[%s4687 + $0x28] sm:$0xff]
      %v4694 = vld [vmem:[%s4687 + $0x30] sm:$0xff]
      %v4695 = vld [vmem:[%s4687 + $0x38] sm:$0xff]
      %4697 = vset.pattern.permute.xlu0 0
      %4698 = vperm.xlu0 %4697, %v4688
      %v4699 = vpop.permute.xlu0 %4698
      %4702 = vset.pattern.permute.xlu0 0
      %4703 = vperm.xlu0 %4702, %v4689
      %v4704 = vpop.permute.xlu0 %4703
      %4707 = vset.pattern.permute.xlu0 0
      %4708 = vperm.xlu0 %4707, %v4690
      %v4709 = vpop.permute.xlu0 %4708
      %4712 = vset.pattern.permute.xlu0 0
      %4713 = vperm.xlu0 %4712, %v4691
      %v4714 = vpop.permute.xlu0 %4713
      %4717 = vset.pattern.permute.xlu0 0
      %4718 = vperm.xlu0 %4717, %v4692
      %v4719 = vpop.permute.xlu0 %4718
      %4722 = vset.pattern.permute.xlu0 0
      %4723 = vperm.xlu0 %4722, %v4693
      %v4724 = vpop.permute.xlu0 %4723
      %4727 = vset.pattern.permute.xlu0 0
      %4728 = vperm.xlu0 %4727, %v4694
      %v4729 = vpop.permute.xlu0 %4728
      %4732 = vset.pattern.permute.xlu0 0
      %4733 = vperm.xlu0 %4732, %v4695
      %v4734 = vpop.permute.xlu0 %4733
      %v4736 = vmul.f32 %v4679, %v4699
      %v4737 = vmul.f32 %v4680, %v4704
      %v4738 = vmul.f32 %v4681, %v4709
      %v4739 = vmul.f32 %v4682, %v4714
      %v4740 = vmul.f32 %v4683, %v4719
      %v4741 = vmul.f32 %v4684, %v4724
      %v4742 = vmul.f32 %v4685, %v4729
      %v4743 = vmul.f32 %v4686, %v4734
      %s4744 = scalar_lea.vmem %s4, 1920
      %v4745 = vld [vmem:[%s4744] sm:$0xff]
      %v4746 = vld [vmem:[%s4744 + $0x8] sm:$0xff]
      %v4747 = vld [vmem:[%s4744 + $0x10] sm:$0xff]
      %v4748 = vld [vmem:[%s4744 + $0x18] sm:$0xff]
      %v4749 = vld [vmem:[%s4744 + $0x20] sm:$0xff]
      %v4750 = vld [vmem:[%s4744 + $0x28] sm:$0xff]
      %v4751 = vld [vmem:[%s4744 + $0x30] sm:$0xff]
      %v4752 = vld [vmem:[%s4744 + $0x38] sm:$0xff]
      %4754 = vset.pattern.permute.xlu0 0
      %4755 = vperm.xlu0 %4754, %v4745
      %v4756 = vpop.permute.xlu0 %4755
      %4759 = vset.pattern.permute.xlu0 0
      %4760 = vperm.xlu0 %4759, %v4746
      %v4761 = vpop.permute.xlu0 %4760
      %4764 = vset.pattern.permute.xlu0 0
      %4765 = vperm.xlu0 %4764, %v4747
      %v4766 = vpop.permute.xlu0 %4765
      %4769 = vset.pattern.permute.xlu0 0
      %4770 = vperm.xlu0 %4769, %v4748
      %v4771 = vpop.permute.xlu0 %4770
      %4774 = vset.pattern.permute.xlu0 0
      %4775 = vperm.xlu0 %4774, %v4749
      %v4776 = vpop.permute.xlu0 %4775
      %4779 = vset.pattern.permute.xlu0 0
      %4780 = vperm.xlu0 %4779, %v4750
      %v4781 = vpop.permute.xlu0 %4780
      %4784 = vset.pattern.permute.xlu0 0
      %4785 = vperm.xlu0 %4784, %v4751
      %v4786 = vpop.permute.xlu0 %4785
      %4789 = vset.pattern.permute.xlu0 0
      %4790 = vperm.xlu0 %4789, %v4752
      %v4791 = vpop.permute.xlu0 %4790
      %v4793 = vadd.f32 %v4736, %v4756
      %v4794 = vadd.f32 %v4737, %v4761
      %v4795 = vadd.f32 %v4738, %v4766
      %v4796 = vadd.f32 %v4739, %v4771
      %v4797 = vadd.f32 %v4740, %v4776
      %v4798 = vadd.f32 %v4741, %v4781
      %v4799 = vadd.f32 %v4742, %v4786
      %v4800 = vadd.f32 %v4743, %v4791
      %vm4801 = vcmp.ge.f32.partialorder %v4793, 0.0
      %vm4802 = vcmp.ge.f32.partialorder %v4794, 0.0
      %vm4803 = vcmp.ge.f32.partialorder %v4795, 0.0
      %vm4804 = vcmp.ge.f32.partialorder %v4796, 0.0
      %vm4805 = vcmp.ge.f32.partialorder %v4797, 0.0
      %vm4806 = vcmp.ge.f32.partialorder %v4798, 0.0
      %vm4807 = vcmp.ge.f32.partialorder %v4799, 0.0
      %vm4808 = vcmp.ge.f32.partialorder %v4800, 0.0
      %v4809 = vmul.f32 %v4793, 0.25
      %v4810 = vmul.f32 %v4794, 0.25
      %v4811 = vmul.f32 %v4795, 0.25
      %v4812 = vmul.f32 %v4796, 0.25
      %v4813 = vmul.f32 %v4797, 0.25
      %v4814 = vmul.f32 %v4798, 0.25
      %v4815 = vmul.f32 %v4799, 0.25
      %v4816 = vmul.f32 %v4800, 0.25
      %v4817 = vsel %vm4801, %v4793, %v4809
      %v4818 = vsel %vm4802, %v4794, %v4810
      %v4819 = vsel %vm4803, %v4795, %v4811
      %v4820 = vsel %vm4804, %v4796, %v4812
      %v4821 = vsel %vm4805, %v4797, %v4813
      %v4822 = vsel %vm4806, %v4798, %v4814
      %v4823 = vsel %vm4807, %v4799, %v4815
      %v4824 = vsel %vm4808, %v4800, %v4816
      %v4825 = vpack.c.bf16 %v4818, %v4817
      %v4826 = vpack.c.bf16 %v4820, %v4819
      %v4827 = vpack.c.bf16 %v4822, %v4821
      %v4828 = vpack.c.bf16 %v4824, %v4823
      %4837 = vrot.lane.b32.xlu0 %v4817, 1
      %v4838 = vpop.permute.xlu0 %4837
      %4839 = vrot.lane.b32.xlu0 %v4818, 1
      %v4840 = vpop.permute.xlu0 %4839
      %4841 = vrot.lane.b32.xlu0 %v4819, 1
      %v4842 = vpop.permute.xlu0 %4841
      %4843 = vrot.lane.b32.xlu0 %v4820, 1
      %v4844 = vpop.permute.xlu0 %4843
      %4845 = vrot.lane.b32.xlu0 %v4821, 1
      %v4846 = vpop.permute.xlu0 %4845
      %4847 = vrot.lane.b32.xlu0 %v4822, 1
      %v4848 = vpop.permute.xlu0 %4847
      %4849 = vrot.lane.b32.xlu0 %v4823, 1
      %v4850 = vpop.permute.xlu0 %4849
      %4851 = vrot.lane.b32.xlu0 %v4824, 1
      %v4852 = vpop.permute.xlu0 %4851
      %v4861 = vld [vmem:[%s5] sm:$0xff]
      %v4862 = vlaneseq
      %v4863 = vshrl.u32 %v4862, 7
      %v4864 = vsub.s32 0, %v4863
      %v4865 = vrot.slane %v4861, %v4864
      %v4866 = vmul.f32 %v4838, %v4865
      %v4867 = vmul.f32 %v4840, %v4865
      %v4868 = vmul.f32 %v4842, %v4865
      %v4869 = vmul.f32 %v4844, %v4865
      %v4870 = vmul.f32 %v4846, %v4865
      %v4871 = vmul.f32 %v4848, %v4865
      %v4872 = vmul.f32 %v4850, %v4865
      %v4873 = vmul.f32 %v4852, %v4865
      %v4874 = vpack.c.bf16 %v4867, %v4866
      %v4875 = vpack.c.bf16 %v4869, %v4868
      %v4876 = vpack.c.bf16 %v4871, %v4870
      %v4877 = vpack.c.bf16 %v4873, %v4872
      %s4878 = scalar_lea.vmem %s2, 160
      %v4879 = vld [vmem:[%s4878] sm:$0xf]
      %v4880 = vld [vmem:[%s4878 + $0x4] sm:$0xf]
      %v4881 = vld [vmem:[%s4878 + $0x8] sm:$0xf]
      %v4882 = vld [vmem:[%s4878 + $0xc] sm:$0xf]
      %v4883 = vld [vmem:[%s4878 + $0x10] sm:$0xf]
      %v4884 = vld [vmem:[%s4878 + $0x14] sm:$0xf]
      %v4885 = vld [vmem:[%s4878 + $0x18] sm:$0xf]
      %v4886 = vld [vmem:[%s4878 + $0x1c] sm:$0xf]
      %s4887 = scalar_lea.vmem %s4, 1984
      %v4888 = vld [vmem:[%s4887] sm:$0xff]
      %v4889 = vld [vmem:[%s4887 + $0x8] sm:$0xff]
      %v4890 = vld [vmem:[%s4887 + $0x10] sm:$0xff]
      %v4891 = vld [vmem:[%s4887 + $0x18] sm:$0xff]
      %v4892 = vld [vmem:[%s4887 + $0x20] sm:$0xff]
      %v4893 = vld [vmem:[%s4887 + $0x28] sm:$0xff]
      %v4894 = vld [vmem:[%s4887 + $0x30] sm:$0xff]
      %v4895 = vld [vmem:[%s4887 + $0x38] sm:$0xff]
      %4897 = vset.pattern.permute.xlu0 0
      %4898 = vperm.xlu0 %4897, %v4888
      %v4899 = vpop.permute.xlu0 %4898
      %4902 = vset.pattern.permute.xlu0 0
      %4903 = vperm.xlu0 %4902, %v4889
      %v4904 = vpop.permute.xlu0 %4903
      %4907 = vset.pattern.permute.xlu0 0
      %4908 = vperm.xlu0 %4907, %v4890
      %v4909 = vpop.permute.xlu0 %4908
      %4912 = vset.pattern.permute.xlu0 0
      %4913 = vperm.xlu0 %4912, %v4891
      %v4914 = vpop.permute.xlu0 %4913
      %4917 = vset.pattern.permute.xlu0 0
      %4918 = vperm.xlu0 %4917, %v4892
      %v4919 = vpop.permute.xlu0 %4918
      %4922 = vset.pattern.permute.xlu0 0
      %4923 = vperm.xlu0 %4922, %v4893
      %v4924 = vpop.permute.xlu0 %4923
      %4927 = vset.pattern.permute.xlu0 0
      %4928 = vperm.xlu0 %4927, %v4894
      %v4929 = vpop.permute.xlu0 %4928
      %4932 = vset.pattern.permute.xlu0 0
      %4933 = vperm.xlu0 %4932, %v4895
      %v4934 = vpop.permute.xlu0 %4933
      %v4944 = vunpack.c.l.b16 %v4879
      %v4945 = vunpack.c.l.b16 %v4880
      %v4946 = vunpack.c.l.b16 %v4881
      %v4947 = vunpack.c.l.b16 %v4882
      %v4948 = vunpack.c.l.b16 %v4883
      %v4949 = vunpack.c.l.b16 %v4884
      %v4950 = vunpack.c.l.b16 %v4885
      %v4951 = vunpack.c.l.b16 %v4886
      %v4952 = vpack.c.b16 %v4945, %v4944
      %v4953 = vpack.c.b16 %v4947, %v4946
      %v4954 = vpack.c.b16 %v4949, %v4948
      %v4955 = vpack.c.b16 %v4951, %v4950
      %4960 = vmatprep.subr.bf16.mxu0 0
      %4961 = vmatpush1.bf16.msra.mxu0 %v4825
      %4962 = vmatprep.subr.bf16.mxu0 0
      %4963 = vmatpush1.bf16.msra.mxu0 %v4826
      %4964 = vmatprep.subr.bf16.mxu0 0
      %4965 = vmatpush1.bf16.msra.mxu0 %v4827
      %4966 = vmatprep.subr.bf16.mxu0 0
      %4967 = vmatpush1.bf16.msra.mxu0 %v4828
      %4968 = vmatprep.subr.bf16.mxu0 0
      %4969 = vmatpush1.bf16.msra.mxu0 %v4874
      %4970 = vmatprep.subr.bf16.mxu0 0
      %4971 = vmatpush1.bf16.msra.mxu0 %v4875
      %4972 = vmatprep.subr.bf16.mxu0 0
      %4973 = vmatpush1.bf16.msra.mxu0 %v4876
      %4974 = vmatprep.subr.bf16.mxu0 0
      %4975 = vmatpush1.bf16.msra.mxu0 %v4877
      %4976 = vmatprep.subr.bf16.mxu0 0
      %4977 = vmatpush1.bf16.msra.mxu0 0
      %4978 = vmatprep.subr.bf16.mxu0 0
      %4979 = vmatpush1.bf16.msra.mxu0 0
      %4980 = vmatprep.subr.bf16.mxu0 0
      %4981 = vmatpush1.bf16.msra.mxu0 0
      %4982 = vmatprep.subr.bf16.mxu0 0
      %4983 = vmatpush1.bf16.msra.mxu0 0
      %4984 = vmatprep.subr.bf16.mxu0 0
      %4985 = vmatpush1.bf16.msra.mxu0 0
      %4986 = vmatprep.subr.bf16.mxu0 0
      %4987 = vmatpush1.bf16.msra.mxu0 0
      %4988 = vmatprep.subr.bf16.mxu0 0
      %4989 = vmatpush1.bf16.msra.mxu0 0
      %4990 = vmatprep.subr.bf16.mxu0 0
      %4991 = vmatpush1.bf16.msra.mxu0 0
      %4992 = vmatprep.mubr.bf16.mxu0 0
      %4993 = vmatmul.mubr.bf16.gmra.mrb[0].mxu0 %v4952
      %v4994 = vpop.f32.mrb[0].mxu0
      %v4995 = vadd.f32 %v4899, %v4994
      %v4996 = vpop.f32.mrb[0].mxu0
      %v4997 = vpop.f32.mrb[0].mxu0
      %v4998 = vadd.f32 %v4904, %v4997
      %v4999 = vpop.f32.mrb[0].mxu0
      %5000 = vmatprep.mubr.bf16.mxu0 0
      %5001 = vmatmul.mubr.bf16.gmra.mrb[0].mxu0 %v4953
      %v5002 = vpop.f32.mrb[0].mxu0
      %v5003 = vadd.f32 %v4909, %v5002
      %v5004 = vpop.f32.mrb[0].mxu0
      %v5005 = vpop.f32.mrb[0].mxu0
      %v5006 = vadd.f32 %v4914, %v5005
      %v5007 = vpop.f32.mrb[0].mxu0
      %5008 = vmatprep.mubr.bf16.mxu0 0
      %5009 = vmatmul.mubr.bf16.gmra.mrb[0].mxu0 %v4954
      %v5010 = vpop.f32.mrb[0].mxu0
      %v5011 = vadd.f32 %v4919, %v5010
      %v5012 = vpop.f32.mrb[0].mxu0
      %v5013 = vpop.f32.mrb[0].mxu0
      %v5014 = vadd.f32 %v4924, %v5013
      %v5015 = vpop.f32.mrb[0].mxu0
      %5016 = vmatprep.mubr.bf16.mxu0 0
      %5017 = vmatmul.mubr.bf16.gmra.mrb[0].mxu0 %v4955
      %v5018 = vpop.f32.mrb[0].mxu0
      %v5019 = vadd.f32 %v4929, %v5018
      %v5020 = vpop.f32.mrb[0].mxu0
      %v5021 = vpop.f32.mrb[0].mxu0
      %v5022 = vadd.f32 %v4934, %v5021
      %v5023 = vpop.f32.mrb[0].mxu0
      %5024 = vdwg.mxu0
      %vm5025 = vcmp.ge.f32.partialorder %v4995, 0.0
      %vm5026 = vcmp.ge.f32.partialorder %v4998, 0.0
      %vm5027 = vcmp.ge.f32.partialorder %v5003, 0.0
      %vm5028 = vcmp.ge.f32.partialorder %v5006, 0.0
      %vm5029 = vcmp.ge.f32.partialorder %v5011, 0.0
      %vm5030 = vcmp.ge.f32.partialorder %v5014, 0.0
      %vm5031 = vcmp.ge.f32.partialorder %v5019, 0.0
      %vm5032 = vcmp.ge.f32.partialorder %v5022, 0.0
      %v5033 = vmul.f32 %v4995, 0.25
      %v5034 = vmul.f32 %v4998, 0.25
      %v5035 = vmul.f32 %v5003, 0.25
      %v5036 = vmul.f32 %v5006, 0.25
      %v5037 = vmul.f32 %v5011, 0.25
      %v5038 = vmul.f32 %v5014, 0.25
      %v5039 = vmul.f32 %v5019, 0.25
      %v5040 = vmul.f32 %v5022, 0.25
      %v5041 = vsel %vm5025, %v4995, %v5033
      %v5042 = vsel %vm5026, %v4998, %v5034
      %v5043 = vsel %vm5027, %v5003, %v5035
      %v5044 = vsel %vm5028, %v5006, %v5036
      %v5045 = vsel %vm5029, %v5011, %v5037
      %v5046 = vsel %vm5030, %v5014, %v5038
      %v5047 = vsel %vm5031, %v5019, %v5039
      %v5048 = vsel %vm5032, %v5022, %v5040
      %v5049 = vpack.c.bf16 %v5042, %v5041
      %v5050 = vpack.c.bf16 %v5044, %v5043
      %v5051 = vpack.c.bf16 %v5046, %v5045
      %v5052 = vpack.c.bf16 %v5048, %v5047
      %5061 = vrot.lane.b32.xlu0 %v5041, 1
      %v5062 = vpop.permute.xlu0 %5061
      %5063 = vrot.lane.b32.xlu0 %v5042, 1
      %v5064 = vpop.permute.xlu0 %5063
      %5065 = vrot.lane.b32.xlu0 %v5043, 1
      %v5066 = vpop.permute.xlu0 %5065
      %5067 = vrot.lane.b32.xlu0 %v5044, 1
      %v5068 = vpop.permute.xlu0 %5067
      %5069 = vrot.lane.b32.xlu0 %v5045, 1
      %v5070 = vpop.permute.xlu0 %5069
      %5071 = vrot.lane.b32.xlu0 %v5046, 1
      %v5072 = vpop.permute.xlu0 %5071
      %5073 = vrot.lane.b32.xlu0 %v5047, 1
      %v5074 = vpop.permute.xlu0 %5073
      %5075 = vrot.lane.b32.xlu0 %v5048, 1
      %v5076 = vpop.permute.xlu0 %5075
      %v5085 = vmul.f32 %v5062, %v4865
      %v5086 = vmul.f32 %v5064, %v4865
      %v5087 = vmul.f32 %v5066, %v4865
      %v5088 = vmul.f32 %v5068, %v4865
      %v5089 = vmul.f32 %v5070, %v4865
      %v5090 = vmul.f32 %v5072, %v4865
      %v5091 = vmul.f32 %v5074, %v4865
      %v5092 = vmul.f32 %v5076, %v4865
      %v5093 = vpack.c.bf16 %v5086, %v5085
      %v5094 = vpack.c.bf16 %v5088, %v5087
      %v5095 = vpack.c.bf16 %v5090, %v5089
      %v5096 = vpack.c.bf16 %v5092, %v5091
      %v5097 = vld [vmem:[%s2448] sm:$0xff]
      %v5098 = vld [vmem:[%s2448 + $0x8] sm:$0xff]
      %v5099 = vld [vmem:[%s2448 + $0x10] sm:$0xff]
      %v5100 = vld [vmem:[%s2448 + $0x18] sm:$0xff]
      %v5101 = vld [vmem:[%s2448 + $0x20] sm:$0xff]
      %v5102 = vld [vmem:[%s2448 + $0x28] sm:$0xff]
      %v5103 = vld [vmem:[%s2448 + $0x30] sm:$0xff]
      %v5104 = vld [vmem:[%s2448 + $0x38] sm:$0xff]
      %v5105 = vpack.c.bf16 %v5098, %v5097
      %v5106 = vpack.c.bf16 %v5100, %v5099
      %v5107 = vpack.c.bf16 %v5102, %v5101
      %v5108 = vpack.c.bf16 %v5104, %v5103
      %5117 = vrot.lane.b32.xlu0 %v5097, 1
      %v5118 = vpop.permute.xlu0 %5117
      %5119 = vrot.lane.b32.xlu0 %v5098, 1
      %v5120 = vpop.permute.xlu0 %5119
      %5121 = vrot.lane.b32.xlu0 %v5099, 1
      %v5122 = vpop.permute.xlu0 %5121
      %5123 = vrot.lane.b32.xlu0 %v5100, 1
      %v5124 = vpop.permute.xlu0 %5123
      %5125 = vrot.lane.b32.xlu0 %v5101, 1
      %v5126 = vpop.permute.xlu0 %5125
      %5127 = vrot.lane.b32.xlu0 %v5102, 1
      %v5128 = vpop.permute.xlu0 %5127
      %5129 = vrot.lane.b32.xlu0 %v5103, 1
      %v5130 = vpop.permute.xlu0 %5129
      %5131 = vrot.lane.b32.xlu0 %v5104, 1
      %v5132 = vpop.permute.xlu0 %5131
      %v5141 = vmul.f32 %v5118, %v4865
      %v5142 = vmul.f32 %v5120, %v4865
      %v5143 = vmul.f32 %v5122, %v4865
      %v5144 = vmul.f32 %v5124, %v4865
      %v5145 = vmul.f32 %v5126, %v4865
      %v5146 = vmul.f32 %v5128, %v4865
      %v5147 = vmul.f32 %v5130, %v4865
      %v5148 = vmul.f32 %v5132, %v4865
      %v5149 = vpack.c.bf16 %v5142, %v5141
      %v5150 = vpack.c.bf16 %v5144, %v5143
      %v5151 = vpack.c.bf16 %v5146, %v5145
      %v5152 = vpack.c.bf16 %v5148, %v5147
      %s5153 = scalar_lea.vmem %s3, 192
      %v5154 = vld [vmem:[%s5153] sm:$0xff]
      %v5155 = vld [vmem:[%s5153 + $0x8] sm:$0xff]
      %v5156 = vld [vmem:[%s5153 + $0x10] sm:$0xff]
      %v5157 = vld [vmem:[%s5153 + $0x18] sm:$0xff]
      %v5158 = vld [vmem:[%s5153 + $0x20] sm:$0xff]
      %v5159 = vld [vmem:[%s5153 + $0x28] sm:$0xff]
      %v5160 = vld [vmem:[%s5153 + $0x30] sm:$0xff]
      %v5161 = vld [vmem:[%s5153 + $0x38] sm:$0xff]
      %s5162 = scalar_lea.vmem %s4, 2048
      %v5163 = vld [vmem:[%s5162] sm:$0xff]
      %v5164 = vld [vmem:[%s5162 + $0x8] sm:$0xff]
      %v5165 = vld [vmem:[%s5162 + $0x10] sm:$0xff]
      %v5166 = vld [vmem:[%s5162 + $0x18] sm:$0xff]
      %v5167 = vld [vmem:[%s5162 + $0x20] sm:$0xff]
      %v5168 = vld [vmem:[%s5162 + $0x28] sm:$0xff]
      %v5169 = vld [vmem:[%s5162 + $0x30] sm:$0xff]
      %v5170 = vld [vmem:[%s5162 + $0x38] sm:$0xff]
      %5172 = vset.pattern.permute.xlu0 0
      %5173 = vperm.xlu0 %5172, %v5163
      %v5174 = vpop.permute.xlu0 %5173
      %5177 = vset.pattern.permute.xlu0 0
      %5178 = vperm.xlu0 %5177, %v5164
      %v5179 = vpop.permute.xlu0 %5178
      %5182 = vset.pattern.permute.xlu0 0
      %5183 = vperm.xlu0 %5182, %v5165
      %v5184 = vpop.permute.xlu0 %5183
      %5187 = vset.pattern.permute.xlu0 0
      %5188 = vperm.xlu0 %5187, %v5166
      %v5189 = vpop.permute.xlu0 %5188
      %5192 = vset.pattern.permute.xlu0 0
      %5193 = vperm.xlu0 %5192, %v5167
      %v5194 = vpop.permute.xlu0 %5193
      %5197 = vset.pattern.permute.xlu0 0
      %5198 = vperm.xlu0 %5197, %v5168
      %v5199 = vpop.permute.xlu0 %5198
      %5202 = vset.pattern.permute.xlu0 0
      %5203 = vperm.xlu0 %5202, %v5169
      %v5204 = vpop.permute.xlu0 %5203
      %5207 = vset.pattern.permute.xlu0 0
      %5208 = vperm.xlu0 %5207, %v5170
      %v5209 = vpop.permute.xlu0 %5208
      %v5219 = vunpack.c.l.b16 %v5154
      %v5220 = vunpack.c.h.b16 %v5154
      %v5221 = vunpack.c.l.b16 %v5155
      %v5222 = vunpack.c.h.b16 %v5155
      %v5223 = vunpack.c.l.b16 %v5156
      %v5224 = vunpack.c.h.b16 %v5156
      %v5225 = vunpack.c.l.b16 %v5157
      %v5226 = vunpack.c.h.b16 %v5157
      %v5227 = vunpack.c.l.b16 %v5158
      %v5228 = vunpack.c.h.b16 %v5158
      %v5229 = vunpack.c.l.b16 %v5159
      %v5230 = vunpack.c.h.b16 %v5159
      %v5231 = vunpack.c.l.b16 %v5160
      %v5232 = vunpack.c.h.b16 %v5160
      %v5233 = vunpack.c.l.b16 %v5161
      %v5234 = vunpack.c.h.b16 %v5161
      %v5235 = vpack.c.b16 %v5221, %v5219
      %v5236 = vpack.c.b16 %v5222, %v5220
      %v5237 = vpack.c.b16 %v5225, %v5223
      %v5238 = vpack.c.b16 %v5226, %v5224
      %v5239 = vpack.c.b16 %v5229, %v5227
      %v5240 = vpack.c.b16 %v5230, %v5228
      %v5241 = vpack.c.b16 %v5233, %v5231
      %v5242 = vpack.c.b16 %v5234, %v5232
      %5251 = vmatprep.subr.bf16.mxu0 0
      %5252 = vmatpush1.bf16.msra.mxu0 %v5049
      %5253 = vmatprep.subr.bf16.mxu0 0
      %5254 = vmatpush1.bf16.msra.mxu0 %v5050
      %5255 = vmatprep.subr.bf16.mxu0 0
      %5256 = vmatpush1.bf16.msra.mxu0 %v5051
      %5257 = vmatprep.subr.bf16.mxu0 0
      %5258 = vmatpush1.bf16.msra.mxu0 %v5052
      %5259 = vmatprep.subr.bf16.mxu0 0
      %5260 = vmatpush1.bf16.msra.mxu0 %v5093
      %5261 = vmatprep.subr.bf16.mxu0 0
      %5262 = vmatpush1.bf16.msra.mxu0 %v5094
      %5263 = vmatprep.subr.bf16.mxu0 0
      %5264 = vmatpush1.bf16.msra.mxu0 %v5095
      %5265 = vmatprep.subr.bf16.mxu0 0
      %5266 = vmatpush1.bf16.msra.mxu0 %v5096
      %5267 = vmatprep.subr.bf16.mxu0 0
      %5268 = vmatpush1.bf16.msra.mxu0 %v5105
      %5269 = vmatprep.subr.bf16.mxu0 0
      %5270 = vmatpush1.bf16.msra.mxu0 %v5106
      %5271 = vmatprep.subr.bf16.mxu0 0
      %5272 = vmatpush1.bf16.msra.mxu0 %v5107
      %5273 = vmatprep.subr.bf16.mxu0 0
      %5274 = vmatpush1.bf16.msra.mxu0 %v5108
      %5275 = vmatprep.subr.bf16.mxu0 0
      %5276 = vmatpush1.bf16.msra.mxu0 %v5149
      %5277 = vmatprep.subr.bf16.mxu0 0
      %5278 = vmatpush1.bf16.msra.mxu0 %v5150
      %5279 = vmatprep.subr.bf16.mxu0 0
      %5280 = vmatpush1.bf16.msra.mxu0 %v5151
      %5281 = vmatprep.subr.bf16.mxu0 0
      %5282 = vmatpush1.bf16.msra.mxu0 %v5152
      %5283 = vmatprep.mubr.bf16.mxu0 %v5236
      %5284 = vmatmul.mubr.bf16.gmra.mrb[0].mxu0 %v5235
      %v5285 = vpop.f32.mrb[0].mxu0
      %v5286 = vadd.f32 %v5174, %v5285
      %v5287 = vpop.f32.mrb[0].mxu0
      %v5288 = vpop.f32.mrb[0].mxu0
      %v5289 = vadd.f32 %v5179, %v5288
      %v5290 = vpop.f32.mrb[0].mxu0
      %5291 = vmatprep.mubr.bf16.mxu0 %v5238
      %5292 = vmatmul.mubr.bf16.gmra.mrb[0].mxu0 %v5237
      %v5293 = vpop.f32.mrb[0].mxu0
      %v5294 = vadd.f32 %v5184, %v5293
      %v5295 = vpop.f32.mrb[0].mxu0
      %v5296 = vpop.f32.mrb[0].mxu0
      %v5297 = vadd.f32 %v5189, %v5296
      %v5298 = vpop.f32.mrb[0].mxu0
      %5299 = vmatprep.mubr.bf16.mxu0 %v5240
      %5300 = vmatmul.mubr.bf16.gmra.mrb[0].mxu0 %v5239
      %v5301 = vpop.f32.mrb[0].mxu0
      %v5302 = vadd.f32 %v5194, %v5301
      %v5303 = vpop.f32.mrb[0].mxu0
      %v5304 = vpop.f32.mrb[0].mxu0
      %v5305 = vadd.f32 %v5199, %v5304
      %v5306 = vpop.f32.mrb[0].mxu0
      %5307 = vmatprep.mubr.bf16.mxu0 %v5242
      %5308 = vmatmul.mubr.bf16.gmra.mrb[0].mxu0 %v5241
      %v5309 = vpop.f32.mrb[0].mxu0
      %v5310 = vadd.f32 %v5204, %v5309
      %v5311 = vpop.f32.mrb[0].mxu0
      %v5312 = vpop.f32.mrb[0].mxu0
      %v5313 = vadd.f32 %v5209, %v5312
      %v5314 = vpop.f32.mrb[0].mxu0
      %5315 = vdwg.mxu0
      %v5316 = vadd.f32 %v5286, %v5289
      %v5317 = vadd.f32 %v5316, %v5294
      %v5318 = vadd.f32 %v5317, %v5297
      %v5319 = vadd.f32 %v5318, %v5302
      %v5320 = vadd.f32 %v5319, %v5305
      %v5321 = vadd.f32 %v5320, %v5310
      %v5322 = vadd.f32 %v5321, %v5313
      %v5323 = vrot.slane %v5322, 4
      %v5324 = vadd.f32 %v5322, %v5323
      %v5325 = vrot.slane %v5324, 2
      %v5326 = vadd.f32 %v5324, %v5325
      %v5327 = vrot.slane %v5326, 1
      %v5328 = vadd.f32 %v5326, %v5327
      %v5329 = vmul.f32 %v5286, %v5286
      %v5330 = vmul.f32 %v5289, %v5289
      %v5331 = vmul.f32 %v5294, %v5294
      %v5332 = vmul.f32 %v5297, %v5297
      %v5333 = vmul.f32 %v5302, %v5302
      %v5334 = vmul.f32 %v5305, %v5305
      %v5335 = vmul.f32 %v5310, %v5310
      %v5336 = vmul.f32 %v5313, %v5313
      %v5337 = vadd.f32 %v5329, %v5330
      %v5338 = vadd.f32 %v5337, %v5331
      %v5339 = vadd.f32 %v5338, %v5332
      %v5340 = vadd.f32 %v5339, %v5333
      %v5341 = vadd.f32 %v5340, %v5334
      %v5342 = vadd.f32 %v5341, %v5335
      %v5343 = vadd.f32 %v5342, %v5336
      %v5344 = vrot.slane %v5343, 4
      %v5345 = vadd.f32 %v5343, %v5344
      %v5346 = vrot.slane %v5345, 2
      %v5347 = vadd.f32 %v5345, %v5346
      %v5348 = vrot.slane %v5347, 1
      %v5349 = vadd.f32 %v5347, %v5348
      %v5350 = vsel %vm531, %v5328, %v5349
      %v5351 = vsel %vm533, %v5350, 0.0
      %5352 = vmatprep.subr.mxu0 0.0
      %5353 = vmatpush1.msra.mxu0 %v323
      %5354 = vmatprep.subr.mxu0 0.0
      %5355 = vmatpush1.msra.mxu0 %v324
      %5356 = vmatprep.subr.mxu0 0.0
      %5357 = vmatpush1.msra.mxu0 %v325
      %5358 = vmatprep.subr.mxu0 0.0
      %5359 = vmatpush1.msra.mxu0 %v326
      %5360 = vmatprep.subr.mxu0 0.0
      %5361 = vmatpush1.msra.mxu0 %v327
      %5362 = vmatprep.subr.mxu0 0.0
      %5363 = vmatpush1.msra.mxu0 %v328
      %5364 = vmatprep.subr.mxu0 0.0
      %5365 = vmatpush1.msra.mxu0 %v329
      %5366 = vmatprep.subr.mxu0 0.0
      %5367 = vmatpush1.msra.mxu0 %v330
      %5368 = vmatprep.subr.mxu0 0.0
      %5369 = vmatpush1.msra.mxu0 %v331
      %5370 = vmatprep.subr.mxu0 0.0
      %5371 = vmatpush1.msra.mxu0 %v332
      %5372 = vmatprep.subr.mxu0 0.0
      %5373 = vmatpush1.msra.mxu0 %v333
      %5374 = vmatprep.subr.mxu0 0.0
      %5375 = vmatpush1.msra.mxu0 %v334
      %5376 = vmatprep.subr.mxu0 0.0
      %5377 = vmatpush1.msra.mxu0 %v335
      %5378 = vmatprep.subr.mxu0 0.0
      %5379 = vmatpush1.msra.mxu0 %v336
      %5380 = vmatprep.subr.mxu0 0.0
      %5381 = vmatpush1.msra.mxu0 %v337
      %5382 = vmatprep.subr.mxu0 0.0
      %5383 = vmatpush1.msra.mxu0 %v338
      %5384 = vmatprep.subr.mxu0 0.0
      %5385 = vmatpush1.msra.mxu0 0.0
      %5386 = vmatprep.subr.mxu0 0.0
      %5387 = vmatpush1.msra.mxu0 0.0
      %5388 = vmatprep.subr.mxu0 0.0
      %5389 = vmatpush1.msra.mxu0 0.0
      %5390 = vmatprep.subr.mxu0 0.0
      %5391 = vmatpush1.msra.mxu0 0.0
      %5392 = vmatprep.subr.mxu0 0.0
      %5393 = vmatpush1.msra.mxu0 0.0
      %5394 = vmatprep.subr.mxu0 0.0
      %5395 = vmatpush1.msra.mxu0 0.0
      %5396 = vmatprep.subr.mxu0 0.0
      %5397 = vmatpush1.msra.mxu0 0.0
      %5398 = vmatprep.subr.mxu0 0.0
      %5399 = vmatpush1.msra.mxu0 0.0
      %5400 = vmatprep.subr.mxu0 0.0
      %5401 = vmatpush1.msra.mxu0 0.0
      %5402 = vmatprep.subr.mxu0 0.0
      %5403 = vmatpush1.msra.mxu0 0.0
      %5404 = vmatprep.subr.mxu0 0.0
      %5405 = vmatpush1.msra.mxu0 0.0
      %5406 = vmatprep.subr.mxu0 0.0
      %5407 = vmatpush1.msra.mxu0 0.0
      %5408 = vmatprep.subr.mxu0 0.0
      %5409 = vmatpush1.msra.mxu0 0.0
      %5410 = vmatprep.subr.mxu0 0.0
      %5411 = vmatpush1.msra.mxu0 0.0
      %5412 = vmatprep.subr.mxu0 0.0
      %5413 = vmatpush1.msra.mxu0 0.0
      %5414 = vmatprep.subr.mxu0 0.0
      %5415 = vmatpush1.msra.mxu0 0.0
      %5416 = vmatprep.mubr.f32.mxu0 0.0
      %5417 = vmatmul.mubr.f32.gmra.mrb[0].mxu0 %v5351
      %v5418 = vpop.f32.mrb[0].mxu0
      %v5419 = vadd.f32 0.0, %v5418
      %v5420 = vpop.f32.mrb[0].mxu0
      %5421 = vdwg.mxu0
      %v5422 = vmul.f32 %v5419, 0.001953125
      %v5423 = vmul.f32 %v5422, %v5422
      %v5425 = vrot.slane %v5423, 7
      %v5427 = vsub.f32 %v5422, %v5425
      %v5428 = vmax.f32 %v5427, 0.0
      %v5429 = vlaneseq
      %v5430 = vshrl.u32 %v5429, 7
      %v5431 = vsub.s32 0, %v5430
      %v5432 = vrot.slane %v5422, %v5431
      %v5433 = vsub.f32 %v5286, %v5432
      %v5434 = vsub.f32 %v5289, %v5432
      %v5435 = vsub.f32 %v5294, %v5432
      %v5436 = vsub.f32 %v5297, %v5432
      %v5437 = vsub.f32 %v5302, %v5432
      %v5438 = vsub.f32 %v5305, %v5432
      %v5439 = vsub.f32 %v5310, %v5432
      %v5440 = vsub.f32 %v5313, %v5432
      %v5441 = vadd.f32 %v5428, 1e-08
      %v5442 = vrsqrt.pop %v5441
      %v5443 = vlaneseq
      %v5444 = vshrl.u32 %v5443, 7
      %v5445 = vsub.s32 1, %v5444
      %v5446 = vrot.slane %v5442, %v5445
      %v5447 = vmul.f32 %v5433, %v5446
      %v5448 = vmul.f32 %v5434, %v5446
      %v5449 = vmul.f32 %v5435, %v5446
      %v5450 = vmul.f32 %v5436, %v5446
      %v5451 = vmul.f32 %v5437, %v5446
      %v5452 = vmul.f32 %v5438, %v5446
      %v5453 = vmul.f32 %v5439, %v5446
      %v5454 = vmul.f32 %v5440, %v5446
      %s5455 = scalar_lea.vmem %s4, 2112
      %v5456 = vld [vmem:[%s5455] sm:$0xff]
      %v5457 = vld [vmem:[%s5455 + $0x8] sm:$0xff]
      %v5458 = vld [vmem:[%s5455 + $0x10] sm:$0xff]
      %v5459 = vld [vmem:[%s5455 + $0x18] sm:$0xff]
      %v5460 = vld [vmem:[%s5455 + $0x20] sm:$0xff]
      %v5461 = vld [vmem:[%s5455 + $0x28] sm:$0xff]
      %v5462 = vld [vmem:[%s5455 + $0x30] sm:$0xff]
      %v5463 = vld [vmem:[%s5455 + $0x38] sm:$0xff]
      %5465 = vset.pattern.permute.xlu0 0
      %5466 = vperm.xlu0 %5465, %v5456
      %v5467 = vpop.permute.xlu0 %5466
      %5470 = vset.pattern.permute.xlu0 0
      %5471 = vperm.xlu0 %5470, %v5457
      %v5472 = vpop.permute.xlu0 %5471
      %5475 = vset.pattern.permute.xlu0 0
      %5476 = vperm.xlu0 %5475, %v5458
      %v5477 = vpop.permute.xlu0 %5476
      %5480 = vset.pattern.permute.xlu0 0
      %5481 = vperm.xlu0 %5480, %v5459
      %v5482 = vpop.permute.xlu0 %5481
      %5485 = vset.pattern.permute.xlu0 0
      %5486 = vperm.xlu0 %5485, %v5460
      %v5487 = vpop.permute.xlu0 %5486
      %5490 = vset.pattern.permute.xlu0 0
      %5491 = vperm.xlu0 %5490, %v5461
      %v5492 = vpop.permute.xlu0 %5491
      %5495 = vset.pattern.permute.xlu0 0
      %5496 = vperm.xlu0 %5495, %v5462
      %v5497 = vpop.permute.xlu0 %5496
      %5500 = vset.pattern.permute.xlu0 0
      %5501 = vperm.xlu0 %5500, %v5463
      %v5502 = vpop.permute.xlu0 %5501
      %v5504 = vmul.f32 %v5447, %v5467
      %v5505 = vmul.f32 %v5448, %v5472
      %v5506 = vmul.f32 %v5449, %v5477
      %v5507 = vmul.f32 %v5450, %v5482
      %v5508 = vmul.f32 %v5451, %v5487
      %v5509 = vmul.f32 %v5452, %v5492
      %v5510 = vmul.f32 %v5453, %v5497
      %v5511 = vmul.f32 %v5454, %v5502
      %s5512 = scalar_lea.vmem %s4, 2176
      %v5513 = vld [vmem:[%s5512] sm:$0xff]
      %v5514 = vld [vmem:[%s5512 + $0x8] sm:$0xff]
      %v5515 = vld [vmem:[%s5512 + $0x10] sm:$0xff]
      %v5516 = vld [vmem:[%s5512 + $0x18] sm:$0xff]
      %v5517 = vld [vmem:[%s5512 + $0x20] sm:$0xff]
      %v5518 = vld [vmem:[%s5512 + $0x28] sm:$0xff]
      %v5519 = vld [vmem:[%s5512 + $0x30] sm:$0xff]
      %v5520 = vld [vmem:[%s5512 + $0x38] sm:$0xff]
      %5522 = vset.pattern.permute.xlu0 0
      %5523 = vperm.xlu0 %5522, %v5513
      %v5524 = vpop.permute.xlu0 %5523
      %5527 = vset.pattern.permute.xlu0 0
      %5528 = vperm.xlu0 %5527, %v5514
      %v5529 = vpop.permute.xlu0 %5528
      %5532 = vset.pattern.permute.xlu0 0
      %5533 = vperm.xlu0 %5532, %v5515
      %v5534 = vpop.permute.xlu0 %5533
      %5537 = vset.pattern.permute.xlu0 0
      %5538 = vperm.xlu0 %5537, %v5516
      %v5539 = vpop.permute.xlu0 %5538
      %5542 = vset.pattern.permute.xlu0 0
      %5543 = vperm.xlu0 %5542, %v5517
      %v5544 = vpop.permute.xlu0 %5543
      %5547 = vset.pattern.permute.xlu0 0
      %5548 = vperm.xlu0 %5547, %v5518
      %v5549 = vpop.permute.xlu0 %5548
      %5552 = vset.pattern.permute.xlu0 0
      %5553 = vperm.xlu0 %5552, %v5519
      %v5554 = vpop.permute.xlu0 %5553
      %5557 = vset.pattern.permute.xlu0 0
      %5558 = vperm.xlu0 %5557, %v5520
      %v5559 = vpop.permute.xlu0 %5558
      %v5561 = vadd.f32 %v5504, %v5524
      %v5562 = vadd.f32 %v5505, %v5529
      %v5563 = vadd.f32 %v5506, %v5534
      %v5564 = vadd.f32 %v5507, %v5539
      %v5565 = vadd.f32 %v5508, %v5544
      %v5566 = vadd.f32 %v5509, %v5549
      %v5567 = vadd.f32 %v5510, %v5554
      %v5568 = vadd.f32 %v5511, %v5559
      %vm5569 = vcmp.ge.f32.partialorder %v5561, 0.0
      %vm5570 = vcmp.ge.f32.partialorder %v5562, 0.0
      %vm5571 = vcmp.ge.f32.partialorder %v5563, 0.0
      %vm5572 = vcmp.ge.f32.partialorder %v5564, 0.0
      %vm5573 = vcmp.ge.f32.partialorder %v5565, 0.0
      %vm5574 = vcmp.ge.f32.partialorder %v5566, 0.0
      %vm5575 = vcmp.ge.f32.partialorder %v5567, 0.0
      %vm5576 = vcmp.ge.f32.partialorder %v5568, 0.0
      %v5577 = vmul.f32 %v5561, 0.25
      %v5578 = vmul.f32 %v5562, 0.25
      %v5579 = vmul.f32 %v5563, 0.25
      %v5580 = vmul.f32 %v5564, 0.25
      %v5581 = vmul.f32 %v5565, 0.25
      %v5582 = vmul.f32 %v5566, 0.25
      %v5583 = vmul.f32 %v5567, 0.25
      %v5584 = vmul.f32 %v5568, 0.25
      %v5585 = vsel %vm5569, %v5561, %v5577
      %v5586 = vsel %vm5570, %v5562, %v5578
      %v5587 = vsel %vm5571, %v5563, %v5579
      %v5588 = vsel %vm5572, %v5564, %v5580
      %v5589 = vsel %vm5573, %v5565, %v5581
      %v5590 = vsel %vm5574, %v5566, %v5582
      %v5591 = vsel %vm5575, %v5567, %v5583
      %v5592 = vsel %vm5576, %v5568, %v5584
      %v5593 = vpack.c.bf16 %v5586, %v5585
      %v5594 = vpack.c.bf16 %v5588, %v5587
      %v5595 = vpack.c.bf16 %v5590, %v5589
      %v5596 = vpack.c.bf16 %v5592, %v5591
      %5605 = vrot.lane.b32.xlu0 %v5585, 1
      %v5606 = vpop.permute.xlu0 %5605
      %5607 = vrot.lane.b32.xlu0 %v5586, 1
      %v5608 = vpop.permute.xlu0 %5607
      %5609 = vrot.lane.b32.xlu0 %v5587, 1
      %v5610 = vpop.permute.xlu0 %5609
      %5611 = vrot.lane.b32.xlu0 %v5588, 1
      %v5612 = vpop.permute.xlu0 %5611
      %5613 = vrot.lane.b32.xlu0 %v5589, 1
      %v5614 = vpop.permute.xlu0 %5613
      %5615 = vrot.lane.b32.xlu0 %v5590, 1
      %v5616 = vpop.permute.xlu0 %5615
      %5617 = vrot.lane.b32.xlu0 %v5591, 1
      %v5618 = vpop.permute.xlu0 %5617
      %5619 = vrot.lane.b32.xlu0 %v5592, 1
      %v5620 = vpop.permute.xlu0 %5619
      %v5629 = vmul.f32 %v5606, %v4865
      %v5630 = vmul.f32 %v5608, %v4865
      %v5631 = vmul.f32 %v5610, %v4865
      %v5632 = vmul.f32 %v5612, %v4865
      %v5633 = vmul.f32 %v5614, %v4865
      %v5634 = vmul.f32 %v5616, %v4865
      %v5635 = vmul.f32 %v5618, %v4865
      %v5636 = vmul.f32 %v5620, %v4865
      %v5637 = vpack.c.bf16 %v5630, %v5629
      %v5638 = vpack.c.bf16 %v5632, %v5631
      %v5639 = vpack.c.bf16 %v5634, %v5633
      %v5640 = vpack.c.bf16 %v5636, %v5635
      %v5641 = vld [vmem:[%s1890] sm:$0xff]
      %v5642 = vld [vmem:[%s1890 + $0x8] sm:$0xff]
      %v5643 = vld [vmem:[%s1890 + $0x10] sm:$0xff]
      %v5644 = vld [vmem:[%s1890 + $0x18] sm:$0xff]
      %v5645 = vld [vmem:[%s1890 + $0x20] sm:$0xff]
      %v5646 = vld [vmem:[%s1890 + $0x28] sm:$0xff]
      %v5647 = vld [vmem:[%s1890 + $0x30] sm:$0xff]
      %v5648 = vld [vmem:[%s1890 + $0x38] sm:$0xff]
      %v5649 = vpack.c.bf16 %v5642, %v5641
      %v5650 = vpack.c.bf16 %v5644, %v5643
      %v5651 = vpack.c.bf16 %v5646, %v5645
      %v5652 = vpack.c.bf16 %v5648, %v5647
      %5661 = vrot.lane.b32.xlu0 %v5641, 1
      %v5662 = vpop.permute.xlu0 %5661
      %5663 = vrot.lane.b32.xlu0 %v5642, 1
      %v5664 = vpop.permute.xlu0 %5663
      %5665 = vrot.lane.b32.xlu0 %v5643, 1
      %v5666 = vpop.permute.xlu0 %5665
      %5667 = vrot.lane.b32.xlu0 %v5644, 1
      %v5668 = vpop.permute.xlu0 %5667
      %5669 = vrot.lane.b32.xlu0 %v5645, 1
      %v5670 = vpop.permute.xlu0 %5669
      %5671 = vrot.lane.b32.xlu0 %v5646, 1
      %v5672 = vpop.permute.xlu0 %5671
      %5673 = vrot.lane.b32.xlu0 %v5647, 1
      %v5674 = vpop.permute.xlu0 %5673
      %5675 = vrot.lane.b32.xlu0 %v5648, 1
      %v5676 = vpop.permute.xlu0 %5675
      %v5685 = vmul.f32 %v5662, %v4865
      %v5686 = vmul.f32 %v5664, %v4865
      %v5687 = vmul.f32 %v5666, %v4865
      %v5688 = vmul.f32 %v5668, %v4865
      %v5689 = vmul.f32 %v5670, %v4865
      %v5690 = vmul.f32 %v5672, %v4865
      %v5691 = vmul.f32 %v5674, %v4865
      %v5692 = vmul.f32 %v5676, %v4865
      %v5693 = vpack.c.bf16 %v5686, %v5685
      %v5694 = vpack.c.bf16 %v5688, %v5687
      %v5695 = vpack.c.bf16 %v5690, %v5689
      %v5696 = vpack.c.bf16 %v5692, %v5691
      %s5697 = scalar_lea.vmem %s3, 256
      %v5698 = vld [vmem:[%s5697] sm:$0xff]
      %v5699 = vld [vmem:[%s5697 + $0x8] sm:$0xff]
      %v5700 = vld [vmem:[%s5697 + $0x10] sm:$0xff]
      %v5701 = vld [vmem:[%s5697 + $0x18] sm:$0xff]
      %v5702 = vld [vmem:[%s5697 + $0x20] sm:$0xff]
      %v5703 = vld [vmem:[%s5697 + $0x28] sm:$0xff]
      %v5704 = vld [vmem:[%s5697 + $0x30] sm:$0xff]
      %v5705 = vld [vmem:[%s5697 + $0x38] sm:$0xff]
      %s5706 = scalar_lea.vmem %s4, 2240
      %v5707 = vld [vmem:[%s5706] sm:$0xff]
      %v5708 = vld [vmem:[%s5706 + $0x8] sm:$0xff]
      %v5709 = vld [vmem:[%s5706 + $0x10] sm:$0xff]
      %v5710 = vld [vmem:[%s5706 + $0x18] sm:$0xff]
      %v5711 = vld [vmem:[%s5706 + $0x20] sm:$0xff]
      %v5712 = vld [vmem:[%s5706 + $0x28] sm:$0xff]
      %v5713 = vld [vmem:[%s5706 + $0x30] sm:$0xff]
      %v5714 = vld [vmem:[%s5706 + $0x38] sm:$0xff]
      %5716 = vset.pattern.permute.xlu0 0
      %5717 = vperm.xlu0 %5716, %v5707
      %v5718 = vpop.permute.xlu0 %5717
      %5721 = vset.pattern.permute.xlu0 0
      %5722 = vperm.xlu0 %5721, %v5708
      %v5723 = vpop.permute.xlu0 %5722
      %5726 = vset.pattern.permute.xlu0 0
      %5727 = vperm.xlu0 %5726, %v5709
      %v5728 = vpop.permute.xlu0 %5727
      %5731 = vset.pattern.permute.xlu0 0
      %5732 = vperm.xlu0 %5731, %v5710
      %v5733 = vpop.permute.xlu0 %5732
      %5736 = vset.pattern.permute.xlu0 0
      %5737 = vperm.xlu0 %5736, %v5711
      %v5738 = vpop.permute.xlu0 %5737
      %5741 = vset.pattern.permute.xlu0 0
      %5742 = vperm.xlu0 %5741, %v5712
      %v5743 = vpop.permute.xlu0 %5742
      %5746 = vset.pattern.permute.xlu0 0
      %5747 = vperm.xlu0 %5746, %v5713
      %v5748 = vpop.permute.xlu0 %5747
      %5751 = vset.pattern.permute.xlu0 0
      %5752 = vperm.xlu0 %5751, %v5714
      %v5753 = vpop.permute.xlu0 %5752
      %v5763 = vunpack.c.l.b16 %v5698
      %v5764 = vunpack.c.h.b16 %v5698
      %v5765 = vunpack.c.l.b16 %v5699
      %v5766 = vunpack.c.h.b16 %v5699
      %v5767 = vunpack.c.l.b16 %v5700
      %v5768 = vunpack.c.h.b16 %v5700
      %v5769 = vunpack.c.l.b16 %v5701
      %v5770 = vunpack.c.h.b16 %v5701
      %v5771 = vunpack.c.l.b16 %v5702
      %v5772 = vunpack.c.h.b16 %v5702
      %v5773 = vunpack.c.l.b16 %v5703
      %v5774 = vunpack.c.h.b16 %v5703
      %v5775 = vunpack.c.l.b16 %v5704
      %v5776 = vunpack.c.h.b16 %v5704
      %v5777 = vunpack.c.l.b16 %v5705
      %v5778 = vunpack.c.h.b16 %v5705
      %v5779 = vpack.c.b16 %v5765, %v5763
      %v5780 = vpack.c.b16 %v5766, %v5764
      %v5781 = vpack.c.b16 %v5769, %v5767
      %v5782 = vpack.c.b16 %v5770, %v5768
      %v5783 = vpack.c.b16 %v5773, %v5771
      %v5784 = vpack.c.b16 %v5774, %v5772
      %v5785 = vpack.c.b16 %v5777, %v5775
      %v5786 = vpack.c.b16 %v5778, %v5776
      %5795 = vmatprep.subr.bf16.mxu0 0
      %5796 = vmatpush1.bf16.msra.mxu0 %v5593
      %5797 = vmatprep.subr.bf16.mxu0 0
      %5798 = vmatpush1.bf16.msra.mxu0 %v5594
      %5799 = vmatprep.subr.bf16.mxu0 0
      %5800 = vmatpush1.bf16.msra.mxu0 %v5595
      %5801 = vmatprep.subr.bf16.mxu0 0
      %5802 = vmatpush1.bf16.msra.mxu0 %v5596
      %5803 = vmatprep.subr.bf16.mxu0 0
      %5804 = vmatpush1.bf16.msra.mxu0 %v5637
      %5805 = vmatprep.subr.bf16.mxu0 0
      %5806 = vmatpush1.bf16.msra.mxu0 %v5638
      %5807 = vmatprep.subr.bf16.mxu0 0
      %5808 = vmatpush1.bf16.msra.mxu0 %v5639
      %5809 = vmatprep.subr.bf16.mxu0 0
      %5810 = vmatpush1.bf16.msra.mxu0 %v5640
      %5811 = vmatprep.subr.bf16.mxu0 0
      %5812 = vmatpush1.bf16.msra.mxu0 %v5649
      %5813 = vmatprep.subr.bf16.mxu0 0
      %5814 = vmatpush1.bf16.msra.mxu0 %v5650
      %5815 = vmatprep.subr.bf16.mxu0 0
      %5816 = vmatpush1.bf16.msra.mxu0 %v5651
      %5817 = vmatprep.subr.bf16.mxu0 0
      %5818 = vmatpush1.bf16.msra.mxu0 %v5652
      %5819 = vmatprep.subr.bf16.mxu0 0
      %5820 = vmatpush1.bf16.msra.mxu0 %v5693
      %5821 = vmatprep.subr.bf16.mxu0 0
      %5822 = vmatpush1.bf16.msra.mxu0 %v5694
      %5823 = vmatprep.subr.bf16.mxu0 0
      %5824 = vmatpush1.bf16.msra.mxu0 %v5695
      %5825 = vmatprep.subr.bf16.mxu0 0
      %5826 = vmatpush1.bf16.msra.mxu0 %v5696
      %5827 = vmatprep.mubr.bf16.mxu0 %v5780
      %5828 = vmatmul.mubr.bf16.gmra.mrb[0].mxu0 %v5779
      %v5829 = vpop.f32.mrb[0].mxu0
      %v5830 = vadd.f32 %v5718, %v5829
      %v5831 = vpop.f32.mrb[0].mxu0
      %v5832 = vpop.f32.mrb[0].mxu0
      %v5833 = vadd.f32 %v5723, %v5832
      %v5834 = vpop.f32.mrb[0].mxu0
      %5835 = vmatprep.mubr.bf16.mxu0 %v5782
      %5836 = vmatmul.mubr.bf16.gmra.mrb[0].mxu0 %v5781
      %v5837 = vpop.f32.mrb[0].mxu0
      %v5838 = vadd.f32 %v5728, %v5837
      %v5839 = vpop.f32.mrb[0].mxu0
      %v5840 = vpop.f32.mrb[0].mxu0
      %v5841 = vadd.f32 %v5733, %v5840
      %v5842 = vpop.f32.mrb[0].mxu0
      %5843 = vmatprep.mubr.bf16.mxu0 %v5784
      %5844 = vmatmul.mubr.bf16.gmra.mrb[0].mxu0 %v5783
      %v5845 = vpop.f32.mrb[0].mxu0
      %v5846 = vadd.f32 %v5738, %v5845
      %v5847 = vpop.f32.mrb[0].mxu0
      %v5848 = vpop.f32.mrb[0].mxu0
      %v5849 = vadd.f32 %v5743, %v5848
      %v5850 = vpop.f32.mrb[0].mxu0
      %5851 = vmatprep.mubr.bf16.mxu0 %v5786
      %5852 = vmatmul.mubr.bf16.gmra.mrb[0].mxu0 %v5785
      %v5853 = vpop.f32.mrb[0].mxu0
      %v5854 = vadd.f32 %v5748, %v5853
      %v5855 = vpop.f32.mrb[0].mxu0
      %v5856 = vpop.f32.mrb[0].mxu0
      %v5857 = vadd.f32 %v5753, %v5856
      %v5858 = vpop.f32.mrb[0].mxu0
      %5859 = vdwg.mxu0
      %v5860 = vadd.f32 %v5830, %v5833
      %v5861 = vadd.f32 %v5860, %v5838
      %v5862 = vadd.f32 %v5861, %v5841
      %v5863 = vadd.f32 %v5862, %v5846
      %v5864 = vadd.f32 %v5863, %v5849
      %v5865 = vadd.f32 %v5864, %v5854
      %v5866 = vadd.f32 %v5865, %v5857
      %v5867 = vrot.slane %v5866, 4
      %v5868 = vadd.f32 %v5866, %v5867
      %v5869 = vrot.slane %v5868, 2
      %v5870 = vadd.f32 %v5868, %v5869
      %v5871 = vrot.slane %v5870, 1
      %v5872 = vadd.f32 %v5870, %v5871
      %v5873 = vmul.f32 %v5830, %v5830
      %v5874 = vmul.f32 %v5833, %v5833
      %v5875 = vmul.f32 %v5838, %v5838
      %v5876 = vmul.f32 %v5841, %v5841
      %v5877 = vmul.f32 %v5846, %v5846
      %v5878 = vmul.f32 %v5849, %v5849
      %v5879 = vmul.f32 %v5854, %v5854
      %v5880 = vmul.f32 %v5857, %v5857
      %v5881 = vadd.f32 %v5873, %v5874
      %v5882 = vadd.f32 %v5881, %v5875
      %v5883 = vadd.f32 %v5882, %v5876
      %v5884 = vadd.f32 %v5883, %v5877
      %v5885 = vadd.f32 %v5884, %v5878
      %v5886 = vadd.f32 %v5885, %v5879
      %v5887 = vadd.f32 %v5886, %v5880
      %v5888 = vrot.slane %v5887, 4
      %v5889 = vadd.f32 %v5887, %v5888
      %v5890 = vrot.slane %v5889, 2
      %v5891 = vadd.f32 %v5889, %v5890
      %v5892 = vrot.slane %v5891, 1
      %v5893 = vadd.f32 %v5891, %v5892
      %v5894 = vsel %vm531, %v5872, %v5893
      %v5895 = vsel %vm533, %v5894, 0.0
      %5896 = vmatprep.subr.mxu0 0.0
      %5897 = vmatpush1.msra.mxu0 %v323
      %5898 = vmatprep.subr.mxu0 0.0
      %5899 = vmatpush1.msra.mxu0 %v324
      %5900 = vmatprep.subr.mxu0 0.0
      %5901 = vmatpush1.msra.mxu0 %v325
      %5902 = vmatprep.subr.mxu0 0.0
      %5903 = vmatpush1.msra.mxu0 %v326
      %5904 = vmatprep.subr.mxu0 0.0
      %5905 = vmatpush1.msra.mxu0 %v327
      %5906 = vmatprep.subr.mxu0 0.0
      %5907 = vmatpush1.msra.mxu0 %v328
      %5908 = vmatprep.subr.mxu0 0.0
      %5909 = vmatpush1.msra.mxu0 %v329
      %5910 = vmatprep.subr.mxu0 0.0
      %5911 = vmatpush1.msra.mxu0 %v330
      %5912 = vmatprep.subr.mxu0 0.0
      %5913 = vmatpush1.msra.mxu0 %v331
      %5914 = vmatprep.subr.mxu0 0.0
      %5915 = vmatpush1.msra.mxu0 %v332
      %5916 = vmatprep.subr.mxu0 0.0
      %5917 = vmatpush1.msra.mxu0 %v333
      %5918 = vmatprep.subr.mxu0 0.0
      %5919 = vmatpush1.msra.mxu0 %v334
      %5920 = vmatprep.subr.mxu0 0.0
      %5921 = vmatpush1.msra.mxu0 %v335
      %5922 = vmatprep.subr.mxu0 0.0
      %5923 = vmatpush1.msra.mxu0 %v336
      %5924 = vmatprep.subr.mxu0 0.0
      %5925 = vmatpush1.msra.mxu0 %v337
      %5926 = vmatprep.subr.mxu0 0.0
      %5927 = vmatpush1.msra.mxu0 %v338
      %5928 = vmatprep.subr.mxu0 0.0
      %5929 = vmatpush1.msra.mxu0 0.0
      %5930 = vmatprep.subr.mxu0 0.0
      %5931 = vmatpush1.msra.mxu0 0.0
      %5932 = vmatprep.subr.mxu0 0.0
      %5933 = vmatpush1.msra.mxu0 0.0
      %5934 = vmatprep.subr.mxu0 0.0
      %5935 = vmatpush1.msra.mxu0 0.0
      %5936 = vmatprep.subr.mxu0 0.0
      %5937 = vmatpush1.msra.mxu0 0.0
      %5938 = vmatprep.subr.mxu0 0.0
      %5939 = vmatpush1.msra.mxu0 0.0
      %5940 = vmatprep.subr.mxu0 0.0
      %5941 = vmatpush1.msra.mxu0 0.0
      %5942 = vmatprep.subr.mxu0 0.0
      %5943 = vmatpush1.msra.mxu0 0.0
      %5944 = vmatprep.subr.mxu0 0.0
      %5945 = vmatpush1.msra.mxu0 0.0
      %5946 = vmatprep.subr.mxu0 0.0
      %5947 = vmatpush1.msra.mxu0 0.0
      %5948 = vmatprep.subr.mxu0 0.0
      %5949 = vmatpush1.msra.mxu0 0.0
      %5950 = vmatprep.subr.mxu0 0.0
      %5951 = vmatpush1.msra.mxu0 0.0
      %5952 = vmatprep.subr.mxu0 0.0
      %5953 = vmatpush1.msra.mxu0 0.0
      %5954 = vmatprep.subr.mxu0 0.0
      %5955 = vmatpush1.msra.mxu0 0.0
      %5956 = vmatprep.subr.mxu0 0.0
      %5957 = vmatpush1.msra.mxu0 0.0
      %5958 = vmatprep.subr.mxu0 0.0
      %5959 = vmatpush1.msra.mxu0 0.0
      %5960 = vmatprep.mubr.f32.mxu0 0.0
      %5961 = vmatmul.mubr.f32.gmra.mrb[0].mxu0 %v5895
      %v5962 = vpop.f32.mrb[0].mxu0
      %v5963 = vadd.f32 0.0, %v5962
      %v5964 = vpop.f32.mrb[0].mxu0
      %5965 = vdwg.mxu0
      %v5966 = vmul.f32 %v5963, 0.0009765625
      %v5967 = vmul.f32 %v5966, %v5966
      %v5969 = vrot.slane %v5967, 7
      %v5971 = vsub.f32 %v5966, %v5969
      %v5972 = vmax.f32 %v5971, 0.0
      %v5973 = vlaneseq
      %v5974 = vshrl.u32 %v5973, 7
      %v5975 = vsub.s32 0, %v5974
      %v5976 = vrot.slane %v5966, %v5975
      %v5977 = vsub.f32 %v5830, %v5976
      %v5978 = vsub.f32 %v5833, %v5976
      %v5979 = vsub.f32 %v5838, %v5976
      %v5980 = vsub.f32 %v5841, %v5976
      %v5981 = vsub.f32 %v5846, %v5976
      %v5982 = vsub.f32 %v5849, %v5976
      %v5983 = vsub.f32 %v5854, %v5976
      %v5984 = vsub.f32 %v5857, %v5976
      %v5985 = vadd.f32 %v5972, 1e-08
      %v5986 = vrsqrt.pop %v5985
      %v5987 = vlaneseq
      %v5988 = vshrl.u32 %v5987, 7
      %v5989 = vsub.s32 1, %v5988
      %v5990 = vrot.slane %v5986, %v5989
      %v5991 = vmul.f32 %v5977, %v5990
      %v5992 = vmul.f32 %v5978, %v5990
      %v5993 = vmul.f32 %v5979, %v5990
      %v5994 = vmul.f32 %v5980, %v5990
      %v5995 = vmul.f32 %v5981, %v5990
      %v5996 = vmul.f32 %v5982, %v5990
      %v5997 = vmul.f32 %v5983, %v5990
      %v5998 = vmul.f32 %v5984, %v5990
      %s5999 = scalar_lea.vmem %s4, 2304
      %v6000 = vld [vmem:[%s5999] sm:$0xff]
      %v6001 = vld [vmem:[%s5999 + $0x8] sm:$0xff]
      %v6002 = vld [vmem:[%s5999 + $0x10] sm:$0xff]
      %v6003 = vld [vmem:[%s5999 + $0x18] sm:$0xff]
      %v6004 = vld [vmem:[%s5999 + $0x20] sm:$0xff]
      %v6005 = vld [vmem:[%s5999 + $0x28] sm:$0xff]
      %v6006 = vld [vmem:[%s5999 + $0x30] sm:$0xff]
      %v6007 = vld [vmem:[%s5999 + $0x38] sm:$0xff]
      %6009 = vset.pattern.permute.xlu0 0
      %6010 = vperm.xlu0 %6009, %v6000
      %v6011 = vpop.permute.xlu0 %6010
      %6014 = vset.pattern.permute.xlu0 0
      %6015 = vperm.xlu0 %6014, %v6001
      %v6016 = vpop.permute.xlu0 %6015
      %6019 = vset.pattern.permute.xlu0 0
      %6020 = vperm.xlu0 %6019, %v6002
      %v6021 = vpop.permute.xlu0 %6020
      %6024 = vset.pattern.permute.xlu0 0
      %6025 = vperm.xlu0 %6024, %v6003
      %v6026 = vpop.permute.xlu0 %6025
      %6029 = vset.pattern.permute.xlu0 0
      %6030 = vperm.xlu0 %6029, %v6004
      %v6031 = vpop.permute.xlu0 %6030
      %6034 = vset.pattern.permute.xlu0 0
      %6035 = vperm.xlu0 %6034, %v6005
      %v6036 = vpop.permute.xlu0 %6035
      %6039 = vset.pattern.permute.xlu0 0
      %6040 = vperm.xlu0 %6039, %v6006
      %v6041 = vpop.permute.xlu0 %6040
      %6044 = vset.pattern.permute.xlu0 0
      %6045 = vperm.xlu0 %6044, %v6007
      %v6046 = vpop.permute.xlu0 %6045
      %v6048 = vmul.f32 %v5991, %v6011
      %v6049 = vmul.f32 %v5992, %v6016
      %v6050 = vmul.f32 %v5993, %v6021
      %v6051 = vmul.f32 %v5994, %v6026
      %v6052 = vmul.f32 %v5995, %v6031
      %v6053 = vmul.f32 %v5996, %v6036
      %v6054 = vmul.f32 %v5997, %v6041
      %v6055 = vmul.f32 %v5998, %v6046
      %s6056 = scalar_lea.vmem %s4, 2368
      %v6057 = vld [vmem:[%s6056] sm:$0xff]
      %v6058 = vld [vmem:[%s6056 + $0x8] sm:$0xff]
      %v6059 = vld [vmem:[%s6056 + $0x10] sm:$0xff]
      %v6060 = vld [vmem:[%s6056 + $0x18] sm:$0xff]
      %v6061 = vld [vmem:[%s6056 + $0x20] sm:$0xff]
      %v6062 = vld [vmem:[%s6056 + $0x28] sm:$0xff]
      %v6063 = vld [vmem:[%s6056 + $0x30] sm:$0xff]
      %v6064 = vld [vmem:[%s6056 + $0x38] sm:$0xff]
      %6066 = vset.pattern.permute.xlu0 0
      %6067 = vperm.xlu0 %6066, %v6057
      %v6068 = vpop.permute.xlu0 %6067
      %6071 = vset.pattern.permute.xlu0 0
      %6072 = vperm.xlu0 %6071, %v6058
      %v6073 = vpop.permute.xlu0 %6072
      %6076 = vset.pattern.permute.xlu0 0
      %6077 = vperm.xlu0 %6076, %v6059
      %v6078 = vpop.permute.xlu0 %6077
      %6081 = vset.pattern.permute.xlu0 0
      %6082 = vperm.xlu0 %6081, %v6060
      %v6083 = vpop.permute.xlu0 %6082
      %6086 = vset.pattern.permute.xlu0 0
      %6087 = vperm.xlu0 %6086, %v6061
      %v6088 = vpop.permute.xlu0 %6087
      %6091 = vset.pattern.permute.xlu0 0
      %6092 = vperm.xlu0 %6091, %v6062
      %v6093 = vpop.permute.xlu0 %6092
      %6096 = vset.pattern.permute.xlu0 0
      %6097 = vperm.xlu0 %6096, %v6063
      %v6098 = vpop.permute.xlu0 %6097
      %6101 = vset.pattern.permute.xlu0 0
      %6102 = vperm.xlu0 %6101, %v6064
      %v6103 = vpop.permute.xlu0 %6102
      %v6105 = vadd.f32 %v6048, %v6068
      %v6106 = vadd.f32 %v6049, %v6073
      %v6107 = vadd.f32 %v6050, %v6078
      %v6108 = vadd.f32 %v6051, %v6083
      %v6109 = vadd.f32 %v6052, %v6088
      %v6110 = vadd.f32 %v6053, %v6093
      %v6111 = vadd.f32 %v6054, %v6098
      %v6112 = vadd.f32 %v6055, %v6103
      %vm6113 = vcmp.ge.f32.partialorder %v6105, 0.0
      %vm6114 = vcmp.ge.f32.partialorder %v6106, 0.0
      %vm6115 = vcmp.ge.f32.partialorder %v6107, 0.0
      %vm6116 = vcmp.ge.f32.partialorder %v6108, 0.0
      %vm6117 = vcmp.ge.f32.partialorder %v6109, 0.0
      %vm6118 = vcmp.ge.f32.partialorder %v6110, 0.0
      %vm6119 = vcmp.ge.f32.partialorder %v6111, 0.0
      %vm6120 = vcmp.ge.f32.partialorder %v6112, 0.0
      %v6121 = vmul.f32 %v6105, 0.25
      %v6122 = vmul.f32 %v6106, 0.25
      %v6123 = vmul.f32 %v6107, 0.25
      %v6124 = vmul.f32 %v6108, 0.25
      %v6125 = vmul.f32 %v6109, 0.25
      %v6126 = vmul.f32 %v6110, 0.25
      %v6127 = vmul.f32 %v6111, 0.25
      %v6128 = vmul.f32 %v6112, 0.25
      %v6129 = vsel %vm6113, %v6105, %v6121
      %v6130 = vsel %vm6114, %v6106, %v6122
      %v6131 = vsel %vm6115, %v6107, %v6123
      %v6132 = vsel %vm6116, %v6108, %v6124
      %v6133 = vsel %vm6117, %v6109, %v6125
      %v6134 = vsel %vm6118, %v6110, %v6126
      %v6135 = vsel %vm6119, %v6111, %v6127
      %v6136 = vsel %vm6120, %v6112, %v6128
      %v6137 = vpack.c.bf16 %v6130, %v6129
      %v6138 = vpack.c.bf16 %v6132, %v6131
      %v6139 = vpack.c.bf16 %v6134, %v6133
      %v6140 = vpack.c.bf16 %v6136, %v6135
      %6149 = vrot.lane.b32.xlu0 %v6129, 1
      %v6150 = vpop.permute.xlu0 %6149
      %6151 = vrot.lane.b32.xlu0 %v6130, 1
      %v6152 = vpop.permute.xlu0 %6151
      %6153 = vrot.lane.b32.xlu0 %v6131, 1
      %v6154 = vpop.permute.xlu0 %6153
      %6155 = vrot.lane.b32.xlu0 %v6132, 1
      %v6156 = vpop.permute.xlu0 %6155
      %6157 = vrot.lane.b32.xlu0 %v6133, 1
      %v6158 = vpop.permute.xlu0 %6157
      %6159 = vrot.lane.b32.xlu0 %v6134, 1
      %v6160 = vpop.permute.xlu0 %6159
      %6161 = vrot.lane.b32.xlu0 %v6135, 1
      %v6162 = vpop.permute.xlu0 %6161
      %6163 = vrot.lane.b32.xlu0 %v6136, 1
      %v6164 = vpop.permute.xlu0 %6163
      %v6173 = vmul.f32 %v6150, %v4865
      %v6174 = vmul.f32 %v6152, %v4865
      %v6175 = vmul.f32 %v6154, %v4865
      %v6176 = vmul.f32 %v6156, %v4865
      %v6177 = vmul.f32 %v6158, %v4865
      %v6178 = vmul.f32 %v6160, %v4865
      %v6179 = vmul.f32 %v6162, %v4865
      %v6180 = vmul.f32 %v6164, %v4865
      %v6181 = vpack.c.bf16 %v6174, %v6173
      %v6182 = vpack.c.bf16 %v6176, %v6175
      %v6183 = vpack.c.bf16 %v6178, %v6177
      %v6184 = vpack.c.bf16 %v6180, %v6179
      %v6185 = vld [vmem:[%s1332] sm:$0xff]
      %v6186 = vld [vmem:[%s1332 + $0x8] sm:$0xff]
      %v6187 = vld [vmem:[%s1332 + $0x10] sm:$0xff]
      %v6188 = vld [vmem:[%s1332 + $0x18] sm:$0xff]
      %v6189 = vld [vmem:[%s1332 + $0x20] sm:$0xff]
      %v6190 = vld [vmem:[%s1332 + $0x28] sm:$0xff]
      %v6191 = vld [vmem:[%s1332 + $0x30] sm:$0xff]
      %v6192 = vld [vmem:[%s1332 + $0x38] sm:$0xff]
      %v6193 = vpack.c.bf16 %v6186, %v6185
      %v6194 = vpack.c.bf16 %v6188, %v6187
      %v6195 = vpack.c.bf16 %v6190, %v6189
      %v6196 = vpack.c.bf16 %v6192, %v6191
      %6205 = vrot.lane.b32.xlu0 %v6185, 1
      %v6206 = vpop.permute.xlu0 %6205
      %6207 = vrot.lane.b32.xlu0 %v6186, 1
      %v6208 = vpop.permute.xlu0 %6207
      %6209 = vrot.lane.b32.xlu0 %v6187, 1
      %v6210 = vpop.permute.xlu0 %6209
      %6211 = vrot.lane.b32.xlu0 %v6188, 1
      %v6212 = vpop.permute.xlu0 %6211
      %6213 = vrot.lane.b32.xlu0 %v6189, 1
      %v6214 = vpop.permute.xlu0 %6213
      %6215 = vrot.lane.b32.xlu0 %v6190, 1
      %v6216 = vpop.permute.xlu0 %6215
      %6217 = vrot.lane.b32.xlu0 %v6191, 1
      %v6218 = vpop.permute.xlu0 %6217
      %6219 = vrot.lane.b32.xlu0 %v6192, 1
      %v6220 = vpop.permute.xlu0 %6219
      %v6229 = vmul.f32 %v6206, %v4865
      %v6230 = vmul.f32 %v6208, %v4865
      %v6231 = vmul.f32 %v6210, %v4865
      %v6232 = vmul.f32 %v6212, %v4865
      %v6233 = vmul.f32 %v6214, %v4865
      %v6234 = vmul.f32 %v6216, %v4865
      %v6235 = vmul.f32 %v6218, %v4865
      %v6236 = vmul.f32 %v6220, %v4865
      %v6237 = vpack.c.bf16 %v6230, %v6229
      %v6238 = vpack.c.bf16 %v6232, %v6231
      %v6239 = vpack.c.bf16 %v6234, %v6233
      %v6240 = vpack.c.bf16 %v6236, %v6235
      %s6241 = scalar_lea.vmem %s3, 320
      %v6242 = vld [vmem:[%s6241] sm:$0xff]
      %v6243 = vld [vmem:[%s6241 + $0x8] sm:$0xff]
      %v6244 = vld [vmem:[%s6241 + $0x10] sm:$0xff]
      %v6245 = vld [vmem:[%s6241 + $0x18] sm:$0xff]
      %v6246 = vld [vmem:[%s6241 + $0x20] sm:$0xff]
      %v6247 = vld [vmem:[%s6241 + $0x28] sm:$0xff]
      %v6248 = vld [vmem:[%s6241 + $0x30] sm:$0xff]
      %v6249 = vld [vmem:[%s6241 + $0x38] sm:$0xff]
      %s6250 = scalar_lea.vmem %s4, 2432
      %v6251 = vld [vmem:[%s6250] sm:$0xff]
      %v6252 = vld [vmem:[%s6250 + $0x8] sm:$0xff]
      %v6253 = vld [vmem:[%s6250 + $0x10] sm:$0xff]
      %v6254 = vld [vmem:[%s6250 + $0x18] sm:$0xff]
      %v6255 = vld [vmem:[%s6250 + $0x20] sm:$0xff]
      %v6256 = vld [vmem:[%s6250 + $0x28] sm:$0xff]
      %v6257 = vld [vmem:[%s6250 + $0x30] sm:$0xff]
      %v6258 = vld [vmem:[%s6250 + $0x38] sm:$0xff]
      %6260 = vset.pattern.permute.xlu0 0
      %6261 = vperm.xlu0 %6260, %v6251
      %v6262 = vpop.permute.xlu0 %6261
      %6265 = vset.pattern.permute.xlu0 0
      %6266 = vperm.xlu0 %6265, %v6252
      %v6267 = vpop.permute.xlu0 %6266
      %6270 = vset.pattern.permute.xlu0 0
      %6271 = vperm.xlu0 %6270, %v6253
      %v6272 = vpop.permute.xlu0 %6271
      %6275 = vset.pattern.permute.xlu0 0
      %6276 = vperm.xlu0 %6275, %v6254
      %v6277 = vpop.permute.xlu0 %6276
      %6280 = vset.pattern.permute.xlu0 0
      %6281 = vperm.xlu0 %6280, %v6255
      %v6282 = vpop.permute.xlu0 %6281
      %6285 = vset.pattern.permute.xlu0 0
      %6286 = vperm.xlu0 %6285, %v6256
      %v6287 = vpop.permute.xlu0 %6286
      %6290 = vset.pattern.permute.xlu0 0
      %6291 = vperm.xlu0 %6290, %v6257
      %v6292 = vpop.permute.xlu0 %6291
      %6295 = vset.pattern.permute.xlu0 0
      %6296 = vperm.xlu0 %6295, %v6258
      %v6297 = vpop.permute.xlu0 %6296
      %v6307 = vunpack.c.l.b16 %v6242
      %v6308 = vunpack.c.h.b16 %v6242
      %v6309 = vunpack.c.l.b16 %v6243
      %v6310 = vunpack.c.h.b16 %v6243
      %v6311 = vunpack.c.l.b16 %v6244
      %v6312 = vunpack.c.h.b16 %v6244
      %v6313 = vunpack.c.l.b16 %v6245
      %v6314 = vunpack.c.h.b16 %v6245
      %v6315 = vunpack.c.l.b16 %v6246
      %v6316 = vunpack.c.h.b16 %v6246
      %v6317 = vunpack.c.l.b16 %v6247
      %v6318 = vunpack.c.h.b16 %v6247
      %v6319 = vunpack.c.l.b16 %v6248
      %v6320 = vunpack.c.h.b16 %v6248
      %v6321 = vunpack.c.l.b16 %v6249
      %v6322 = vunpack.c.h.b16 %v6249
      %v6323 = vpack.c.b16 %v6309, %v6307
      %v6324 = vpack.c.b16 %v6310, %v6308
      %v6325 = vpack.c.b16 %v6313, %v6311
      %v6326 = vpack.c.b16 %v6314, %v6312
      %v6327 = vpack.c.b16 %v6317, %v6315
      %v6328 = vpack.c.b16 %v6318, %v6316
      %v6329 = vpack.c.b16 %v6321, %v6319
      %v6330 = vpack.c.b16 %v6322, %v6320
      %6339 = vmatprep.subr.bf16.mxu0 0
      %6340 = vmatpush1.bf16.msra.mxu0 %v6137
      %6341 = vmatprep.subr.bf16.mxu0 0
      %6342 = vmatpush1.bf16.msra.mxu0 %v6138
      %6343 = vmatprep.subr.bf16.mxu0 0
      %6344 = vmatpush1.bf16.msra.mxu0 %v6139
      %6345 = vmatprep.subr.bf16.mxu0 0
      %6346 = vmatpush1.bf16.msra.mxu0 %v6140
      %6347 = vmatprep.subr.bf16.mxu0 0
      %6348 = vmatpush1.bf16.msra.mxu0 %v6181
      %6349 = vmatprep.subr.bf16.mxu0 0
      %6350 = vmatpush1.bf16.msra.mxu0 %v6182
      %6351 = vmatprep.subr.bf16.mxu0 0
      %6352 = vmatpush1.bf16.msra.mxu0 %v6183
      %6353 = vmatprep.subr.bf16.mxu0 0
      %6354 = vmatpush1.bf16.msra.mxu0 %v6184
      %6355 = vmatprep.subr.bf16.mxu0 0
      %6356 = vmatpush1.bf16.msra.mxu0 %v6193
      %6357 = vmatprep.subr.bf16.mxu0 0
      %6358 = vmatpush1.bf16.msra.mxu0 %v6194
      %6359 = vmatprep.subr.bf16.mxu0 0
      %6360 = vmatpush1.bf16.msra.mxu0 %v6195
      %6361 = vmatprep.subr.bf16.mxu0 0
      %6362 = vmatpush1.bf16.msra.mxu0 %v6196
      %6363 = vmatprep.subr.bf16.mxu0 0
      %6364 = vmatpush1.bf16.msra.mxu0 %v6237
      %6365 = vmatprep.subr.bf16.mxu0 0
      %6366 = vmatpush1.bf16.msra.mxu0 %v6238
      %6367 = vmatprep.subr.bf16.mxu0 0
      %6368 = vmatpush1.bf16.msra.mxu0 %v6239
      %6369 = vmatprep.subr.bf16.mxu0 0
      %6370 = vmatpush1.bf16.msra.mxu0 %v6240
      %6371 = vmatprep.mubr.bf16.mxu0 %v6324
      %6372 = vmatmul.mubr.bf16.gmra.mrb[0].mxu0 %v6323
      %v6373 = vpop.f32.mrb[0].mxu0
      %v6374 = vadd.f32 %v6262, %v6373
      %v6375 = vpop.f32.mrb[0].mxu0
      %v6376 = vpop.f32.mrb[0].mxu0
      %v6377 = vadd.f32 %v6267, %v6376
      %v6378 = vpop.f32.mrb[0].mxu0
      %6379 = vmatprep.mubr.bf16.mxu0 %v6326
      %6380 = vmatmul.mubr.bf16.gmra.mrb[0].mxu0 %v6325
      %v6381 = vpop.f32.mrb[0].mxu0
      %v6382 = vadd.f32 %v6272, %v6381
      %v6383 = vpop.f32.mrb[0].mxu0
      %v6384 = vpop.f32.mrb[0].mxu0
      %v6385 = vadd.f32 %v6277, %v6384
      %v6386 = vpop.f32.mrb[0].mxu0
      %6387 = vmatprep.mubr.bf16.mxu0 %v6328
      %6388 = vmatmul.mubr.bf16.gmra.mrb[0].mxu0 %v6327
      %v6389 = vpop.f32.mrb[0].mxu0
      %v6390 = vadd.f32 %v6282, %v6389
      %v6391 = vpop.f32.mrb[0].mxu0
      %v6392 = vpop.f32.mrb[0].mxu0
      %v6393 = vadd.f32 %v6287, %v6392
      %v6394 = vpop.f32.mrb[0].mxu0
      %6395 = vmatprep.mubr.bf16.mxu0 %v6330
      %6396 = vmatmul.mubr.bf16.gmra.mrb[0].mxu0 %v6329
      %v6397 = vpop.f32.mrb[0].mxu0
      %v6398 = vadd.f32 %v6292, %v6397
      %v6399 = vpop.f32.mrb[0].mxu0
      %v6400 = vpop.f32.mrb[0].mxu0
      %v6401 = vadd.f32 %v6297, %v6400
      %v6402 = vpop.f32.mrb[0].mxu0
      %6403 = vdwg.mxu0
      %v6404 = vadd.f32 %v6374, %v6377
      %v6405 = vadd.f32 %v6404, %v6382
      %v6406 = vadd.f32 %v6405, %v6385
      %v6407 = vadd.f32 %v6406, %v6390
      %v6408 = vadd.f32 %v6407, %v6393
      %v6409 = vadd.f32 %v6408, %v6398
      %v6410 = vadd.f32 %v6409, %v6401
      %v6411 = vrot.slane %v6410, 4
      %v6412 = vadd.f32 %v6410, %v6411
      %v6413 = vrot.slane %v6412, 2
      %v6414 = vadd.f32 %v6412, %v6413
      %v6415 = vrot.slane %v6414, 1
      %v6416 = vadd.f32 %v6414, %v6415
      %v6417 = vmul.f32 %v6374, %v6374
      %v6418 = vmul.f32 %v6377, %v6377
      %v6419 = vmul.f32 %v6382, %v6382
      %v6420 = vmul.f32 %v6385, %v6385
      %v6421 = vmul.f32 %v6390, %v6390
      %v6422 = vmul.f32 %v6393, %v6393
      %v6423 = vmul.f32 %v6398, %v6398
      %v6424 = vmul.f32 %v6401, %v6401
      %v6425 = vadd.f32 %v6417, %v6418
      %v6426 = vadd.f32 %v6425, %v6419
      %v6427 = vadd.f32 %v6426, %v6420
      %v6428 = vadd.f32 %v6427, %v6421
      %v6429 = vadd.f32 %v6428, %v6422
      %v6430 = vadd.f32 %v6429, %v6423
      %v6431 = vadd.f32 %v6430, %v6424
      %v6432 = vrot.slane %v6431, 4
      %v6433 = vadd.f32 %v6431, %v6432
      %v6434 = vrot.slane %v6433, 2
      %v6435 = vadd.f32 %v6433, %v6434
      %v6436 = vrot.slane %v6435, 1
      %v6437 = vadd.f32 %v6435, %v6436
      %v6438 = vsel %vm531, %v6416, %v6437
      %v6439 = vsel %vm533, %v6438, 0.0
      %6440 = vmatprep.subr.mxu0 0.0
      %6441 = vmatpush1.msra.mxu0 %v323
      %6442 = vmatprep.subr.mxu0 0.0
      %6443 = vmatpush1.msra.mxu0 %v324
      %6444 = vmatprep.subr.mxu0 0.0
      %6445 = vmatpush1.msra.mxu0 %v325
      %6446 = vmatprep.subr.mxu0 0.0
      %6447 = vmatpush1.msra.mxu0 %v326
      %6448 = vmatprep.subr.mxu0 0.0
      %6449 = vmatpush1.msra.mxu0 %v327
      %6450 = vmatprep.subr.mxu0 0.0
      %6451 = vmatpush1.msra.mxu0 %v328
      %6452 = vmatprep.subr.mxu0 0.0
      %6453 = vmatpush1.msra.mxu0 %v329
      %6454 = vmatprep.subr.mxu0 0.0
      %6455 = vmatpush1.msra.mxu0 %v330
      %6456 = vmatprep.subr.mxu0 0.0
      %6457 = vmatpush1.msra.mxu0 %v331
      %6458 = vmatprep.subr.mxu0 0.0
      %6459 = vmatpush1.msra.mxu0 %v332
      %6460 = vmatprep.subr.mxu0 0.0
      %6461 = vmatpush1.msra.mxu0 %v333
      %6462 = vmatprep.subr.mxu0 0.0
      %6463 = vmatpush1.msra.mxu0 %v334
      %6464 = vmatprep.subr.mxu0 0.0
      %6465 = vmatpush1.msra.mxu0 %v335
      %6466 = vmatprep.subr.mxu0 0.0
      %6467 = vmatpush1.msra.mxu0 %v336
      %6468 = vmatprep.subr.mxu0 0.0
      %6469 = vmatpush1.msra.mxu0 %v337
      %6470 = vmatprep.subr.mxu0 0.0
      %6471 = vmatpush1.msra.mxu0 %v338
      %6472 = vmatprep.subr.mxu0 0.0
      %6473 = vmatpush1.msra.mxu0 0.0
      %6474 = vmatprep.subr.mxu0 0.0
      %6475 = vmatpush1.msra.mxu0 0.0
      %6476 = vmatprep.subr.mxu0 0.0
      %6477 = vmatpush1.msra.mxu0 0.0
      %6478 = vmatprep.subr.mxu0 0.0
      %6479 = vmatpush1.msra.mxu0 0.0
      %6480 = vmatprep.subr.mxu0 0.0
      %6481 = vmatpush1.msra.mxu0 0.0
      %6482 = vmatprep.subr.mxu0 0.0
      %6483 = vmatpush1.msra.mxu0 0.0
      %6484 = vmatprep.subr.mxu0 0.0
      %6485 = vmatpush1.msra.mxu0 0.0
      %6486 = vmatprep.subr.mxu0 0.0
      %6487 = vmatpush1.msra.mxu0 0.0
      %6488 = vmatprep.subr.mxu0 0.0
      %6489 = vmatpush1.msra.mxu0 0.0
      %6490 = vmatprep.subr.mxu0 0.0
      %6491 = vmatpush1.msra.mxu0 0.0
      %6492 = vmatprep.subr.mxu0 0.0
      %6493 = vmatpush1.msra.mxu0 0.0
      %6494 = vmatprep.subr.mxu0 0.0
      %6495 = vmatpush1.msra.mxu0 0.0
      %6496 = vmatprep.subr.mxu0 0.0
      %6497 = vmatpush1.msra.mxu0 0.0
      %6498 = vmatprep.subr.mxu0 0.0
      %6499 = vmatpush1.msra.mxu0 0.0
      %6500 = vmatprep.subr.mxu0 0.0
      %6501 = vmatpush1.msra.mxu0 0.0
      %6502 = vmatprep.subr.mxu0 0.0
      %6503 = vmatpush1.msra.mxu0 0.0
      %6504 = vmatprep.mubr.f32.mxu0 0.0
      %6505 = vmatmul.mubr.f32.gmra.mrb[0].mxu0 %v6439
      %v6506 = vpop.f32.mrb[0].mxu0
      %v6507 = vadd.f32 0.0, %v6506
      %v6508 = vpop.f32.mrb[0].mxu0
      %6509 = vdwg.mxu0
      %v6510 = vmul.f32 %v6507, 0.0009765625
      %v6511 = vmul.f32 %v6510, %v6510
      %v6513 = vrot.slane %v6511, 7
      %v6515 = vsub.f32 %v6510, %v6513
      %v6516 = vmax.f32 %v6515, 0.0
      %v6517 = vlaneseq
      %v6518 = vshrl.u32 %v6517, 7
      %v6519 = vsub.s32 0, %v6518
      %v6520 = vrot.slane %v6510, %v6519
      %v6521 = vsub.f32 %v6374, %v6520
      %v6522 = vsub.f32 %v6377, %v6520
      %v6523 = vsub.f32 %v6382, %v6520
      %v6524 = vsub.f32 %v6385, %v6520
      %v6525 = vsub.f32 %v6390, %v6520
      %v6526 = vsub.f32 %v6393, %v6520
      %v6527 = vsub.f32 %v6398, %v6520
      %v6528 = vsub.f32 %v6401, %v6520
      %v6529 = vadd.f32 %v6516, 1e-08
      %v6530 = vrsqrt.pop %v6529
      %v6531 = vlaneseq
      %v6532 = vshrl.u32 %v6531, 7
      %v6533 = vsub.s32 1, %v6532
      %v6534 = vrot.slane %v6530, %v6533
      %v6535 = vmul.f32 %v6521, %v6534
      %v6536 = vmul.f32 %v6522, %v6534
      %v6537 = vmul.f32 %v6523, %v6534
      %v6538 = vmul.f32 %v6524, %v6534
      %v6539 = vmul.f32 %v6525, %v6534
      %v6540 = vmul.f32 %v6526, %v6534
      %v6541 = vmul.f32 %v6527, %v6534
      %v6542 = vmul.f32 %v6528, %v6534
      %s6543 = scalar_lea.vmem %s4, 2496
      %v6544 = vld [vmem:[%s6543] sm:$0xff]
      %v6545 = vld [vmem:[%s6543 + $0x8] sm:$0xff]
      %v6546 = vld [vmem:[%s6543 + $0x10] sm:$0xff]
      %v6547 = vld [vmem:[%s6543 + $0x18] sm:$0xff]
      %v6548 = vld [vmem:[%s6543 + $0x20] sm:$0xff]
      %v6549 = vld [vmem:[%s6543 + $0x28] sm:$0xff]
      %v6550 = vld [vmem:[%s6543 + $0x30] sm:$0xff]
      %v6551 = vld [vmem:[%s6543 + $0x38] sm:$0xff]
      %6553 = vset.pattern.permute.xlu0 0
      %6554 = vperm.xlu0 %6553, %v6544
      %v6555 = vpop.permute.xlu0 %6554
      %6558 = vset.pattern.permute.xlu0 0
      %6559 = vperm.xlu0 %6558, %v6545
      %v6560 = vpop.permute.xlu0 %6559
      %6563 = vset.pattern.permute.xlu0 0
      %6564 = vperm.xlu0 %6563, %v6546
      %v6565 = vpop.permute.xlu0 %6564
      %6568 = vset.pattern.permute.xlu0 0
      %6569 = vperm.xlu0 %6568, %v6547
      %v6570 = vpop.permute.xlu0 %6569
      %6573 = vset.pattern.permute.xlu0 0
      %6574 = vperm.xlu0 %6573, %v6548
      %v6575 = vpop.permute.xlu0 %6574
      %6578 = vset.pattern.permute.xlu0 0
      %6579 = vperm.xlu0 %6578, %v6549
      %v6580 = vpop.permute.xlu0 %6579
      %6583 = vset.pattern.permute.xlu0 0
      %6584 = vperm.xlu0 %6583, %v6550
      %v6585 = vpop.permute.xlu0 %6584
      %6588 = vset.pattern.permute.xlu0 0
      %6589 = vperm.xlu0 %6588, %v6551
      %v6590 = vpop.permute.xlu0 %6589
      %v6592 = vmul.f32 %v6535, %v6555
      %v6593 = vmul.f32 %v6536, %v6560
      %v6594 = vmul.f32 %v6537, %v6565
      %v6595 = vmul.f32 %v6538, %v6570
      %v6596 = vmul.f32 %v6539, %v6575
      %v6597 = vmul.f32 %v6540, %v6580
      %v6598 = vmul.f32 %v6541, %v6585
      %v6599 = vmul.f32 %v6542, %v6590
      %s6600 = scalar_lea.vmem %s4, 2560
      %v6601 = vld [vmem:[%s6600] sm:$0xff]
      %v6602 = vld [vmem:[%s6600 + $0x8] sm:$0xff]
      %v6603 = vld [vmem:[%s6600 + $0x10] sm:$0xff]
      %v6604 = vld [vmem:[%s6600 + $0x18] sm:$0xff]
      %v6605 = vld [vmem:[%s6600 + $0x20] sm:$0xff]
      %v6606 = vld [vmem:[%s6600 + $0x28] sm:$0xff]
      %v6607 = vld [vmem:[%s6600 + $0x30] sm:$0xff]
      %v6608 = vld [vmem:[%s6600 + $0x38] sm:$0xff]
      %6610 = vset.pattern.permute.xlu0 0
      %6611 = vperm.xlu0 %6610, %v6601
      %v6612 = vpop.permute.xlu0 %6611
      %6615 = vset.pattern.permute.xlu0 0
      %6616 = vperm.xlu0 %6615, %v6602
      %v6617 = vpop.permute.xlu0 %6616
      %6620 = vset.pattern.permute.xlu0 0
      %6621 = vperm.xlu0 %6620, %v6603
      %v6622 = vpop.permute.xlu0 %6621
      %6625 = vset.pattern.permute.xlu0 0
      %6626 = vperm.xlu0 %6625, %v6604
      %v6627 = vpop.permute.xlu0 %6626
      %6630 = vset.pattern.permute.xlu0 0
      %6631 = vperm.xlu0 %6630, %v6605
      %v6632 = vpop.permute.xlu0 %6631
      %6635 = vset.pattern.permute.xlu0 0
      %6636 = vperm.xlu0 %6635, %v6606
      %v6637 = vpop.permute.xlu0 %6636
      %6640 = vset.pattern.permute.xlu0 0
      %6641 = vperm.xlu0 %6640, %v6607
      %v6642 = vpop.permute.xlu0 %6641
      %6645 = vset.pattern.permute.xlu0 0
      %6646 = vperm.xlu0 %6645, %v6608
      %v6647 = vpop.permute.xlu0 %6646
      %v6649 = vadd.f32 %v6592, %v6612
      %v6650 = vadd.f32 %v6593, %v6617
      %v6651 = vadd.f32 %v6594, %v6622
      %v6652 = vadd.f32 %v6595, %v6627
      %v6653 = vadd.f32 %v6596, %v6632
      %v6654 = vadd.f32 %v6597, %v6637
      %v6655 = vadd.f32 %v6598, %v6642
      %v6656 = vadd.f32 %v6599, %v6647
      %vm6657 = vcmp.ge.f32.partialorder %v6649, 0.0
      %vm6658 = vcmp.ge.f32.partialorder %v6650, 0.0
      %vm6659 = vcmp.ge.f32.partialorder %v6651, 0.0
      %vm6660 = vcmp.ge.f32.partialorder %v6652, 0.0
      %vm6661 = vcmp.ge.f32.partialorder %v6653, 0.0
      %vm6662 = vcmp.ge.f32.partialorder %v6654, 0.0
      %vm6663 = vcmp.ge.f32.partialorder %v6655, 0.0
      %vm6664 = vcmp.ge.f32.partialorder %v6656, 0.0
      %v6665 = vmul.f32 %v6649, 0.25
      %v6666 = vmul.f32 %v6650, 0.25
      %v6667 = vmul.f32 %v6651, 0.25
      %v6668 = vmul.f32 %v6652, 0.25
      %v6669 = vmul.f32 %v6653, 0.25
      %v6670 = vmul.f32 %v6654, 0.25
      %v6671 = vmul.f32 %v6655, 0.25
      %v6672 = vmul.f32 %v6656, 0.25
      %v6673 = vsel %vm6657, %v6649, %v6665
      %v6674 = vsel %vm6658, %v6650, %v6666
      %v6675 = vsel %vm6659, %v6651, %v6667
      %v6676 = vsel %vm6660, %v6652, %v6668
      %v6677 = vsel %vm6661, %v6653, %v6669
      %v6678 = vsel %vm6662, %v6654, %v6670
      %v6679 = vsel %vm6663, %v6655, %v6671
      %v6680 = vsel %vm6664, %v6656, %v6672
      %v6681 = vld [vmem:[#allocation3] sm:$0xff]
      %v6682 = vld [vmem:[#allocation3 + $0x8] sm:$0xff]
      %v6683 = vld [vmem:[#allocation3 + $0x10] sm:$0xff]
      %v6684 = vld [vmem:[#allocation3 + $0x18] sm:$0xff]
      %v6685 = vld [vmem:[#allocation3 + $0x20] sm:$0xff]
      %v6686 = vld [vmem:[#allocation3 + $0x28] sm:$0xff]
      %v6687 = vld [vmem:[#allocation3 + $0x30] sm:$0xff]
      %v6688 = vld [vmem:[#allocation3 + $0x38] sm:$0xff]
      %v6689 = vadd.f32 %v6673, %v6681
      %v6690 = vadd.f32 %v6674, %v6682
      %v6691 = vadd.f32 %v6675, %v6683
      %v6692 = vadd.f32 %v6676, %v6684
      %v6693 = vadd.f32 %v6677, %v6685
      %v6694 = vadd.f32 %v6678, %v6686
      %v6695 = vadd.f32 %v6679, %v6687
      %v6696 = vadd.f32 %v6680, %v6688
      %6697 = vst [vmem:[%s278] sm:$0xff] %v6689
      %6698 = vst [vmem:[%s278 + $0x8] sm:$0xff] %v6690
      %6699 = vst [vmem:[%s278 + $0x10] sm:$0xff] %v6691
      %6700 = vst [vmem:[%s278 + $0x18] sm:$0xff] %v6692
      %6701 = vst [vmem:[%s278 + $0x20] sm:$0xff] %v6693
      %6702 = vst [vmem:[%s278 + $0x28] sm:$0xff] %v6694
      %6703 = vst [vmem:[%s278 + $0x30] sm:$0xff] %v6695
      %6704 = vst [vmem:[%s278 + $0x38] sm:$0xff] %v6696
      %p6705 = scmp.lt.s32.totalorder %s18, 1
      %s6706 = scalar_select %p6705, %s18, 1
      %s6707 = smul.addr %s6706, 8
      %s6708 = smul.addr %s6707, 8
      %s6709 = scalar_lea.vmem %s7, %s6708
      // Predicated region
      $region49: #{fwd.1} parent=47 // pred_check
        %p6710 = pneg %p188
      $region50: #{fwd.1} parent=47 // pred_check_branch
        %6712 = sbr.rel (%p6710) target = $region52
      $region51: #{fwd.1} parent=47 // pred_region
        _
      $region52: #{fwd.1} parent=47 // pred_fallthru
        _
    $region48: #{fwd.1} parent=5 // pred_fallthru
      _
    %p6713 = scmp.le.s32.totalorder 2, %s13
    // Predicated region
    $region53: #{fwd.1} parent=5 // pred_check
      %p6714 = pneg %p6713
    $region54: #{fwd.1} parent=5 // pred_check_branch
      %6716 = sbr.rel (%p6714) target = $region56
    $region55: #{fwd.1} parent=5 // pred_region
      %s6717 = ssub.s32 %s13, 2
      // Predicated region
      $region57: #{fwd.1} parent=55 // pred_check
        %p6718 = pneg %p194
      $region58: #{fwd.1} parent=55 // pred_check_branch
        %6720 = sbr.rel (%p6718) target = $region60
      $region59: #{fwd.1} parent=55 // pred_region
        %p6721 = scmp.lt.s32.totalorder %s19, 1
        %s6722 = scalar_select %p6721, %s19, 1
        %s6723 = smul.addr %s6722, 8
        %s6724 = smul.addr %s6723, 8
        %s6725 = scalar_lea.vmem %s7, %s6724
      $region60: #{fwd.1} parent=55 // pred_fallthru
        _
    $region56: #{fwd.1} parent=5 // pred_fallthru
      _
  $region6: #{fwd.1} parent=0 // loop_footer
    %s17 = sadd.s32 1, %s13
  $region7: #{fwd.1} parent=0 // loop_footer_branch
    %12 = sbr.rel target = $region3
  $region8: #{fwd.1} parent=0 // loop_exit
    _

</llo_original>
